<compile_context>
chip_gen: v6e
topology: v6e:2x2x1
jax: 0.10.0
libtpu: 0.0.40
codegen_flags: <defaults>
</compile_context>

<pallas_src>
import functools

import jax
import jax.numpy as jnp
from jax.experimental import pallas as pl
from jax.experimental.pallas import tpu as pltpu


def _round_up(x, m):
    return (x + m - 1) // m * m


# ---------------------------------------------------------------------------
# Stage 1 kernel: fused 1x1 reduce convs (branch2-reduce + branch3-reduce)
# ---------------------------------------------------------------------------
def _fused_1x1_kernel(x_ref, w_ref, b_ref, o_ref):
    """(TM, Cin) @ (Cin, Crp) + b ; Crp is 128-padded -> lane-dense store."""
    x = x_ref[...].astype(w_ref.dtype)
    acc = jnp.dot(x, w_ref[...], preferred_element_type=jnp.float32)
    o_ref[...] = (acc + b_ref[...]).astype(o_ref.dtype)


def _pick_tile_m(m):
    """Largest row tile (multiple of 8) dividing m, capped at 512."""
    for t in (512, 256, 128, 64, 32, 16, 8):
        if m % t == 0:
            return t
    return m  # fallback: full-extent block is always legal


def fused_pointwise_conv(x_flat, w, b, out_dtype):
    """(M, K) @ (K, Crp) + b, tiled over M with a pipelined parallel grid."""
    M, K = x_flat.shape
    cout = w.shape[1]
    tm = _pick_tile_m(M)
    flops = 2 * M * K * cout
    bytes_accessed = (x_flat.size * x_flat.dtype.itemsize
                      + w.size * w.dtype.itemsize + 4 * cout
                      + M * cout * jnp.dtype(out_dtype).itemsize)
    return pl.pallas_call(
        _fused_1x1_kernel,
        out_shape=jax.ShapeDtypeStruct((M, cout), out_dtype),
        grid=(M // tm,),
        in_specs=[
            pl.BlockSpec((tm, K), lambda i: (i, 0)),
            pl.BlockSpec((K, cout), lambda i: (0, 0)),
            pl.BlockSpec((1, cout), lambda i: (0, 0)),
        ],
        out_specs=pl.BlockSpec((tm, cout), lambda i: (i, 0)),
        compiler_params=pltpu.CompilerParams(dimension_semantics=("parallel",)),
        cost_estimate=pl.CostEstimate(flops=flops, transcendentals=0,
                                      bytes_accessed=bytes_accessed),
    )(x_flat, w, b.reshape(1, cout))


# ---------------------------------------------------------------------------
# Stage 2 kernel: all four branches on one (image, row-tile) block
# ---------------------------------------------------------------------------
def _branches_kernel(xp_ref, rp_ref, w1_ref, w3_ref, w5_ref, wp_ref, b_ref,
                     o_ref, *, c3r, c5r):
    """One halo row-tile per grid step.

      xp_ref : (1, TH+2, W+2, Cin)  x window, halo 1, padded with f32-min
                                    (maxpool identity; 1x1s read the interior)
      rp_ref : (1, TH+4, W+4, Crp)  fused reduce activations, halo 2, zero pad;
                                    channels [0:c3r] feed the 3x3 conv,
                                    [c3r:c3r+c5r] feed the 5x5 conv.
      w1/wp  : (Cin, ch)            1x1 weights
      w3     : (9,  c3r, ch3)       per-tap 3x3 weights (ky*3+kx major)
      w5     : (25, c5r, ch5)       per-tap 5x5 weights (ky*5+kx major)
      b_ref  : (1, Ctot_p)          concatenated biases, zero-padded
      o_ref  : (1, TH, W, Ctot_p)   lane-dense concatenated output
    """
    TH, W = o_ref.shape[1], o_ref.shape[2]
    xp = xp_ref[0]                       # (TH+2, W+2, Cin), f32
    rp = rp_ref[0]                       # (TH+4, W+4, Crp)
    cin = xp.shape[-1]
    cdt = w1_ref.dtype                   # matmul operand dtype (f32 or bf16)

    # --- branch 1: 1x1 conv on the interior of the halo-1 window ------------
    x_int = xp[1:TH + 1, 1:W + 1, :].reshape(TH * W, cin)
    br1 = jnp.dot(x_int.astype(cdt), w1_ref[...],
                  preferred_element_type=jnp.float32)

    # --- branch 2: 3x3 conv as a sum of 9 shifted matmuls (no im2col) -------
    ch3 = w3_ref.shape[-1]
    br2 = jnp.zeros((TH * W, ch3), jnp.float32)
    for ky in range(3):
        for kx in range(3):
            sl = rp[1 + ky:1 + ky + TH, 1 + kx:1 + kx + W, 0:c3r]
            sl = sl.reshape(TH * W, c3r).astype(cdt)
            br2 = br2 + jnp.dot(sl, w3_ref[ky * 3 + kx],
                                preferred_element_type=jnp.float32)

    # --- branch 3: 5x5 conv as a sum of 25 shifted matmuls ------------------
    ch5 = w5_ref.shape[-1]
    br3 = jnp.zeros((TH * W, ch5), jnp.float32)
    for ky in range(5):
        for kx in range(5):
            sl = rp[ky:ky + TH, kx:kx + W, c3r:c3r + c5r]
            sl = sl.reshape(TH * W, c5r).astype(cdt)
            br3 = br3 + jnp.dot(sl, w5_ref[ky * 5 + kx],
                                preferred_element_type=jnp.float32)

    # --- branch 4: 3x3 maxpool (f32 VPU work, hides under MXU) + 1x1 --------
    m = xp[0:TH, 0:W, :]
    for ky in range(3):
        for kx in range(3):
            if ky == 0 and kx == 0:
                continue
            m = jnp.maximum(m, xp[ky:ky + TH, kx:kx + W, :])
    br4 = jnp.dot(m.reshape(TH * W, cin).astype(cdt), wp_ref[...],
                  preferred_element_type=jnp.float32)

    # --- concatenate in-register, pad lanes to 128-multiple, single store ---
    out = jnp.concatenate([br1, br2, br3, br4], axis=-1)
    ctot = out.shape[-1]
    ctot_p = o_ref.shape[-1]
    if ctot_p > ctot:
        out = jnp.concatenate(
            [out, jnp.zeros((TH * W, ctot_p - ctot), jnp.float32)], axis=-1)
    out = out + b_ref[...]
    o_ref[...] = out.reshape(1, TH, W, ctot_p).astype(o_ref.dtype)


# ---------------------------------------------------------------------------
# Weight layout helpers (PyTorch OIHW -> matmul layouts)
# ---------------------------------------------------------------------------
def _wmat(w_pt, dtype):
    """OIHW -> (kh*kw*cin, cout)."""
    cout, cin, kh, kw = w_pt.shape
    return jnp.transpose(w_pt, (2, 3, 1, 0)).reshape(kh * kw * cin, cout).astype(dtype)


def _wtap(w_pt, dtype):
    """OIHW -> per-tap (kh*kw, cin, cout) for sum-of-shifted-matmuls."""
    cout, cin, kh, kw = w_pt.shape
    return jnp.transpose(w_pt, (2, 3, 1, 0)).reshape(kh * kw, cin, cout).astype(dtype)


def _pick_tile_h(h):
    """Row-tile height: prefer ~8-16 rows per step, must divide h."""
    for t in (8, 16, 14, 7, 12, 6, 4, 10, 5, 2):
        if t <= h and h % t == 0:
            return t
    return h


# ---------------------------------------------------------------------------
# InceptionModule forward
# ---------------------------------------------------------------------------
def inception_forward(x_nchw, p, *, compute_dtype=jnp.float32):
    # External interface NCHW (PyTorch); compute in NHWC (channels on lanes).
    x = jnp.transpose(x_nchw, (0, 2, 3, 1)).astype(jnp.float32)
    N, H, W, cin = x.shape

    ch1 = p["b1_w"].shape[0]
    c3r = p["b2r_w"].shape[0]
    ch3 = p["b2_w"].shape[0]
    c5r = p["b3r_w"].shape[0]
    ch5 = p["b3_w"].shape[0]
    chp = p["b4_w"].shape[0]
    ctot = ch1 + ch3 + ch5 + chp
    ctot_p = _round_up(ctot, 128)
    cr = c3r + c5r
    crp = _round_up(cr, 128)

    # ---- stage 1: fused 1x1 reduce convs, lane-dense (128-padded) output ---
    w_red = jnp.concatenate([_wmat(p["b2r_w"], compute_dtype),
                             _wmat(p["b3r_w"], compute_dtype)], axis=1)
    w_red = jnp.pad(w_red, ((0, 0), (0, crp - cr)))
    b_red = jnp.pad(jnp.concatenate([p["b2r_b"], p["b3r_b"]]),
                    (0, crp - cr)).astype(jnp.float32)
    red = fused_pointwise_conv(x.reshape(N * H * W, cin), w_red, b_red,
                               compute_dtype)
    red = red.reshape(N, H, W, crp)

    # ---- halo padding + row windowing (thin JAX glue) -----------------------
    # One combined zero-padded reduce tensor (halo 2) feeds BOTH the 3x3 and
    # the 5x5 convs; x is padded once by 1 with f32-min for the maxpool.
    th = _pick_tile_h(H)
    R = H // th
    G = N * R
    neg = jnp.finfo(jnp.float32).min
    xp = jnp.pad(x, ((0, 0), (1, 1), (1, 1), (0, 0)), constant_values=neg)
    redp = jnp.pad(red, ((0, 0), (2, 2), (2, 2), (0, 0)))
    xp_t = jnp.stack([xp[:, r * th:r * th + th + 2] for r in range(R)],
                     axis=1).reshape(G, th + 2, W + 2, cin)
    redp_t = jnp.stack([redp[:, r * th:r * th + th + 4] for r in range(R)],
                       axis=1).reshape(G, th + 4, W + 4, crp)

    # ---- stage 2 weights / bias ---------------------------------------------
    w1m = _wmat(p["b1_w"], compute_dtype)      # (cin, ch1)
    w3c = _wtap(p["b2_w"], compute_dtype)      # (9,  c3r, ch3)
    w5c = _wtap(p["b3_w"], compute_dtype)      # (25, c5r, ch5)
    wpm = _wmat(p["b4_w"], compute_dtype)      # (cin, chp)
    b_all = jnp.concatenate([p["b1_b"], p["b2_b"], p["b3_b"], p["b4_b"]])
    b_all = jnp.pad(b_all, (0, ctot_p - ctot)).astype(jnp.float32).reshape(1, ctot_p)

    flops = 2 * G * th * W * (cin * ch1 + 9 * c3r * ch3 + 25 * c5r * ch5 + cin * chp)
    bytes_accessed = (xp_t.size * xp_t.dtype.itemsize
                      + redp_t.size * redp_t.dtype.itemsize
                      + (w1m.size + w3c.size + w5c.size + wpm.size) * w1m.dtype.itemsize
                      + b_all.size * 4 + G * th * W * ctot_p * 4)

    kernel = functools.partial(_branches_kernel, c3r=c3r, c5r=c5r)
    out_t = pl.pallas_call(
        kernel,
        out_shape=jax.ShapeDtypeStruct((G, th, W, ctot_p), jnp.float32),
        grid=(G,),
        in_specs=[
            pl.BlockSpec((1, th + 2, W + 2, cin), lambda g: (g, 0, 0, 0)),
            pl.BlockSpec((1, th + 4, W + 4, crp), lambda g: (g, 0, 0, 0)),
            pl.BlockSpec((cin, ch1), lambda g: (0, 0)),
            pl.BlockSpec((9, c3r, ch3), lambda g: (0, 0, 0)),
            pl.BlockSpec((25, c5r, ch5), lambda g: (0, 0, 0)),
            pl.BlockSpec((cin, chp), lambda g: (0, 0)),
            pl.BlockSpec((1, ctot_p), lambda g: (0, 0)),
        ],
        out_specs=pl.BlockSpec((1, th, W, ctot_p), lambda g: (g, 0, 0, 0)),
        compiler_params=pltpu.CompilerParams(dimension_semantics=("parallel",)),
        cost_estimate=pl.CostEstimate(flops=flops, transcendentals=0,
                                      bytes_accessed=bytes_accessed),
    )(xp_t, redp_t, w1m, w3c, w5c, wpm, b_all)

    # (G, th, W, Cp) -> (N, H, W, Cp) is a free reshape (same memory layout);
    # slice off channel padding and return NCHW.
    out = out_t.reshape(N, H, W, ctot_p)[..., :ctot]
    return jnp.transpose(out, (0, 3, 1, 2)).astype(x_nchw.dtype)


# ---------------------------------------------------------------------------
# Pure-JAX reference (for correctness check)
# ---------------------------------------------------------------------------
def _ref_conv(x_nchw, w, b, pad):
    out = jax.lax.conv_general_dilated(
        x_nchw, w, (1, 1), [(pad, pad), (pad, pad)],
        dimension_numbers=("NCHW", "OIHW", "NCHW"))
    return out + b[None, :, None, None]


def _ref_maxpool(x_nchw):
    neg = jnp.finfo(x_nchw.dtype).min
    return jax.lax.reduce_window(x_nchw, neg, jax.lax.max,
                                 (1, 1, 3, 3), (1, 1, 1, 1),
                                 [(0, 0), (0, 0), (1, 1), (1, 1)])


def inception_reference(x, p):
    b1 = _ref_conv(x, p["b1_w"], p["b1_b"], 0)
    b2 = _ref_conv(_ref_conv(x, p["b2r_w"], p["b2r_b"], 0), p["b2_w"], p["b2_b"], 1)
    b3 = _ref_conv(_ref_conv(x, p["b3r_w"], p["b3r_b"], 0), p["b3_w"], p["b3_b"], 2)
    b4 = _ref_conv(_ref_maxpool(x), p["b4_w"], p["b4_b"], 0)
    return jnp.concatenate([b1, b2, b3, b4], axis=1)


# ---------------------------------------------------------------------------
# Deterministic parameter init (synthetic; PyTorch OIHW weight layout)
# ---------------------------------------------------------------------------
def init_params(key, in_channels, ch1x1, ch3x3red, ch3x3, ch5x5red, ch5x5, pool_proj):
    ks = jax.random.split(key, 12)

    def w(k, cout, cin, ksz):
        return 0.1 * jax.random.normal(k, (cout, cin, ksz, ksz), jnp.float32)

    def b(k, cout):
        return 0.1 * jax.random.normal(k, (cout,), jnp.float32)

    return {
        "b1_w": w(ks[0], ch1x1, in_channels, 1),      "b1_b": b(ks[1], ch1x1),
        "b2r_w": w(ks[2], ch3x3red, in_channels, 1),  "b2r_b": b(ks[3], ch3x3red),
        "b2_w": w(ks[4], ch3x3, ch3x3red, 3),         "b2_b": b(ks[5], ch3x3),
        "b3r_w": w(ks[6], ch5x5red, in_channels, 1),  "b3r_b": b(ks[7], ch5x5red),
        "b3_w": w(ks[8], ch5x5, ch5x5red, 5),         "b3_b": b(ks[9], ch5x5),
        "b4_w": w(ks[10], pool_proj, in_channels, 1), "b4_b": b(ks[11], pool_proj),
    }


if __name__ == "__main__":
    key = jax.random.PRNGKey(0)
    k_x, k_p = jax.random.split(key)

    # Small InceptionModule config: in=4, ch1x1=4, ch3x3red=4, ch3x3=8,
    # ch5x5red=2, ch5x5=4, pool_proj=4  -> out channels = 20
    in_channels, ch1x1, ch3x3red, ch3x3, ch5x5red, ch5x5, pool_proj = 4, 4, 4, 8, 2, 4, 4
    N, H, W = 2, 16, 16

    x = jax.random.normal(k_x, (N, in_channels, H, W), jnp.float32)
    params = init_params(k_p, in_channels, ch1x1, ch3x3red, ch3x3, ch5x5red,
                         ch5x5, pool_proj)

    expected_c = ch1x1 + ch3x3 + ch5x5 + pool_proj
    ref = jax.block_until_ready(inception_reference(x, params))

    # f32 matmul path: exact PyTorch-module numerics.
    fwd_f32 = jax.jit(functools.partial(inception_forward,
                                        compute_dtype=jnp.float32))
    out = jax.block_until_ready(fwd_f32(x, params))
    assert out.shape == (N, expected_c, H, W), out.shape
    assert jnp.allclose(out, ref, rtol=2e-3, atol=2e-3), \
        float(jnp.max(jnp.abs(out - ref)))

    # bf16 matmul-operand path (recommended on v6e/v7x): f32 accumulation,
    # maxpool / bias / elementwise stay f32 -> only matmul rounding differs.
    fwd_bf16 = jax.jit(functools.partial(inception_forward,
                                         compute_dtype=jnp.bfloat16))
    out_bf = jax.block_until_ready(fwd_bf16(x, params))
    assert out_bf.shape == (N, expected_c, H, W), out_bf.shape
    assert jnp.allclose(out_bf, ref, rtol=5e-2, atol=5e-2), \
        float(jnp.max(jnp.abs(out_bf - ref)))

    print("KERNEL_OK")
</pallas_src>

<mosaic_0001>
module attributes {stable_mosaic.version = 11 : i64} {
  func.func @_fused_1x1_kernel(%arg0: i32, %arg1: memref<512x4xf32, #tpu.memory_space<vmem>>, %arg2: memref<4x128xf32, #tpu.memory_space<vmem>>, %arg3: memref<1x128xf32, #tpu.memory_space<vmem>>, %arg4: memref<512x128xf32, #tpu.memory_space<vmem>>) attributes {dimension_semantics = [#tpu.dimension_semantics<parallel>], iteration_bounds = array<i64: 1>, scalar_prefetch = 0 : i64, scratch_operands = 0 : i64, tpu.core_type = #tpu.core_type<tc>, window_params = [{transform_indices = @transform_0, window_bounds = array<i64: 512, 4>}, {pipeline_mode = #tpu.pipeline_mode<synchronous>, transform_indices = @transform_1, window_bounds = array<i64: 4, 128>}, {pipeline_mode = #tpu.pipeline_mode<synchronous>, transform_indices = @transform_2, window_bounds = array<i64: 1, 128>}, {transform_indices = @transform_3, window_bounds = array<i64: 512, 128>}]} {
    %c0 = arith.constant 0 : index
    %c0_0 = arith.constant 0 : index
    %0 = vector.load %arg1[%c0, %c0_0] : memref<512x4xf32, #tpu.memory_space<vmem>>, vector<512x4xf32>
    %c0_1 = arith.constant 0 : index
    %c0_2 = arith.constant 0 : index
    %1 = vector.load %arg2[%c0_1, %c0_2] : memref<4x128xf32, #tpu.memory_space<vmem>>, vector<4x128xf32>
    %cst = arith.constant dense<0.000000e+00> : vector<512x128xf32>
    %2 = tpu.matmul %0, %1, %cst {dimension_numbers = #tpu.dot_dimension_numbers<[1], [0], [0], [1], [0, 0, 1, 1], [], []>} : vector<512x4xf32>, vector<4x128xf32>, vector<512x128xf32> -> vector<512x128xf32>
    %c0_3 = arith.constant 0 : index
    %c0_4 = arith.constant 0 : index
    %3 = vector.load %arg3[%c0_3, %c0_4] : memref<1x128xf32, #tpu.memory_space<vmem>>, vector<1x128xf32>
    %4 = vector.broadcast %3 : vector<1x128xf32> to vector<512x128xf32>
    %5 = arith.addf %2, %4 : vector<512x128xf32>
    %c0_5 = arith.constant 0 : index
    %c0_6 = arith.constant 0 : index
    %6 = vector.load %arg4[%c0_5, %c0_6] : memref<512x128xf32, #tpu.memory_space<vmem>>, vector<512x128xf32>
    tpu.vector_store %arg4[%c0_5, %c0_6], %5 {strides = array<i32>} : memref<512x128xf32, #tpu.memory_space<vmem>>, vector<512x128xf32>,
    return
  }
  func.func @transform_0(%arg0: i32) -> (i32, i32) {
    %c0_i32 = arith.constant 0 : i32
    %c0_i32_0 = arith.constant 0 : i32
    return %arg0, %c0_i32 : i32, i32
  }
  func.func @transform_1(%arg0: i32) -> (i32, i32) {
    %c0_i32 = arith.constant 0 : i32
    %c0_i32_0 = arith.constant 0 : i32
    %c0_i32_1 = arith.constant 0 : i32
    return %c0_i32, %c0_i32_0 : i32, i32
  }
  func.func @transform_2(%arg0: i32) -> (i32, i32) {
    %c0_i32 = arith.constant 0 : i32
    %c0_i32_0 = arith.constant 0 : i32
    %c0_i32_1 = arith.constant 0 : i32
    return %c0_i32, %c0_i32_0 : i32, i32
  }
  func.func @transform_3(%arg0: i32) -> (i32, i32) {
    %c0_i32 = arith.constant 0 : i32
    %c0_i32_0 = arith.constant 0 : i32
    return %arg0, %c0_i32 : i32, i32
  }
}

module attributes {stable_mosaic.version = 11 : i64} {
  func.func @_branches_kernel(%arg0: i32, %arg1: memref<1x10x18x4xf32, #tpu.memory_space<vmem>>, %arg2: memref<1x12x20x128xf32, #tpu.memory_space<vmem>>, %arg3: memref<4x4xf32, #tpu.memory_space<vmem>>, %arg4: memref<9x4x8xf32, #tpu.memory_space<vmem>>, %arg5: memref<25x2x4xf32, #tpu.memory_space<vmem>>, %arg6: memref<4x4xf32, #tpu.memory_space<vmem>>, %arg7: memref<1x128xf32, #tpu.memory_space<vmem>>, %arg8: memref<1x8x16x128xf32, #tpu.memory_space<vmem>>) attributes {dimension_semantics = [#tpu.dimension_semantics<parallel>], iteration_bounds = array<i64: 4>, scalar_prefetch = 0 : i64, scratch_operands = 0 : i64, tpu.core_type = #tpu.core_type<tc>, window_params = [{transform_indices = @transform_0, window_bounds = array<i64: 1, 10, 18, 4>}, {transform_indices = @transform_1, window_bounds = array<i64: 1, 12, 20, 128>}, {pipeline_mode = #tpu.pipeline_mode<synchronous>, transform_indices = @transform_2, window_bounds = array<i64: 4, 4>}, {pipeline_mode = #tpu.pipeline_mode<synchronous>, transform_indices = @transform_3, window_bounds = array<i64: 9, 4, 8>}, {pipeline_mode = #tpu.pipeline_mode<synchronous>, transform_indices = @transform_4, window_bounds = array<i64: 25, 2, 4>}, {pipeline_mode = #tpu.pipeline_mode<synchronous>, transform_indices = @transform_5, window_bounds = array<i64: 4, 4>}, {pipeline_mode = #tpu.pipeline_mode<synchronous>, transform_indices = @transform_6, window_bounds = array<i64: 1, 128>}, {transform_indices = @transform_7, window_bounds = array<i64: 1, 8, 16, 128>}]} {
    %c0 = arith.constant 0 : index
    %c0_0 = arith.constant 0 : index
    %c0_1 = arith.constant 0 : index
    %c0_2 = arith.constant 0 : index
    %0 = vector.load %arg1[%c0, %c0_0, %c0_1, %c0_2] : memref<1x10x18x4xf32, #tpu.memory_space<vmem>>, vector<1x10x18x4xf32>
    %1 = vector.shape_cast %0 : vector<1x10x18x4xf32> to vector<10x18x4xf32>
    %c0_3 = arith.constant 0 : index
    %c0_4 = arith.constant 0 : index
    %c0_5 = arith.constant 0 : index
    %c0_6 = arith.constant 0 : index
    %2 = vector.load %arg2[%c0_3, %c0_4, %c0_5, %c0_6] : memref<1x12x20x128xf32, #tpu.memory_space<vmem>>, vector<1x12x20x128xf32>
    %3 = vector.shape_cast %2 : vector<1x12x20x128xf32> to vector<12x20x128xf32>
    %4 = vector.extract_strided_slice %1 {offsets = [1, 1, 0], sizes = [8, 16, 4], strides = [1, 1, 1]} : vector<10x18x4xf32> to vector<8x16x4xf32>
    %5 = vector.shape_cast %4 : vector<8x16x4xf32> to vector<128x4xf32>
    %c0_7 = arith.constant 0 : index
    %c0_8 = arith.constant 0 : index
    %6 = vector.load %arg3[%c0_7, %c0_8] : memref<4x4xf32, #tpu.memory_space<vmem>>, vector<4x4xf32>
    %cst = arith.constant dense<0.000000e+00> : vector<128x4xf32>
    %7 = tpu.matmul %5, %6, %cst {dimension_numbers = #tpu.dot_dimension_numbers<[1], [0], [0], [1], [0, 0, 1, 1], [], []>} : vector<128x4xf32>, vector<4x4xf32>, vector<128x4xf32> -> vector<128x4xf32>
    %cst_9 = arith.constant 0.000000e+00 : f32
    %8 = vector.broadcast %cst_9 : f32 to vector<128x8xf32>
    %9 = vector.extract_strided_slice %3 {offsets = [1, 1, 0], sizes = [8, 16, 4], strides = [1, 1, 1]} : vector<12x20x128xf32> to vector<8x16x4xf32>
    %10 = vector.shape_cast %9 : vector<8x16x4xf32> to vector<128x4xf32>
    %c0_10 = arith.constant 0 : index
    %c0_11 = arith.constant 0 : index
    %c0_12 = arith.constant 0 : index
    %11 = vector.load %arg4[%c0_10, %c0_11, %c0_12] : memref<9x4x8xf32, #tpu.memory_space<vmem>>, vector<1x4x8xf32>
    %12 = vector.shape_cast %11 : vector<1x4x8xf32> to vector<4x8xf32>
    %cst_13 = arith.constant dense<0.000000e+00> : vector<128x8xf32>
    %13 = tpu.matmul %10, %12, %cst_13 {dimension_numbers = #tpu.dot_dimension_numbers<[1], [0], [0], [1], [0, 0, 1, 1], [], []>} : vector<128x4xf32>, vector<4x8xf32>, vector<128x8xf32> -> vector<128x8xf32>
    %14 = arith.addf %8, %13 : vector<128x8xf32>
    %15 = vector.extract_strided_slice %3 {offsets = [1, 2, 0], sizes = [8, 16, 4], strides = [1, 1, 1]} : vector<12x20x128xf32> to vector<8x16x4xf32>
    %16 = vector.shape_cast %15 : vector<8x16x4xf32> to vector<128x4xf32>
    %c1 = arith.constant 1 : index
    %c0_14 = arith.constant 0 : index
    %c0_15 = arith.constant 0 : index
    %17 = vector.load %arg4[%c1, %c0_14, %c0_15] : memref<9x4x8xf32, #tpu.memory_space<vmem>>, vector<1x4x8xf32>
    %18 = vector.shape_cast %17 : vector<1x4x8xf32> to vector<4x8xf32>
    %cst_16 = arith.constant dense<0.000000e+00> : vector<128x8xf32>
    %19 = tpu.matmul %16, %18, %cst_16 {dimension_numbers = #tpu.dot_dimension_numbers<[1], [0], [0], [1], [0, 0, 1, 1], [], []>} : vector<128x4xf32>, vector<4x8xf32>, vector<128x8xf32> -> vector<128x8xf32>
    %20 = arith.addf %14, %19 : vector<128x8xf32>
    %21 = vector.extract_strided_slice %3 {offsets = [1, 3, 0], sizes = [8, 16, 4], strides = [1, 1, 1]} : vector<12x20x128xf32> to vector<8x16x4xf32>
    %22 = vector.shape_cast %21 : vector<8x16x4xf32> to vector<128x4xf32>
    %c2 = arith.constant 2 : index
    %c0_17 = arith.constant 0 : index
    %c0_18 = arith.constant 0 : index
    %23 = vector.load %arg4[%c2, %c0_17, %c0_18] : memref<9x4x8xf32, #tpu.memory_space<vmem>>, vector<1x4x8xf32>
    %24 = vector.shape_cast %23 : vector<1x4x8xf32> to vector<4x8xf32>
    %cst_19 = arith.constant dense<0.000000e+00> : vector<128x8xf32>
    %25 = tpu.matmul %22, %24, %cst_19 {dimension_numbers = #tpu.dot_dimension_numbers<[1], [0], [0], [1], [0, 0, 1, 1], [], []>} : vector<128x4xf32>, vector<4x8xf32>, vector<128x8xf32> -> vector<128x8xf32>
    %26 = arith.addf %20, %25 : vector<128x8xf32>
    %27 = vector.extract_strided_slice %3 {offsets = [2, 1, 0], sizes = [8, 16, 4], strides = [1, 1, 1]} : vector<12x20x128xf32> to vector<8x16x4xf32>
    %28 = vector.shape_cast %27 : vector<8x16x4xf32> to vector<128x4xf32>
    %c3 = arith.constant 3 : index
    %c0_20 = arith.constant 0 : index
    %c0_21 = arith.constant 0 : index
    %29 = vector.load %arg4[%c3, %c0_20, %c0_21] : memref<9x4x8xf32, #tpu.memory_space<vmem>>, vector<1x4x8xf32>
    %30 = vector.shape_cast %29 : vector<1x4x8xf32> to vector<4x8xf32>
    %cst_22 = arith.constant dense<0.000000e+00> : vector<128x8xf32>
    %31 = tpu.matmul %28, %30, %cst_22 {dimension_numbers = #tpu.dot_dimension_numbers<[1], [0], [0], [1], [0, 0, 1, 1], [], []>} : vector<128x4xf32>, vector<4x8xf32>, vector<128x8xf32> -> vector<128x8xf32>
    %32 = arith.addf %26, %31 : vector<128x8xf32>
    %33 = vector.extract_strided_slice %3 {offsets = [2, 2, 0], sizes = [8, 16, 4], strides = [1, 1, 1]} : vector<12x20x128xf32> to vector<8x16x4xf32>
    %34 = vector.shape_cast %33 : vector<8x16x4xf32> to vector<128x4xf32>
    %c4 = arith.constant 4 : index
    %c0_23 = arith.constant 0 : index
    %c0_24 = arith.constant 0 : index
    %35 = vector.load %arg4[%c4, %c0_23, %c0_24] : memref<9x4x8xf32, #tpu.memory_space<vmem>>, vector<1x4x8xf32>
    %36 = vector.shape_cast %35 : vector<1x4x8xf32> to vector<4x8xf32>
    %cst_25 = arith.constant dense<0.000000e+00> : vector<128x8xf32>
    %37 = tpu.matmul %34, %36, %cst_25 {dimension_numbers = #tpu.dot_dimension_numbers<[1], [0], [0], [1], [0, 0, 1, 1], [], []>} : vector<128x4xf32>, vector<4x8xf32>, vector<128x8xf32> -> vector<128x8xf32>
    %38 = arith.addf %32, %37 : vector<128x8xf32>
    %39 = vector.extract_strided_slice %3 {offsets = [2, 3, 0], sizes = [8, 16, 4], strides = [1, 1, 1]} : vector<12x20x128xf32> to vector<8x16x4xf32>
    %40 = vector.shape_cast %39 : vector<8x16x4xf32> to vector<128x4xf32>
    %c5 = arith.constant 5 : index
    %c0_26 = arith.constant 0 : index
    %c0_27 = arith.constant 0 : index
    %41 = vector.load %arg4[%c5, %c0_26, %c0_27] : memref<9x4x8xf32, #tpu.memory_space<vmem>>, vector<1x4x8xf32>
    %42 = vector.shape_cast %41 : vector<1x4x8xf32> to vector<4x8xf32>
    %cst_28 = arith.constant dense<0.000000e+00> : vector<128x8xf32>
    %43 = tpu.matmul %40, %42, %cst_28 {dimension_numbers = #tpu.dot_dimension_numbers<[1], [0], [0], [1], [0, 0, 1, 1], [], []>} : vector<128x4xf32>, vector<4x8xf32>, vector<128x8xf32> -> vector<128x8xf32>
    %44 = arith.addf %38, %43 : vector<128x8xf32>
    %45 = vector.extract_strided_slice %3 {offsets = [3, 1, 0], sizes = [8, 16, 4], strides = [1, 1, 1]} : vector<12x20x128xf32> to vector<8x16x4xf32>
    %46 = vector.shape_cast %45 : vector<8x16x4xf32> to vector<128x4xf32>
    %c6 = arith.constant 6 : index
    %c0_29 = arith.constant 0 : index
    %c0_30 = arith.constant 0 : index
    %47 = vector.load %arg4[%c6, %c0_29, %c0_30] : memref<9x4x8xf32, #tpu.memory_space<vmem>>, vector<1x4x8xf32>
    %48 = vector.shape_cast %47 : vector<1x4x8xf32> to vector<4x8xf32>
    %cst_31 = arith.constant dense<0.000000e+00> : vector<128x8xf32>
    %49 = tpu.matmul %46, %48, %cst_31 {dimension_numbers = #tpu.dot_dimension_numbers<[1], [0], [0], [1], [0, 0, 1, 1], [], []>} : vector<128x4xf32>, vector<4x8xf32>, vector<128x8xf32> -> vector<128x8xf32>
    %50 = arith.addf %44, %49 : vector<128x8xf32>
    %51 = vector.extract_strided_slice %3 {offsets = [3, 2, 0], sizes = [8, 16, 4], strides = [1, 1, 1]} : vector<12x20x128xf32> to vector<8x16x4xf32>
    %52 = vector.shape_cast %51 : vector<8x16x4xf32> to vector<128x4xf32>
    %c7 = arith.constant 7 : index
    %c0_32 = arith.constant 0 : index
    %c0_33 = arith.constant 0 : index
    %53 = vector.load %arg4[%c7, %c0_32, %c0_33] : memref<9x4x8xf32, #tpu.memory_space<vmem>>, vector<1x4x8xf32>
    %54 = vector.shape_cast %53 : vector<1x4x8xf32> to vector<4x8xf32>
    %cst_34 = arith.constant dense<0.000000e+00> : vector<128x8xf32>
    %55 = tpu.matmul %52, %54, %cst_34 {dimension_numbers = #tpu.dot_dimension_numbers<[1], [0], [0], [1], [0, 0, 1, 1], [], []>} : vector<128x4xf32>, vector<4x8xf32>, vector<128x8xf32> -> vector<128x8xf32>
    %56 = arith.addf %50, %55 : vector<128x8xf32>
    %57 = vector.extract_strided_slice %3 {offsets = [3, 3, 0], sizes = [8, 16, 4], strides = [1, 1, 1]} : vector<12x20x128xf32> to vector<8x16x4xf32>
    %58 = vector.shape_cast %57 : vector<8x16x4xf32> to vector<128x4xf32>
    %c8 = arith.constant 8 : index
    %c0_35 = arith.constant 0 : index
    %c0_36 = arith.constant 0 : index
    %59 = vector.load %arg4[%c8, %c0_35, %c0_36] : memref<9x4x8xf32, #tpu.memory_space<vmem>>, vector<1x4x8xf32>
    %60 = vector.shape_cast %59 : vector<1x4x8xf32> to vector<4x8xf32>
    %cst_37 = arith.constant dense<0.000000e+00> : vector<128x8xf32>
    %61 = tpu.matmul %58, %60, %cst_37 {dimension_numbers = #tpu.dot_dimension_numbers<[1], [0], [0], [1], [0, 0, 1, 1], [], []>} : vector<128x4xf32>, vector<4x8xf32>, vector<128x8xf32> -> vector<128x8xf32>
    %62 = arith.addf %56, %61 : vector<128x8xf32>
    %cst_38 = arith.constant 0.000000e+00 : f32
    %63 = vector.broadcast %cst_38 : f32 to vector<128x4xf32>
    %64 = vector.extract_strided_slice %3 {offsets = [0, 0, 4], sizes = [8, 16, 2], strides = [1, 1, 1]} : vector<12x20x128xf32> to vector<8x16x2xf32>
    %65 = vector.shape_cast %64 : vector<8x16x2xf32> to vector<128x2xf32>
    %c0_39 = arith.constant 0 : index
    %c0_40 = arith.constant 0 : index
    %c0_41 = arith.constant 0 : index
    %66 = vector.load %arg5[%c0_39, %c0_40, %c0_41] : memref<25x2x4xf32, #tpu.memory_space<vmem>>, vector<1x2x4xf32>
    %67 = vector.shape_cast %66 : vector<1x2x4xf32> to vector<2x4xf32>
    %cst_42 = arith.constant dense<0.000000e+00> : vector<128x4xf32>
    %68 = tpu.matmul %65, %67, %cst_42 {dimension_numbers = #tpu.dot_dimension_numbers<[1], [0], [0], [1], [0, 0, 1, 1], [], []>} : vector<128x2xf32>, vector<2x4xf32>, vector<128x4xf32> -> vector<128x4xf32>
    %69 = arith.addf %63, %68 : vector<128x4xf32>
    %70 = vector.extract_strided_slice %3 {offsets = [0, 1, 4], sizes = [8, 16, 2], strides = [1, 1, 1]} : vector<12x20x128xf32> to vector<8x16x2xf32>
    %71 = vector.shape_cast %70 : vector<8x16x2xf32> to vector<128x2xf32>
    %c1_43 = arith.constant 1 : index
    %c0_44 = arith.constant 0 : index
    %c0_45 = arith.constant 0 : index
    %72 = vector.load %arg5[%c1_43, %c0_44, %c0_45] : memref<25x2x4xf32, #tpu.memory_space<vmem>>, vector<1x2x4xf32>
    %73 = vector.shape_cast %72 : vector<1x2x4xf32> to vector<2x4xf32>
    %cst_46 = arith.constant dense<0.000000e+00> : vector<128x4xf32>
    %74 = tpu.matmul %71, %73, %cst_46 {dimension_numbers = #tpu.dot_dimension_numbers<[1], [0], [0], [1], [0, 0, 1, 1], [], []>} : vector<128x2xf32>, vector<2x4xf32>, vector<128x4xf32> -> vector<128x4xf32>
    %75 = arith.addf %69, %74 : vector<128x4xf32>
    %76 = vector.extract_strided_slice %3 {offsets = [0, 2, 4], sizes = [8, 16, 2], strides = [1, 1, 1]} : vector<12x20x128xf32> to vector<8x16x2xf32>
    %77 = vector.shape_cast %76 : vector<8x16x2xf32> to vector<128x2xf32>
    %c2_47 = arith.constant 2 : index
    %c0_48 = arith.constant 0 : index
    %c0_49 = arith.constant 0 : index
    %78 = vector.load %arg5[%c2_47, %c0_48, %c0_49] : memref<25x2x4xf32, #tpu.memory_space<vmem>>, vector<1x2x4xf32>
    %79 = vector.shape_cast %78 : vector<1x2x4xf32> to vector<2x4xf32>
    %cst_50 = arith.constant dense<0.000000e+00> : vector<128x4xf32>
    %80 = tpu.matmul %77, %79, %cst_50 {dimension_numbers = #tpu.dot_dimension_numbers<[1], [0], [0], [1], [0, 0, 1, 1], [], []>} : vector<128x2xf32>, vector<2x4xf32>, vector<128x4xf32> -> vector<128x4xf32>
    %81 = arith.addf %75, %80 : vector<128x4xf32>
    %82 = vector.extract_strided_slice %3 {offsets = [0, 3, 4], sizes = [8, 16, 2], strides = [1, 1, 1]} : vector<12x20x128xf32> to vector<8x16x2xf32>
    %83 = vector.shape_cast %82 : vector<8x16x2xf32> to vector<128x2xf32>
    %c3_51 = arith.constant 3 : index
    %c0_52 = arith.constant 0 : index
    %c0_53 = arith.constant 0 : index
    %84 = vector.load %arg5[%c3_51, %c0_52, %c0_53] : memref<25x2x4xf32, #tpu.memory_space<vmem>>, vector<1x2x4xf32>
    %85 = vector.shape_cast %84 : vector<1x2x4xf32> to vector<2x4xf32>
    %cst_54 = arith.constant dense<0.000000e+00> : vector<128x4xf32>
    %86 = tpu.matmul %83, %85, %cst_54 {dimension_numbers = #tpu.dot_dimension_numbers<[1], [0], [0], [1], [0, 0, 1, 1], [], []>} : vector<128x2xf32>, vector<2x4xf32>, vector<128x4xf32> -> vector<128x4xf32>
    %87 = arith.addf %81, %86 : vector<128x4xf32>
    %88 = vector.extract_strided_slice %3 {offsets = [0, 4, 4], sizes = [8, 16, 2], strides = [1, 1, 1]} : vector<12x20x128xf32> to vector<8x16x2xf32>
    %89 = vector.shape_cast %88 : vector<8x16x2xf32> to vector<128x2xf32>
    %c4_55 = arith.constant 4 : index
    %c0_56 = arith.constant 0 : index
    %c0_57 = arith.constant 0 : index
    %90 = vector.load %arg5[%c4_55, %c0_56, %c0_57] : memref<25x2x4xf32, #tpu.memory_space<vmem>>, vector<1x2x4xf32>
    %91 = vector.shape_cast %90 : vector<1x2x4xf32> to vector<2x4xf32>
    %cst_58 = arith.constant dense<0.000000e+00> : vector<128x4xf32>
    %92 = tpu.matmul %89, %91, %cst_58 {dimension_numbers = #tpu.dot_dimension_numbers<[1], [0], [0], [1], [0, 0, 1, 1], [], []>} : vector<128x2xf32>, vector<2x4xf32>, vector<128x4xf32> -> vector<128x4xf32>
    %93 = arith.addf %87, %92 : vector<128x4xf32>
    %94 = vector.extract_strided_slice %3 {offsets = [1, 0, 4], sizes = [8, 16, 2], strides = [1, 1, 1]} : vector<12x20x128xf32> to vector<8x16x2xf32>
    %95 = vector.shape_cast %94 : vector<8x16x2xf32> to vector<128x2xf32>
    %c5_59 = arith.constant 5 : index
    %c0_60 = arith.constant 0 : index
    %c0_61 = arith.constant 0 : index
    %96 = vector.load %arg5[%c5_59, %c0_60, %c0_61] : memref<25x2x4xf32, #tpu.memory_space<vmem>>, vector<1x2x4xf32>
    %97 = vector.shape_cast %96 : vector<1x2x4xf32> to vector<2x4xf32>
    %cst_62 = arith.constant dense<0.000000e+00> : vector<128x4xf32>
    %98 = tpu.matmul %95, %97, %cst_62 {dimension_numbers = #tpu.dot_dimension_numbers<[1], [0], [0], [1], [0, 0, 1, 1], [], []>} : vector<128x2xf32>, vector<2x4xf32>, vector<128x4xf32> -> vector<128x4xf32>
    %99 = arith.addf %93, %98 : vector<128x4xf32>
    %100 = vector.extract_strided_slice %3 {offsets = [1, 1, 4], sizes = [8, 16, 2], strides = [1, 1, 1]} : vector<12x20x128xf32> to vector<8x16x2xf32>
    %101 = vector.shape_cast %100 : vector<8x16x2xf32> to vector<128x2xf32>
    %c6_63 = arith.constant 6 : index
    %c0_64 = arith.constant 0 : index
    %c0_65 = arith.constant 0 : index
    %102 = vector.load %arg5[%c6_63, %c0_64, %c0_65] : memref<25x2x4xf32, #tpu.memory_space<vmem>>, vector<1x2x4xf32>
    %103 = vector.shape_cast %102 : vector<1x2x4xf32> to vector<2x4xf32>
    %cst_66 = arith.constant dense<0.000000e+00> : vector<128x4xf32>
    %104 = tpu.matmul %101, %103, %cst_66 {dimension_numbers = #tpu.dot_dimension_numbers<[1], [0], [0], [1], [0, 0, 1, 1], [], []>} : vector<128x2xf32>, vector<2x4xf32>, vector<128x4xf32> -> vector<128x4xf32>
    %105 = arith.addf %99, %104 : vector<128x4xf32>
    %106 = vector.extract_strided_slice %3 {offsets = [1, 2, 4], sizes = [8, 16, 2], strides = [1, 1, 1]} : vector<12x20x128xf32> to vector<8x16x2xf32>
    %107 = vector.shape_cast %106 : vector<8x16x2xf32> to vector<128x2xf32>
    %c7_67 = arith.constant 7 : index
    %c0_68 = arith.constant 0 : index
    %c0_69 = arith.constant 0 : index
    %108 = vector.load %arg5[%c7_67, %c0_68, %c0_69] : memref<25x2x4xf32, #tpu.memory_space<vmem>>, vector<1x2x4xf32>
    %109 = vector.shape_cast %108 : vector<1x2x4xf32> to vector<2x4xf32>
    %cst_70 = arith.constant dense<0.000000e+00> : vector<128x4xf32>
    %110 = tpu.matmul %107, %109, %cst_70 {dimension_numbers = #tpu.dot_dimension_numbers<[1], [0], [0], [1], [0, 0, 1, 1], [], []>} : vector<128x2xf32>, vector<2x4xf32>, vector<128x4xf32> -> vector<128x4xf32>
    %111 = arith.addf %105, %110 : vector<128x4xf32>
    %112 = vector.extract_strided_slice %3 {offsets = [1, 3, 4], sizes = [8, 16, 2], strides = [1, 1, 1]} : vector<12x20x128xf32> to vector<8x16x2xf32>
    %113 = vector.shape_cast %112 : vector<8x16x2xf32> to vector<128x2xf32>
    %c8_71 = arith.constant 8 : index
    %c0_72 = arith.constant 0 : index
    %c0_73 = arith.constant 0 : index
    %114 = vector.load %arg5[%c8_71, %c0_72, %c0_73] : memref<25x2x4xf32, #tpu.memory_space<vmem>>, vector<1x2x4xf32>
    %115 = vector.shape_cast %114 : vector<1x2x4xf32> to vector<2x4xf32>
    %cst_74 = arith.constant dense<0.000000e+00> : vector<128x4xf32>
    %116 = tpu.matmul %113, %115, %cst_74 {dimension_numbers = #tpu.dot_dimension_numbers<[1], [0], [0], [1], [0, 0, 1, 1], [], []>} : vector<128x2xf32>, vector<2x4xf32>, vector<128x4xf32> -> vector<128x4xf32>
    %117 = arith.addf %111, %116 : vector<128x4xf32>
    %118 = vector.extract_strided_slice %3 {offsets = [1, 4, 4], sizes = [8, 16, 2], strides = [1, 1, 1]} : vector<12x20x128xf32> to vector<8x16x2xf32>
    %119 = vector.shape_cast %118 : vector<8x16x2xf32> to vector<128x2xf32>
    %c9 = arith.constant 9 : index
    %c0_75 = arith.constant 0 : index
    %c0_76 = arith.constant 0 : index
    %120 = vector.load %arg5[%c9, %c0_75, %c0_76] : memref<25x2x4xf32, #tpu.memory_space<vmem>>, vector<1x2x4xf32>
    %121 = vector.shape_cast %120 : vector<1x2x4xf32> to vector<2x4xf32>
    %cst_77 = arith.constant dense<0.000000e+00> : vector<128x4xf32>
    %122 = tpu.matmul %119, %121, %cst_77 {dimension_numbers = #tpu.dot_dimension_numbers<[1], [0], [0], [1], [0, 0, 1, 1], [], []>} : vector<128x2xf32>, vector<2x4xf32>, vector<128x4xf32> -> vector<128x4xf32>
    %123 = arith.addf %117, %122 : vector<128x4xf32>
    %124 = vector.extract_strided_slice %3 {offsets = [2, 0, 4], sizes = [8, 16, 2], strides = [1, 1, 1]} : vector<12x20x128xf32> to vector<8x16x2xf32>
    %125 = vector.shape_cast %124 : vector<8x16x2xf32> to vector<128x2xf32>
    %c10 = arith.constant 10 : index
    %c0_78 = arith.constant 0 : index
    %c0_79 = arith.constant 0 : index
    %126 = vector.load %arg5[%c10, %c0_78, %c0_79] : memref<25x2x4xf32, #tpu.memory_space<vmem>>, vector<1x2x4xf32>
    %127 = vector.shape_cast %126 : vector<1x2x4xf32> to vector<2x4xf32>
    %cst_80 = arith.constant dense<0.000000e+00> : vector<128x4xf32>
    %128 = tpu.matmul %125, %127, %cst_80 {dimension_numbers = #tpu.dot_dimension_numbers<[1], [0], [0], [1], [0, 0, 1, 1], [], []>} : vector<128x2xf32>, vector<2x4xf32>, vector<128x4xf32> -> vector<128x4xf32>
    %129 = arith.addf %123, %128 : vector<128x4xf32>
    %130 = vector.extract_strided_slice %3 {offsets = [2, 1, 4], sizes = [8, 16, 2], strides = [1, 1, 1]} : vector<12x20x128xf32> to vector<8x16x2xf32>
    %131 = vector.shape_cast %130 : vector<8x16x2xf32> to vector<128x2xf32>
    %c11 = arith.constant 11 : index
    %c0_81 = arith.constant 0 : index
    %c0_82 = arith.constant 0 : index
    %132 = vector.load %arg5[%c11, %c0_81, %c0_82] : memref<25x2x4xf32, #tpu.memory_space<vmem>>, vector<1x2x4xf32>
    %133 = vector.shape_cast %132 : vector<1x2x4xf32> to vector<2x4xf32>
    %cst_83 = arith.constant dense<0.000000e+00> : vector<128x4xf32>
    %134 = tpu.matmul %131, %133, %cst_83 {dimension_numbers = #tpu.dot_dimension_numbers<[1], [0], [0], [1], [0, 0, 1, 1], [], []>} : vector<128x2xf32>, vector<2x4xf32>, vector<128x4xf32> -> vector<128x4xf32>
    %135 = arith.addf %129, %134 : vector<128x4xf32>
    %136 = vector.extract_strided_slice %3 {offsets = [2, 2, 4], sizes = [8, 16, 2], strides = [1, 1, 1]} : vector<12x20x128xf32> to vector<8x16x2xf32>
    %137 = vector.shape_cast %136 : vector<8x16x2xf32> to vector<128x2xf32>
    %c12 = arith.constant 12 : index
    %c0_84 = arith.constant 0 : index
    %c0_85 = arith.constant 0 : index
    %138 = vector.load %arg5[%c12, %c0_84, %c0_85] : memref<25x2x4xf32, #tpu.memory_space<vmem>>, vector<1x2x4xf32>
    %139 = vector.shape_cast %138 : vector<1x2x4xf32> to vector<2x4xf32>
    %cst_86 = arith.constant dense<0.000000e+00> : vector<128x4xf32>
    %140 = tpu.matmul %137, %139, %cst_86 {dimension_numbers = #tpu.dot_dimension_numbers<[1], [0], [0], [1], [0, 0, 1, 1], [], []>} : vector<128x2xf32>, vector<2x4xf32>, vector<128x4xf32> -> vector<128x4xf32>
    %141 = arith.addf %135, %140 : vector<128x4xf32>
    %142 = vector.extract_strided_slice %3 {offsets = [2, 3, 4], sizes = [8, 16, 2], strides = [1, 1, 1]} : vector<12x20x128xf32> to vector<8x16x2xf32>
    %143 = vector.shape_cast %142 : vector<8x16x2xf32> to vector<128x2xf32>
    %c13 = arith.constant 13 : index
    %c0_87 = arith.constant 0 : index
    %c0_88 = arith.constant 0 : index
    %144 = vector.load %arg5[%c13, %c0_87, %c0_88] : memref<25x2x4xf32, #tpu.memory_space<vmem>>, vector<1x2x4xf32>
    %145 = vector.shape_cast %144 : vector<1x2x4xf32> to vector<2x4xf32>
    %cst_89 = arith.constant dense<0.000000e+00> : vector<128x4xf32>
    %146 = tpu.matmul %143, %145, %cst_89 {dimension_numbers = #tpu.dot_dimension_numbers<[1], [0], [0], [1], [0, 0, 1, 1], [], []>} : vector<128x2xf32>, vector<2x4xf32>, vector<128x4xf32> -> vector<128x4xf32>
    %147 = arith.addf %141, %146 : vector<128x4xf32>
    %148 = vector.extract_strided_slice %3 {offsets = [2, 4, 4], sizes = [8, 16, 2], strides = [1, 1, 1]} : vector<12x20x128xf32> to vector<8x16x2xf32>
    %149 = vector.shape_cast %148 : vector<8x16x2xf32> to vector<128x2xf32>
    %c14 = arith.constant 14 : index
    %c0_90 = arith.constant 0 : index
    %c0_91 = arith.constant 0 : index
    %150 = vector.load %arg5[%c14, %c0_90, %c0_91] : memref<25x2x4xf32, #tpu.memory_space<vmem>>, vector<1x2x4xf32>
    %151 = vector.shape_cast %150 : vector<1x2x4xf32> to vector<2x4xf32>
    %cst_92 = arith.constant dense<0.000000e+00> : vector<128x4xf32>
    %152 = tpu.matmul %149, %151, %cst_92 {dimension_numbers = #tpu.dot_dimension_numbers<[1], [0], [0], [1], [0, 0, 1, 1], [], []>} : vector<128x2xf32>, vector<2x4xf32>, vector<128x4xf32> -> vector<128x4xf32>
    %153 = arith.addf %147, %152 : vector<128x4xf32>
    %154 = vector.extract_strided_slice %3 {offsets = [3, 0, 4], sizes = [8, 16, 2], strides = [1, 1, 1]} : vector<12x20x128xf32> to vector<8x16x2xf32>
    %155 = vector.shape_cast %154 : vector<8x16x2xf32> to vector<128x2xf32>
    %c15 = arith.constant 15 : index
    %c0_93 = arith.constant 0 : index
    %c0_94 = arith.constant 0 : index
    %156 = vector.load %arg5[%c15, %c0_93, %c0_94] : memref<25x2x4xf32, #tpu.memory_space<vmem>>, vector<1x2x4xf32>
    %157 = vector.shape_cast %156 : vector<1x2x4xf32> to vector<2x4xf32>
    %cst_95 = arith.constant dense<0.000000e+00> : vector<128x4xf32>
    %158 = tpu.matmul %155, %157, %cst_95 {dimension_numbers = #tpu.dot_dimension_numbers<[1], [0], [0], [1], [0, 0, 1, 1], [], []>} : vector<128x2xf32>, vector<2x4xf32>, vector<128x4xf32> -> vector<128x4xf32>
    %159 = arith.addf %153, %158 : vector<128x4xf32>
    %160 = vector.extract_strided_slice %3 {offsets = [3, 1, 4], sizes = [8, 16, 2], strides = [1, 1, 1]} : vector<12x20x128xf32> to vector<8x16x2xf32>
    %161 = vector.shape_cast %160 : vector<8x16x2xf32> to vector<128x2xf32>
    %c16 = arith.constant 16 : index
    %c0_96 = arith.constant 0 : index
    %c0_97 = arith.constant 0 : index
    %162 = vector.load %arg5[%c16, %c0_96, %c0_97] : memref<25x2x4xf32, #tpu.memory_space<vmem>>, vector<1x2x4xf32>
    %163 = vector.shape_cast %162 : vector<1x2x4xf32> to vector<2x4xf32>
    %cst_98 = arith.constant dense<0.000000e+00> : vector<128x4xf32>
    %164 = tpu.matmul %161, %163, %cst_98 {dimension_numbers = #tpu.dot_dimension_numbers<[1], [0], [0], [1], [0, 0, 1, 1], [], []>} : vector<128x2xf32>, vector<2x4xf32>, vector<128x4xf32> -> vector<128x4xf32>
    %165 = arith.addf %159, %164 : vector<128x4xf32>
    %166 = vector.extract_strided_slice %3 {offsets = [3, 2, 4], sizes = [8, 16, 2], strides = [1, 1, 1]} : vector<12x20x128xf32> to vector<8x16x2xf32>
    %167 = vector.shape_cast %166 : vector<8x16x2xf32> to vector<128x2xf32>
    %c17 = arith.constant 17 : index
    %c0_99 = arith.constant 0 : index
    %c0_100 = arith.constant 0 : index
    %168 = vector.load %arg5[%c17, %c0_99, %c0_100] : memref<25x2x4xf32, #tpu.memory_space<vmem>>, vector<1x2x4xf32>
    %169 = vector.shape_cast %168 : vector<1x2x4xf32> to vector<2x4xf32>
    %cst_101 = arith.constant dense<0.000000e+00> : vector<128x4xf32>
    %170 = tpu.matmul %167, %169, %cst_101 {dimension_numbers = #tpu.dot_dimension_numbers<[1], [0], [0], [1], [0, 0, 1, 1], [], []>} : vector<128x2xf32>, vector<2x4xf32>, vector<128x4xf32> -> vector<128x4xf32>
    %171 = arith.addf %165, %170 : vector<128x4xf32>
    %172 = vector.extract_strided_slice %3 {offsets = [3, 3, 4], sizes = [8, 16, 2], strides = [1, 1, 1]} : vector<12x20x128xf32> to vector<8x16x2xf32>
    %173 = vector.shape_cast %172 : vector<8x16x2xf32> to vector<128x2xf32>
    %c18 = arith.constant 18 : index
    %c0_102 = arith.constant 0 : index
    %c0_103 = arith.constant 0 : index
    %174 = vector.load %arg5[%c18, %c0_102, %c0_103] : memref<25x2x4xf32, #tpu.memory_space<vmem>>, vector<1x2x4xf32>
    %175 = vector.shape_cast %174 : vector<1x2x4xf32> to vector<2x4xf32>
    %cst_104 = arith.constant dense<0.000000e+00> : vector<128x4xf32>
    %176 = tpu.matmul %173, %175, %cst_104 {dimension_numbers = #tpu.dot_dimension_numbers<[1], [0], [0], [1], [0, 0, 1, 1], [], []>} : vector<128x2xf32>, vector<2x4xf32>, vector<128x4xf32> -> vector<128x4xf32>
    %177 = arith.addf %171, %176 : vector<128x4xf32>
    %178 = vector.extract_strided_slice %3 {offsets = [3, 4, 4], sizes = [8, 16, 2], strides = [1, 1, 1]} : vector<12x20x128xf32> to vector<8x16x2xf32>
    %179 = vector.shape_cast %178 : vector<8x16x2xf32> to vector<128x2xf32>
    %c19 = arith.constant 19 : index
    %c0_105 = arith.constant 0 : index
    %c0_106 = arith.constant 0 : index
    %180 = vector.load %arg5[%c19, %c0_105, %c0_106] : memref<25x2x4xf32, #tpu.memory_space<vmem>>, vector<1x2x4xf32>
    %181 = vector.shape_cast %180 : vector<1x2x4xf32> to vector<2x4xf32>
    %cst_107 = arith.constant dense<0.000000e+00> : vector<128x4xf32>
    %182 = tpu.matmul %179, %181, %cst_107 {dimension_numbers = #tpu.dot_dimension_numbers<[1], [0], [0], [1], [0, 0, 1, 1], [], []>} : vector<128x2xf32>, vector<2x4xf32>, vector<128x4xf32> -> vector<128x4xf32>
    %183 = arith.addf %177, %182 : vector<128x4xf32>
    %184 = vector.extract_strided_slice %3 {offsets = [4, 0, 4], sizes = [8, 16, 2], strides = [1, 1, 1]} : vector<12x20x128xf32> to vector<8x16x2xf32>
    %185 = vector.shape_cast %184 : vector<8x16x2xf32> to vector<128x2xf32>
    %c20 = arith.constant 20 : index
    %c0_108 = arith.constant 0 : index
    %c0_109 = arith.constant 0 : index
    %186 = vector.load %arg5[%c20, %c0_108, %c0_109] : memref<25x2x4xf32, #tpu.memory_space<vmem>>, vector<1x2x4xf32>
    %187 = vector.shape_cast %186 : vector<1x2x4xf32> to vector<2x4xf32>
    %cst_110 = arith.constant dense<0.000000e+00> : vector<128x4xf32>
    %188 = tpu.matmul %185, %187, %cst_110 {dimension_numbers = #tpu.dot_dimension_numbers<[1], [0], [0], [1], [0, 0, 1, 1], [], []>} : vector<128x2xf32>, vector<2x4xf32>, vector<128x4xf32> -> vector<128x4xf32>
    %189 = arith.addf %183, %188 : vector<128x4xf32>
    %190 = vector.extract_strided_slice %3 {offsets = [4, 1, 4], sizes = [8, 16, 2], strides = [1, 1, 1]} : vector<12x20x128xf32> to vector<8x16x2xf32>
    %191 = vector.shape_cast %190 : vector<8x16x2xf32> to vector<128x2xf32>
    %c21 = arith.constant 21 : index
    %c0_111 = arith.constant 0 : index
    %c0_112 = arith.constant 0 : index
    %192 = vector.load %arg5[%c21, %c0_111, %c0_112] : memref<25x2x4xf32, #tpu.memory_space<vmem>>, vector<1x2x4xf32>
    %193 = vector.shape_cast %192 : vector<1x2x4xf32> to vector<2x4xf32>
    %cst_113 = arith.constant dense<0.000000e+00> : vector<128x4xf32>
    %194 = tpu.matmul %191, %193, %cst_113 {dimension_numbers = #tpu.dot_dimension_numbers<[1], [0], [0], [1], [0, 0, 1, 1], [], []>} : vector<128x2xf32>, vector<2x4xf32>, vector<128x4xf32> -> vector<128x4xf32>
    %195 = arith.addf %189, %194 : vector<128x4xf32>
    %196 = vector.extract_strided_slice %3 {offsets = [4, 2, 4], sizes = [8, 16, 2], strides = [1, 1, 1]} : vector<12x20x128xf32> to vector<8x16x2xf32>
    %197 = vector.shape_cast %196 : vector<8x16x2xf32> to vector<128x2xf32>
    %c22 = arith.constant 22 : index
    %c0_114 = arith.constant 0 : index
    %c0_115 = arith.constant 0 : index
    %198 = vector.load %arg5[%c22, %c0_114, %c0_115] : memref<25x2x4xf32, #tpu.memory_space<vmem>>, vector<1x2x4xf32>
    %199 = vector.shape_cast %198 : vector<1x2x4xf32> to vector<2x4xf32>
    %cst_116 = arith.constant dense<0.000000e+00> : vector<128x4xf32>
    %200 = tpu.matmul %197, %199, %cst_116 {dimension_numbers = #tpu.dot_dimension_numbers<[1], [0], [0], [1], [0, 0, 1, 1], [], []>} : vector<128x2xf32>, vector<2x4xf32>, vector<128x4xf32> -> vector<128x4xf32>
    %201 = arith.addf %195, %200 : vector<128x4xf32>
    %202 = vector.extract_strided_slice %3 {offsets = [4, 3, 4], sizes = [8, 16, 2], strides = [1, 1, 1]} : vector<12x20x128xf32> to vector<8x16x2xf32>
    %203 = vector.shape_cast %202 : vector<8x16x2xf32> to vector<128x2xf32>
    %c23 = arith.constant 23 : index
    %c0_117 = arith.constant 0 : index
    %c0_118 = arith.constant 0 : index
    %204 = vector.load %arg5[%c23, %c0_117, %c0_118] : memref<25x2x4xf32, #tpu.memory_space<vmem>>, vector<1x2x4xf32>
    %205 = vector.shape_cast %204 : vector<1x2x4xf32> to vector<2x4xf32>
    %cst_119 = arith.constant dense<0.000000e+00> : vector<128x4xf32>
    %206 = tpu.matmul %203, %205, %cst_119 {dimension_numbers = #tpu.dot_dimension_numbers<[1], [0], [0], [1], [0, 0, 1, 1], [], []>} : vector<128x2xf32>, vector<2x4xf32>, vector<128x4xf32> -> vector<128x4xf32>
    %207 = arith.addf %201, %206 : vector<128x4xf32>
    %208 = vector.extract_strided_slice %3 {offsets = [4, 4, 4], sizes = [8, 16, 2], strides = [1, 1, 1]} : vector<12x20x128xf32> to vector<8x16x2xf32>
    %209 = vector.shape_cast %208 : vector<8x16x2xf32> to vector<128x2xf32>
    %c24 = arith.constant 24 : index
    %c0_120 = arith.constant 0 : index
    %c0_121 = arith.constant 0 : index
    %210 = vector.load %arg5[%c24, %c0_120, %c0_121] : memref<25x2x4xf32, #tpu.memory_space<vmem>>, vector<1x2x4xf32>
    %211 = vector.shape_cast %210 : vector<1x2x4xf32> to vector<2x4xf32>
    %cst_122 = arith.constant dense<0.000000e+00> : vector<128x4xf32>
    %212 = tpu.matmul %209, %211, %cst_122 {dimension_numbers = #tpu.dot_dimension_numbers<[1], [0], [0], [1], [0, 0, 1, 1], [], []>} : vector<128x2xf32>, vector<2x4xf32>, vector<128x4xf32> -> vector<128x4xf32>
    %213 = arith.addf %207, %212 : vector<128x4xf32>
    %214 = vector.extract_strided_slice %1 {offsets = [0, 0, 0], sizes = [8, 16, 4], strides = [1, 1, 1]} : vector<10x18x4xf32> to vector<8x16x4xf32>
    %215 = vector.extract_strided_slice %1 {offsets = [0, 1, 0], sizes = [8, 16, 4], strides = [1, 1, 1]} : vector<10x18x4xf32> to vector<8x16x4xf32>
    %216 = arith.maximumf %214, %215 : vector<8x16x4xf32>
    %217 = vector.extract_strided_slice %1 {offsets = [0, 2, 0], sizes = [8, 16, 4], strides = [1, 1, 1]} : vector<10x18x4xf32> to vector<8x16x4xf32>
    %218 = arith.maximumf %216, %217 : vector<8x16x4xf32>
    %219 = vector.extract_strided_slice %1 {offsets = [1, 0, 0], sizes = [8, 16, 4], strides = [1, 1, 1]} : vector<10x18x4xf32> to vector<8x16x4xf32>
    %220 = arith.maximumf %218, %219 : vector<8x16x4xf32>
    %221 = vector.extract_strided_slice %1 {offsets = [1, 1, 0], sizes = [8, 16, 4], strides = [1, 1, 1]} : vector<10x18x4xf32> to vector<8x16x4xf32>
    %222 = arith.maximumf %220, %221 : vector<8x16x4xf32>
    %223 = vector.extract_strided_slice %1 {offsets = [1, 2, 0], sizes = [8, 16, 4], strides = [1, 1, 1]} : vector<10x18x4xf32> to vector<8x16x4xf32>
    %224 = arith.maximumf %222, %223 : vector<8x16x4xf32>
    %225 = vector.extract_strided_slice %1 {offsets = [2, 0, 0], sizes = [8, 16, 4], strides = [1, 1, 1]} : vector<10x18x4xf32> to vector<8x16x4xf32>
    %226 = arith.maximumf %224, %225 : vector<8x16x4xf32>
    %227 = vector.extract_strided_slice %1 {offsets = [2, 1, 0], sizes = [8, 16, 4], strides = [1, 1, 1]} : vector<10x18x4xf32> to vector<8x16x4xf32>
    %228 = arith.maximumf %226, %227 : vector<8x16x4xf32>
    %229 = vector.extract_strided_slice %1 {offsets = [2, 2, 0], sizes = [8, 16, 4], strides = [1, 1, 1]} : vector<10x18x4xf32> to vector<8x16x4xf32>
    %230 = arith.maximumf %228, %229 : vector<8x16x4xf32>
    %231 = vector.shape_cast %230 : vector<8x16x4xf32> to vector<128x4xf32>
    %c0_123 = arith.constant 0 : index
    %c0_124 = arith.constant 0 : index
    %232 = vector.load %arg6[%c0_123, %c0_124] : memref<4x4xf32, #tpu.memory_space<vmem>>, vector<4x4xf32>
    %cst_125 = arith.constant dense<0.000000e+00> : vector<128x4xf32>
    %233 = tpu.matmul %231, %232, %cst_125 {dimension_numbers = #tpu.dot_dimension_numbers<[1], [0], [0], [1], [0, 0, 1, 1], [], []>} : vector<128x4xf32>, vector<4x4xf32>, vector<128x4xf32> -> vector<128x4xf32>
    %234 = tpu.concatenate %7, %62, %213, %233 in 1 : vector<128x4xf32>, vector<128x8xf32>, vector<128x4xf32>, vector<128x4xf32> -> vector<128x20xf32>
    %cst_126 = arith.constant 0.000000e+00 : f32
    %235 = vector.broadcast %cst_126 : f32 to vector<128x108xf32>
    %236 = tpu.concatenate %234, %235 in 1 : vector<128x20xf32>, vector<128x108xf32> -> vector<128x128xf32>
    %c0_127 = arith.constant 0 : index
    %c0_128 = arith.constant 0 : index
    %237 = vector.load %arg7[%c0_127, %c0_128] : memref<1x128xf32, #tpu.memory_space<vmem>>, vector<1x128xf32>
    %238 = vector.broadcast %237 : vector<1x128xf32> to vector<128x128xf32>
    %239 = arith.addf %236, %238 : vector<128x128xf32>
    %240 = vector.shape_cast %239 : vector<128x128xf32> to vector<1x8x16x128xf32>
    %c0_129 = arith.constant 0 : index
    %c0_130 = arith.constant 0 : index
    %c0_131 = arith.constant 0 : index
    %c0_132 = arith.constant 0 : index
    %241 = vector.load %arg8[%c0_129, %c0_130, %c0_131, %c0_132] : memref<1x8x16x128xf32, #tpu.memory_space<vmem>>, vector<1x8x16x128xf32>
    tpu.vector_store %arg8[%c0_129, %c0_130, %c0_131, %c0_132], %240 {strides = array<i32>} : memref<1x8x16x128xf32, #tpu.memory_space<vmem>>, vector<1x8x16x128xf32>,
    return
  }
  func.func @transform_0(%arg0: i32) -> (i32, i32, i32, i32) {
    %c0_i32 = arith.constant 0 : i32
    %c0_i32_0 = arith.constant 0 : i32
    %c0_i32_1 = arith.constant 0 : i32
    %c0_i32_2 = arith.constant 0 : i32
    return %arg0, %c0_i32, %c0_i32_0, %c0_i32_1 : i32, i32, i32, i32
  }
  func.func @transform_1(%arg0: i32) -> (i32, i32, i32, i32) {
    %c0_i32 = arith.constant 0 : i32
    %c0_i32_0 = arith.constant 0 : i32
    %c0_i32_1 = arith.constant 0 : i32
    %c0_i32_2 = arith.constant 0 : i32
    return %arg0, %c0_i32, %c0_i32_0, %c0_i32_1 : i32, i32, i32, i32
  }
  func.func @transform_2(%arg0: i32) -> (i32, i32) {
    %c0_i32 = arith.constant 0 : i32
    %c0_i32_0 = arith.constant 0 : i32
    %c0_i32_1 = arith.constant 0 : i32
    return %c0_i32, %c0_i32_0 : i32, i32
  }
  func.func @transform_3(%arg0: i32) -> (i32, i32, i32) {
    %c0_i32 = arith.constant 0 : i32
    %c0_i32_0 = arith.constant 0 : i32
    %c0_i32_1 = arith.constant 0 : i32
    %c0_i32_2 = arith.constant 0 : i32
    return %c0_i32, %c0_i32_0, %c0_i32_1 : i32, i32, i32
  }
  func.func @transform_4(%arg0: i32) -> (i32, i32, i32) {
    %c0_i32 = arith.constant 0 : i32
    %c0_i32_0 = arith.constant 0 : i32
    %c0_i32_1 = arith.constant 0 : i32
    %c0_i32_2 = arith.constant 0 : i32
    return %c0_i32, %c0_i32_0, %c0_i32_1 : i32, i32, i32
  }
  func.func @transform_5(%arg0: i32) -> (i32, i32) {
    %c0_i32 = arith.constant 0 : i32
    %c0_i32_0 = arith.constant 0 : i32
    %c0_i32_1 = arith.constant 0 : i32
    return %c0_i32, %c0_i32_0 : i32, i32
  }
  func.func @transform_6(%arg0: i32) -> (i32, i32) {
    %c0_i32 = arith.constant 0 : i32
    %c0_i32_0 = arith.constant 0 : i32
    %c0_i32_1 = arith.constant 0 : i32
    return %c0_i32, %c0_i32_0 : i32, i32
  }
  func.func @transform_7(%arg0: i32) -> (i32, i32, i32, i32) {
    %c0_i32 = arith.constant 0 : i32
    %c0_i32_0 = arith.constant 0 : i32
    %c0_i32_1 = arith.constant 0 : i32
    %c0_i32_2 = arith.constant 0 : i32
    return %arg0, %c0_i32, %c0_i32_0, %c0_i32_1 : i32, i32, i32, i32
  }
}

</mosaic_0001>

<llo_original>
// kernel: inception_forward.2
$region0: #{inception_forward.2}
  #allocation0 [shape = 'u32[]', space=smem, size = 0x4, offset = 0x4, fixed_abs, tag = 'smem constant byte address 0x4 - core index']
  #allocation1 [shape = 'u32[144,128]{1,0:T(1,128)}', space=vmem, size = 0x12000, scoped, tag = 'internal scratch']
  %s0 = inlined_call_operand.vmem [shape: f32[512,4], index: 0, kind: input, shape index: {}]
  %s1 = inlined_call_operand.vmem [shape: f32[4,128], index: 1, kind: input, shape index: {}]
  %s2 = inlined_call_operand.vmem [shape: f32[1,128], index: 2, kind: input, shape index: {}]
  %s3 = inlined_call_operand.vmem [shape: f32[512,128], index: 3, kind: output, shape index: {}]
  %s4 = sld [smem:[#allocation0]]
  $region22: #{inception_forward.2} parent=0
    _
  %s6 = ssub.s32 1, %s4
  %s7 = scalar_select 0, %s6, %s4
  // Predicated region
  $region2: #{inception_forward.2} parent=0 // pred_check
    _
  $region3: #{inception_forward.2} parent=0 // pred_check_branch
    %9 = sbr.rel (0) target = $region5
  $region4: #{inception_forward.2} parent=0 // pred_region
    _
  $region5: #{inception_forward.2} parent=0 // pred_fallthru
    _
  // Predicated region
  $region6: #{inception_forward.2} parent=0 // pred_check
    _
  $region7: #{inception_forward.2} parent=0 // pred_check_branch
    %11 = sbr.rel (0) target = $region9
  $region8: #{inception_forward.2} parent=0 // pred_region
    _
  $region9: #{inception_forward.2} parent=0 // pred_fallthru
    _
  // Predicated region
  $region10: #{inception_forward.2} parent=0 // pred_check
    _
  $region11: #{inception_forward.2} parent=0 // pred_check_branch
    %13 = sbr.rel (0) target = $region13
  $region12: #{inception_forward.2} parent=0 // pred_region
    _
  $region13: #{inception_forward.2} parent=0 // pred_fallthru
    _
  %v14 = vld [vmem:[%s0] sm:$0xff]
  %v15 = vld [vmem:[%s0 + $0x8] sm:$0xff]
  %v16 = vld [vmem:[%s0 + $0x10] sm:$0xff]
  %v17 = vld [vmem:[%s0 + $0x18] sm:$0xff]
  %v18 = vld [vmem:[%s0 + $0x20] sm:$0xff]
  %v19 = vld [vmem:[%s0 + $0x28] sm:$0xff]
  %v20 = vld [vmem:[%s0 + $0x30] sm:$0xff]
  %v21 = vld [vmem:[%s0 + $0x38] sm:$0xff]
  %v22 = vld [vmem:[%s0 + $0x40] sm:$0xff]
  %v23 = vld [vmem:[%s0 + $0x48] sm:$0xff]
  %v24 = vld [vmem:[%s0 + $0x50] sm:$0xff]
  %v25 = vld [vmem:[%s0 + $0x58] sm:$0xff]
  %v26 = vld [vmem:[%s0 + $0x60] sm:$0xff]
  %v27 = vld [vmem:[%s0 + $0x68] sm:$0xff]
  %v28 = vld [vmem:[%s0 + $0x70] sm:$0xff]
  %v29 = vld [vmem:[%s0 + $0x78] sm:$0xff]
  %v30 = vld [vmem:[%s0 + $0x80] sm:$0xff]
  %v31 = vld [vmem:[%s0 + $0x88] sm:$0xff]
  %v32 = vld [vmem:[%s0 + $0x90] sm:$0xff]
  %v33 = vld [vmem:[%s0 + $0x98] sm:$0xff]
  %v34 = vld [vmem:[%s0 + $0xa0] sm:$0xff]
  %v35 = vld [vmem:[%s0 + $0xa8] sm:$0xff]
  %v36 = vld [vmem:[%s0 + $0xb0] sm:$0xff]
  %v37 = vld [vmem:[%s0 + $0xb8] sm:$0xff]
  %v38 = vld [vmem:[%s0 + $0xc0] sm:$0xff]
  %v39 = vld [vmem:[%s0 + $0xc8] sm:$0xff]
  %v40 = vld [vmem:[%s0 + $0xd0] sm:$0xff]
  %v41 = vld [vmem:[%s0 + $0xd8] sm:$0xff]
  %v42 = vld [vmem:[%s0 + $0xe0] sm:$0xff]
  %v43 = vld [vmem:[%s0 + $0xe8] sm:$0xff]
  %v44 = vld [vmem:[%s0 + $0xf0] sm:$0xff]
  %v45 = vld [vmem:[%s0 + $0xf8] sm:$0xff]
  %v46 = vld [vmem:[%s0 + $0x100] sm:$0xff]
  %v47 = vld [vmem:[%s0 + $0x108] sm:$0xff]
  %v48 = vld [vmem:[%s0 + $0x110] sm:$0xff]
  %v49 = vld [vmem:[%s0 + $0x118] sm:$0xff]
  %v50 = vld [vmem:[%s0 + $0x120] sm:$0xff]
  %v51 = vld [vmem:[%s0 + $0x128] sm:$0xff]
  %v52 = vld [vmem:[%s0 + $0x130] sm:$0xff]
  %v53 = vld [vmem:[%s0 + $0x138] sm:$0xff]
  %v54 = vld [vmem:[%s0 + $0x140] sm:$0xff]
  %v55 = vld [vmem:[%s0 + $0x148] sm:$0xff]
  %v56 = vld [vmem:[%s0 + $0x150] sm:$0xff]
  %v57 = vld [vmem:[%s0 + $0x158] sm:$0xff]
  %v58 = vld [vmem:[%s0 + $0x160] sm:$0xff]
  %v59 = vld [vmem:[%s0 + $0x168] sm:$0xff]
  %v60 = vld [vmem:[%s0 + $0x170] sm:$0xff]
  %v61 = vld [vmem:[%s0 + $0x178] sm:$0xff]
  %v62 = vld [vmem:[%s0 + $0x180] sm:$0xff]
  %v63 = vld [vmem:[%s0 + $0x188] sm:$0xff]
  %v64 = vld [vmem:[%s0 + $0x190] sm:$0xff]
  %v65 = vld [vmem:[%s0 + $0x198] sm:$0xff]
  %v66 = vld [vmem:[%s0 + $0x1a0] sm:$0xff]
  %v67 = vld [vmem:[%s0 + $0x1a8] sm:$0xff]
  %v68 = vld [vmem:[%s0 + $0x1b0] sm:$0xff]
  %v69 = vld [vmem:[%s0 + $0x1b8] sm:$0xff]
  %v70 = vld [vmem:[%s0 + $0x1c0] sm:$0xff]
  %v71 = vld [vmem:[%s0 + $0x1c8] sm:$0xff]
  %v72 = vld [vmem:[%s0 + $0x1d0] sm:$0xff]
  %v73 = vld [vmem:[%s0 + $0x1d8] sm:$0xff]
  %v74 = vld [vmem:[%s0 + $0x1e0] sm:$0xff]
  %v75 = vld [vmem:[%s0 + $0x1e8] sm:$0xff]
  %v76 = vld [vmem:[%s0 + $0x1f0] sm:$0xff]
  %v77 = vld [vmem:[%s0 + $0x1f8] sm:$0xff]
  %v78 = vld [vmem:[%s1] sm:$0xf]
  %v79 = vld [vmem:[%s2] sm:$0x1]
  %v81 = vlaneseq
  %v82 = vshrl.u32 %v81, 7
  %v83 = vsub.s32 0, %v82
  %v84 = vrot.slane %v79, %v83
  %vm86 = vcmask 31744
  %v88 = vsel %vm86, %v14, 0
  %v91 = vsel %vm86, %v15, 0
  %v94 = vsel %vm86, %v16, 0
  %v97 = vsel %vm86, %v17, 0
  %v100 = vsel %vm86, %v18, 0
  %v103 = vsel %vm86, %v19, 0
  %v106 = vsel %vm86, %v20, 0
  %v109 = vsel %vm86, %v21, 0
  %v112 = vsel %vm86, %v22, 0
  %v115 = vsel %vm86, %v23, 0
  %v118 = vsel %vm86, %v24, 0
  %v121 = vsel %vm86, %v25, 0
  %v124 = vsel %vm86, %v26, 0
  %v127 = vsel %vm86, %v27, 0
  %v130 = vsel %vm86, %v28, 0
  %v133 = vsel %vm86, %v29, 0
  %v136 = vsel %vm86, %v30, 0
  %v139 = vsel %vm86, %v31, 0
  %v142 = vsel %vm86, %v32, 0
  %v145 = vsel %vm86, %v33, 0
  %v148 = vsel %vm86, %v34, 0
  %v151 = vsel %vm86, %v35, 0
  %v154 = vsel %vm86, %v36, 0
  %v157 = vsel %vm86, %v37, 0
  %v160 = vsel %vm86, %v38, 0
  %v163 = vsel %vm86, %v39, 0
  %v166 = vsel %vm86, %v40, 0
  %v169 = vsel %vm86, %v41, 0
  %v172 = vsel %vm86, %v42, 0
  %v175 = vsel %vm86, %v43, 0
  %v178 = vsel %vm86, %v44, 0
  %v181 = vsel %vm86, %v45, 0
  %v184 = vsel %vm86, %v46, 0
  %v187 = vsel %vm86, %v47, 0
  %v190 = vsel %vm86, %v48, 0
  %v193 = vsel %vm86, %v49, 0
  %v196 = vsel %vm86, %v50, 0
  %v199 = vsel %vm86, %v51, 0
  %v202 = vsel %vm86, %v52, 0
  %v205 = vsel %vm86, %v53, 0
  %v208 = vsel %vm86, %v54, 0
  %v211 = vsel %vm86, %v55, 0
  %v214 = vsel %vm86, %v56, 0
  %v217 = vsel %vm86, %v57, 0
  %v220 = vsel %vm86, %v58, 0
  %v223 = vsel %vm86, %v59, 0
  %v226 = vsel %vm86, %v60, 0
  %v229 = vsel %vm86, %v61, 0
  %v232 = vsel %vm86, %v62, 0
  %v235 = vsel %vm86, %v63, 0
  %v238 = vsel %vm86, %v64, 0
  %v241 = vsel %vm86, %v65, 0
  %v244 = vsel %vm86, %v66, 0
  %v247 = vsel %vm86, %v67, 0
  %v250 = vsel %vm86, %v68, 0
  %v253 = vsel %vm86, %v69, 0
  %v256 = vsel %vm86, %v70, 0
  %v259 = vsel %vm86, %v71, 0
  %v262 = vsel %vm86, %v72, 0
  %v265 = vsel %vm86, %v73, 0
  %v268 = vsel %vm86, %v74, 0
  %v271 = vsel %vm86, %v75, 0
  %v274 = vsel %vm86, %v76, 0
  %v277 = vsel %vm86, %v77, 0
  %vm279 = vcmask 1043456
  %v281 = vsel %vm279, %v78, 0
  %283 = vmatprep.subr.mxu0 0.0
  %284 = vmatpush1.msra.mxu0 0.0
  %285 = vmatprep.subr.mxu0 0.0
  %286 = vmatpush1.msra.mxu0 0.0
  %287 = vmatprep.subr.mxu0 0.0
  %288 = vmatpush1.msra.mxu0 0.0
  %289 = vmatprep.subr.mxu0 0.0
  %290 = vmatpush1.msra.mxu0 0.0
  %291 = vmatprep.subr.mxu0 0.0
  %292 = vmatpush1.msra.mxu0 0.0
  %293 = vmatprep.subr.mxu0 0.0
  %294 = vmatpush1.msra.mxu0 0.0
  %295 = vmatprep.subr.mxu0 0.0
  %296 = vmatpush1.msra.mxu0 0.0
  %297 = vmatprep.subr.mxu0 0.0
  %298 = vmatpush1.msra.mxu0 0.0
  %299 = vmatprep.subr.mxu0 0.0
  %300 = vmatpush1.msra.mxu0 0.0
  %301 = vmatprep.subr.mxu0 0.0
  %302 = vmatpush1.msra.mxu0 0.0
  %303 = vmatprep.subr.mxu0 0.0
  %304 = vmatpush1.msra.mxu0 0.0
  %305 = vmatprep.subr.mxu0 0.0
  %306 = vmatpush1.msra.mxu0 0.0
  %307 = vmatprep.subr.mxu0 0.0
  %308 = vmatpush1.msra.mxu0 0.0
  %309 = vmatprep.subr.mxu0 0.0
  %310 = vmatpush1.msra.mxu0 0.0
  %311 = vmatprep.subr.mxu0 0.0
  %312 = vmatpush1.msra.mxu0 0.0
  %313 = vmatprep.subr.mxu0 0.0
  %314 = vmatpush1.msra.mxu0 %v281
  %315 = vmatprep.subr.mxu0 0.0
  %316 = vmatpush2.msra.mxu0 0.0
  %317 = vmatprep.subr.mxu0 0.0
  %318 = vmatpush2.msra.mxu0 0.0
  %319 = vmatprep.subr.mxu0 0.0
  %320 = vmatpush2.msra.mxu0 0.0
  %321 = vmatprep.subr.mxu0 0.0
  %322 = vmatpush2.msra.mxu0 0.0
  %323 = vmatprep.subr.mxu0 0.0
  %324 = vmatpush2.msra.mxu0 0.0
  %325 = vmatprep.subr.mxu0 0.0
  %326 = vmatpush2.msra.mxu0 0.0
  %327 = vmatprep.subr.mxu0 0.0
  %328 = vmatpush2.msra.mxu0 0.0
  %329 = vmatprep.subr.mxu0 0.0
  %330 = vmatpush2.msra.mxu0 0.0
  %331 = vmatprep.subr.mxu0 0.0
  %332 = vmatpush2.msra.mxu0 0.0
  %333 = vmatprep.subr.mxu0 0.0
  %334 = vmatpush2.msra.mxu0 0.0
  %335 = vmatprep.subr.mxu0 0.0
  %336 = vmatpush2.msra.mxu0 0.0
  %337 = vmatprep.subr.mxu0 0.0
  %338 = vmatpush2.msra.mxu0 0.0
  %339 = vmatprep.subr.mxu0 0.0
  %340 = vmatpush2.msra.mxu0 0.0
  %341 = vmatprep.subr.mxu0 0.0
  %342 = vmatpush2.msra.mxu0 0.0
  %343 = vmatprep.subr.mxu0 0.0
  %344 = vmatpush2.msra.mxu0 0.0
  %345 = vmatprep.subr.mxu0 0.0
  %346 = vmatpush2.msra.mxu0 0.0
  %347 = vmatprep.mubr.f32.mxu0 0.0
  %348 = vmatmul.mubr.f32.gmra.mxu0 %v88
  %v349 = vpop.f32.mrf.mxu0
  %v350 = vadd.f32 %v84, %v349
  %v351 = vpop.f32.mrf.mxu0
  %352 = vmatprep.mubr.f32.mxu0 0.0
  %353 = vmatmul.mubr.f32.gmra.mxu0 %v91
  %v354 = vpop.f32.mrf.mxu0
  %v355 = vadd.f32 %v84, %v354
  %v356 = vpop.f32.mrf.mxu0
  %357 = vmatprep.mubr.f32.mxu0 0.0
  %358 = vmatmul.mubr.f32.gmra.mxu0 %v94
  %v359 = vpop.f32.mrf.mxu0
  %v360 = vadd.f32 %v84, %v359
  %v361 = vpop.f32.mrf.mxu0
  %362 = vmatprep.mubr.f32.mxu0 0.0
  %363 = vmatmul.mubr.f32.gmra.mxu0 %v97
  %v364 = vpop.f32.mrf.mxu0
  %v365 = vadd.f32 %v84, %v364
  %v366 = vpop.f32.mrf.mxu0
  %367 = vmatprep.mubr.f32.mxu0 0.0
  %368 = vmatmul.mubr.f32.gmra.mxu0 %v100
  %v369 = vpop.f32.mrf.mxu0
  %v370 = vadd.f32 %v84, %v369
  %v371 = vpop.f32.mrf.mxu0
  %372 = vmatprep.mubr.f32.mxu0 0.0
  %373 = vmatmul.mubr.f32.gmra.mxu0 %v103
  %v374 = vpop.f32.mrf.mxu0
  %v375 = vadd.f32 %v84, %v374
  %v376 = vpop.f32.mrf.mxu0
  %377 = vmatprep.mubr.f32.mxu0 0.0
  %378 = vmatmul.mubr.f32.gmra.mxu0 %v106
  %v379 = vpop.f32.mrf.mxu0
  %v380 = vadd.f32 %v84, %v379
  %v381 = vpop.f32.mrf.mxu0
  %382 = vmatprep.mubr.f32.mxu0 0.0
  %383 = vmatmul.mubr.f32.gmra.mxu0 %v109
  %v384 = vpop.f32.mrf.mxu0
  %v385 = vadd.f32 %v84, %v384
  %v386 = vpop.f32.mrf.mxu0
  %387 = vmatprep.mubr.f32.mxu0 0.0
  %388 = vmatmul.mubr.f32.gmra.mxu0 %v112
  %v389 = vpop.f32.mrf.mxu0
  %v390 = vadd.f32 %v84, %v389
  %v391 = vpop.f32.mrf.mxu0
  %392 = vmatprep.mubr.f32.mxu0 0.0
  %393 = vmatmul.mubr.f32.gmra.mxu0 %v115
  %v394 = vpop.f32.mrf.mxu0
  %v395 = vadd.f32 %v84, %v394
  %v396 = vpop.f32.mrf.mxu0
  %397 = vmatprep.mubr.f32.mxu0 0.0
  %398 = vmatmul.mubr.f32.gmra.mxu0 %v118
  %v399 = vpop.f32.mrf.mxu0
  %v400 = vadd.f32 %v84, %v399
  %v401 = vpop.f32.mrf.mxu0
  %402 = vmatprep.mubr.f32.mxu0 0.0
  %403 = vmatmul.mubr.f32.gmra.mxu0 %v121
  %v404 = vpop.f32.mrf.mxu0
  %v405 = vadd.f32 %v84, %v404
  %v406 = vpop.f32.mrf.mxu0
  %407 = vmatprep.mubr.f32.mxu0 0.0
  %408 = vmatmul.mubr.f32.gmra.mxu0 %v124
  %v409 = vpop.f32.mrf.mxu0
  %v410 = vadd.f32 %v84, %v409
  %v411 = vpop.f32.mrf.mxu0
  %412 = vmatprep.mubr.f32.mxu0 0.0
  %413 = vmatmul.mubr.f32.gmra.mxu0 %v127
  %v414 = vpop.f32.mrf.mxu0
  %v415 = vadd.f32 %v84, %v414
  %v416 = vpop.f32.mrf.mxu0
  %417 = vmatprep.mubr.f32.mxu0 0.0
  %418 = vmatmul.mubr.f32.gmra.mxu0 %v130
  %v419 = vpop.f32.mrf.mxu0
  %v420 = vadd.f32 %v84, %v419
  %v421 = vpop.f32.mrf.mxu0
  %422 = vmatprep.mubr.f32.mxu0 0.0
  %423 = vmatmul.mubr.f32.gmra.mxu0 %v133
  %v424 = vpop.f32.mrf.mxu0
  %v425 = vadd.f32 %v84, %v424
  %v426 = vpop.f32.mrf.mxu0
  %427 = vmatprep.mubr.f32.mxu0 0.0
  %428 = vmatmul.mubr.f32.gmra.mxu0 %v136
  %v429 = vpop.f32.mrf.mxu0
  %v430 = vadd.f32 %v84, %v429
  %v431 = vpop.f32.mrf.mxu0
  %432 = vmatprep.mubr.f32.mxu0 0.0
  %433 = vmatmul.mubr.f32.gmra.mxu0 %v139
  %v434 = vpop.f32.mrf.mxu0
  %v435 = vadd.f32 %v84, %v434
  %v436 = vpop.f32.mrf.mxu0
  %437 = vmatprep.mubr.f32.mxu0 0.0
  %438 = vmatmul.mubr.f32.gmra.mxu0 %v142
  %v439 = vpop.f32.mrf.mxu0
  %v440 = vadd.f32 %v84, %v439
  %v441 = vpop.f32.mrf.mxu0
  %442 = vmatprep.mubr.f32.mxu0 0.0
  %443 = vmatmul.mubr.f32.gmra.mxu0 %v145
  %v444 = vpop.f32.mrf.mxu0
  %v445 = vadd.f32 %v84, %v444
  %v446 = vpop.f32.mrf.mxu0
  %447 = vmatprep.mubr.f32.mxu0 0.0
  %448 = vmatmul.mubr.f32.gmra.mxu0 %v148
  %v449 = vpop.f32.mrf.mxu0
  %v450 = vadd.f32 %v84, %v449
  %v451 = vpop.f32.mrf.mxu0
  %452 = vmatprep.mubr.f32.mxu0 0.0
  %453 = vmatmul.mubr.f32.gmra.mxu0 %v151
  %v454 = vpop.f32.mrf.mxu0
  %v455 = vadd.f32 %v84, %v454
  %v456 = vpop.f32.mrf.mxu0
  %457 = vmatprep.mubr.f32.mxu0 0.0
  %458 = vmatmul.mubr.f32.gmra.mxu0 %v154
  %v459 = vpop.f32.mrf.mxu0
  %v460 = vadd.f32 %v84, %v459
  %v461 = vpop.f32.mrf.mxu0
  %462 = vmatprep.mubr.f32.mxu0 0.0
  %463 = vmatmul.mubr.f32.gmra.mxu0 %v157
  %v464 = vpop.f32.mrf.mxu0
  %v465 = vadd.f32 %v84, %v464
  %v466 = vpop.f32.mrf.mxu0
  %467 = vmatprep.mubr.f32.mxu0 0.0
  %468 = vmatmul.mubr.f32.gmra.mxu0 %v160
  %v469 = vpop.f32.mrf.mxu0
  %v470 = vadd.f32 %v84, %v469
  %v471 = vpop.f32.mrf.mxu0
  %472 = vmatprep.mubr.f32.mxu0 0.0
  %473 = vmatmul.mubr.f32.gmra.mxu0 %v163
  %v474 = vpop.f32.mrf.mxu0
  %v475 = vadd.f32 %v84, %v474
  %v476 = vpop.f32.mrf.mxu0
  %477 = vmatprep.mubr.f32.mxu0 0.0
  %478 = vmatmul.mubr.f32.gmra.mxu0 %v166
  %v479 = vpop.f32.mrf.mxu0
  %v480 = vadd.f32 %v84, %v479
  %v481 = vpop.f32.mrf.mxu0
  %482 = vmatprep.mubr.f32.mxu0 0.0
  %483 = vmatmul.mubr.f32.gmra.mxu0 %v169
  %v484 = vpop.f32.mrf.mxu0
  %v485 = vadd.f32 %v84, %v484
  %v486 = vpop.f32.mrf.mxu0
  %487 = vmatprep.mubr.f32.mxu0 0.0
  %488 = vmatmul.mubr.f32.gmra.mxu0 %v172
  %v489 = vpop.f32.mrf.mxu0
  %v490 = vadd.f32 %v84, %v489
  %v491 = vpop.f32.mrf.mxu0
  %492 = vmatprep.mubr.f32.mxu0 0.0
  %493 = vmatmul.mubr.f32.gmra.mxu0 %v175
  %v494 = vpop.f32.mrf.mxu0
  %v495 = vadd.f32 %v84, %v494
  %v496 = vpop.f32.mrf.mxu0
  %497 = vmatprep.mubr.f32.mxu0 0.0
  %498 = vmatmul.mubr.f32.gmra.mxu0 %v178
  %v499 = vpop.f32.mrf.mxu0
  %v500 = vadd.f32 %v84, %v499
  %v501 = vpop.f32.mrf.mxu0
  %502 = vmatprep.mubr.f32.mxu0 0.0
  %503 = vmatmul.mubr.f32.gmra.mxu0 %v181
  %v504 = vpop.f32.mrf.mxu0
  %v505 = vadd.f32 %v84, %v504
  %v506 = vpop.f32.mrf.mxu0
  %507 = vmatprep.mubr.f32.mxu0 0.0
  %508 = vmatmul.mubr.f32.gmra.mxu0 %v184
  %v509 = vpop.f32.mrf.mxu0
  %v510 = vadd.f32 %v84, %v509
  %v511 = vpop.f32.mrf.mxu0
  %512 = vmatprep.mubr.f32.mxu0 0.0
  %513 = vmatmul.mubr.f32.gmra.mxu0 %v187
  %v514 = vpop.f32.mrf.mxu0
  %v515 = vadd.f32 %v84, %v514
  %v516 = vpop.f32.mrf.mxu0
  %517 = vmatprep.mubr.f32.mxu0 0.0
  %518 = vmatmul.mubr.f32.gmra.mxu0 %v190
  %v519 = vpop.f32.mrf.mxu0
  %v520 = vadd.f32 %v84, %v519
  %v521 = vpop.f32.mrf.mxu0
  %522 = vmatprep.mubr.f32.mxu0 0.0
  %523 = vmatmul.mubr.f32.gmra.mxu0 %v193
  %v524 = vpop.f32.mrf.mxu0
  %v525 = vadd.f32 %v84, %v524
  %v526 = vpop.f32.mrf.mxu0
  %527 = vmatprep.mubr.f32.mxu0 0.0
  %528 = vmatmul.mubr.f32.gmra.mxu0 %v196
  %v529 = vpop.f32.mrf.mxu0
  %v530 = vadd.f32 %v84, %v529
  %v531 = vpop.f32.mrf.mxu0
  %532 = vmatprep.mubr.f32.mxu0 0.0
  %533 = vmatmul.mubr.f32.gmra.mxu0 %v199
  %v534 = vpop.f32.mrf.mxu0
  %v535 = vadd.f32 %v84, %v534
  %v536 = vpop.f32.mrf.mxu0
  %537 = vmatprep.mubr.f32.mxu0 0.0
  %538 = vmatmul.mubr.f32.gmra.mxu0 %v202
  %v539 = vpop.f32.mrf.mxu0
  %v540 = vadd.f32 %v84, %v539
  %v541 = vpop.f32.mrf.mxu0
  %542 = vmatprep.mubr.f32.mxu0 0.0
  %543 = vmatmul.mubr.f32.gmra.mxu0 %v205
  %v544 = vpop.f32.mrf.mxu0
  %v545 = vadd.f32 %v84, %v544
  %v546 = vpop.f32.mrf.mxu0
  %547 = vmatprep.mubr.f32.mxu0 0.0
  %548 = vmatmul.mubr.f32.gmra.mxu0 %v208
  %v549 = vpop.f32.mrf.mxu0
  %v550 = vadd.f32 %v84, %v549
  %v551 = vpop.f32.mrf.mxu0
  %552 = vmatprep.mubr.f32.mxu0 0.0
  %553 = vmatmul.mubr.f32.gmra.mxu0 %v211
  %v554 = vpop.f32.mrf.mxu0
  %v555 = vadd.f32 %v84, %v554
  %v556 = vpop.f32.mrf.mxu0
  %557 = vmatprep.mubr.f32.mxu0 0.0
  %558 = vmatmul.mubr.f32.gmra.mxu0 %v214
  %v559 = vpop.f32.mrf.mxu0
  %v560 = vadd.f32 %v84, %v559
  %v561 = vpop.f32.mrf.mxu0
  %562 = vmatprep.mubr.f32.mxu0 0.0
  %563 = vmatmul.mubr.f32.gmra.mxu0 %v217
  %v564 = vpop.f32.mrf.mxu0
  %v565 = vadd.f32 %v84, %v564
  %v566 = vpop.f32.mrf.mxu0
  %567 = vmatprep.mubr.f32.mxu0 0.0
  %568 = vmatmul.mubr.f32.gmra.mxu0 %v220
  %v569 = vpop.f32.mrf.mxu0
  %v570 = vadd.f32 %v84, %v569
  %v571 = vpop.f32.mrf.mxu0
  %572 = vmatprep.mubr.f32.mxu0 0.0
  %573 = vmatmul.mubr.f32.gmra.mxu0 %v223
  %v574 = vpop.f32.mrf.mxu0
  %v575 = vadd.f32 %v84, %v574
  %v576 = vpop.f32.mrf.mxu0
  %577 = vmatprep.mubr.f32.mxu0 0.0
  %578 = vmatmul.mubr.f32.gmra.mxu0 %v226
  %v579 = vpop.f32.mrf.mxu0
  %v580 = vadd.f32 %v84, %v579
  %v581 = vpop.f32.mrf.mxu0
  %582 = vmatprep.mubr.f32.mxu0 0.0
  %583 = vmatmul.mubr.f32.gmra.mxu0 %v229
  %v584 = vpop.f32.mrf.mxu0
  %v585 = vadd.f32 %v84, %v584
  %v586 = vpop.f32.mrf.mxu0
  %587 = vmatprep.mubr.f32.mxu0 0.0
  %588 = vmatmul.mubr.f32.gmra.mxu0 %v232
  %v589 = vpop.f32.mrf.mxu0
  %v590 = vadd.f32 %v84, %v589
  %v591 = vpop.f32.mrf.mxu0
  %592 = vmatprep.mubr.f32.mxu0 0.0
  %593 = vmatmul.mubr.f32.gmra.mxu0 %v235
  %v594 = vpop.f32.mrf.mxu0
  %v595 = vadd.f32 %v84, %v594
  %v596 = vpop.f32.mrf.mxu0
  %597 = vmatprep.mubr.f32.mxu0 0.0
  %598 = vmatmul.mubr.f32.gmra.mxu0 %v238
  %v599 = vpop.f32.mrf.mxu0
  %v600 = vadd.f32 %v84, %v599
  %v601 = vpop.f32.mrf.mxu0
  %602 = vmatprep.mubr.f32.mxu0 0.0
  %603 = vmatmul.mubr.f32.gmra.mxu0 %v241
  %v604 = vpop.f32.mrf.mxu0
  %v605 = vadd.f32 %v84, %v604
  %v606 = vpop.f32.mrf.mxu0
  %607 = vmatprep.mubr.f32.mxu0 0.0
  %608 = vmatmul.mubr.f32.gmra.mxu0 %v244
  %v609 = vpop.f32.mrf.mxu0
  %v610 = vadd.f32 %v84, %v609
  %v611 = vpop.f32.mrf.mxu0
  %612 = vmatprep.mubr.f32.mxu0 0.0
  %613 = vmatmul.mubr.f32.gmra.mxu0 %v247
  %v614 = vpop.f32.mrf.mxu0
  %v615 = vadd.f32 %v84, %v614
  %v616 = vpop.f32.mrf.mxu0
  %617 = vmatprep.mubr.f32.mxu0 0.0
  %618 = vmatmul.mubr.f32.gmra.mxu0 %v250
  %v619 = vpop.f32.mrf.mxu0
  %v620 = vadd.f32 %v84, %v619
  %v621 = vpop.f32.mrf.mxu0
  %622 = vmatprep.mubr.f32.mxu0 0.0
  %623 = vmatmul.mubr.f32.gmra.mxu0 %v253
  %v624 = vpop.f32.mrf.mxu0
  %v625 = vadd.f32 %v84, %v624
  %v626 = vpop.f32.mrf.mxu0
  %627 = vmatprep.mubr.f32.mxu0 0.0
  %628 = vmatmul.mubr.f32.gmra.mxu0 %v256
  %v629 = vpop.f32.mrf.mxu0
  %v630 = vadd.f32 %v84, %v629
  %v631 = vpop.f32.mrf.mxu0
  %632 = vmatprep.mubr.f32.mxu0 0.0
  %633 = vmatmul.mubr.f32.gmra.mxu0 %v259
  %v634 = vpop.f32.mrf.mxu0
  %v635 = vadd.f32 %v84, %v634
  %v636 = vpop.f32.mrf.mxu0
  %637 = vmatprep.mubr.f32.mxu0 0.0
  %638 = vmatmul.mubr.f32.gmra.mxu0 %v262
  %v639 = vpop.f32.mrf.mxu0
  %v640 = vadd.f32 %v84, %v639
  %v641 = vpop.f32.mrf.mxu0
  %642 = vmatprep.mubr.f32.mxu0 0.0
  %643 = vmatmul.mubr.f32.gmra.mxu0 %v265
  %v644 = vpop.f32.mrf.mxu0
  %v645 = vadd.f32 %v84, %v644
  %v646 = vpop.f32.mrf.mxu0
  %647 = vmatprep.mubr.f32.mxu0 0.0
  %648 = vmatmul.mubr.f32.gmra.mxu0 %v268
  %v649 = vpop.f32.mrf.mxu0
  %v650 = vadd.f32 %v84, %v649
  %v651 = vpop.f32.mrf.mxu0
  %652 = vmatprep.mubr.f32.mxu0 0.0
  %653 = vmatmul.mubr.f32.gmra.mxu0 %v271
  %v654 = vpop.f32.mrf.mxu0
  %v655 = vadd.f32 %v84, %v654
  %v656 = vpop.f32.mrf.mxu0
  %657 = vmatprep.mubr.f32.mxu0 0.0
  %658 = vmatmul.mubr.f32.gmra.mxu0 %v274
  %v659 = vpop.f32.mrf.mxu0
  %v660 = vadd.f32 %v84, %v659
  %v661 = vpop.f32.mrf.mxu0
  %662 = vmatprep.mubr.f32.mxu0 0.0
  %663 = vmatmul.mubr.f32.gmra.mxu0 %v277
  %v664 = vpop.f32.mrf.mxu0
  %v665 = vadd.f32 %v84, %v664
  %v666 = vpop.f32.mrf.mxu0
  %667 = vdwg.mxu0
  %668 = vst [vmem:[%s3] sm:$0xff] %v350
  %669 = vst [vmem:[%s3 + $0x8] sm:$0xff] %v355
  %670 = vst [vmem:[%s3 + $0x10] sm:$0xff] %v360
  %671 = vst [vmem:[%s3 + $0x18] sm:$0xff] %v365
  %672 = vst [vmem:[%s3 + $0x20] sm:$0xff] %v370
  %673 = vst [vmem:[%s3 + $0x28] sm:$0xff] %v375
  %674 = vst [vmem:[%s3 + $0x30] sm:$0xff] %v380
  %675 = vst [vmem:[%s3 + $0x38] sm:$0xff] %v385
  %676 = vst [vmem:[%s3 + $0x40] sm:$0xff] %v390
  %677 = vst [vmem:[%s3 + $0x48] sm:$0xff] %v395
  %678 = vst [vmem:[%s3 + $0x50] sm:$0xff] %v400
  %679 = vst [vmem:[%s3 + $0x58] sm:$0xff] %v405
  %680 = vst [vmem:[%s3 + $0x60] sm:$0xff] %v410
  %681 = vst [vmem:[%s3 + $0x68] sm:$0xff] %v415
  %682 = vst [vmem:[%s3 + $0x70] sm:$0xff] %v420
  %683 = vst [vmem:[%s3 + $0x78] sm:$0xff] %v425
  %684 = vst [vmem:[%s3 + $0x80] sm:$0xff] %v430
  %685 = vst [vmem:[%s3 + $0x88] sm:$0xff] %v435
  %686 = vst [vmem:[%s3 + $0x90] sm:$0xff] %v440
  %687 = vst [vmem:[%s3 + $0x98] sm:$0xff] %v445
  %688 = vst [vmem:[%s3 + $0xa0] sm:$0xff] %v450
  %689 = vst [vmem:[%s3 + $0xa8] sm:$0xff] %v455
  %690 = vst [vmem:[%s3 + $0xb0] sm:$0xff] %v460
  %691 = vst [vmem:[%s3 + $0xb8] sm:$0xff] %v465
  %692 = vst [vmem:[%s3 + $0xc0] sm:$0xff] %v470
  %693 = vst [vmem:[%s3 + $0xc8] sm:$0xff] %v475
  %694 = vst [vmem:[%s3 + $0xd0] sm:$0xff] %v480
  %695 = vst [vmem:[%s3 + $0xd8] sm:$0xff] %v485
  %696 = vst [vmem:[%s3 + $0xe0] sm:$0xff] %v490
  %697 = vst [vmem:[%s3 + $0xe8] sm:$0xff] %v495
  %698 = vst [vmem:[%s3 + $0xf0] sm:$0xff] %v500
  %699 = vst [vmem:[%s3 + $0xf8] sm:$0xff] %v505
  %700 = vst [vmem:[%s3 + $0x100] sm:$0xff] %v510
  %701 = vst [vmem:[%s3 + $0x108] sm:$0xff] %v515
  %702 = vst [vmem:[%s3 + $0x110] sm:$0xff] %v520
  %703 = vst [vmem:[%s3 + $0x118] sm:$0xff] %v525
  %704 = vst [vmem:[%s3 + $0x120] sm:$0xff] %v530
  %705 = vst [vmem:[%s3 + $0x128] sm:$0xff] %v535
  %706 = vst [vmem:[%s3 + $0x130] sm:$0xff] %v540
  %707 = vst [vmem:[%s3 + $0x138] sm:$0xff] %v545
  %708 = vst [vmem:[%s3 + $0x140] sm:$0xff] %v550
  %709 = vst [vmem:[%s3 + $0x148] sm:$0xff] %v555
  %710 = vst [vmem:[%s3 + $0x150] sm:$0xff] %v560
  %711 = vst [vmem:[%s3 + $0x158] sm:$0xff] %v565
  %712 = vst [vmem:[%s3 + $0x160] sm:$0xff] %v570
  %713 = vst [vmem:[%s3 + $0x168] sm:$0xff] %v575
  %714 = vst [vmem:[%s3 + $0x170] sm:$0xff] %v580
  %715 = vst [vmem:[%s3 + $0x178] sm:$0xff] %v585
  %716 = vst [vmem:[%s3 + $0x180] sm:$0xff] %v590
  %717 = vst [vmem:[%s3 + $0x188] sm:$0xff] %v595
  %718 = vst [vmem:[%s3 + $0x190] sm:$0xff] %v600
  %719 = vst [vmem:[%s3 + $0x198] sm:$0xff] %v605
  %720 = vst [vmem:[%s3 + $0x1a0] sm:$0xff] %v610
  %721 = vst [vmem:[%s3 + $0x1a8] sm:$0xff] %v615
  %722 = vst [vmem:[%s3 + $0x1b0] sm:$0xff] %v620
  %723 = vst [vmem:[%s3 + $0x1b8] sm:$0xff] %v625
  %724 = vst [vmem:[%s3 + $0x1c0] sm:$0xff] %v630
  %725 = vst [vmem:[%s3 + $0x1c8] sm:$0xff] %v635
  %726 = vst [vmem:[%s3 + $0x1d0] sm:$0xff] %v640
  %727 = vst [vmem:[%s3 + $0x1d8] sm:$0xff] %v645
  %728 = vst [vmem:[%s3 + $0x1e0] sm:$0xff] %v650
  %729 = vst [vmem:[%s3 + $0x1e8] sm:$0xff] %v655
  %730 = vst [vmem:[%s3 + $0x1f0] sm:$0xff] %v660
  %731 = vst [vmem:[%s3 + $0x1f8] sm:$0xff] %v665
  // Predicated region
  $region14: #{inception_forward.2} parent=0 // pred_check
    _
  $region15: #{inception_forward.2} parent=0 // pred_check_branch
    %733 = sbr.rel (0) target = $region17
  $region16: #{inception_forward.2} parent=0 // pred_region
    _
  $region17: #{inception_forward.2} parent=0 // pred_fallthru
    _
  // Predicated region
  $region18: #{inception_forward.2} parent=0 // pred_check
    _
  $region19: #{inception_forward.2} parent=0 // pred_check_branch
    %735 = sbr.rel (0) target = $region21
  $region20: #{inception_forward.2} parent=0 // pred_region
    _
  $region21: #{inception_forward.2} parent=0 // pred_fallthru
    _

// kernel: inception_forward.3
$region0: #{inception_forward.3}
  #allocation0 [shape = 'u32[]', space=smem, size = 0x4, offset = 0x4, fixed_abs, tag = 'smem constant byte address 0x4 - core index']
  #allocation1 [shape = 'u32[144,128]{1,0:T(1,128)}', space=vmem, size = 0x12000, scoped, tag = 'internal scratch']
  %s0 = inlined_call_operand.vmem [shape: f32[4,10,18,4], index: 0, kind: input, shape index: {}]
  %s1 = inlined_call_operand.vmem [shape: f32[4,12,20,128], index: 1, kind: input, shape index: {}]
  %s2 = inlined_call_operand.vmem [shape: f32[4,4], index: 2, kind: input, shape index: {}]
  %s3 = inlined_call_operand.vmem [shape: f32[9,4,8], index: 3, kind: input, shape index: {}]
  %s4 = inlined_call_operand.vmem [shape: f32[25,2,4], index: 4, kind: input, shape index: {}]
  %s5 = inlined_call_operand.vmem [shape: f32[4,4], index: 5, kind: input, shape index: {}]
  %s6 = inlined_call_operand.vmem [shape: f32[1,128], index: 6, kind: input, shape index: {}]
  %s7 = inlined_call_operand.vmem [shape: f32[4,8,16,128], index: 7, kind: output, shape index: {}]
  %s8 = sld [smem:[#allocation0]]
  $region61: #{inception_forward.3} parent=0
    _
  %s10 = ssub.s32 1, %s8
  %s11 = scalar_select 0, %s10, %s8
  loop: start=0, step=1, limit=6
  $region2: #{inception_forward.3} parent=0 // loop_pre_header
    _
  $region3: #{inception_forward.3} parent=0 // loop_header
    %s13 = sphi 0, %s17
    %p14 = scmp.ge.s32.totalorder %s13, 6
    %s23 = sphi 0, %s25
    %s26 = sphi 0, %s23
    %s27 = sphi 0, %s26
    %s43 = sphi 0, %s27
    %s49 = sphi 0, %s51
    %s52 = sphi 0, %s49
    %s53 = sphi 0, %s52
    %s69 = sphi 0, %s53
    %s73 = sphi 0, %s73
    %s75 = sphi 0, %s73
    %s76 = sphi 0, %s75
    %s90 = sphi 0, %s76
    %s94 = sphi 0, %s94
    %s96 = sphi 0, %s94
    %s97 = sphi 0, %s96
    %s111 = sphi 0, %s97
    %s115 = sphi 0, %s115
    %s117 = sphi 0, %s115
    %s118 = sphi 0, %s117
    %s132 = sphi 0, %s118
    %s136 = sphi 0, %s136
    %s138 = sphi 0, %s136
    %s139 = sphi 0, %s138
    %s153 = sphi 0, %s139
    %s157 = sphi 0, %s157
    %s159 = sphi 0, %s157
    %s160 = sphi 0, %s159
    %s174 = sphi 0, %s160
    %s180 = sphi 0, %s182
    %s183 = sphi 0, %s180
    %s184 = sphi 0, %s183
    %s200 = sphi 0, %s184
  $region4: #{inception_forward.3} parent=0 // loop_header_branch
    %16 = sbr.rel (%p14) target = $region8
  $region5: #{inception_forward.3} parent=0 // loop_body
    %s18 = ssub.s32 %s13, 1
    %s19 = ssub.s32 %s13, 2
    %s20 = sadd.s32 %s13, 1
    %s21 = ssub.s32 %s13, %s20
    %p22 = scmp.eq.s32.totalorder %s21, 0
    %s24 = sadd.s32 %s23, 1
    %s25 = scalar_select %p22, %s23, %s24
    %p28 = pneg %p22
    %p29 = scmp.eq.s32.totalorder %s13, 3
    %p30 = por %p28, %p29
    %p31 = scmp.ne.s32.totalorder %s23, %s26
    %p32 = scmp.eq.s32.totalorder %s13, 0
    %p33 = por %p31, %p32
    %p34 = scmp.ne.s32.totalorder %s23, %s26
    %p35 = scmp.eq.s32.totalorder %s18, 3
    %p36 = por %p34, %p35
    %p37 = scmp.ne.s32.totalorder %s26, %s27
    %p38 = scmp.eq.s32.totalorder %s18, 0
    %p39 = por %p37, %p38
    %p40 = scmp.ne.s32.totalorder %s26, %s27
    %p41 = scmp.eq.s32.totalorder %s19, 3
    %p42 = por %p40, %p41
    %p44 = scmp.ne.s32.totalorder %s27, %s43
    %p45 = scmp.eq.s32.totalorder %s19, 0
    %p46 = por %p44, %p45
    %s47 = ssub.s32 %s13, %s20
    %p48 = scmp.eq.s32.totalorder %s47, 0
    %s50 = sadd.s32 %s49, 1
    %s51 = scalar_select %p48, %s49, %s50
    %p54 = pneg %p48
    %p55 = scmp.eq.s32.totalorder %s13, 3
    %p56 = por %p54, %p55
    %p57 = scmp.ne.s32.totalorder %s49, %s52
    %p58 = scmp.eq.s32.totalorder %s13, 0
    %p59 = por %p57, %p58
    %p60 = scmp.ne.s32.totalorder %s49, %s52
    %p61 = scmp.eq.s32.totalorder %s18, 3
    %p62 = por %p60, %p61
    %p63 = scmp.ne.s32.totalorder %s52, %s53
    %p64 = scmp.eq.s32.totalorder %s18, 0
    %p65 = por %p63, %p64
    %p66 = scmp.ne.s32.totalorder %s52, %s53
    %p67 = scmp.eq.s32.totalorder %s19, 3
    %p68 = por %p66, %p67
    %p70 = scmp.ne.s32.totalorder %s53, %s69
    %p71 = scmp.eq.s32.totalorder %s19, 0
    %p72 = por %p70, %p71
    %s74 = sadd.s32 %s73, 1
    %p77 = scmp.eq.s32.totalorder %s13, 3
    %p78 = scmp.ne.s32.totalorder %s73, %s75
    %p79 = scmp.eq.s32.totalorder %s13, 0
    %p80 = por %p78, %p79
    %p81 = scmp.ne.s32.totalorder %s73, %s75
    %p82 = scmp.eq.s32.totalorder %s18, 3
    %p83 = por %p81, %p82
    %p84 = scmp.ne.s32.totalorder %s75, %s76
    %p85 = scmp.eq.s32.totalorder %s18, 0
    %p86 = por %p84, %p85
    %p87 = scmp.ne.s32.totalorder %s75, %s76
    %p88 = scmp.eq.s32.totalorder %s19, 3
    %p89 = por %p87, %p88
    %p91 = scmp.ne.s32.totalorder %s76, %s90
    %p92 = scmp.eq.s32.totalorder %s19, 0
    %p93 = por %p91, %p92
    %s95 = sadd.s32 %s94, 1
    %p98 = scmp.eq.s32.totalorder %s13, 3
    %p99 = scmp.ne.s32.totalorder %s94, %s96
    %p100 = scmp.eq.s32.totalorder %s13, 0
    %p101 = por %p99, %p100
    %p102 = scmp.ne.s32.totalorder %s94, %s96
    %p103 = scmp.eq.s32.totalorder %s18, 3
    %p104 = por %p102, %p103
    %p105 = scmp.ne.s32.totalorder %s96, %s97
    %p106 = scmp.eq.s32.totalorder %s18, 0
    %p107 = por %p105, %p106
    %p108 = scmp.ne.s32.totalorder %s96, %s97
    %p109 = scmp.eq.s32.totalorder %s19, 3
    %p110 = por %p108, %p109
    %p112 = scmp.ne.s32.totalorder %s97, %s111
    %p113 = scmp.eq.s32.totalorder %s19, 0
    %p114 = por %p112, %p113
    %s116 = sadd.s32 %s115, 1
    %p119 = scmp.eq.s32.totalorder %s13, 3
    %p120 = scmp.ne.s32.totalorder %s115, %s117
    %p121 = scmp.eq.s32.totalorder %s13, 0
    %p122 = por %p120, %p121
    %p123 = scmp.ne.s32.totalorder %s115, %s117
    %p124 = scmp.eq.s32.totalorder %s18, 3
    %p125 = por %p123, %p124
    %p126 = scmp.ne.s32.totalorder %s117, %s118
    %p127 = scmp.eq.s32.totalorder %s18, 0
    %p128 = por %p126, %p127
    %p129 = scmp.ne.s32.totalorder %s117, %s118
    %p130 = scmp.eq.s32.totalorder %s19, 3
    %p131 = por %p129, %p130
    %p133 = scmp.ne.s32.totalorder %s118, %s132
    %p134 = scmp.eq.s32.totalorder %s19, 0
    %p135 = por %p133, %p134
    %s137 = sadd.s32 %s136, 1
    %p140 = scmp.eq.s32.totalorder %s13, 3
    %p141 = scmp.ne.s32.totalorder %s136, %s138
    %p142 = scmp.eq.s32.totalorder %s13, 0
    %p143 = por %p141, %p142
    %p144 = scmp.ne.s32.totalorder %s136, %s138
    %p145 = scmp.eq.s32.totalorder %s18, 3
    %p146 = por %p144, %p145
    %p147 = scmp.ne.s32.totalorder %s138, %s139
    %p148 = scmp.eq.s32.totalorder %s18, 0
    %p149 = por %p147, %p148
    %p150 = scmp.ne.s32.totalorder %s138, %s139
    %p151 = scmp.eq.s32.totalorder %s19, 3
    %p152 = por %p150, %p151
    %p154 = scmp.ne.s32.totalorder %s139, %s153
    %p155 = scmp.eq.s32.totalorder %s19, 0
    %p156 = por %p154, %p155
    %s158 = sadd.s32 %s157, 1
    %p161 = scmp.eq.s32.totalorder %s13, 3
    %p162 = scmp.ne.s32.totalorder %s157, %s159
    %p163 = scmp.eq.s32.totalorder %s13, 0
    %p164 = por %p162, %p163
    %p165 = scmp.ne.s32.totalorder %s157, %s159
    %p166 = scmp.eq.s32.totalorder %s18, 3
    %p167 = por %p165, %p166
    %p168 = scmp.ne.s32.totalorder %s159, %s160
    %p169 = scmp.eq.s32.totalorder %s18, 0
    %p170 = por %p168, %p169
    %p171 = scmp.ne.s32.totalorder %s159, %s160
    %p172 = scmp.eq.s32.totalorder %s19, 3
    %p173 = por %p171, %p172
    %p175 = scmp.ne.s32.totalorder %s160, %s174
    %p176 = scmp.eq.s32.totalorder %s19, 0
    %p177 = por %p175, %p176
    %s178 = ssub.s32 %s13, %s20
    %p179 = scmp.eq.s32.totalorder %s178, 0
    %s181 = sadd.s32 %s180, 1
    %s182 = scalar_select %p179, %s180, %s181
    %p185 = pneg %p179
    %p186 = scmp.eq.s32.totalorder %s13, 3
    %p187 = por %p185, %p186
    %p188 = scmp.ne.s32.totalorder %s180, %s183
    %p189 = scmp.eq.s32.totalorder %s13, 0
    %p190 = por %p188, %p189
    %p191 = scmp.ne.s32.totalorder %s180, %s183
    %p192 = scmp.eq.s32.totalorder %s18, 3
    %p193 = por %p191, %p192
    %p194 = scmp.ne.s32.totalorder %s183, %s184
    %p195 = scmp.eq.s32.totalorder %s18, 0
    %p196 = por %p194, %p195
    %p197 = scmp.ne.s32.totalorder %s183, %s184
    %p198 = scmp.eq.s32.totalorder %s19, 3
    %p199 = por %p197, %p198
    %p201 = scmp.ne.s32.totalorder %s184, %s200
    %p202 = scmp.eq.s32.totalorder %s19, 0
    %p203 = por %p201, %p202
    %p204 = scmp.le.s32.totalorder 1, %s13
    %p205 = scmp.lt.s32.totalorder %s13, 5
    %p206 = pnand %p204, %p205
    %p207 = pneg %p206
    // Predicated region
    $region9: #{inception_forward.3} parent=5 // pred_check
      _
    $region10: #{inception_forward.3} parent=5 // pred_check_branch
      %209 = sbr.rel (%p206) target = $region12
    $region11: #{inception_forward.3} parent=5 // pred_region
      %s210 = ssub.s32 %s13, 1
      // Predicated region
      $region13: #{inception_forward.3} parent=11 // pred_check
        %p211 = pneg %p86
      $region14: #{inception_forward.3} parent=11 // pred_check_branch
        %213 = sbr.rel (%p211) target = $region16
      $region15: #{inception_forward.3} parent=11 // pred_region
        _
      $region16: #{inception_forward.3} parent=11 // pred_fallthru
        _
      // Predicated region
      $region17: #{inception_forward.3} parent=11 // pred_check
        %p214 = pneg %p107
      $region18: #{inception_forward.3} parent=11 // pred_check_branch
        %216 = sbr.rel (%p214) target = $region20
      $region19: #{inception_forward.3} parent=11 // pred_region
        _
      $region20: #{inception_forward.3} parent=11 // pred_fallthru
        _
      // Predicated region
      $region21: #{inception_forward.3} parent=11 // pred_check
        %p217 = pneg %p128
      $region22: #{inception_forward.3} parent=11 // pred_check_branch
        %219 = sbr.rel (%p217) target = $region24
      $region23: #{inception_forward.3} parent=11 // pred_region
        _
      $region24: #{inception_forward.3} parent=11 // pred_fallthru
        _
      // Predicated region
      $region25: #{inception_forward.3} parent=11 // pred_check
        %p220 = pneg %p149
      $region26: #{inception_forward.3} parent=11 // pred_check_branch
        %222 = sbr.rel (%p220) target = $region28
      $region27: #{inception_forward.3} parent=11 // pred_region
        _
      $region28: #{inception_forward.3} parent=11 // pred_fallthru
        _
      // Predicated region
      $region29: #{inception_forward.3} parent=11 // pred_check
        %p223 = pneg %p170
      $region30: #{inception_forward.3} parent=11 // pred_check_branch
        %225 = sbr.rel (%p223) target = $region32
      $region31: #{inception_forward.3} parent=11 // pred_region
        _
      $region32: #{inception_forward.3} parent=11 // pred_fallthru
        _
    $region12: #{inception_forward.3} parent=5 // pred_fallthru
      _
    %p226 = scmp.lt.s32.totalorder %s13, 4
    // Predicated region
    $region33: #{inception_forward.3} parent=5 // pred_check
      %p227 = pneg %p226
    $region34: #{inception_forward.3} parent=5 // pred_check_branch
      %229 = sbr.rel (%p227) target = $region36
    $region35: #{inception_forward.3} parent=5 // pred_region
      // Predicated region
      $region37: #{inception_forward.3} parent=35 // pred_check
        %p230 = pneg %p33
      $region38: #{inception_forward.3} parent=35 // pred_check_branch
        %232 = sbr.rel (%p230) target = $region40
      $region39: #{inception_forward.3} parent=35 // pred_region
        %p233 = scmp.lt.s32.totalorder %s13, 3
        %s234 = scalar_select %p233, %s13, 3
        %s235 = smul.addr %s234, 30
        %s236 = smul.addr %s235, 8
        %s237 = scalar_lea.vmem %s0, %s236
      $region40: #{inception_forward.3} parent=35 // pred_fallthru
        _
      // Predicated region
      $region41: #{inception_forward.3} parent=35 // pred_check
        %p238 = pneg %p59
      $region42: #{inception_forward.3} parent=35 // pred_check_branch
        %240 = sbr.rel (%p238) target = $region44
      $region43: #{inception_forward.3} parent=35 // pred_region
        %p241 = scmp.lt.s32.totalorder %s13, 3
        %s242 = scalar_select %p241, %s13, 3
        %s243 = smul.addr %s242, 36
        %s244 = smul.addr %s243, 8
        %s245 = scalar_lea.vmem %s1, %s244
      $region44: #{inception_forward.3} parent=35 // pred_fallthru
        _
    $region36: #{inception_forward.3} parent=5 // pred_fallthru
      _
    %p246 = scmp.le.s32.totalorder 1, %s13
    %p247 = scmp.lt.s32.totalorder %s13, 5
    %p248 = pnand %p246, %p247
    %p249 = pneg %p248
    // Predicated region
    $region45: #{inception_forward.3} parent=5 // pred_check
      _
    $region46: #{inception_forward.3} parent=5 // pred_check_branch
      %251 = sbr.rel (%p248) target = $region48
    $region47: #{inception_forward.3} parent=5 // pred_region
      %s252 = ssub.s32 %s13, 1
      %p253 = scmp.lt.s32.totalorder %s18, 3
      %s254 = scalar_select %p253, %s18, 3
      %s255 = smul.addr %s254, 30
      %s256 = smul.addr %s255, 8
      %s257 = scalar_lea.vmem %s0, %s256
      %p258 = pneg %p39
      %p259 = pneg %p36
      %p260 = scmp.lt.s32.totalorder %s18, 3
      %s261 = scalar_select %p260, %s18, 3
      %s262 = smul.addr %s261, 36
      %s263 = smul.addr %s262, 8
      %s264 = scalar_lea.vmem %s1, %s263
      %p265 = pneg %p65
      %p266 = pneg %p62
      %p267 = pneg %p86
      %p268 = pneg %p83
      %p269 = pneg %p107
      %p270 = pneg %p104
      %p271 = pneg %p128
      %p272 = pneg %p125
      %p273 = pneg %p149
      %p274 = pneg %p146
      %p275 = pneg %p170
      %p276 = pneg %p167
      %p277 = pneg %p196
      %p278 = pneg %p193
      %p279 = scmp.lt.s32.totalorder %s18, 3
      %s280 = scalar_select %p279, %s18, 3
      %s281 = smul.addr %s280, 16
      %s282 = smul.addr %s281, 8
      %s283 = scalar_lea.vmem %s7, %s282
      %p284 = scmp.lt.s32.totalorder %s18, 3
      %s285 = scalar_select %p284, %s18, 3
      %s286 = smul.addr %s285, 30
      %s287 = smul.addr %s286, 8
      %s288 = scalar_lea.vmem %s0, %s287
      %p289 = scmp.lt.s32.totalorder %s18, 3
      %s290 = scalar_select %p289, %s18, 3
      %s291 = smul.addr %s290, 36
      %s292 = smul.addr %s291, 8
      %s293 = scalar_lea.vmem %s1, %s292
      %p294 = scmp.lt.s32.totalorder %s18, 3
      %s295 = scalar_select %p294, %s18, 3
      %s296 = smul.addr %s295, 16
      %s297 = smul.addr %s296, 8
      %s298 = scalar_lea.vmem %s7, %s297
      %v299 = vld [vmem:[%s288] sm:$0xff]
      %v300 = vld [vmem:[%s288 + $0x8] sm:$0xff]
      %v301 = vld [vmem:[%s288 + $0x10] sm:$0x3]
      %v302 = vld [vmem:[%s288 + $0x18] sm:$0xff]
      %v303 = vld [vmem:[%s288 + $0x20] sm:$0xff]
      %v304 = vld [vmem:[%s288 + $0x28] sm:$0x3]
      %v305 = vld [vmem:[%s288 + $0x30] sm:$0xff]
      %v306 = vld [vmem:[%s288 + $0x38] sm:$0xff]
      %v307 = vld [vmem:[%s288 + $0x40] sm:$0x3]
      %v308 = vld [vmem:[%s288 + $0x48] sm:$0xff]
      %v309 = vld [vmem:[%s288 + $0x50] sm:$0xff]
      %v310 = vld [vmem:[%s288 + $0x58] sm:$0x3]
      %v311 = vld [vmem:[%s288 + $0x60] sm:$0xff]
      %v312 = vld [vmem:[%s288 + $0x68] sm:$0xff]
      %v313 = vld [vmem:[%s288 + $0x70] sm:$0x3]
      %v314 = vld [vmem:[%s288 + $0x78] sm:$0xff]
      %v315 = vld [vmem:[%s288 + $0x80] sm:$0xff]
      %v316 = vld [vmem:[%s288 + $0x88] sm:$0x3]
      %v317 = vld [vmem:[%s288 + $0x90] sm:$0xff]
      %v318 = vld [vmem:[%s288 + $0x98] sm:$0xff]
      %v319 = vld [vmem:[%s288 + $0xa0] sm:$0x3]
      %v320 = vld [vmem:[%s288 + $0xa8] sm:$0xff]
      %v321 = vld [vmem:[%s288 + $0xb0] sm:$0xff]
      %v322 = vld [vmem:[%s288 + $0xb8] sm:$0x3]
      %v323 = vld [vmem:[%s288 + $0xc0] sm:$0xff]
      %v324 = vld [vmem:[%s288 + $0xc8] sm:$0xff]
      %v325 = vld [vmem:[%s288 + $0xd0] sm:$0x3]
      %v326 = vld [vmem:[%s288 + $0xd8] sm:$0xff]
      %v327 = vld [vmem:[%s288 + $0xe0] sm:$0xff]
      %v328 = vld [vmem:[%s288 + $0xe8] sm:$0x3]
      %v329 = vld [vmem:[%s293] sm:$0xff]
      %v330 = vld [vmem:[%s293 + $0x8] sm:$0xff]
      %v331 = vld [vmem:[%s293 + $0x10] sm:$0xf]
      %v332 = vld [vmem:[%s293 + $0x18] sm:$0xff]
      %v333 = vld [vmem:[%s293 + $0x20] sm:$0xff]
      %v334 = vld [vmem:[%s293 + $0x28] sm:$0xf]
      %v335 = vld [vmem:[%s293 + $0x30] sm:$0xff]
      %v336 = vld [vmem:[%s293 + $0x38] sm:$0xff]
      %v337 = vld [vmem:[%s293 + $0x40] sm:$0xf]
      %v338 = vld [vmem:[%s293 + $0x48] sm:$0xff]
      %v339 = vld [vmem:[%s293 + $0x50] sm:$0xff]
      %v340 = vld [vmem:[%s293 + $0x58] sm:$0xf]
      %v341 = vld [vmem:[%s293 + $0x60] sm:$0xff]
      %v342 = vld [vmem:[%s293 + $0x68] sm:$0xff]
      %v343 = vld [vmem:[%s293 + $0x70] sm:$0xf]
      %v344 = vld [vmem:[%s293 + $0x78] sm:$0xff]
      %v345 = vld [vmem:[%s293 + $0x80] sm:$0xff]
      %v346 = vld [vmem:[%s293 + $0x88] sm:$0xf]
      %v347 = vld [vmem:[%s293 + $0x90] sm:$0xff]
      %v348 = vld [vmem:[%s293 + $0x98] sm:$0xff]
      %v349 = vld [vmem:[%s293 + $0xa0] sm:$0xf]
      %v350 = vld [vmem:[%s293 + $0xa8] sm:$0xff]
      %v351 = vld [vmem:[%s293 + $0xb0] sm:$0xff]
      %v352 = vld [vmem:[%s293 + $0xb8] sm:$0xf]
      %v353 = vld [vmem:[%s293 + $0xc0] sm:$0xff]
      %v354 = vld [vmem:[%s293 + $0xc8] sm:$0xff]
      %v355 = vld [vmem:[%s293 + $0xd0] sm:$0xf]
      %v356 = vld [vmem:[%s293 + $0xd8] sm:$0xff]
      %v357 = vld [vmem:[%s293 + $0xe0] sm:$0xff]
      %v358 = vld [vmem:[%s293 + $0xe8] sm:$0xf]
      %v359 = vld [vmem:[%s293 + $0xf0] sm:$0xff]
      %v360 = vld [vmem:[%s293 + $0xf8] sm:$0xff]
      %v361 = vld [vmem:[%s293 + $0x100] sm:$0xf]
      %v362 = vld [vmem:[%s293 + $0x108] sm:$0xff]
      %v363 = vld [vmem:[%s293 + $0x110] sm:$0xff]
      %v364 = vld [vmem:[%s293 + $0x118] sm:$0xf]
      %vm389 = vcmask 1046528
      %v390 = vrot.slane %v302, 1
      %v391 = vrot.slane %v303, 1
      %v392 = vsel %vm389, %v390, %v391
      %v393 = vrot.slane %v304, 1
      %v394 = vsel %vm389, %v391, %v393
      %v395 = vrot.slane %v305, 1
      %v396 = vrot.slane %v306, 1
      %v397 = vsel %vm389, %v395, %v396
      %v398 = vrot.slane %v307, 1
      %v399 = vsel %vm389, %v396, %v398
      %v400 = vrot.slane %v308, 1
      %v401 = vrot.slane %v309, 1
      %v402 = vsel %vm389, %v400, %v401
      %v403 = vrot.slane %v310, 1
      %v404 = vsel %vm389, %v401, %v403
      %v405 = vrot.slane %v311, 1
      %v406 = vrot.slane %v312, 1
      %v407 = vsel %vm389, %v405, %v406
      %v408 = vrot.slane %v313, 1
      %v409 = vsel %vm389, %v406, %v408
      %v410 = vrot.slane %v314, 1
      %v411 = vrot.slane %v315, 1
      %v412 = vsel %vm389, %v410, %v411
      %v413 = vrot.slane %v316, 1
      %v414 = vsel %vm389, %v411, %v413
      %v415 = vrot.slane %v317, 1
      %v416 = vrot.slane %v318, 1
      %v417 = vsel %vm389, %v415, %v416
      %v418 = vrot.slane %v319, 1
      %v419 = vsel %vm389, %v416, %v418
      %v420 = vrot.slane %v320, 1
      %v421 = vrot.slane %v321, 1
      %v422 = vsel %vm389, %v420, %v421
      %v423 = vrot.slane %v322, 1
      %v424 = vsel %vm389, %v421, %v423
      %v425 = vrot.slane %v323, 1
      %v426 = vrot.slane %v324, 1
      %v427 = vsel %vm389, %v425, %v426
      %v428 = vrot.slane %v325, 1
      %v429 = vsel %vm389, %v426, %v428
      %v430 = vld [vmem:[%s2] sm:$0xf]
      %vm431 = vcmask 31744
      %v432 = vsel %vm431, %v392, 0
      %v434 = vsel %vm431, %v394, 0
      %v436 = vsel %vm431, %v397, 0
      %v438 = vsel %vm431, %v399, 0
      %v440 = vsel %vm431, %v402, 0
      %v442 = vsel %vm431, %v404, 0
      %v444 = vsel %vm431, %v407, 0
      %v446 = vsel %vm431, %v409, 0
      %v448 = vsel %vm431, %v412, 0
      %v450 = vsel %vm431, %v414, 0
      %v452 = vsel %vm431, %v417, 0
      %v454 = vsel %vm431, %v419, 0
      %v456 = vsel %vm431, %v422, 0
      %v458 = vsel %vm431, %v424, 0
      %v460 = vsel %vm431, %v427, 0
      %v462 = vsel %vm431, %v429, 0
      %vm464 = vcmask 1043456
      %v466 = vsel %vm464, %v430, 0
      %468 = vmatprep.subr.mxu0 0.0
      %469 = vmatpush1.msra.mxu0 0.0
      %470 = vmatprep.subr.mxu0 0.0
      %471 = vmatpush1.msra.mxu0 0.0
      %472 = vmatprep.subr.mxu0 0.0
      %473 = vmatpush1.msra.mxu0 0.0
      %474 = vmatprep.subr.mxu0 0.0
      %475 = vmatpush1.msra.mxu0 0.0
      %476 = vmatprep.subr.mxu0 0.0
      %477 = vmatpush1.msra.mxu0 0.0
      %478 = vmatprep.subr.mxu0 0.0
      %479 = vmatpush1.msra.mxu0 0.0
      %480 = vmatprep.subr.mxu0 0.0
      %481 = vmatpush1.msra.mxu0 0.0
      %482 = vmatprep.subr.mxu0 0.0
      %483 = vmatpush1.msra.mxu0 0.0
      %484 = vmatprep.subr.mxu0 0.0
      %485 = vmatpush1.msra.mxu0 0.0
      %486 = vmatprep.subr.mxu0 0.0
      %487 = vmatpush1.msra.mxu0 0.0
      %488 = vmatprep.subr.mxu0 0.0
      %489 = vmatpush1.msra.mxu0 0.0
      %490 = vmatprep.subr.mxu0 0.0
      %491 = vmatpush1.msra.mxu0 0.0
      %492 = vmatprep.subr.mxu0 0.0
      %493 = vmatpush1.msra.mxu0 0.0
      %494 = vmatprep.subr.mxu0 0.0
      %495 = vmatpush1.msra.mxu0 0.0
      %496 = vmatprep.subr.mxu0 0.0
      %497 = vmatpush1.msra.mxu0 0.0
      %498 = vmatprep.subr.mxu0 0.0
      %499 = vmatpush1.msra.mxu0 %v466
      %500 = vmatprep.subr.mxu0 0.0
      %501 = vmatpush2.msra.mxu0 0.0
      %502 = vmatprep.subr.mxu0 0.0
      %503 = vmatpush2.msra.mxu0 0.0
      %504 = vmatprep.subr.mxu0 0.0
      %505 = vmatpush2.msra.mxu0 0.0
      %506 = vmatprep.subr.mxu0 0.0
      %507 = vmatpush2.msra.mxu0 0.0
      %508 = vmatprep.subr.mxu0 0.0
      %509 = vmatpush2.msra.mxu0 0.0
      %510 = vmatprep.subr.mxu0 0.0
      %511 = vmatpush2.msra.mxu0 0.0
      %512 = vmatprep.subr.mxu0 0.0
      %513 = vmatpush2.msra.mxu0 0.0
      %514 = vmatprep.subr.mxu0 0.0
      %515 = vmatpush2.msra.mxu0 0.0
      %516 = vmatprep.subr.mxu0 0.0
      %517 = vmatpush2.msra.mxu0 0.0
      %518 = vmatprep.subr.mxu0 0.0
      %519 = vmatpush2.msra.mxu0 0.0
      %520 = vmatprep.subr.mxu0 0.0
      %521 = vmatpush2.msra.mxu0 0.0
      %522 = vmatprep.subr.mxu0 0.0
      %523 = vmatpush2.msra.mxu0 0.0
      %524 = vmatprep.subr.mxu0 0.0
      %525 = vmatpush2.msra.mxu0 0.0
      %526 = vmatprep.subr.mxu0 0.0
      %527 = vmatpush2.msra.mxu0 0.0
      %528 = vmatprep.subr.mxu0 0.0
      %529 = vmatpush2.msra.mxu0 0.0
      %530 = vmatprep.subr.mxu0 0.0
      %531 = vmatpush2.msra.mxu0 0.0
      %532 = vmatprep.mubr.f32.mxu0 0.0
      %533 = vmatmul.mubr.f32.gmra.mxu0 %v432
      %v534 = vpop.f32.mrf.mxu0
      %v535 = vadd.f32 0.0, %v534
      %v536 = vpop.f32.mrf.mxu0
      %537 = vmatprep.mubr.f32.mxu0 0.0
      %538 = vmatmul.mubr.f32.gmra.mxu0 %v434
      %v539 = vpop.f32.mrf.mxu0
      %v540 = vadd.f32 0.0, %v539
      %v541 = vpop.f32.mrf.mxu0
      %542 = vmatprep.mubr.f32.mxu0 0.0
      %543 = vmatmul.mubr.f32.gmra.mxu0 %v436
      %v544 = vpop.f32.mrf.mxu0
      %v545 = vadd.f32 0.0, %v544
      %v546 = vpop.f32.mrf.mxu0
      %547 = vmatprep.mubr.f32.mxu0 0.0
      %548 = vmatmul.mubr.f32.gmra.mxu0 %v438
      %v549 = vpop.f32.mrf.mxu0
      %v550 = vadd.f32 0.0, %v549
      %v551 = vpop.f32.mrf.mxu0
      %552 = vmatprep.mubr.f32.mxu0 0.0
      %553 = vmatmul.mubr.f32.gmra.mxu0 %v440
      %v554 = vpop.f32.mrf.mxu0
      %v555 = vadd.f32 0.0, %v554
      %v556 = vpop.f32.mrf.mxu0
      %557 = vmatprep.mubr.f32.mxu0 0.0
      %558 = vmatmul.mubr.f32.gmra.mxu0 %v442
      %v559 = vpop.f32.mrf.mxu0
      %v560 = vadd.f32 0.0, %v559
      %v561 = vpop.f32.mrf.mxu0
      %562 = vmatprep.mubr.f32.mxu0 0.0
      %563 = vmatmul.mubr.f32.gmra.mxu0 %v444
      %v564 = vpop.f32.mrf.mxu0
      %v565 = vadd.f32 0.0, %v564
      %v566 = vpop.f32.mrf.mxu0
      %567 = vmatprep.mubr.f32.mxu0 0.0
      %568 = vmatmul.mubr.f32.gmra.mxu0 %v446
      %v569 = vpop.f32.mrf.mxu0
      %v570 = vadd.f32 0.0, %v569
      %v571 = vpop.f32.mrf.mxu0
      %572 = vmatprep.mubr.f32.mxu0 0.0
      %573 = vmatmul.mubr.f32.gmra.mxu0 %v448
      %v574 = vpop.f32.mrf.mxu0
      %v575 = vadd.f32 0.0, %v574
      %v576 = vpop.f32.mrf.mxu0
      %577 = vmatprep.mubr.f32.mxu0 0.0
      %578 = vmatmul.mubr.f32.gmra.mxu0 %v450
      %v579 = vpop.f32.mrf.mxu0
      %v580 = vadd.f32 0.0, %v579
      %v581 = vpop.f32.mrf.mxu0
      %582 = vmatprep.mubr.f32.mxu0 0.0
      %583 = vmatmul.mubr.f32.gmra.mxu0 %v452
      %v584 = vpop.f32.mrf.mxu0
      %v585 = vadd.f32 0.0, %v584
      %v586 = vpop.f32.mrf.mxu0
      %587 = vmatprep.mubr.f32.mxu0 0.0
      %588 = vmatmul.mubr.f32.gmra.mxu0 %v454
      %v589 = vpop.f32.mrf.mxu0
      %v590 = vadd.f32 0.0, %v589
      %v591 = vpop.f32.mrf.mxu0
      %592 = vmatprep.mubr.f32.mxu0 0.0
      %593 = vmatmul.mubr.f32.gmra.mxu0 %v456
      %v594 = vpop.f32.mrf.mxu0
      %v595 = vadd.f32 0.0, %v594
      %v596 = vpop.f32.mrf.mxu0
      %597 = vmatprep.mubr.f32.mxu0 0.0
      %598 = vmatmul.mubr.f32.gmra.mxu0 %v458
      %v599 = vpop.f32.mrf.mxu0
      %v600 = vadd.f32 0.0, %v599
      %v601 = vpop.f32.mrf.mxu0
      %602 = vmatprep.mubr.f32.mxu0 0.0
      %603 = vmatmul.mubr.f32.gmra.mxu0 %v460
      %v604 = vpop.f32.mrf.mxu0
      %v605 = vadd.f32 0.0, %v604
      %v606 = vpop.f32.mrf.mxu0
      %607 = vmatprep.mubr.f32.mxu0 0.0
      %608 = vmatmul.mubr.f32.gmra.mxu0 %v462
      %v609 = vpop.f32.mrf.mxu0
      %v610 = vadd.f32 0.0, %v609
      %v611 = vpop.f32.mrf.mxu0
      %612 = vdwg.mxu0
      %v637 = vrot.slane %v332, 1
      %v638 = vrot.slane %v333, 1
      %v639 = vsel %vm389, %v637, %v638
      %v640 = vrot.slane %v334, 1
      %v641 = vsel %vm389, %v638, %v640
      %v642 = vrot.slane %v335, 1
      %v643 = vrot.slane %v336, 1
      %v644 = vsel %vm389, %v642, %v643
      %v645 = vrot.slane %v337, 1
      %v646 = vsel %vm389, %v643, %v645
      %v647 = vrot.slane %v338, 1
      %v648 = vrot.slane %v339, 1
      %v649 = vsel %vm389, %v647, %v648
      %v650 = vrot.slane %v340, 1
      %v651 = vsel %vm389, %v648, %v650
      %v652 = vrot.slane %v341, 1
      %v653 = vrot.slane %v342, 1
      %v654 = vsel %vm389, %v652, %v653
      %v655 = vrot.slane %v343, 1
      %v656 = vsel %vm389, %v653, %v655
      %v657 = vrot.slane %v344, 1
      %v658 = vrot.slane %v345, 1
      %v659 = vsel %vm389, %v657, %v658
      %v660 = vrot.slane %v346, 1
      %v661 = vsel %vm389, %v658, %v660
      %v662 = vrot.slane %v347, 1
      %v663 = vrot.slane %v348, 1
      %v664 = vsel %vm389, %v662, %v663
      %v665 = vrot.slane %v349, 1
      %v666 = vsel %vm389, %v663, %v665
      %v667 = vrot.slane %v350, 1
      %v668 = vrot.slane %v351, 1
      %v669 = vsel %vm389, %v667, %v668
      %v670 = vrot.slane %v352, 1
      %v671 = vsel %vm389, %v668, %v670
      %v672 = vrot.slane %v353, 1
      %v673 = vrot.slane %v354, 1
      %v674 = vsel %vm389, %v672, %v673
      %v675 = vrot.slane %v355, 1
      %v676 = vsel %vm389, %v673, %v675
      %v677 = vld [vmem:[%s3] sm:$0xf]
      %vm678 = vcmask 1045504
      %v679 = vrot.slane %v332, 2
      %v680 = vrot.slane %v333, 2
      %v681 = vsel %vm678, %v679, %v680
      %v682 = vrot.slane %v334, 2
      %v683 = vsel %vm678, %v680, %v682
      %v684 = vrot.slane %v335, 2
      %v685 = vrot.slane %v336, 2
      %v686 = vsel %vm678, %v684, %v685
      %v687 = vrot.slane %v337, 2
      %v688 = vsel %vm678, %v685, %v687
      %v689 = vrot.slane %v338, 2
      %v690 = vrot.slane %v339, 2
      %v691 = vsel %vm678, %v689, %v690
      %v692 = vrot.slane %v340, 2
      %v693 = vsel %vm678, %v690, %v692
      %v694 = vrot.slane %v341, 2
      %v695 = vrot.slane %v342, 2
      %v696 = vsel %vm678, %v694, %v695
      %v697 = vrot.slane %v343, 2
      %v698 = vsel %vm678, %v695, %v697
      %v699 = vrot.slane %v344, 2
      %v700 = vrot.slane %v345, 2
      %v701 = vsel %vm678, %v699, %v700
      %v702 = vrot.slane %v346, 2
      %v703 = vsel %vm678, %v700, %v702
      %v704 = vrot.slane %v347, 2
      %v705 = vrot.slane %v348, 2
      %v706 = vsel %vm678, %v704, %v705
      %v707 = vrot.slane %v349, 2
      %v708 = vsel %vm678, %v705, %v707
      %v709 = vrot.slane %v350, 2
      %v710 = vrot.slane %v351, 2
      %v711 = vsel %vm678, %v709, %v710
      %v712 = vrot.slane %v352, 2
      %v713 = vsel %vm678, %v710, %v712
      %v714 = vrot.slane %v353, 2
      %v715 = vrot.slane %v354, 2
      %v716 = vsel %vm678, %v714, %v715
      %v717 = vrot.slane %v355, 2
      %v718 = vsel %vm678, %v715, %v717
      %s719 = scalar_lea.vmem %s3, 4
      %v720 = vld [vmem:[%s719] sm:$0xf]
      %v721 = vsel %vm431, %v681, 0
      %v723 = vsel %vm431, %v683, 0
      %v725 = vsel %vm431, %v686, 0
      %v727 = vsel %vm431, %v688, 0
      %v729 = vsel %vm431, %v691, 0
      %v731 = vsel %vm431, %v693, 0
      %v733 = vsel %vm431, %v696, 0
      %v735 = vsel %vm431, %v698, 0
      %v737 = vsel %vm431, %v701, 0
      %v739 = vsel %vm431, %v703, 0
      %v741 = vsel %vm431, %v706, 0
      %v743 = vsel %vm431, %v708, 0
      %v745 = vsel %vm431, %v711, 0
      %v747 = vsel %vm431, %v713, 0
      %v749 = vsel %vm431, %v716, 0
      %v751 = vsel %vm431, %v718, 0
      %v754 = vsel %vm464, %v720, 0
      %756 = vmatprep.subr.mxu0 0.0
      %757 = vmatpush1.msra.mxu0 0.0
      %758 = vmatprep.subr.mxu0 0.0
      %759 = vmatpush1.msra.mxu0 0.0
      %760 = vmatprep.subr.mxu0 0.0
      %761 = vmatpush1.msra.mxu0 0.0
      %762 = vmatprep.subr.mxu0 0.0
      %763 = vmatpush1.msra.mxu0 0.0
      %764 = vmatprep.subr.mxu0 0.0
      %765 = vmatpush1.msra.mxu0 0.0
      %766 = vmatprep.subr.mxu0 0.0
      %767 = vmatpush1.msra.mxu0 0.0
      %768 = vmatprep.subr.mxu0 0.0
      %769 = vmatpush1.msra.mxu0 0.0
      %770 = vmatprep.subr.mxu0 0.0
      %771 = vmatpush1.msra.mxu0 0.0
      %772 = vmatprep.subr.mxu0 0.0
      %773 = vmatpush1.msra.mxu0 0.0
      %774 = vmatprep.subr.mxu0 0.0
      %775 = vmatpush1.msra.mxu0 0.0
      %776 = vmatprep.subr.mxu0 0.0
      %777 = vmatpush1.msra.mxu0 0.0
      %778 = vmatprep.subr.mxu0 0.0
      %779 = vmatpush1.msra.mxu0 0.0
      %780 = vmatprep.subr.mxu0 0.0
      %781 = vmatpush1.msra.mxu0 0.0
      %782 = vmatprep.subr.mxu0 0.0
      %783 = vmatpush1.msra.mxu0 0.0
      %784 = vmatprep.subr.mxu0 0.0
      %785 = vmatpush1.msra.mxu0 0.0
      %786 = vmatprep.subr.mxu0 0.0
      %787 = vmatpush1.msra.mxu0 %v754
      %788 = vmatprep.subr.mxu0 0.0
      %789 = vmatpush2.msra.mxu0 0.0
      %790 = vmatprep.subr.mxu0 0.0
      %791 = vmatpush2.msra.mxu0 0.0
      %792 = vmatprep.subr.mxu0 0.0
      %793 = vmatpush2.msra.mxu0 0.0
      %794 = vmatprep.subr.mxu0 0.0
      %795 = vmatpush2.msra.mxu0 0.0
      %796 = vmatprep.subr.mxu0 0.0
      %797 = vmatpush2.msra.mxu0 0.0
      %798 = vmatprep.subr.mxu0 0.0
      %799 = vmatpush2.msra.mxu0 0.0
      %800 = vmatprep.subr.mxu0 0.0
      %801 = vmatpush2.msra.mxu0 0.0
      %802 = vmatprep.subr.mxu0 0.0
      %803 = vmatpush2.msra.mxu0 0.0
      %804 = vmatprep.subr.mxu0 0.0
      %805 = vmatpush2.msra.mxu0 0.0
      %806 = vmatprep.subr.mxu0 0.0
      %807 = vmatpush2.msra.mxu0 0.0
      %808 = vmatprep.subr.mxu0 0.0
      %809 = vmatpush2.msra.mxu0 0.0
      %810 = vmatprep.subr.mxu0 0.0
      %811 = vmatpush2.msra.mxu0 0.0
      %812 = vmatprep.subr.mxu0 0.0
      %813 = vmatpush2.msra.mxu0 0.0
      %814 = vmatprep.subr.mxu0 0.0
      %815 = vmatpush2.msra.mxu0 0.0
      %816 = vmatprep.subr.mxu0 0.0
      %817 = vmatpush2.msra.mxu0 0.0
      %818 = vmatprep.subr.mxu0 0.0
      %819 = vmatpush2.msra.mxu0 0.0
      %820 = vmatprep.mubr.f32.mxu0 0.0
      %821 = vmatmul.mubr.f32.gmra.mxu0 %v721
      %v822 = vpop.f32.mrf.mxu0
      %v823 = vadd.f32 0.0, %v822
      %v824 = vpop.f32.mrf.mxu0
      %825 = vmatprep.mubr.f32.mxu0 0.0
      %826 = vmatmul.mubr.f32.gmra.mxu0 %v723
      %v827 = vpop.f32.mrf.mxu0
      %v828 = vadd.f32 0.0, %v827
      %v829 = vpop.f32.mrf.mxu0
      %830 = vmatprep.mubr.f32.mxu0 0.0
      %831 = vmatmul.mubr.f32.gmra.mxu0 %v725
      %v832 = vpop.f32.mrf.mxu0
      %v833 = vadd.f32 0.0, %v832
      %v834 = vpop.f32.mrf.mxu0
      %835 = vmatprep.mubr.f32.mxu0 0.0
      %836 = vmatmul.mubr.f32.gmra.mxu0 %v727
      %v837 = vpop.f32.mrf.mxu0
      %v838 = vadd.f32 0.0, %v837
      %v839 = vpop.f32.mrf.mxu0
      %840 = vmatprep.mubr.f32.mxu0 0.0
      %841 = vmatmul.mubr.f32.gmra.mxu0 %v729
      %v842 = vpop.f32.mrf.mxu0
      %v843 = vadd.f32 0.0, %v842
      %v844 = vpop.f32.mrf.mxu0
      %845 = vmatprep.mubr.f32.mxu0 0.0
      %846 = vmatmul.mubr.f32.gmra.mxu0 %v731
      %v847 = vpop.f32.mrf.mxu0
      %v848 = vadd.f32 0.0, %v847
      %v849 = vpop.f32.mrf.mxu0
      %850 = vmatprep.mubr.f32.mxu0 0.0
      %851 = vmatmul.mubr.f32.gmra.mxu0 %v733
      %v852 = vpop.f32.mrf.mxu0
      %v853 = vadd.f32 0.0, %v852
      %v854 = vpop.f32.mrf.mxu0
      %855 = vmatprep.mubr.f32.mxu0 0.0
      %856 = vmatmul.mubr.f32.gmra.mxu0 %v735
      %v857 = vpop.f32.mrf.mxu0
      %v858 = vadd.f32 0.0, %v857
      %v859 = vpop.f32.mrf.mxu0
      %860 = vmatprep.mubr.f32.mxu0 0.0
      %861 = vmatmul.mubr.f32.gmra.mxu0 %v737
      %v862 = vpop.f32.mrf.mxu0
      %v863 = vadd.f32 0.0, %v862
      %v864 = vpop.f32.mrf.mxu0
      %865 = vmatprep.mubr.f32.mxu0 0.0
      %866 = vmatmul.mubr.f32.gmra.mxu0 %v739
      %v867 = vpop.f32.mrf.mxu0
      %v868 = vadd.f32 0.0, %v867
      %v869 = vpop.f32.mrf.mxu0
      %870 = vmatprep.mubr.f32.mxu0 0.0
      %871 = vmatmul.mubr.f32.gmra.mxu0 %v741
      %v872 = vpop.f32.mrf.mxu0
      %v873 = vadd.f32 0.0, %v872
      %v874 = vpop.f32.mrf.mxu0
      %875 = vmatprep.mubr.f32.mxu0 0.0
      %876 = vmatmul.mubr.f32.gmra.mxu0 %v743
      %v877 = vpop.f32.mrf.mxu0
      %v878 = vadd.f32 0.0, %v877
      %v879 = vpop.f32.mrf.mxu0
      %880 = vmatprep.mubr.f32.mxu0 0.0
      %881 = vmatmul.mubr.f32.gmra.mxu0 %v745
      %v882 = vpop.f32.mrf.mxu0
      %v883 = vadd.f32 0.0, %v882
      %v884 = vpop.f32.mrf.mxu0
      %885 = vmatprep.mubr.f32.mxu0 0.0
      %886 = vmatmul.mubr.f32.gmra.mxu0 %v747
      %v887 = vpop.f32.mrf.mxu0
      %v888 = vadd.f32 0.0, %v887
      %v889 = vpop.f32.mrf.mxu0
      %890 = vmatprep.mubr.f32.mxu0 0.0
      %891 = vmatmul.mubr.f32.gmra.mxu0 %v749
      %v892 = vpop.f32.mrf.mxu0
      %v893 = vadd.f32 0.0, %v892
      %v894 = vpop.f32.mrf.mxu0
      %895 = vmatprep.mubr.f32.mxu0 0.0
      %896 = vmatmul.mubr.f32.gmra.mxu0 %v751
      %v897 = vpop.f32.mrf.mxu0
      %v898 = vadd.f32 0.0, %v897
      %v899 = vpop.f32.mrf.mxu0
      %900 = vdwg.mxu0
      %v901 = vsel %vm431, %v639, 0
      %v903 = vsel %vm431, %v641, 0
      %v905 = vsel %vm431, %v644, 0
      %v907 = vsel %vm431, %v646, 0
      %v909 = vsel %vm431, %v649, 0
      %v911 = vsel %vm431, %v651, 0
      %v913 = vsel %vm431, %v654, 0
      %v915 = vsel %vm431, %v656, 0
      %v917 = vsel %vm431, %v659, 0
      %v919 = vsel %vm431, %v661, 0
      %v921 = vsel %vm431, %v664, 0
      %v923 = vsel %vm431, %v666, 0
      %v925 = vsel %vm431, %v669, 0
      %v927 = vsel %vm431, %v671, 0
      %v929 = vsel %vm431, %v674, 0
      %v931 = vsel %vm431, %v676, 0
      %v934 = vsel %vm464, %v677, 0
      %936 = vmatprep.subr.mxu0 0.0
      %937 = vmatpush1.msra.mxu0 0.0
      %938 = vmatprep.subr.mxu0 0.0
      %939 = vmatpush1.msra.mxu0 0.0
      %940 = vmatprep.subr.mxu0 0.0
      %941 = vmatpush1.msra.mxu0 0.0
      %942 = vmatprep.subr.mxu0 0.0
      %943 = vmatpush1.msra.mxu0 0.0
      %944 = vmatprep.subr.mxu0 0.0
      %945 = vmatpush1.msra.mxu0 0.0
      %946 = vmatprep.subr.mxu0 0.0
      %947 = vmatpush1.msra.mxu0 0.0
      %948 = vmatprep.subr.mxu0 0.0
      %949 = vmatpush1.msra.mxu0 0.0
      %950 = vmatprep.subr.mxu0 0.0
      %951 = vmatpush1.msra.mxu0 0.0
      %952 = vmatprep.subr.mxu0 0.0
      %953 = vmatpush1.msra.mxu0 0.0
      %954 = vmatprep.subr.mxu0 0.0
      %955 = vmatpush1.msra.mxu0 0.0
      %956 = vmatprep.subr.mxu0 0.0
      %957 = vmatpush1.msra.mxu0 0.0
      %958 = vmatprep.subr.mxu0 0.0
      %959 = vmatpush1.msra.mxu0 0.0
      %960 = vmatprep.subr.mxu0 0.0
      %961 = vmatpush1.msra.mxu0 0.0
      %962 = vmatprep.subr.mxu0 0.0
      %963 = vmatpush1.msra.mxu0 0.0
      %964 = vmatprep.subr.mxu0 0.0
      %965 = vmatpush1.msra.mxu0 0.0
      %966 = vmatprep.subr.mxu0 0.0
      %967 = vmatpush1.msra.mxu0 %v934
      %968 = vmatprep.subr.mxu0 0.0
      %969 = vmatpush2.msra.mxu0 0.0
      %970 = vmatprep.subr.mxu0 0.0
      %971 = vmatpush2.msra.mxu0 0.0
      %972 = vmatprep.subr.mxu0 0.0
      %973 = vmatpush2.msra.mxu0 0.0
      %974 = vmatprep.subr.mxu0 0.0
      %975 = vmatpush2.msra.mxu0 0.0
      %976 = vmatprep.subr.mxu0 0.0
      %977 = vmatpush2.msra.mxu0 0.0
      %978 = vmatprep.subr.mxu0 0.0
      %979 = vmatpush2.msra.mxu0 0.0
      %980 = vmatprep.subr.mxu0 0.0
      %981 = vmatpush2.msra.mxu0 0.0
      %982 = vmatprep.subr.mxu0 0.0
      %983 = vmatpush2.msra.mxu0 0.0
      %984 = vmatprep.subr.mxu0 0.0
      %985 = vmatpush2.msra.mxu0 0.0
      %986 = vmatprep.subr.mxu0 0.0
      %987 = vmatpush2.msra.mxu0 0.0
      %988 = vmatprep.subr.mxu0 0.0
      %989 = vmatpush2.msra.mxu0 0.0
      %990 = vmatprep.subr.mxu0 0.0
      %991 = vmatpush2.msra.mxu0 0.0
      %992 = vmatprep.subr.mxu0 0.0
      %993 = vmatpush2.msra.mxu0 0.0
      %994 = vmatprep.subr.mxu0 0.0
      %995 = vmatpush2.msra.mxu0 0.0
      %996 = vmatprep.subr.mxu0 0.0
      %997 = vmatpush2.msra.mxu0 0.0
      %998 = vmatprep.subr.mxu0 0.0
      %999 = vmatpush2.msra.mxu0 0.0
      %1000 = vmatprep.mubr.f32.mxu0 0.0
      %1001 = vmatmul.mubr.f32.gmra.mxu0 %v901
      %v1002 = vpop.f32.mrf.mxu0
      %v1003 = vadd.f32 %v823, %v1002
      %v1004 = vpop.f32.mrf.mxu0
      %1005 = vmatprep.mubr.f32.mxu0 0.0
      %1006 = vmatmul.mubr.f32.gmra.mxu0 %v903
      %v1007 = vpop.f32.mrf.mxu0
      %v1008 = vadd.f32 %v828, %v1007
      %v1009 = vpop.f32.mrf.mxu0
      %1010 = vmatprep.mubr.f32.mxu0 0.0
      %1011 = vmatmul.mubr.f32.gmra.mxu0 %v905
      %v1012 = vpop.f32.mrf.mxu0
      %v1013 = vadd.f32 %v833, %v1012
      %v1014 = vpop.f32.mrf.mxu0
      %1015 = vmatprep.mubr.f32.mxu0 0.0
      %1016 = vmatmul.mubr.f32.gmra.mxu0 %v907
      %v1017 = vpop.f32.mrf.mxu0
      %v1018 = vadd.f32 %v838, %v1017
      %v1019 = vpop.f32.mrf.mxu0
      %1020 = vmatprep.mubr.f32.mxu0 0.0
      %1021 = vmatmul.mubr.f32.gmra.mxu0 %v909
      %v1022 = vpop.f32.mrf.mxu0
      %v1023 = vadd.f32 %v843, %v1022
      %v1024 = vpop.f32.mrf.mxu0
      %1025 = vmatprep.mubr.f32.mxu0 0.0
      %1026 = vmatmul.mubr.f32.gmra.mxu0 %v911
      %v1027 = vpop.f32.mrf.mxu0
      %v1028 = vadd.f32 %v848, %v1027
      %v1029 = vpop.f32.mrf.mxu0
      %1030 = vmatprep.mubr.f32.mxu0 0.0
      %1031 = vmatmul.mubr.f32.gmra.mxu0 %v913
      %v1032 = vpop.f32.mrf.mxu0
      %v1033 = vadd.f32 %v853, %v1032
      %v1034 = vpop.f32.mrf.mxu0
      %1035 = vmatprep.mubr.f32.mxu0 0.0
      %1036 = vmatmul.mubr.f32.gmra.mxu0 %v915
      %v1037 = vpop.f32.mrf.mxu0
      %v1038 = vadd.f32 %v858, %v1037
      %v1039 = vpop.f32.mrf.mxu0
      %1040 = vmatprep.mubr.f32.mxu0 0.0
      %1041 = vmatmul.mubr.f32.gmra.mxu0 %v917
      %v1042 = vpop.f32.mrf.mxu0
      %v1043 = vadd.f32 %v863, %v1042
      %v1044 = vpop.f32.mrf.mxu0
      %1045 = vmatprep.mubr.f32.mxu0 0.0
      %1046 = vmatmul.mubr.f32.gmra.mxu0 %v919
      %v1047 = vpop.f32.mrf.mxu0
      %v1048 = vadd.f32 %v868, %v1047
      %v1049 = vpop.f32.mrf.mxu0
      %1050 = vmatprep.mubr.f32.mxu0 0.0
      %1051 = vmatmul.mubr.f32.gmra.mxu0 %v921
      %v1052 = vpop.f32.mrf.mxu0
      %v1053 = vadd.f32 %v873, %v1052
      %v1054 = vpop.f32.mrf.mxu0
      %1055 = vmatprep.mubr.f32.mxu0 0.0
      %1056 = vmatmul.mubr.f32.gmra.mxu0 %v923
      %v1057 = vpop.f32.mrf.mxu0
      %v1058 = vadd.f32 %v878, %v1057
      %v1059 = vpop.f32.mrf.mxu0
      %1060 = vmatprep.mubr.f32.mxu0 0.0
      %1061 = vmatmul.mubr.f32.gmra.mxu0 %v925
      %v1062 = vpop.f32.mrf.mxu0
      %v1063 = vadd.f32 %v883, %v1062
      %v1064 = vpop.f32.mrf.mxu0
      %1065 = vmatprep.mubr.f32.mxu0 0.0
      %1066 = vmatmul.mubr.f32.gmra.mxu0 %v927
      %v1067 = vpop.f32.mrf.mxu0
      %v1068 = vadd.f32 %v888, %v1067
      %v1069 = vpop.f32.mrf.mxu0
      %1070 = vmatprep.mubr.f32.mxu0 0.0
      %1071 = vmatmul.mubr.f32.gmra.mxu0 %v929
      %v1072 = vpop.f32.mrf.mxu0
      %v1073 = vadd.f32 %v893, %v1072
      %v1074 = vpop.f32.mrf.mxu0
      %1075 = vmatprep.mubr.f32.mxu0 0.0
      %1076 = vmatmul.mubr.f32.gmra.mxu0 %v931
      %v1077 = vpop.f32.mrf.mxu0
      %v1078 = vadd.f32 %v898, %v1077
      %v1079 = vpop.f32.mrf.mxu0
      %1080 = vdwg.mxu0
      %vm1081 = vcmask 1044480
      %v1082 = vrot.slane %v332, 3
      %v1083 = vrot.slane %v333, 3
      %v1084 = vsel %vm1081, %v1082, %v1083
      %v1085 = vrot.slane %v334, 3
      %v1086 = vsel %vm1081, %v1083, %v1085
      %v1087 = vrot.slane %v335, 3
      %v1088 = vrot.slane %v336, 3
      %v1089 = vsel %vm1081, %v1087, %v1088
      %v1090 = vrot.slane %v337, 3
      %v1091 = vsel %vm1081, %v1088, %v1090
      %v1092 = vrot.slane %v338, 3
      %v1093 = vrot.slane %v339, 3
      %v1094 = vsel %vm1081, %v1092, %v1093
      %v1095 = vrot.slane %v340, 3
      %v1096 = vsel %vm1081, %v1093, %v1095
      %v1097 = vrot.slane %v341, 3
      %v1098 = vrot.slane %v342, 3
      %v1099 = vsel %vm1081, %v1097, %v1098
      %v1100 = vrot.slane %v343, 3
      %v1101 = vsel %vm1081, %v1098, %v1100
      %v1102 = vrot.slane %v344, 3
      %v1103 = vrot.slane %v345, 3
      %v1104 = vsel %vm1081, %v1102, %v1103
      %v1105 = vrot.slane %v346, 3
      %v1106 = vsel %vm1081, %v1103, %v1105
      %v1107 = vrot.slane %v347, 3
      %v1108 = vrot.slane %v348, 3
      %v1109 = vsel %vm1081, %v1107, %v1108
      %v1110 = vrot.slane %v349, 3
      %v1111 = vsel %vm1081, %v1108, %v1110
      %v1112 = vrot.slane %v350, 3
      %v1113 = vrot.slane %v351, 3
      %v1114 = vsel %vm1081, %v1112, %v1113
      %v1115 = vrot.slane %v352, 3
      %v1116 = vsel %vm1081, %v1113, %v1115
      %v1117 = vrot.slane %v353, 3
      %v1118 = vrot.slane %v354, 3
      %v1119 = vsel %vm1081, %v1117, %v1118
      %v1120 = vrot.slane %v355, 3
      %v1121 = vsel %vm1081, %v1118, %v1120
      %s1122 = scalar_lea.vmem %s3, 8
      %v1123 = vld [vmem:[%s1122] sm:$0xf]
      %v1124 = vsel %vm431, %v1084, 0
      %v1126 = vsel %vm431, %v1086, 0
      %v1128 = vsel %vm431, %v1089, 0
      %v1130 = vsel %vm431, %v1091, 0
      %v1132 = vsel %vm431, %v1094, 0
      %v1134 = vsel %vm431, %v1096, 0
      %v1136 = vsel %vm431, %v1099, 0
      %v1138 = vsel %vm431, %v1101, 0
      %v1140 = vsel %vm431, %v1104, 0
      %v1142 = vsel %vm431, %v1106, 0
      %v1144 = vsel %vm431, %v1109, 0
      %v1146 = vsel %vm431, %v1111, 0
      %v1148 = vsel %vm431, %v1114, 0
      %v1150 = vsel %vm431, %v1116, 0
      %v1152 = vsel %vm431, %v1119, 0
      %v1154 = vsel %vm431, %v1121, 0
      %v1157 = vsel %vm464, %v1123, 0
      %1159 = vmatprep.subr.mxu0 0.0
      %1160 = vmatpush1.msra.mxu0 0.0
      %1161 = vmatprep.subr.mxu0 0.0
      %1162 = vmatpush1.msra.mxu0 0.0
      %1163 = vmatprep.subr.mxu0 0.0
      %1164 = vmatpush1.msra.mxu0 0.0
      %1165 = vmatprep.subr.mxu0 0.0
      %1166 = vmatpush1.msra.mxu0 0.0
      %1167 = vmatprep.subr.mxu0 0.0
      %1168 = vmatpush1.msra.mxu0 0.0
      %1169 = vmatprep.subr.mxu0 0.0
      %1170 = vmatpush1.msra.mxu0 0.0
      %1171 = vmatprep.subr.mxu0 0.0
      %1172 = vmatpush1.msra.mxu0 0.0
      %1173 = vmatprep.subr.mxu0 0.0
      %1174 = vmatpush1.msra.mxu0 0.0
      %1175 = vmatprep.subr.mxu0 0.0
      %1176 = vmatpush1.msra.mxu0 0.0
      %1177 = vmatprep.subr.mxu0 0.0
      %1178 = vmatpush1.msra.mxu0 0.0
      %1179 = vmatprep.subr.mxu0 0.0
      %1180 = vmatpush1.msra.mxu0 0.0
      %1181 = vmatprep.subr.mxu0 0.0
      %1182 = vmatpush1.msra.mxu0 0.0
      %1183 = vmatprep.subr.mxu0 0.0
      %1184 = vmatpush1.msra.mxu0 0.0
      %1185 = vmatprep.subr.mxu0 0.0
      %1186 = vmatpush1.msra.mxu0 0.0
      %1187 = vmatprep.subr.mxu0 0.0
      %1188 = vmatpush1.msra.mxu0 0.0
      %1189 = vmatprep.subr.mxu0 0.0
      %1190 = vmatpush1.msra.mxu0 %v1157
      %1191 = vmatprep.subr.mxu0 0.0
      %1192 = vmatpush2.msra.mxu0 0.0
      %1193 = vmatprep.subr.mxu0 0.0
      %1194 = vmatpush2.msra.mxu0 0.0
      %1195 = vmatprep.subr.mxu0 0.0
      %1196 = vmatpush2.msra.mxu0 0.0
      %1197 = vmatprep.subr.mxu0 0.0
      %1198 = vmatpush2.msra.mxu0 0.0
      %1199 = vmatprep.subr.mxu0 0.0
      %1200 = vmatpush2.msra.mxu0 0.0
      %1201 = vmatprep.subr.mxu0 0.0
      %1202 = vmatpush2.msra.mxu0 0.0
      %1203 = vmatprep.subr.mxu0 0.0
      %1204 = vmatpush2.msra.mxu0 0.0
      %1205 = vmatprep.subr.mxu0 0.0
      %1206 = vmatpush2.msra.mxu0 0.0
      %1207 = vmatprep.subr.mxu0 0.0
      %1208 = vmatpush2.msra.mxu0 0.0
      %1209 = vmatprep.subr.mxu0 0.0
      %1210 = vmatpush2.msra.mxu0 0.0
      %1211 = vmatprep.subr.mxu0 0.0
      %1212 = vmatpush2.msra.mxu0 0.0
      %1213 = vmatprep.subr.mxu0 0.0
      %1214 = vmatpush2.msra.mxu0 0.0
      %1215 = vmatprep.subr.mxu0 0.0
      %1216 = vmatpush2.msra.mxu0 0.0
      %1217 = vmatprep.subr.mxu0 0.0
      %1218 = vmatpush2.msra.mxu0 0.0
      %1219 = vmatprep.subr.mxu0 0.0
      %1220 = vmatpush2.msra.mxu0 0.0
      %1221 = vmatprep.subr.mxu0 0.0
      %1222 = vmatpush2.msra.mxu0 0.0
      %1223 = vmatprep.mubr.f32.mxu0 0.0
      %1224 = vmatmul.mubr.f32.gmra.mxu0 %v1124
      %v1225 = vpop.f32.mrf.mxu0
      %v1226 = vadd.f32 0.0, %v1225
      %v1227 = vpop.f32.mrf.mxu0
      %1228 = vmatprep.mubr.f32.mxu0 0.0
      %1229 = vmatmul.mubr.f32.gmra.mxu0 %v1126
      %v1230 = vpop.f32.mrf.mxu0
      %v1231 = vadd.f32 0.0, %v1230
      %v1232 = vpop.f32.mrf.mxu0
      %1233 = vmatprep.mubr.f32.mxu0 0.0
      %1234 = vmatmul.mubr.f32.gmra.mxu0 %v1128
      %v1235 = vpop.f32.mrf.mxu0
      %v1236 = vadd.f32 0.0, %v1235
      %v1237 = vpop.f32.mrf.mxu0
      %1238 = vmatprep.mubr.f32.mxu0 0.0
      %1239 = vmatmul.mubr.f32.gmra.mxu0 %v1130
      %v1240 = vpop.f32.mrf.mxu0
      %v1241 = vadd.f32 0.0, %v1240
      %v1242 = vpop.f32.mrf.mxu0
      %1243 = vmatprep.mubr.f32.mxu0 0.0
      %1244 = vmatmul.mubr.f32.gmra.mxu0 %v1132
      %v1245 = vpop.f32.mrf.mxu0
      %v1246 = vadd.f32 0.0, %v1245
      %v1247 = vpop.f32.mrf.mxu0
      %1248 = vmatprep.mubr.f32.mxu0 0.0
      %1249 = vmatmul.mubr.f32.gmra.mxu0 %v1134
      %v1250 = vpop.f32.mrf.mxu0
      %v1251 = vadd.f32 0.0, %v1250
      %v1252 = vpop.f32.mrf.mxu0
      %1253 = vmatprep.mubr.f32.mxu0 0.0
      %1254 = vmatmul.mubr.f32.gmra.mxu0 %v1136
      %v1255 = vpop.f32.mrf.mxu0
      %v1256 = vadd.f32 0.0, %v1255
      %v1257 = vpop.f32.mrf.mxu0
      %1258 = vmatprep.mubr.f32.mxu0 0.0
      %1259 = vmatmul.mubr.f32.gmra.mxu0 %v1138
      %v1260 = vpop.f32.mrf.mxu0
      %v1261 = vadd.f32 0.0, %v1260
      %v1262 = vpop.f32.mrf.mxu0
      %1263 = vmatprep.mubr.f32.mxu0 0.0
      %1264 = vmatmul.mubr.f32.gmra.mxu0 %v1140
      %v1265 = vpop.f32.mrf.mxu0
      %v1266 = vadd.f32 0.0, %v1265
      %v1267 = vpop.f32.mrf.mxu0
      %1268 = vmatprep.mubr.f32.mxu0 0.0
      %1269 = vmatmul.mubr.f32.gmra.mxu0 %v1142
      %v1270 = vpop.f32.mrf.mxu0
      %v1271 = vadd.f32 0.0, %v1270
      %v1272 = vpop.f32.mrf.mxu0
      %1273 = vmatprep.mubr.f32.mxu0 0.0
      %1274 = vmatmul.mubr.f32.gmra.mxu0 %v1144
      %v1275 = vpop.f32.mrf.mxu0
      %v1276 = vadd.f32 0.0, %v1275
      %v1277 = vpop.f32.mrf.mxu0
      %1278 = vmatprep.mubr.f32.mxu0 0.0
      %1279 = vmatmul.mubr.f32.gmra.mxu0 %v1146
      %v1280 = vpop.f32.mrf.mxu0
      %v1281 = vadd.f32 0.0, %v1280
      %v1282 = vpop.f32.mrf.mxu0
      %1283 = vmatprep.mubr.f32.mxu0 0.0
      %1284 = vmatmul.mubr.f32.gmra.mxu0 %v1148
      %v1285 = vpop.f32.mrf.mxu0
      %v1286 = vadd.f32 0.0, %v1285
      %v1287 = vpop.f32.mrf.mxu0
      %1288 = vmatprep.mubr.f32.mxu0 0.0
      %1289 = vmatmul.mubr.f32.gmra.mxu0 %v1150
      %v1290 = vpop.f32.mrf.mxu0
      %v1291 = vadd.f32 0.0, %v1290
      %v1292 = vpop.f32.mrf.mxu0
      %1293 = vmatprep.mubr.f32.mxu0 0.0
      %1294 = vmatmul.mubr.f32.gmra.mxu0 %v1152
      %v1295 = vpop.f32.mrf.mxu0
      %v1296 = vadd.f32 0.0, %v1295
      %v1297 = vpop.f32.mrf.mxu0
      %1298 = vmatprep.mubr.f32.mxu0 0.0
      %1299 = vmatmul.mubr.f32.gmra.mxu0 %v1154
      %v1300 = vpop.f32.mrf.mxu0
      %v1301 = vadd.f32 0.0, %v1300
      %v1302 = vpop.f32.mrf.mxu0
      %1303 = vdwg.mxu0
      %v1304 = vadd.f32 %v1003, %v1226
      %v1305 = vadd.f32 %v1008, %v1231
      %v1306 = vadd.f32 %v1013, %v1236
      %v1307 = vadd.f32 %v1018, %v1241
      %v1308 = vadd.f32 %v1023, %v1246
      %v1309 = vadd.f32 %v1028, %v1251
      %v1310 = vadd.f32 %v1033, %v1256
      %v1311 = vadd.f32 %v1038, %v1261
      %v1312 = vadd.f32 %v1043, %v1266
      %v1313 = vadd.f32 %v1048, %v1271
      %v1314 = vadd.f32 %v1053, %v1276
      %v1315 = vadd.f32 %v1058, %v1281
      %v1316 = vadd.f32 %v1063, %v1286
      %v1317 = vadd.f32 %v1068, %v1291
      %v1318 = vadd.f32 %v1073, %v1296
      %v1319 = vadd.f32 %v1078, %v1301
      %v1323 = vrot.slane %v356, 1
      %v1324 = vrot.slane %v357, 1
      %v1325 = vsel %vm389, %v1323, %v1324
      %v1326 = vrot.slane %v358, 1
      %v1327 = vsel %vm389, %v1324, %v1326
      %s1328 = scalar_lea.vmem %s3, 12
      %v1329 = vld [vmem:[%s1328] sm:$0xf]
      %v1330 = vsel %vm431, %v1325, 0
      %v1332 = vsel %vm431, %v1327, 0
      %v1335 = vsel %vm464, %v1329, 0
      %1337 = vmatprep.subr.mxu0 0.0
      %1338 = vmatpush1.msra.mxu0 0.0
      %1339 = vmatprep.subr.mxu0 0.0
      %1340 = vmatpush1.msra.mxu0 0.0
      %1341 = vmatprep.subr.mxu0 0.0
      %1342 = vmatpush1.msra.mxu0 0.0
      %1343 = vmatprep.subr.mxu0 0.0
      %1344 = vmatpush1.msra.mxu0 0.0
      %1345 = vmatprep.subr.mxu0 0.0
      %1346 = vmatpush1.msra.mxu0 0.0
      %1347 = vmatprep.subr.mxu0 0.0
      %1348 = vmatpush1.msra.mxu0 0.0
      %1349 = vmatprep.subr.mxu0 0.0
      %1350 = vmatpush1.msra.mxu0 0.0
      %1351 = vmatprep.subr.mxu0 0.0
      %1352 = vmatpush1.msra.mxu0 0.0
      %1353 = vmatprep.subr.mxu0 0.0
      %1354 = vmatpush1.msra.mxu0 0.0
      %1355 = vmatprep.subr.mxu0 0.0
      %1356 = vmatpush1.msra.mxu0 0.0
      %1357 = vmatprep.subr.mxu0 0.0
      %1358 = vmatpush1.msra.mxu0 0.0
      %1359 = vmatprep.subr.mxu0 0.0
      %1360 = vmatpush1.msra.mxu0 0.0
      %1361 = vmatprep.subr.mxu0 0.0
      %1362 = vmatpush1.msra.mxu0 0.0
      %1363 = vmatprep.subr.mxu0 0.0
      %1364 = vmatpush1.msra.mxu0 0.0
      %1365 = vmatprep.subr.mxu0 0.0
      %1366 = vmatpush1.msra.mxu0 0.0
      %1367 = vmatprep.subr.mxu0 0.0
      %1368 = vmatpush1.msra.mxu0 %v1335
      %1369 = vmatprep.subr.mxu0 0.0
      %1370 = vmatpush2.msra.mxu0 0.0
      %1371 = vmatprep.subr.mxu0 0.0
      %1372 = vmatpush2.msra.mxu0 0.0
      %1373 = vmatprep.subr.mxu0 0.0
      %1374 = vmatpush2.msra.mxu0 0.0
      %1375 = vmatprep.subr.mxu0 0.0
      %1376 = vmatpush2.msra.mxu0 0.0
      %1377 = vmatprep.subr.mxu0 0.0
      %1378 = vmatpush2.msra.mxu0 0.0
      %1379 = vmatprep.subr.mxu0 0.0
      %1380 = vmatpush2.msra.mxu0 0.0
      %1381 = vmatprep.subr.mxu0 0.0
      %1382 = vmatpush2.msra.mxu0 0.0
      %1383 = vmatprep.subr.mxu0 0.0
      %1384 = vmatpush2.msra.mxu0 0.0
      %1385 = vmatprep.subr.mxu0 0.0
      %1386 = vmatpush2.msra.mxu0 0.0
      %1387 = vmatprep.subr.mxu0 0.0
      %1388 = vmatpush2.msra.mxu0 0.0
      %1389 = vmatprep.subr.mxu0 0.0
      %1390 = vmatpush2.msra.mxu0 0.0
      %1391 = vmatprep.subr.mxu0 0.0
      %1392 = vmatpush2.msra.mxu0 0.0
      %1393 = vmatprep.subr.mxu0 0.0
      %1394 = vmatpush2.msra.mxu0 0.0
      %1395 = vmatprep.subr.mxu0 0.0
      %1396 = vmatpush2.msra.mxu0 0.0
      %1397 = vmatprep.subr.mxu0 0.0
      %1398 = vmatpush2.msra.mxu0 0.0
      %1399 = vmatprep.subr.mxu0 0.0
      %1400 = vmatpush2.msra.mxu0 0.0
      %1401 = vmatprep.mubr.f32.mxu0 0.0
      %1402 = vmatmul.mubr.f32.gmra.mxu0 %v905
      %v1403 = vpop.f32.mrf.mxu0
      %v1404 = vadd.f32 0.0, %v1403
      %v1405 = vpop.f32.mrf.mxu0
      %1406 = vmatprep.mubr.f32.mxu0 0.0
      %1407 = vmatmul.mubr.f32.gmra.mxu0 %v907
      %v1408 = vpop.f32.mrf.mxu0
      %v1409 = vadd.f32 0.0, %v1408
      %v1410 = vpop.f32.mrf.mxu0
      %1411 = vmatprep.mubr.f32.mxu0 0.0
      %1412 = vmatmul.mubr.f32.gmra.mxu0 %v909
      %v1413 = vpop.f32.mrf.mxu0
      %v1414 = vadd.f32 0.0, %v1413
      %v1415 = vpop.f32.mrf.mxu0
      %1416 = vmatprep.mubr.f32.mxu0 0.0
      %1417 = vmatmul.mubr.f32.gmra.mxu0 %v911
      %v1418 = vpop.f32.mrf.mxu0
      %v1419 = vadd.f32 0.0, %v1418
      %v1420 = vpop.f32.mrf.mxu0
      %1421 = vmatprep.mubr.f32.mxu0 0.0
      %1422 = vmatmul.mubr.f32.gmra.mxu0 %v913
      %v1423 = vpop.f32.mrf.mxu0
      %v1424 = vadd.f32 0.0, %v1423
      %v1425 = vpop.f32.mrf.mxu0
      %1426 = vmatprep.mubr.f32.mxu0 0.0
      %1427 = vmatmul.mubr.f32.gmra.mxu0 %v915
      %v1428 = vpop.f32.mrf.mxu0
      %v1429 = vadd.f32 0.0, %v1428
      %v1430 = vpop.f32.mrf.mxu0
      %1431 = vmatprep.mubr.f32.mxu0 0.0
      %1432 = vmatmul.mubr.f32.gmra.mxu0 %v917
      %v1433 = vpop.f32.mrf.mxu0
      %v1434 = vadd.f32 0.0, %v1433
      %v1435 = vpop.f32.mrf.mxu0
      %1436 = vmatprep.mubr.f32.mxu0 0.0
      %1437 = vmatmul.mubr.f32.gmra.mxu0 %v919
      %v1438 = vpop.f32.mrf.mxu0
      %v1439 = vadd.f32 0.0, %v1438
      %v1440 = vpop.f32.mrf.mxu0
      %1441 = vmatprep.mubr.f32.mxu0 0.0
      %1442 = vmatmul.mubr.f32.gmra.mxu0 %v921
      %v1443 = vpop.f32.mrf.mxu0
      %v1444 = vadd.f32 0.0, %v1443
      %v1445 = vpop.f32.mrf.mxu0
      %1446 = vmatprep.mubr.f32.mxu0 0.0
      %1447 = vmatmul.mubr.f32.gmra.mxu0 %v923
      %v1448 = vpop.f32.mrf.mxu0
      %v1449 = vadd.f32 0.0, %v1448
      %v1450 = vpop.f32.mrf.mxu0
      %1451 = vmatprep.mubr.f32.mxu0 0.0
      %1452 = vmatmul.mubr.f32.gmra.mxu0 %v925
      %v1453 = vpop.f32.mrf.mxu0
      %v1454 = vadd.f32 0.0, %v1453
      %v1455 = vpop.f32.mrf.mxu0
      %1456 = vmatprep.mubr.f32.mxu0 0.0
      %1457 = vmatmul.mubr.f32.gmra.mxu0 %v927
      %v1458 = vpop.f32.mrf.mxu0
      %v1459 = vadd.f32 0.0, %v1458
      %v1460 = vpop.f32.mrf.mxu0
      %1461 = vmatprep.mubr.f32.mxu0 0.0
      %1462 = vmatmul.mubr.f32.gmra.mxu0 %v929
      %v1463 = vpop.f32.mrf.mxu0
      %v1464 = vadd.f32 0.0, %v1463
      %v1465 = vpop.f32.mrf.mxu0
      %1466 = vmatprep.mubr.f32.mxu0 0.0
      %1467 = vmatmul.mubr.f32.gmra.mxu0 %v931
      %v1468 = vpop.f32.mrf.mxu0
      %v1469 = vadd.f32 0.0, %v1468
      %v1470 = vpop.f32.mrf.mxu0
      %1471 = vmatprep.mubr.f32.mxu0 0.0
      %1472 = vmatmul.mubr.f32.gmra.mxu0 %v1330
      %v1473 = vpop.f32.mrf.mxu0
      %v1474 = vadd.f32 0.0, %v1473
      %v1475 = vpop.f32.mrf.mxu0
      %1476 = vmatprep.mubr.f32.mxu0 0.0
      %1477 = vmatmul.mubr.f32.gmra.mxu0 %v1332
      %v1478 = vpop.f32.mrf.mxu0
      %v1479 = vadd.f32 0.0, %v1478
      %v1480 = vpop.f32.mrf.mxu0
      %1481 = vdwg.mxu0
      %v1482 = vadd.f32 %v1304, %v1404
      %v1483 = vadd.f32 %v1305, %v1409
      %v1484 = vadd.f32 %v1306, %v1414
      %v1485 = vadd.f32 %v1307, %v1419
      %v1486 = vadd.f32 %v1308, %v1424
      %v1487 = vadd.f32 %v1309, %v1429
      %v1488 = vadd.f32 %v1310, %v1434
      %v1489 = vadd.f32 %v1311, %v1439
      %v1490 = vadd.f32 %v1312, %v1444
      %v1491 = vadd.f32 %v1313, %v1449
      %v1492 = vadd.f32 %v1314, %v1454
      %v1493 = vadd.f32 %v1315, %v1459
      %v1494 = vadd.f32 %v1316, %v1464
      %v1495 = vadd.f32 %v1317, %v1469
      %v1496 = vadd.f32 %v1318, %v1474
      %v1497 = vadd.f32 %v1319, %v1479
      %v1498 = vrot.slane %v356, 2
      %v1499 = vrot.slane %v357, 2
      %v1500 = vsel %vm678, %v1498, %v1499
      %v1501 = vrot.slane %v358, 2
      %v1502 = vsel %vm678, %v1499, %v1501
      %s1503 = scalar_lea.vmem %s3, 16
      %v1504 = vld [vmem:[%s1503] sm:$0xf]
      %v1505 = vsel %vm431, %v1500, 0
      %v1507 = vsel %vm431, %v1502, 0
      %v1510 = vsel %vm464, %v1504, 0
      %1512 = vmatprep.subr.mxu0 0.0
      %1513 = vmatpush1.msra.mxu0 0.0
      %1514 = vmatprep.subr.mxu0 0.0
      %1515 = vmatpush1.msra.mxu0 0.0
      %1516 = vmatprep.subr.mxu0 0.0
      %1517 = vmatpush1.msra.mxu0 0.0
      %1518 = vmatprep.subr.mxu0 0.0
      %1519 = vmatpush1.msra.mxu0 0.0
      %1520 = vmatprep.subr.mxu0 0.0
      %1521 = vmatpush1.msra.mxu0 0.0
      %1522 = vmatprep.subr.mxu0 0.0
      %1523 = vmatpush1.msra.mxu0 0.0
      %1524 = vmatprep.subr.mxu0 0.0
      %1525 = vmatpush1.msra.mxu0 0.0
      %1526 = vmatprep.subr.mxu0 0.0
      %1527 = vmatpush1.msra.mxu0 0.0
      %1528 = vmatprep.subr.mxu0 0.0
      %1529 = vmatpush1.msra.mxu0 0.0
      %1530 = vmatprep.subr.mxu0 0.0
      %1531 = vmatpush1.msra.mxu0 0.0
      %1532 = vmatprep.subr.mxu0 0.0
      %1533 = vmatpush1.msra.mxu0 0.0
      %1534 = vmatprep.subr.mxu0 0.0
      %1535 = vmatpush1.msra.mxu0 0.0
      %1536 = vmatprep.subr.mxu0 0.0
      %1537 = vmatpush1.msra.mxu0 0.0
      %1538 = vmatprep.subr.mxu0 0.0
      %1539 = vmatpush1.msra.mxu0 0.0
      %1540 = vmatprep.subr.mxu0 0.0
      %1541 = vmatpush1.msra.mxu0 0.0
      %1542 = vmatprep.subr.mxu0 0.0
      %1543 = vmatpush1.msra.mxu0 %v1510
      %1544 = vmatprep.subr.mxu0 0.0
      %1545 = vmatpush2.msra.mxu0 0.0
      %1546 = vmatprep.subr.mxu0 0.0
      %1547 = vmatpush2.msra.mxu0 0.0
      %1548 = vmatprep.subr.mxu0 0.0
      %1549 = vmatpush2.msra.mxu0 0.0
      %1550 = vmatprep.subr.mxu0 0.0
      %1551 = vmatpush2.msra.mxu0 0.0
      %1552 = vmatprep.subr.mxu0 0.0
      %1553 = vmatpush2.msra.mxu0 0.0
      %1554 = vmatprep.subr.mxu0 0.0
      %1555 = vmatpush2.msra.mxu0 0.0
      %1556 = vmatprep.subr.mxu0 0.0
      %1557 = vmatpush2.msra.mxu0 0.0
      %1558 = vmatprep.subr.mxu0 0.0
      %1559 = vmatpush2.msra.mxu0 0.0
      %1560 = vmatprep.subr.mxu0 0.0
      %1561 = vmatpush2.msra.mxu0 0.0
      %1562 = vmatprep.subr.mxu0 0.0
      %1563 = vmatpush2.msra.mxu0 0.0
      %1564 = vmatprep.subr.mxu0 0.0
      %1565 = vmatpush2.msra.mxu0 0.0
      %1566 = vmatprep.subr.mxu0 0.0
      %1567 = vmatpush2.msra.mxu0 0.0
      %1568 = vmatprep.subr.mxu0 0.0
      %1569 = vmatpush2.msra.mxu0 0.0
      %1570 = vmatprep.subr.mxu0 0.0
      %1571 = vmatpush2.msra.mxu0 0.0
      %1572 = vmatprep.subr.mxu0 0.0
      %1573 = vmatpush2.msra.mxu0 0.0
      %1574 = vmatprep.subr.mxu0 0.0
      %1575 = vmatpush2.msra.mxu0 0.0
      %1576 = vmatprep.mubr.f32.mxu0 0.0
      %1577 = vmatmul.mubr.f32.gmra.mxu0 %v725
      %v1578 = vpop.f32.mrf.mxu0
      %v1579 = vadd.f32 0.0, %v1578
      %v1580 = vpop.f32.mrf.mxu0
      %1581 = vmatprep.mubr.f32.mxu0 0.0
      %1582 = vmatmul.mubr.f32.gmra.mxu0 %v727
      %v1583 = vpop.f32.mrf.mxu0
      %v1584 = vadd.f32 0.0, %v1583
      %v1585 = vpop.f32.mrf.mxu0
      %1586 = vmatprep.mubr.f32.mxu0 0.0
      %1587 = vmatmul.mubr.f32.gmra.mxu0 %v729
      %v1588 = vpop.f32.mrf.mxu0
      %v1589 = vadd.f32 0.0, %v1588
      %v1590 = vpop.f32.mrf.mxu0
      %1591 = vmatprep.mubr.f32.mxu0 0.0
      %1592 = vmatmul.mubr.f32.gmra.mxu0 %v731
      %v1593 = vpop.f32.mrf.mxu0
      %v1594 = vadd.f32 0.0, %v1593
      %v1595 = vpop.f32.mrf.mxu0
      %1596 = vmatprep.mubr.f32.mxu0 0.0
      %1597 = vmatmul.mubr.f32.gmra.mxu0 %v733
      %v1598 = vpop.f32.mrf.mxu0
      %v1599 = vadd.f32 0.0, %v1598
      %v1600 = vpop.f32.mrf.mxu0
      %1601 = vmatprep.mubr.f32.mxu0 0.0
      %1602 = vmatmul.mubr.f32.gmra.mxu0 %v735
      %v1603 = vpop.f32.mrf.mxu0
      %v1604 = vadd.f32 0.0, %v1603
      %v1605 = vpop.f32.mrf.mxu0
      %1606 = vmatprep.mubr.f32.mxu0 0.0
      %1607 = vmatmul.mubr.f32.gmra.mxu0 %v737
      %v1608 = vpop.f32.mrf.mxu0
      %v1609 = vadd.f32 0.0, %v1608
      %v1610 = vpop.f32.mrf.mxu0
      %1611 = vmatprep.mubr.f32.mxu0 0.0
      %1612 = vmatmul.mubr.f32.gmra.mxu0 %v739
      %v1613 = vpop.f32.mrf.mxu0
      %v1614 = vadd.f32 0.0, %v1613
      %v1615 = vpop.f32.mrf.mxu0
      %1616 = vmatprep.mubr.f32.mxu0 0.0
      %1617 = vmatmul.mubr.f32.gmra.mxu0 %v741
      %v1618 = vpop.f32.mrf.mxu0
      %v1619 = vadd.f32 0.0, %v1618
      %v1620 = vpop.f32.mrf.mxu0
      %1621 = vmatprep.mubr.f32.mxu0 0.0
      %1622 = vmatmul.mubr.f32.gmra.mxu0 %v743
      %v1623 = vpop.f32.mrf.mxu0
      %v1624 = vadd.f32 0.0, %v1623
      %v1625 = vpop.f32.mrf.mxu0
      %1626 = vmatprep.mubr.f32.mxu0 0.0
      %1627 = vmatmul.mubr.f32.gmra.mxu0 %v745
      %v1628 = vpop.f32.mrf.mxu0
      %v1629 = vadd.f32 0.0, %v1628
      %v1630 = vpop.f32.mrf.mxu0
      %1631 = vmatprep.mubr.f32.mxu0 0.0
      %1632 = vmatmul.mubr.f32.gmra.mxu0 %v747
      %v1633 = vpop.f32.mrf.mxu0
      %v1634 = vadd.f32 0.0, %v1633
      %v1635 = vpop.f32.mrf.mxu0
      %1636 = vmatprep.mubr.f32.mxu0 0.0
      %1637 = vmatmul.mubr.f32.gmra.mxu0 %v749
      %v1638 = vpop.f32.mrf.mxu0
      %v1639 = vadd.f32 0.0, %v1638
      %v1640 = vpop.f32.mrf.mxu0
      %1641 = vmatprep.mubr.f32.mxu0 0.0
      %1642 = vmatmul.mubr.f32.gmra.mxu0 %v751
      %v1643 = vpop.f32.mrf.mxu0
      %v1644 = vadd.f32 0.0, %v1643
      %v1645 = vpop.f32.mrf.mxu0
      %1646 = vmatprep.mubr.f32.mxu0 0.0
      %1647 = vmatmul.mubr.f32.gmra.mxu0 %v1505
      %v1648 = vpop.f32.mrf.mxu0
      %v1649 = vadd.f32 0.0, %v1648
      %v1650 = vpop.f32.mrf.mxu0
      %1651 = vmatprep.mubr.f32.mxu0 0.0
      %1652 = vmatmul.mubr.f32.gmra.mxu0 %v1507
      %v1653 = vpop.f32.mrf.mxu0
      %v1654 = vadd.f32 0.0, %v1653
      %v1655 = vpop.f32.mrf.mxu0
      %1656 = vdwg.mxu0
      %v1657 = vadd.f32 %v1482, %v1579
      %v1658 = vadd.f32 %v1483, %v1584
      %v1659 = vadd.f32 %v1484, %v1589
      %v1660 = vadd.f32 %v1485, %v1594
      %v1661 = vadd.f32 %v1486, %v1599
      %v1662 = vadd.f32 %v1487, %v1604
      %v1663 = vadd.f32 %v1488, %v1609
      %v1664 = vadd.f32 %v1489, %v1614
      %v1665 = vadd.f32 %v1490, %v1619
      %v1666 = vadd.f32 %v1491, %v1624
      %v1667 = vadd.f32 %v1492, %v1629
      %v1668 = vadd.f32 %v1493, %v1634
      %v1669 = vadd.f32 %v1494, %v1639
      %v1670 = vadd.f32 %v1495, %v1644
      %v1671 = vadd.f32 %v1496, %v1649
      %v1672 = vadd.f32 %v1497, %v1654
      %v1673 = vrot.slane %v356, 3
      %v1674 = vrot.slane %v357, 3
      %v1675 = vsel %vm1081, %v1673, %v1674
      %v1676 = vrot.slane %v358, 3
      %v1677 = vsel %vm1081, %v1674, %v1676
      %s1678 = scalar_lea.vmem %s3, 20
      %v1679 = vld [vmem:[%s1678] sm:$0xf]
      %v1680 = vsel %vm431, %v1675, 0
      %v1682 = vsel %vm431, %v1677, 0
      %v1685 = vsel %vm464, %v1679, 0
      %1687 = vmatprep.subr.mxu0 0.0
      %1688 = vmatpush1.msra.mxu0 0.0
      %1689 = vmatprep.subr.mxu0 0.0
      %1690 = vmatpush1.msra.mxu0 0.0
      %1691 = vmatprep.subr.mxu0 0.0
      %1692 = vmatpush1.msra.mxu0 0.0
      %1693 = vmatprep.subr.mxu0 0.0
      %1694 = vmatpush1.msra.mxu0 0.0
      %1695 = vmatprep.subr.mxu0 0.0
      %1696 = vmatpush1.msra.mxu0 0.0
      %1697 = vmatprep.subr.mxu0 0.0
      %1698 = vmatpush1.msra.mxu0 0.0
      %1699 = vmatprep.subr.mxu0 0.0
      %1700 = vmatpush1.msra.mxu0 0.0
      %1701 = vmatprep.subr.mxu0 0.0
      %1702 = vmatpush1.msra.mxu0 0.0
      %1703 = vmatprep.subr.mxu0 0.0
      %1704 = vmatpush1.msra.mxu0 0.0
      %1705 = vmatprep.subr.mxu0 0.0
      %1706 = vmatpush1.msra.mxu0 0.0
      %1707 = vmatprep.subr.mxu0 0.0
      %1708 = vmatpush1.msra.mxu0 0.0
      %1709 = vmatprep.subr.mxu0 0.0
      %1710 = vmatpush1.msra.mxu0 0.0
      %1711 = vmatprep.subr.mxu0 0.0
      %1712 = vmatpush1.msra.mxu0 0.0
      %1713 = vmatprep.subr.mxu0 0.0
      %1714 = vmatpush1.msra.mxu0 0.0
      %1715 = vmatprep.subr.mxu0 0.0
      %1716 = vmatpush1.msra.mxu0 0.0
      %1717 = vmatprep.subr.mxu0 0.0
      %1718 = vmatpush1.msra.mxu0 %v1685
      %1719 = vmatprep.subr.mxu0 0.0
      %1720 = vmatpush2.msra.mxu0 0.0
      %1721 = vmatprep.subr.mxu0 0.0
      %1722 = vmatpush2.msra.mxu0 0.0
      %1723 = vmatprep.subr.mxu0 0.0
      %1724 = vmatpush2.msra.mxu0 0.0
      %1725 = vmatprep.subr.mxu0 0.0
      %1726 = vmatpush2.msra.mxu0 0.0
      %1727 = vmatprep.subr.mxu0 0.0
      %1728 = vmatpush2.msra.mxu0 0.0
      %1729 = vmatprep.subr.mxu0 0.0
      %1730 = vmatpush2.msra.mxu0 0.0
      %1731 = vmatprep.subr.mxu0 0.0
      %1732 = vmatpush2.msra.mxu0 0.0
      %1733 = vmatprep.subr.mxu0 0.0
      %1734 = vmatpush2.msra.mxu0 0.0
      %1735 = vmatprep.subr.mxu0 0.0
      %1736 = vmatpush2.msra.mxu0 0.0
      %1737 = vmatprep.subr.mxu0 0.0
      %1738 = vmatpush2.msra.mxu0 0.0
      %1739 = vmatprep.subr.mxu0 0.0
      %1740 = vmatpush2.msra.mxu0 0.0
      %1741 = vmatprep.subr.mxu0 0.0
      %1742 = vmatpush2.msra.mxu0 0.0
      %1743 = vmatprep.subr.mxu0 0.0
      %1744 = vmatpush2.msra.mxu0 0.0
      %1745 = vmatprep.subr.mxu0 0.0
      %1746 = vmatpush2.msra.mxu0 0.0
      %1747 = vmatprep.subr.mxu0 0.0
      %1748 = vmatpush2.msra.mxu0 0.0
      %1749 = vmatprep.subr.mxu0 0.0
      %1750 = vmatpush2.msra.mxu0 0.0
      %1751 = vmatprep.mubr.f32.mxu0 0.0
      %1752 = vmatmul.mubr.f32.gmra.mxu0 %v1128
      %v1753 = vpop.f32.mrf.mxu0
      %v1754 = vadd.f32 0.0, %v1753
      %v1755 = vpop.f32.mrf.mxu0
      %1756 = vmatprep.mubr.f32.mxu0 0.0
      %1757 = vmatmul.mubr.f32.gmra.mxu0 %v1130
      %v1758 = vpop.f32.mrf.mxu0
      %v1759 = vadd.f32 0.0, %v1758
      %v1760 = vpop.f32.mrf.mxu0
      %1761 = vmatprep.mubr.f32.mxu0 0.0
      %1762 = vmatmul.mubr.f32.gmra.mxu0 %v1132
      %v1763 = vpop.f32.mrf.mxu0
      %v1764 = vadd.f32 0.0, %v1763
      %v1765 = vpop.f32.mrf.mxu0
      %1766 = vmatprep.mubr.f32.mxu0 0.0
      %1767 = vmatmul.mubr.f32.gmra.mxu0 %v1134
      %v1768 = vpop.f32.mrf.mxu0
      %v1769 = vadd.f32 0.0, %v1768
      %v1770 = vpop.f32.mrf.mxu0
      %1771 = vmatprep.mubr.f32.mxu0 0.0
      %1772 = vmatmul.mubr.f32.gmra.mxu0 %v1136
      %v1773 = vpop.f32.mrf.mxu0
      %v1774 = vadd.f32 0.0, %v1773
      %v1775 = vpop.f32.mrf.mxu0
      %1776 = vmatprep.mubr.f32.mxu0 0.0
      %1777 = vmatmul.mubr.f32.gmra.mxu0 %v1138
      %v1778 = vpop.f32.mrf.mxu0
      %v1779 = vadd.f32 0.0, %v1778
      %v1780 = vpop.f32.mrf.mxu0
      %1781 = vmatprep.mubr.f32.mxu0 0.0
      %1782 = vmatmul.mubr.f32.gmra.mxu0 %v1140
      %v1783 = vpop.f32.mrf.mxu0
      %v1784 = vadd.f32 0.0, %v1783
      %v1785 = vpop.f32.mrf.mxu0
      %1786 = vmatprep.mubr.f32.mxu0 0.0
      %1787 = vmatmul.mubr.f32.gmra.mxu0 %v1142
      %v1788 = vpop.f32.mrf.mxu0
      %v1789 = vadd.f32 0.0, %v1788
      %v1790 = vpop.f32.mrf.mxu0
      %1791 = vmatprep.mubr.f32.mxu0 0.0
      %1792 = vmatmul.mubr.f32.gmra.mxu0 %v1144
      %v1793 = vpop.f32.mrf.mxu0
      %v1794 = vadd.f32 0.0, %v1793
      %v1795 = vpop.f32.mrf.mxu0
      %1796 = vmatprep.mubr.f32.mxu0 0.0
      %1797 = vmatmul.mubr.f32.gmra.mxu0 %v1146
      %v1798 = vpop.f32.mrf.mxu0
      %v1799 = vadd.f32 0.0, %v1798
      %v1800 = vpop.f32.mrf.mxu0
      %1801 = vmatprep.mubr.f32.mxu0 0.0
      %1802 = vmatmul.mubr.f32.gmra.mxu0 %v1148
      %v1803 = vpop.f32.mrf.mxu0
      %v1804 = vadd.f32 0.0, %v1803
      %v1805 = vpop.f32.mrf.mxu0
      %1806 = vmatprep.mubr.f32.mxu0 0.0
      %1807 = vmatmul.mubr.f32.gmra.mxu0 %v1150
      %v1808 = vpop.f32.mrf.mxu0
      %v1809 = vadd.f32 0.0, %v1808
      %v1810 = vpop.f32.mrf.mxu0
      %1811 = vmatprep.mubr.f32.mxu0 0.0
      %1812 = vmatmul.mubr.f32.gmra.mxu0 %v1152
      %v1813 = vpop.f32.mrf.mxu0
      %v1814 = vadd.f32 0.0, %v1813
      %v1815 = vpop.f32.mrf.mxu0
      %1816 = vmatprep.mubr.f32.mxu0 0.0
      %1817 = vmatmul.mubr.f32.gmra.mxu0 %v1154
      %v1818 = vpop.f32.mrf.mxu0
      %v1819 = vadd.f32 0.0, %v1818
      %v1820 = vpop.f32.mrf.mxu0
      %1821 = vmatprep.mubr.f32.mxu0 0.0
      %1822 = vmatmul.mubr.f32.gmra.mxu0 %v1680
      %v1823 = vpop.f32.mrf.mxu0
      %v1824 = vadd.f32 0.0, %v1823
      %v1825 = vpop.f32.mrf.mxu0
      %1826 = vmatprep.mubr.f32.mxu0 0.0
      %1827 = vmatmul.mubr.f32.gmra.mxu0 %v1682
      %v1828 = vpop.f32.mrf.mxu0
      %v1829 = vadd.f32 0.0, %v1828
      %v1830 = vpop.f32.mrf.mxu0
      %1831 = vdwg.mxu0
      %v1832 = vadd.f32 %v1657, %v1754
      %v1833 = vadd.f32 %v1658, %v1759
      %v1834 = vadd.f32 %v1659, %v1764
      %v1835 = vadd.f32 %v1660, %v1769
      %v1836 = vadd.f32 %v1661, %v1774
      %v1837 = vadd.f32 %v1662, %v1779
      %v1838 = vadd.f32 %v1663, %v1784
      %v1839 = vadd.f32 %v1664, %v1789
      %v1840 = vadd.f32 %v1665, %v1794
      %v1841 = vadd.f32 %v1666, %v1799
      %v1842 = vadd.f32 %v1667, %v1804
      %v1843 = vadd.f32 %v1668, %v1809
      %v1844 = vadd.f32 %v1669, %v1814
      %v1845 = vadd.f32 %v1670, %v1819
      %v1846 = vadd.f32 %v1671, %v1824
      %v1847 = vadd.f32 %v1672, %v1829
      %v1851 = vrot.slane %v359, 1
      %v1852 = vrot.slane %v360, 1
      %v1853 = vsel %vm389, %v1851, %v1852
      %v1854 = vrot.slane %v361, 1
      %v1855 = vsel %vm389, %v1852, %v1854
      %s1856 = scalar_lea.vmem %s3, 24
      %v1857 = vld [vmem:[%s1856] sm:$0xf]
      %v1858 = vsel %vm431, %v1853, 0
      %v1860 = vsel %vm431, %v1855, 0
      %v1863 = vsel %vm464, %v1857, 0
      %1865 = vmatprep.subr.mxu0 0.0
      %1866 = vmatpush1.msra.mxu0 0.0
      %1867 = vmatprep.subr.mxu0 0.0
      %1868 = vmatpush1.msra.mxu0 0.0
      %1869 = vmatprep.subr.mxu0 0.0
      %1870 = vmatpush1.msra.mxu0 0.0
      %1871 = vmatprep.subr.mxu0 0.0
      %1872 = vmatpush1.msra.mxu0 0.0
      %1873 = vmatprep.subr.mxu0 0.0
      %1874 = vmatpush1.msra.mxu0 0.0
      %1875 = vmatprep.subr.mxu0 0.0
      %1876 = vmatpush1.msra.mxu0 0.0
      %1877 = vmatprep.subr.mxu0 0.0
      %1878 = vmatpush1.msra.mxu0 0.0
      %1879 = vmatprep.subr.mxu0 0.0
      %1880 = vmatpush1.msra.mxu0 0.0
      %1881 = vmatprep.subr.mxu0 0.0
      %1882 = vmatpush1.msra.mxu0 0.0
      %1883 = vmatprep.subr.mxu0 0.0
      %1884 = vmatpush1.msra.mxu0 0.0
      %1885 = vmatprep.subr.mxu0 0.0
      %1886 = vmatpush1.msra.mxu0 0.0
      %1887 = vmatprep.subr.mxu0 0.0
      %1888 = vmatpush1.msra.mxu0 0.0
      %1889 = vmatprep.subr.mxu0 0.0
      %1890 = vmatpush1.msra.mxu0 0.0
      %1891 = vmatprep.subr.mxu0 0.0
      %1892 = vmatpush1.msra.mxu0 0.0
      %1893 = vmatprep.subr.mxu0 0.0
      %1894 = vmatpush1.msra.mxu0 0.0
      %1895 = vmatprep.subr.mxu0 0.0
      %1896 = vmatpush1.msra.mxu0 %v1863
      %1897 = vmatprep.subr.mxu0 0.0
      %1898 = vmatpush2.msra.mxu0 0.0
      %1899 = vmatprep.subr.mxu0 0.0
      %1900 = vmatpush2.msra.mxu0 0.0
      %1901 = vmatprep.subr.mxu0 0.0
      %1902 = vmatpush2.msra.mxu0 0.0
      %1903 = vmatprep.subr.mxu0 0.0
      %1904 = vmatpush2.msra.mxu0 0.0
      %1905 = vmatprep.subr.mxu0 0.0
      %1906 = vmatpush2.msra.mxu0 0.0
      %1907 = vmatprep.subr.mxu0 0.0
      %1908 = vmatpush2.msra.mxu0 0.0
      %1909 = vmatprep.subr.mxu0 0.0
      %1910 = vmatpush2.msra.mxu0 0.0
      %1911 = vmatprep.subr.mxu0 0.0
      %1912 = vmatpush2.msra.mxu0 0.0
      %1913 = vmatprep.subr.mxu0 0.0
      %1914 = vmatpush2.msra.mxu0 0.0
      %1915 = vmatprep.subr.mxu0 0.0
      %1916 = vmatpush2.msra.mxu0 0.0
      %1917 = vmatprep.subr.mxu0 0.0
      %1918 = vmatpush2.msra.mxu0 0.0
      %1919 = vmatprep.subr.mxu0 0.0
      %1920 = vmatpush2.msra.mxu0 0.0
      %1921 = vmatprep.subr.mxu0 0.0
      %1922 = vmatpush2.msra.mxu0 0.0
      %1923 = vmatprep.subr.mxu0 0.0
      %1924 = vmatpush2.msra.mxu0 0.0
      %1925 = vmatprep.subr.mxu0 0.0
      %1926 = vmatpush2.msra.mxu0 0.0
      %1927 = vmatprep.subr.mxu0 0.0
      %1928 = vmatpush2.msra.mxu0 0.0
      %1929 = vmatprep.mubr.f32.mxu0 0.0
      %1930 = vmatmul.mubr.f32.gmra.mxu0 %v909
      %v1931 = vpop.f32.mrf.mxu0
      %v1932 = vadd.f32 0.0, %v1931
      %v1933 = vpop.f32.mrf.mxu0
      %1934 = vmatprep.mubr.f32.mxu0 0.0
      %1935 = vmatmul.mubr.f32.gmra.mxu0 %v911
      %v1936 = vpop.f32.mrf.mxu0
      %v1937 = vadd.f32 0.0, %v1936
      %v1938 = vpop.f32.mrf.mxu0
      %1939 = vmatprep.mubr.f32.mxu0 0.0
      %1940 = vmatmul.mubr.f32.gmra.mxu0 %v913
      %v1941 = vpop.f32.mrf.mxu0
      %v1942 = vadd.f32 0.0, %v1941
      %v1943 = vpop.f32.mrf.mxu0
      %1944 = vmatprep.mubr.f32.mxu0 0.0
      %1945 = vmatmul.mubr.f32.gmra.mxu0 %v915
      %v1946 = vpop.f32.mrf.mxu0
      %v1947 = vadd.f32 0.0, %v1946
      %v1948 = vpop.f32.mrf.mxu0
      %1949 = vmatprep.mubr.f32.mxu0 0.0
      %1950 = vmatmul.mubr.f32.gmra.mxu0 %v917
      %v1951 = vpop.f32.mrf.mxu0
      %v1952 = vadd.f32 0.0, %v1951
      %v1953 = vpop.f32.mrf.mxu0
      %1954 = vmatprep.mubr.f32.mxu0 0.0
      %1955 = vmatmul.mubr.f32.gmra.mxu0 %v919
      %v1956 = vpop.f32.mrf.mxu0
      %v1957 = vadd.f32 0.0, %v1956
      %v1958 = vpop.f32.mrf.mxu0
      %1959 = vmatprep.mubr.f32.mxu0 0.0
      %1960 = vmatmul.mubr.f32.gmra.mxu0 %v921
      %v1961 = vpop.f32.mrf.mxu0
      %v1962 = vadd.f32 0.0, %v1961
      %v1963 = vpop.f32.mrf.mxu0
      %1964 = vmatprep.mubr.f32.mxu0 0.0
      %1965 = vmatmul.mubr.f32.gmra.mxu0 %v923
      %v1966 = vpop.f32.mrf.mxu0
      %v1967 = vadd.f32 0.0, %v1966
      %v1968 = vpop.f32.mrf.mxu0
      %1969 = vmatprep.mubr.f32.mxu0 0.0
      %1970 = vmatmul.mubr.f32.gmra.mxu0 %v925
      %v1971 = vpop.f32.mrf.mxu0
      %v1972 = vadd.f32 0.0, %v1971
      %v1973 = vpop.f32.mrf.mxu0
      %1974 = vmatprep.mubr.f32.mxu0 0.0
      %1975 = vmatmul.mubr.f32.gmra.mxu0 %v927
      %v1976 = vpop.f32.mrf.mxu0
      %v1977 = vadd.f32 0.0, %v1976
      %v1978 = vpop.f32.mrf.mxu0
      %1979 = vmatprep.mubr.f32.mxu0 0.0
      %1980 = vmatmul.mubr.f32.gmra.mxu0 %v929
      %v1981 = vpop.f32.mrf.mxu0
      %v1982 = vadd.f32 0.0, %v1981
      %v1983 = vpop.f32.mrf.mxu0
      %1984 = vmatprep.mubr.f32.mxu0 0.0
      %1985 = vmatmul.mubr.f32.gmra.mxu0 %v931
      %v1986 = vpop.f32.mrf.mxu0
      %v1987 = vadd.f32 0.0, %v1986
      %v1988 = vpop.f32.mrf.mxu0
      %1989 = vmatprep.mubr.f32.mxu0 0.0
      %1990 = vmatmul.mubr.f32.gmra.mxu0 %v1330
      %v1991 = vpop.f32.mrf.mxu0
      %v1992 = vadd.f32 0.0, %v1991
      %v1993 = vpop.f32.mrf.mxu0
      %1994 = vmatprep.mubr.f32.mxu0 0.0
      %1995 = vmatmul.mubr.f32.gmra.mxu0 %v1332
      %v1996 = vpop.f32.mrf.mxu0
      %v1997 = vadd.f32 0.0, %v1996
      %v1998 = vpop.f32.mrf.mxu0
      %1999 = vmatprep.mubr.f32.mxu0 0.0
      %2000 = vmatmul.mubr.f32.gmra.mxu0 %v1858
      %v2001 = vpop.f32.mrf.mxu0
      %v2002 = vadd.f32 0.0, %v2001
      %v2003 = vpop.f32.mrf.mxu0
      %2004 = vmatprep.mubr.f32.mxu0 0.0
      %2005 = vmatmul.mubr.f32.gmra.mxu0 %v1860
      %v2006 = vpop.f32.mrf.mxu0
      %v2007 = vadd.f32 0.0, %v2006
      %v2008 = vpop.f32.mrf.mxu0
      %2009 = vdwg.mxu0
      %v2010 = vadd.f32 %v1832, %v1932
      %v2011 = vadd.f32 %v1833, %v1937
      %v2012 = vadd.f32 %v1834, %v1942
      %v2013 = vadd.f32 %v1835, %v1947
      %v2014 = vadd.f32 %v1836, %v1952
      %v2015 = vadd.f32 %v1837, %v1957
      %v2016 = vadd.f32 %v1838, %v1962
      %v2017 = vadd.f32 %v1839, %v1967
      %v2018 = vadd.f32 %v1840, %v1972
      %v2019 = vadd.f32 %v1841, %v1977
      %v2020 = vadd.f32 %v1842, %v1982
      %v2021 = vadd.f32 %v1843, %v1987
      %v2022 = vadd.f32 %v1844, %v1992
      %v2023 = vadd.f32 %v1845, %v1997
      %v2024 = vadd.f32 %v1846, %v2002
      %v2025 = vadd.f32 %v1847, %v2007
      %v2026 = vrot.slane %v359, 2
      %v2027 = vrot.slane %v360, 2
      %v2028 = vsel %vm678, %v2026, %v2027
      %v2029 = vrot.slane %v361, 2
      %v2030 = vsel %vm678, %v2027, %v2029
      %s2031 = scalar_lea.vmem %s3, 28
      %v2032 = vld [vmem:[%s2031] sm:$0xf]
      %v2033 = vsel %vm431, %v2028, 0
      %v2035 = vsel %vm431, %v2030, 0
      %v2038 = vsel %vm464, %v2032, 0
      %2040 = vmatprep.subr.mxu0 0.0
      %2041 = vmatpush1.msra.mxu0 0.0
      %2042 = vmatprep.subr.mxu0 0.0
      %2043 = vmatpush1.msra.mxu0 0.0
      %2044 = vmatprep.subr.mxu0 0.0
      %2045 = vmatpush1.msra.mxu0 0.0
      %2046 = vmatprep.subr.mxu0 0.0
      %2047 = vmatpush1.msra.mxu0 0.0
      %2048 = vmatprep.subr.mxu0 0.0
      %2049 = vmatpush1.msra.mxu0 0.0
      %2050 = vmatprep.subr.mxu0 0.0
      %2051 = vmatpush1.msra.mxu0 0.0
      %2052 = vmatprep.subr.mxu0 0.0
      %2053 = vmatpush1.msra.mxu0 0.0
      %2054 = vmatprep.subr.mxu0 0.0
      %2055 = vmatpush1.msra.mxu0 0.0
      %2056 = vmatprep.subr.mxu0 0.0
      %2057 = vmatpush1.msra.mxu0 0.0
      %2058 = vmatprep.subr.mxu0 0.0
      %2059 = vmatpush1.msra.mxu0 0.0
      %2060 = vmatprep.subr.mxu0 0.0
      %2061 = vmatpush1.msra.mxu0 0.0
      %2062 = vmatprep.subr.mxu0 0.0
      %2063 = vmatpush1.msra.mxu0 0.0
      %2064 = vmatprep.subr.mxu0 0.0
      %2065 = vmatpush1.msra.mxu0 0.0
      %2066 = vmatprep.subr.mxu0 0.0
      %2067 = vmatpush1.msra.mxu0 0.0
      %2068 = vmatprep.subr.mxu0 0.0
      %2069 = vmatpush1.msra.mxu0 0.0
      %2070 = vmatprep.subr.mxu0 0.0
      %2071 = vmatpush1.msra.mxu0 %v2038
      %2072 = vmatprep.subr.mxu0 0.0
      %2073 = vmatpush2.msra.mxu0 0.0
      %2074 = vmatprep.subr.mxu0 0.0
      %2075 = vmatpush2.msra.mxu0 0.0
      %2076 = vmatprep.subr.mxu0 0.0
      %2077 = vmatpush2.msra.mxu0 0.0
      %2078 = vmatprep.subr.mxu0 0.0
      %2079 = vmatpush2.msra.mxu0 0.0
      %2080 = vmatprep.subr.mxu0 0.0
      %2081 = vmatpush2.msra.mxu0 0.0
      %2082 = vmatprep.subr.mxu0 0.0
      %2083 = vmatpush2.msra.mxu0 0.0
      %2084 = vmatprep.subr.mxu0 0.0
      %2085 = vmatpush2.msra.mxu0 0.0
      %2086 = vmatprep.subr.mxu0 0.0
      %2087 = vmatpush2.msra.mxu0 0.0
      %2088 = vmatprep.subr.mxu0 0.0
      %2089 = vmatpush2.msra.mxu0 0.0
      %2090 = vmatprep.subr.mxu0 0.0
      %2091 = vmatpush2.msra.mxu0 0.0
      %2092 = vmatprep.subr.mxu0 0.0
      %2093 = vmatpush2.msra.mxu0 0.0
      %2094 = vmatprep.subr.mxu0 0.0
      %2095 = vmatpush2.msra.mxu0 0.0
      %2096 = vmatprep.subr.mxu0 0.0
      %2097 = vmatpush2.msra.mxu0 0.0
      %2098 = vmatprep.subr.mxu0 0.0
      %2099 = vmatpush2.msra.mxu0 0.0
      %2100 = vmatprep.subr.mxu0 0.0
      %2101 = vmatpush2.msra.mxu0 0.0
      %2102 = vmatprep.subr.mxu0 0.0
      %2103 = vmatpush2.msra.mxu0 0.0
      %2104 = vmatprep.mubr.f32.mxu0 0.0
      %2105 = vmatmul.mubr.f32.gmra.mxu0 %v729
      %v2106 = vpop.f32.mrf.mxu0
      %v2107 = vadd.f32 0.0, %v2106
      %v2108 = vpop.f32.mrf.mxu0
      %2109 = vmatprep.mubr.f32.mxu0 0.0
      %2110 = vmatmul.mubr.f32.gmra.mxu0 %v731
      %v2111 = vpop.f32.mrf.mxu0
      %v2112 = vadd.f32 0.0, %v2111
      %v2113 = vpop.f32.mrf.mxu0
      %2114 = vmatprep.mubr.f32.mxu0 0.0
      %2115 = vmatmul.mubr.f32.gmra.mxu0 %v733
      %v2116 = vpop.f32.mrf.mxu0
      %v2117 = vadd.f32 0.0, %v2116
      %v2118 = vpop.f32.mrf.mxu0
      %2119 = vmatprep.mubr.f32.mxu0 0.0
      %2120 = vmatmul.mubr.f32.gmra.mxu0 %v735
      %v2121 = vpop.f32.mrf.mxu0
      %v2122 = vadd.f32 0.0, %v2121
      %v2123 = vpop.f32.mrf.mxu0
      %2124 = vmatprep.mubr.f32.mxu0 0.0
      %2125 = vmatmul.mubr.f32.gmra.mxu0 %v737
      %v2126 = vpop.f32.mrf.mxu0
      %v2127 = vadd.f32 0.0, %v2126
      %v2128 = vpop.f32.mrf.mxu0
      %2129 = vmatprep.mubr.f32.mxu0 0.0
      %2130 = vmatmul.mubr.f32.gmra.mxu0 %v739
      %v2131 = vpop.f32.mrf.mxu0
      %v2132 = vadd.f32 0.0, %v2131
      %v2133 = vpop.f32.mrf.mxu0
      %2134 = vmatprep.mubr.f32.mxu0 0.0
      %2135 = vmatmul.mubr.f32.gmra.mxu0 %v741
      %v2136 = vpop.f32.mrf.mxu0
      %v2137 = vadd.f32 0.0, %v2136
      %v2138 = vpop.f32.mrf.mxu0
      %2139 = vmatprep.mubr.f32.mxu0 0.0
      %2140 = vmatmul.mubr.f32.gmra.mxu0 %v743
      %v2141 = vpop.f32.mrf.mxu0
      %v2142 = vadd.f32 0.0, %v2141
      %v2143 = vpop.f32.mrf.mxu0
      %2144 = vmatprep.mubr.f32.mxu0 0.0
      %2145 = vmatmul.mubr.f32.gmra.mxu0 %v745
      %v2146 = vpop.f32.mrf.mxu0
      %v2147 = vadd.f32 0.0, %v2146
      %v2148 = vpop.f32.mrf.mxu0
      %2149 = vmatprep.mubr.f32.mxu0 0.0
      %2150 = vmatmul.mubr.f32.gmra.mxu0 %v747
      %v2151 = vpop.f32.mrf.mxu0
      %v2152 = vadd.f32 0.0, %v2151
      %v2153 = vpop.f32.mrf.mxu0
      %2154 = vmatprep.mubr.f32.mxu0 0.0
      %2155 = vmatmul.mubr.f32.gmra.mxu0 %v749
      %v2156 = vpop.f32.mrf.mxu0
      %v2157 = vadd.f32 0.0, %v2156
      %v2158 = vpop.f32.mrf.mxu0
      %2159 = vmatprep.mubr.f32.mxu0 0.0
      %2160 = vmatmul.mubr.f32.gmra.mxu0 %v751
      %v2161 = vpop.f32.mrf.mxu0
      %v2162 = vadd.f32 0.0, %v2161
      %v2163 = vpop.f32.mrf.mxu0
      %2164 = vmatprep.mubr.f32.mxu0 0.0
      %2165 = vmatmul.mubr.f32.gmra.mxu0 %v1505
      %v2166 = vpop.f32.mrf.mxu0
      %v2167 = vadd.f32 0.0, %v2166
      %v2168 = vpop.f32.mrf.mxu0
      %2169 = vmatprep.mubr.f32.mxu0 0.0
      %2170 = vmatmul.mubr.f32.gmra.mxu0 %v1507
      %v2171 = vpop.f32.mrf.mxu0
      %v2172 = vadd.f32 0.0, %v2171
      %v2173 = vpop.f32.mrf.mxu0
      %2174 = vmatprep.mubr.f32.mxu0 0.0
      %2175 = vmatmul.mubr.f32.gmra.mxu0 %v2033
      %v2176 = vpop.f32.mrf.mxu0
      %v2177 = vadd.f32 0.0, %v2176
      %v2178 = vpop.f32.mrf.mxu0
      %2179 = vmatprep.mubr.f32.mxu0 0.0
      %2180 = vmatmul.mubr.f32.gmra.mxu0 %v2035
      %v2181 = vpop.f32.mrf.mxu0
      %v2182 = vadd.f32 0.0, %v2181
      %v2183 = vpop.f32.mrf.mxu0
      %2184 = vdwg.mxu0
      %v2185 = vadd.f32 %v2010, %v2107
      %v2186 = vadd.f32 %v2011, %v2112
      %v2187 = vadd.f32 %v2012, %v2117
      %v2188 = vadd.f32 %v2013, %v2122
      %v2189 = vadd.f32 %v2014, %v2127
      %v2190 = vadd.f32 %v2015, %v2132
      %v2191 = vadd.f32 %v2016, %v2137
      %v2192 = vadd.f32 %v2017, %v2142
      %v2193 = vadd.f32 %v2018, %v2147
      %v2194 = vadd.f32 %v2019, %v2152
      %v2195 = vadd.f32 %v2020, %v2157
      %v2196 = vadd.f32 %v2021, %v2162
      %v2197 = vadd.f32 %v2022, %v2167
      %v2198 = vadd.f32 %v2023, %v2172
      %v2199 = vadd.f32 %v2024, %v2177
      %v2200 = vadd.f32 %v2025, %v2182
      %v2201 = vrot.slane %v359, 3
      %v2202 = vrot.slane %v360, 3
      %v2203 = vsel %vm1081, %v2201, %v2202
      %v2204 = vrot.slane %v361, 3
      %v2205 = vsel %vm1081, %v2202, %v2204
      %s2206 = scalar_lea.vmem %s3, 32
      %v2207 = vld [vmem:[%s2206] sm:$0xf]
      %v2208 = vsel %vm431, %v2203, 0
      %v2210 = vsel %vm431, %v2205, 0
      %v2213 = vsel %vm464, %v2207, 0
      %2215 = vmatprep.subr.mxu0 0.0
      %2216 = vmatpush1.msra.mxu0 0.0
      %2217 = vmatprep.subr.mxu0 0.0
      %2218 = vmatpush1.msra.mxu0 0.0
      %2219 = vmatprep.subr.mxu0 0.0
      %2220 = vmatpush1.msra.mxu0 0.0
      %2221 = vmatprep.subr.mxu0 0.0
      %2222 = vmatpush1.msra.mxu0 0.0
      %2223 = vmatprep.subr.mxu0 0.0
      %2224 = vmatpush1.msra.mxu0 0.0
      %2225 = vmatprep.subr.mxu0 0.0
      %2226 = vmatpush1.msra.mxu0 0.0
      %2227 = vmatprep.subr.mxu0 0.0
      %2228 = vmatpush1.msra.mxu0 0.0
      %2229 = vmatprep.subr.mxu0 0.0
      %2230 = vmatpush1.msra.mxu0 0.0
      %2231 = vmatprep.subr.mxu0 0.0
      %2232 = vmatpush1.msra.mxu0 0.0
      %2233 = vmatprep.subr.mxu0 0.0
      %2234 = vmatpush1.msra.mxu0 0.0
      %2235 = vmatprep.subr.mxu0 0.0
      %2236 = vmatpush1.msra.mxu0 0.0
      %2237 = vmatprep.subr.mxu0 0.0
      %2238 = vmatpush1.msra.mxu0 0.0
      %2239 = vmatprep.subr.mxu0 0.0
      %2240 = vmatpush1.msra.mxu0 0.0
      %2241 = vmatprep.subr.mxu0 0.0
      %2242 = vmatpush1.msra.mxu0 0.0
      %2243 = vmatprep.subr.mxu0 0.0
      %2244 = vmatpush1.msra.mxu0 0.0
      %2245 = vmatprep.subr.mxu0 0.0
      %2246 = vmatpush1.msra.mxu0 %v2213
      %2247 = vmatprep.subr.mxu0 0.0
      %2248 = vmatpush2.msra.mxu0 0.0
      %2249 = vmatprep.subr.mxu0 0.0
      %2250 = vmatpush2.msra.mxu0 0.0
      %2251 = vmatprep.subr.mxu0 0.0
      %2252 = vmatpush2.msra.mxu0 0.0
      %2253 = vmatprep.subr.mxu0 0.0
      %2254 = vmatpush2.msra.mxu0 0.0
      %2255 = vmatprep.subr.mxu0 0.0
      %2256 = vmatpush2.msra.mxu0 0.0
      %2257 = vmatprep.subr.mxu0 0.0
      %2258 = vmatpush2.msra.mxu0 0.0
      %2259 = vmatprep.subr.mxu0 0.0
      %2260 = vmatpush2.msra.mxu0 0.0
      %2261 = vmatprep.subr.mxu0 0.0
      %2262 = vmatpush2.msra.mxu0 0.0
      %2263 = vmatprep.subr.mxu0 0.0
      %2264 = vmatpush2.msra.mxu0 0.0
      %2265 = vmatprep.subr.mxu0 0.0
      %2266 = vmatpush2.msra.mxu0 0.0
      %2267 = vmatprep.subr.mxu0 0.0
      %2268 = vmatpush2.msra.mxu0 0.0
      %2269 = vmatprep.subr.mxu0 0.0
      %2270 = vmatpush2.msra.mxu0 0.0
      %2271 = vmatprep.subr.mxu0 0.0
      %2272 = vmatpush2.msra.mxu0 0.0
      %2273 = vmatprep.subr.mxu0 0.0
      %2274 = vmatpush2.msra.mxu0 0.0
      %2275 = vmatprep.subr.mxu0 0.0
      %2276 = vmatpush2.msra.mxu0 0.0
      %2277 = vmatprep.subr.mxu0 0.0
      %2278 = vmatpush2.msra.mxu0 0.0
      %2279 = vmatprep.mubr.f32.mxu0 0.0
      %2280 = vmatmul.mubr.f32.gmra.mxu0 %v1132
      %v2281 = vpop.f32.mrf.mxu0
      %v2282 = vadd.f32 0.0, %v2281
      %v2283 = vpop.f32.mrf.mxu0
      %2284 = vmatprep.mubr.f32.mxu0 0.0
      %2285 = vmatmul.mubr.f32.gmra.mxu0 %v1134
      %v2286 = vpop.f32.mrf.mxu0
      %v2287 = vadd.f32 0.0, %v2286
      %v2288 = vpop.f32.mrf.mxu0
      %2289 = vmatprep.mubr.f32.mxu0 0.0
      %2290 = vmatmul.mubr.f32.gmra.mxu0 %v1136
      %v2291 = vpop.f32.mrf.mxu0
      %v2292 = vadd.f32 0.0, %v2291
      %v2293 = vpop.f32.mrf.mxu0
      %2294 = vmatprep.mubr.f32.mxu0 0.0
      %2295 = vmatmul.mubr.f32.gmra.mxu0 %v1138
      %v2296 = vpop.f32.mrf.mxu0
      %v2297 = vadd.f32 0.0, %v2296
      %v2298 = vpop.f32.mrf.mxu0
      %2299 = vmatprep.mubr.f32.mxu0 0.0
      %2300 = vmatmul.mubr.f32.gmra.mxu0 %v1140
      %v2301 = vpop.f32.mrf.mxu0
      %v2302 = vadd.f32 0.0, %v2301
      %v2303 = vpop.f32.mrf.mxu0
      %2304 = vmatprep.mubr.f32.mxu0 0.0
      %2305 = vmatmul.mubr.f32.gmra.mxu0 %v1142
      %v2306 = vpop.f32.mrf.mxu0
      %v2307 = vadd.f32 0.0, %v2306
      %v2308 = vpop.f32.mrf.mxu0
      %2309 = vmatprep.mubr.f32.mxu0 0.0
      %2310 = vmatmul.mubr.f32.gmra.mxu0 %v1144
      %v2311 = vpop.f32.mrf.mxu0
      %v2312 = vadd.f32 0.0, %v2311
      %v2313 = vpop.f32.mrf.mxu0
      %2314 = vmatprep.mubr.f32.mxu0 0.0
      %2315 = vmatmul.mubr.f32.gmra.mxu0 %v1146
      %v2316 = vpop.f32.mrf.mxu0
      %v2317 = vadd.f32 0.0, %v2316
      %v2318 = vpop.f32.mrf.mxu0
      %2319 = vmatprep.mubr.f32.mxu0 0.0
      %2320 = vmatmul.mubr.f32.gmra.mxu0 %v1148
      %v2321 = vpop.f32.mrf.mxu0
      %v2322 = vadd.f32 0.0, %v2321
      %v2323 = vpop.f32.mrf.mxu0
      %2324 = vmatprep.mubr.f32.mxu0 0.0
      %2325 = vmatmul.mubr.f32.gmra.mxu0 %v1150
      %v2326 = vpop.f32.mrf.mxu0
      %v2327 = vadd.f32 0.0, %v2326
      %v2328 = vpop.f32.mrf.mxu0
      %2329 = vmatprep.mubr.f32.mxu0 0.0
      %2330 = vmatmul.mubr.f32.gmra.mxu0 %v1152
      %v2331 = vpop.f32.mrf.mxu0
      %v2332 = vadd.f32 0.0, %v2331
      %v2333 = vpop.f32.mrf.mxu0
      %2334 = vmatprep.mubr.f32.mxu0 0.0
      %2335 = vmatmul.mubr.f32.gmra.mxu0 %v1154
      %v2336 = vpop.f32.mrf.mxu0
      %v2337 = vadd.f32 0.0, %v2336
      %v2338 = vpop.f32.mrf.mxu0
      %2339 = vmatprep.mubr.f32.mxu0 0.0
      %2340 = vmatmul.mubr.f32.gmra.mxu0 %v1680
      %v2341 = vpop.f32.mrf.mxu0
      %v2342 = vadd.f32 0.0, %v2341
      %v2343 = vpop.f32.mrf.mxu0
      %2344 = vmatprep.mubr.f32.mxu0 0.0
      %2345 = vmatmul.mubr.f32.gmra.mxu0 %v1682
      %v2346 = vpop.f32.mrf.mxu0
      %v2347 = vadd.f32 0.0, %v2346
      %v2348 = vpop.f32.mrf.mxu0
      %2349 = vmatprep.mubr.f32.mxu0 0.0
      %2350 = vmatmul.mubr.f32.gmra.mxu0 %v2208
      %v2351 = vpop.f32.mrf.mxu0
      %v2352 = vadd.f32 0.0, %v2351
      %v2353 = vpop.f32.mrf.mxu0
      %2354 = vmatprep.mubr.f32.mxu0 0.0
      %2355 = vmatmul.mubr.f32.gmra.mxu0 %v2210
      %v2356 = vpop.f32.mrf.mxu0
      %v2357 = vadd.f32 0.0, %v2356
      %v2358 = vpop.f32.mrf.mxu0
      %2359 = vdwg.mxu0
      %v2360 = vadd.f32 %v2185, %v2282
      %v2361 = vadd.f32 %v2186, %v2287
      %v2362 = vadd.f32 %v2187, %v2292
      %v2363 = vadd.f32 %v2188, %v2297
      %v2364 = vadd.f32 %v2189, %v2302
      %v2365 = vadd.f32 %v2190, %v2307
      %v2366 = vadd.f32 %v2191, %v2312
      %v2367 = vadd.f32 %v2192, %v2317
      %v2368 = vadd.f32 %v2193, %v2322
      %v2369 = vadd.f32 %v2194, %v2327
      %v2370 = vadd.f32 %v2195, %v2332
      %v2371 = vadd.f32 %v2196, %v2337
      %v2372 = vadd.f32 %v2197, %v2342
      %v2373 = vadd.f32 %v2198, %v2347
      %v2374 = vadd.f32 %v2199, %v2352
      %v2375 = vadd.f32 %v2200, %v2357
      %v2376 = vld [vmem:[%s4] sm:$0x3]
      %v2380 = vrot.slane %v329, 1
      %v2381 = vrot.slane %v330, 1
      %v2382 = vsel %vm389, %v2380, %v2381
      %v2383 = vrot.slane %v331, 1
      %v2384 = vsel %vm389, %v2381, %v2383
      %s2385 = scalar_lea.vmem %s4, 2
      %v2386 = vld [vmem:[%s2385] sm:$0x3]
      %2387 = vrot.lane.b32.xlu0 %v2382, 124
      %v2388 = vpop.permute.xlu0 %2387
      %2389 = vrot.lane.b32.xlu0 %v2384, 124
      %v2390 = vpop.permute.xlu0 %2389
      %2391 = vrot.lane.b32.xlu0 %v639, 124
      %v2392 = vpop.permute.xlu0 %2391
      %2393 = vrot.lane.b32.xlu0 %v641, 124
      %v2394 = vpop.permute.xlu0 %2393
      %2395 = vrot.lane.b32.xlu0 %v644, 124
      %v2396 = vpop.permute.xlu0 %2395
      %2397 = vrot.lane.b32.xlu0 %v646, 124
      %v2398 = vpop.permute.xlu0 %2397
      %2399 = vrot.lane.b32.xlu0 %v649, 124
      %v2400 = vpop.permute.xlu0 %2399
      %2401 = vrot.lane.b32.xlu0 %v651, 124
      %v2402 = vpop.permute.xlu0 %2401
      %2403 = vrot.lane.b32.xlu0 %v654, 124
      %v2404 = vpop.permute.xlu0 %2403
      %2405 = vrot.lane.b32.xlu0 %v656, 124
      %v2406 = vpop.permute.xlu0 %2405
      %2407 = vrot.lane.b32.xlu0 %v659, 124
      %v2408 = vpop.permute.xlu0 %2407
      %2409 = vrot.lane.b32.xlu0 %v661, 124
      %v2410 = vpop.permute.xlu0 %2409
      %2411 = vrot.lane.b32.xlu0 %v664, 124
      %v2412 = vpop.permute.xlu0 %2411
      %2413 = vrot.lane.b32.xlu0 %v666, 124
      %v2414 = vpop.permute.xlu0 %2413
      %2415 = vrot.lane.b32.xlu0 %v669, 124
      %v2416 = vpop.permute.xlu0 %2415
      %2417 = vrot.lane.b32.xlu0 %v671, 124
      %v2418 = vpop.permute.xlu0 %2417
      %vm2419 = vcmask 15360
      %v2420 = vsel %vm2419, %v2388, 0
      %v2422 = vsel %vm2419, %v2390, 0
      %v2424 = vsel %vm2419, %v2392, 0
      %v2426 = vsel %vm2419, %v2394, 0
      %v2428 = vsel %vm2419, %v2396, 0
      %v2430 = vsel %vm2419, %v2398, 0
      %v2432 = vsel %vm2419, %v2400, 0
      %v2434 = vsel %vm2419, %v2402, 0
      %v2436 = vsel %vm2419, %v2404, 0
      %v2438 = vsel %vm2419, %v2406, 0
      %v2440 = vsel %vm2419, %v2408, 0
      %v2442 = vsel %vm2419, %v2410, 0
      %v2444 = vsel %vm2419, %v2412, 0
      %v2446 = vsel %vm2419, %v2414, 0
      %v2448 = vsel %vm2419, %v2416, 0
      %v2450 = vsel %vm2419, %v2418, 0
      %vm2452 = vcmask 1041408
      %v2454 = vsel %vm2452, %v2386, 0
      %2456 = vmatprep.subr.mxu0 0.0
      %2457 = vmatpush1.msra.mxu0 0.0
      %2458 = vmatprep.subr.mxu0 0.0
      %2459 = vmatpush1.msra.mxu0 0.0
      %2460 = vmatprep.subr.mxu0 0.0
      %2461 = vmatpush1.msra.mxu0 0.0
      %2462 = vmatprep.subr.mxu0 0.0
      %2463 = vmatpush1.msra.mxu0 0.0
      %2464 = vmatprep.subr.mxu0 0.0
      %2465 = vmatpush1.msra.mxu0 0.0
      %2466 = vmatprep.subr.mxu0 0.0
      %2467 = vmatpush1.msra.mxu0 0.0
      %2468 = vmatprep.subr.mxu0 0.0
      %2469 = vmatpush1.msra.mxu0 0.0
      %2470 = vmatprep.subr.mxu0 0.0
      %2471 = vmatpush1.msra.mxu0 0.0
      %2472 = vmatprep.subr.mxu0 0.0
      %2473 = vmatpush1.msra.mxu0 0.0
      %2474 = vmatprep.subr.mxu0 0.0
      %2475 = vmatpush1.msra.mxu0 0.0
      %2476 = vmatprep.subr.mxu0 0.0
      %2477 = vmatpush1.msra.mxu0 0.0
      %2478 = vmatprep.subr.mxu0 0.0
      %2479 = vmatpush1.msra.mxu0 0.0
      %2480 = vmatprep.subr.mxu0 0.0
      %2481 = vmatpush1.msra.mxu0 0.0
      %2482 = vmatprep.subr.mxu0 0.0
      %2483 = vmatpush1.msra.mxu0 0.0
      %2484 = vmatprep.subr.mxu0 0.0
      %2485 = vmatpush1.msra.mxu0 0.0
      %2486 = vmatprep.subr.mxu0 0.0
      %2487 = vmatpush1.msra.mxu0 %v2454
      %2488 = vmatprep.subr.mxu0 0.0
      %2489 = vmatpush2.msra.mxu0 0.0
      %2490 = vmatprep.subr.mxu0 0.0
      %2491 = vmatpush2.msra.mxu0 0.0
      %2492 = vmatprep.subr.mxu0 0.0
      %2493 = vmatpush2.msra.mxu0 0.0
      %2494 = vmatprep.subr.mxu0 0.0
      %2495 = vmatpush2.msra.mxu0 0.0
      %2496 = vmatprep.subr.mxu0 0.0
      %2497 = vmatpush2.msra.mxu0 0.0
      %2498 = vmatprep.subr.mxu0 0.0
      %2499 = vmatpush2.msra.mxu0 0.0
      %2500 = vmatprep.subr.mxu0 0.0
      %2501 = vmatpush2.msra.mxu0 0.0
      %2502 = vmatprep.subr.mxu0 0.0
      %2503 = vmatpush2.msra.mxu0 0.0
      %2504 = vmatprep.subr.mxu0 0.0
      %2505 = vmatpush2.msra.mxu0 0.0
      %2506 = vmatprep.subr.mxu0 0.0
      %2507 = vmatpush2.msra.mxu0 0.0
      %2508 = vmatprep.subr.mxu0 0.0
      %2509 = vmatpush2.msra.mxu0 0.0
      %2510 = vmatprep.subr.mxu0 0.0
      %2511 = vmatpush2.msra.mxu0 0.0
      %2512 = vmatprep.subr.mxu0 0.0
      %2513 = vmatpush2.msra.mxu0 0.0
      %2514 = vmatprep.subr.mxu0 0.0
      %2515 = vmatpush2.msra.mxu0 0.0
      %2516 = vmatprep.subr.mxu0 0.0
      %2517 = vmatpush2.msra.mxu0 0.0
      %2518 = vmatprep.subr.mxu0 0.0
      %2519 = vmatpush2.msra.mxu0 0.0
      %2520 = vmatprep.mubr.f32.mxu0 0.0
      %2521 = vmatmul.mubr.f32.gmra.mxu0 %v2420
      %v2522 = vpop.f32.mrf.mxu0
      %v2523 = vadd.f32 0.0, %v2522
      %v2524 = vpop.f32.mrf.mxu0
      %2525 = vmatprep.mubr.f32.mxu0 0.0
      %2526 = vmatmul.mubr.f32.gmra.mxu0 %v2422
      %v2527 = vpop.f32.mrf.mxu0
      %v2528 = vadd.f32 0.0, %v2527
      %v2529 = vpop.f32.mrf.mxu0
      %2530 = vmatprep.mubr.f32.mxu0 0.0
      %2531 = vmatmul.mubr.f32.gmra.mxu0 %v2424
      %v2532 = vpop.f32.mrf.mxu0
      %v2533 = vadd.f32 0.0, %v2532
      %v2534 = vpop.f32.mrf.mxu0
      %2535 = vmatprep.mubr.f32.mxu0 0.0
      %2536 = vmatmul.mubr.f32.gmra.mxu0 %v2426
      %v2537 = vpop.f32.mrf.mxu0
      %v2538 = vadd.f32 0.0, %v2537
      %v2539 = vpop.f32.mrf.mxu0
      %2540 = vmatprep.mubr.f32.mxu0 0.0
      %2541 = vmatmul.mubr.f32.gmra.mxu0 %v2428
      %v2542 = vpop.f32.mrf.mxu0
      %v2543 = vadd.f32 0.0, %v2542
      %v2544 = vpop.f32.mrf.mxu0
      %2545 = vmatprep.mubr.f32.mxu0 0.0
      %2546 = vmatmul.mubr.f32.gmra.mxu0 %v2430
      %v2547 = vpop.f32.mrf.mxu0
      %v2548 = vadd.f32 0.0, %v2547
      %v2549 = vpop.f32.mrf.mxu0
      %2550 = vmatprep.mubr.f32.mxu0 0.0
      %2551 = vmatmul.mubr.f32.gmra.mxu0 %v2432
      %v2552 = vpop.f32.mrf.mxu0
      %v2553 = vadd.f32 0.0, %v2552
      %v2554 = vpop.f32.mrf.mxu0
      %2555 = vmatprep.mubr.f32.mxu0 0.0
      %2556 = vmatmul.mubr.f32.gmra.mxu0 %v2434
      %v2557 = vpop.f32.mrf.mxu0
      %v2558 = vadd.f32 0.0, %v2557
      %v2559 = vpop.f32.mrf.mxu0
      %2560 = vmatprep.mubr.f32.mxu0 0.0
      %2561 = vmatmul.mubr.f32.gmra.mxu0 %v2436
      %v2562 = vpop.f32.mrf.mxu0
      %v2563 = vadd.f32 0.0, %v2562
      %v2564 = vpop.f32.mrf.mxu0
      %2565 = vmatprep.mubr.f32.mxu0 0.0
      %2566 = vmatmul.mubr.f32.gmra.mxu0 %v2438
      %v2567 = vpop.f32.mrf.mxu0
      %v2568 = vadd.f32 0.0, %v2567
      %v2569 = vpop.f32.mrf.mxu0
      %2570 = vmatprep.mubr.f32.mxu0 0.0
      %2571 = vmatmul.mubr.f32.gmra.mxu0 %v2440
      %v2572 = vpop.f32.mrf.mxu0
      %v2573 = vadd.f32 0.0, %v2572
      %v2574 = vpop.f32.mrf.mxu0
      %2575 = vmatprep.mubr.f32.mxu0 0.0
      %2576 = vmatmul.mubr.f32.gmra.mxu0 %v2442
      %v2577 = vpop.f32.mrf.mxu0
      %v2578 = vadd.f32 0.0, %v2577
      %v2579 = vpop.f32.mrf.mxu0
      %2580 = vmatprep.mubr.f32.mxu0 0.0
      %2581 = vmatmul.mubr.f32.gmra.mxu0 %v2444
      %v2582 = vpop.f32.mrf.mxu0
      %v2583 = vadd.f32 0.0, %v2582
      %v2584 = vpop.f32.mrf.mxu0
      %2585 = vmatprep.mubr.f32.mxu0 0.0
      %2586 = vmatmul.mubr.f32.gmra.mxu0 %v2446
      %v2587 = vpop.f32.mrf.mxu0
      %v2588 = vadd.f32 0.0, %v2587
      %v2589 = vpop.f32.mrf.mxu0
      %2590 = vmatprep.mubr.f32.mxu0 0.0
      %2591 = vmatmul.mubr.f32.gmra.mxu0 %v2448
      %v2592 = vpop.f32.mrf.mxu0
      %v2593 = vadd.f32 0.0, %v2592
      %v2594 = vpop.f32.mrf.mxu0
      %2595 = vmatprep.mubr.f32.mxu0 0.0
      %2596 = vmatmul.mubr.f32.gmra.mxu0 %v2450
      %v2597 = vpop.f32.mrf.mxu0
      %v2598 = vadd.f32 0.0, %v2597
      %v2599 = vpop.f32.mrf.mxu0
      %2600 = vdwg.mxu0
      %2601 = vrot.lane.b32.xlu0 %v329, 124
      %v2602 = vpop.permute.xlu0 %2601
      %2603 = vrot.lane.b32.xlu0 %v330, 124
      %v2604 = vpop.permute.xlu0 %2603
      %2605 = vrot.lane.b32.xlu0 %v332, 124
      %v2606 = vpop.permute.xlu0 %2605
      %2607 = vrot.lane.b32.xlu0 %v333, 124
      %v2608 = vpop.permute.xlu0 %2607
      %2609 = vrot.lane.b32.xlu0 %v335, 124
      %v2610 = vpop.permute.xlu0 %2609
      %2611 = vrot.lane.b32.xlu0 %v336, 124
      %v2612 = vpop.permute.xlu0 %2611
      %2613 = vrot.lane.b32.xlu0 %v338, 124
      %v2614 = vpop.permute.xlu0 %2613
      %2615 = vrot.lane.b32.xlu0 %v339, 124
      %v2616 = vpop.permute.xlu0 %2615
      %2617 = vrot.lane.b32.xlu0 %v341, 124
      %v2618 = vpop.permute.xlu0 %2617
      %2619 = vrot.lane.b32.xlu0 %v342, 124
      %v2620 = vpop.permute.xlu0 %2619
      %2621 = vrot.lane.b32.xlu0 %v344, 124
      %v2622 = vpop.permute.xlu0 %2621
      %2623 = vrot.lane.b32.xlu0 %v345, 124
      %v2624 = vpop.permute.xlu0 %2623
      %2625 = vrot.lane.b32.xlu0 %v347, 124
      %v2626 = vpop.permute.xlu0 %2625
      %2627 = vrot.lane.b32.xlu0 %v348, 124
      %v2628 = vpop.permute.xlu0 %2627
      %2629 = vrot.lane.b32.xlu0 %v350, 124
      %v2630 = vpop.permute.xlu0 %2629
      %2631 = vrot.lane.b32.xlu0 %v351, 124
      %v2632 = vpop.permute.xlu0 %2631
      %v2633 = vsel %vm2419, %v2602, 0
      %v2635 = vsel %vm2419, %v2604, 0
      %v2637 = vsel %vm2419, %v2606, 0
      %v2639 = vsel %vm2419, %v2608, 0
      %v2641 = vsel %vm2419, %v2610, 0
      %v2643 = vsel %vm2419, %v2612, 0
      %v2645 = vsel %vm2419, %v2614, 0
      %v2647 = vsel %vm2419, %v2616, 0
      %v2649 = vsel %vm2419, %v2618, 0
      %v2651 = vsel %vm2419, %v2620, 0
      %v2653 = vsel %vm2419, %v2622, 0
      %v2655 = vsel %vm2419, %v2624, 0
      %v2657 = vsel %vm2419, %v2626, 0
      %v2659 = vsel %vm2419, %v2628, 0
      %v2661 = vsel %vm2419, %v2630, 0
      %v2663 = vsel %vm2419, %v2632, 0
      %v2666 = vsel %vm2452, %v2376, 0
      %2668 = vmatprep.subr.mxu0 0.0
      %2669 = vmatpush1.msra.mxu0 0.0
      %2670 = vmatprep.subr.mxu0 0.0
      %2671 = vmatpush1.msra.mxu0 0.0
      %2672 = vmatprep.subr.mxu0 0.0
      %2673 = vmatpush1.msra.mxu0 0.0
      %2674 = vmatprep.subr.mxu0 0.0
      %2675 = vmatpush1.msra.mxu0 0.0
      %2676 = vmatprep.subr.mxu0 0.0
      %2677 = vmatpush1.msra.mxu0 0.0
      %2678 = vmatprep.subr.mxu0 0.0
      %2679 = vmatpush1.msra.mxu0 0.0
      %2680 = vmatprep.subr.mxu0 0.0
      %2681 = vmatpush1.msra.mxu0 0.0
      %2682 = vmatprep.subr.mxu0 0.0
      %2683 = vmatpush1.msra.mxu0 0.0
      %2684 = vmatprep.subr.mxu0 0.0
      %2685 = vmatpush1.msra.mxu0 0.0
      %2686 = vmatprep.subr.mxu0 0.0
      %2687 = vmatpush1.msra.mxu0 0.0
      %2688 = vmatprep.subr.mxu0 0.0
      %2689 = vmatpush1.msra.mxu0 0.0
      %2690 = vmatprep.subr.mxu0 0.0
      %2691 = vmatpush1.msra.mxu0 0.0
      %2692 = vmatprep.subr.mxu0 0.0
      %2693 = vmatpush1.msra.mxu0 0.0
      %2694 = vmatprep.subr.mxu0 0.0
      %2695 = vmatpush1.msra.mxu0 0.0
      %2696 = vmatprep.subr.mxu0 0.0
      %2697 = vmatpush1.msra.mxu0 0.0
      %2698 = vmatprep.subr.mxu0 0.0
      %2699 = vmatpush1.msra.mxu0 %v2666
      %2700 = vmatprep.subr.mxu0 0.0
      %2701 = vmatpush2.msra.mxu0 0.0
      %2702 = vmatprep.subr.mxu0 0.0
      %2703 = vmatpush2.msra.mxu0 0.0
      %2704 = vmatprep.subr.mxu0 0.0
      %2705 = vmatpush2.msra.mxu0 0.0
      %2706 = vmatprep.subr.mxu0 0.0
      %2707 = vmatpush2.msra.mxu0 0.0
      %2708 = vmatprep.subr.mxu0 0.0
      %2709 = vmatpush2.msra.mxu0 0.0
      %2710 = vmatprep.subr.mxu0 0.0
      %2711 = vmatpush2.msra.mxu0 0.0
      %2712 = vmatprep.subr.mxu0 0.0
      %2713 = vmatpush2.msra.mxu0 0.0
      %2714 = vmatprep.subr.mxu0 0.0
      %2715 = vmatpush2.msra.mxu0 0.0
      %2716 = vmatprep.subr.mxu0 0.0
      %2717 = vmatpush2.msra.mxu0 0.0
      %2718 = vmatprep.subr.mxu0 0.0
      %2719 = vmatpush2.msra.mxu0 0.0
      %2720 = vmatprep.subr.mxu0 0.0
      %2721 = vmatpush2.msra.mxu0 0.0
      %2722 = vmatprep.subr.mxu0 0.0
      %2723 = vmatpush2.msra.mxu0 0.0
      %2724 = vmatprep.subr.mxu0 0.0
      %2725 = vmatpush2.msra.mxu0 0.0
      %2726 = vmatprep.subr.mxu0 0.0
      %2727 = vmatpush2.msra.mxu0 0.0
      %2728 = vmatprep.subr.mxu0 0.0
      %2729 = vmatpush2.msra.mxu0 0.0
      %2730 = vmatprep.subr.mxu0 0.0
      %2731 = vmatpush2.msra.mxu0 0.0
      %2732 = vmatprep.mubr.f32.mxu0 0.0
      %2733 = vmatmul.mubr.f32.gmra.mxu0 %v2633
      %v2734 = vpop.f32.mrf.mxu0
      %v2735 = vadd.f32 %v2523, %v2734
      %v2736 = vpop.f32.mrf.mxu0
      %2737 = vmatprep.mubr.f32.mxu0 0.0
      %2738 = vmatmul.mubr.f32.gmra.mxu0 %v2635
      %v2739 = vpop.f32.mrf.mxu0
      %v2740 = vadd.f32 %v2528, %v2739
      %v2741 = vpop.f32.mrf.mxu0
      %2742 = vmatprep.mubr.f32.mxu0 0.0
      %2743 = vmatmul.mubr.f32.gmra.mxu0 %v2637
      %v2744 = vpop.f32.mrf.mxu0
      %v2745 = vadd.f32 %v2533, %v2744
      %v2746 = vpop.f32.mrf.mxu0
      %2747 = vmatprep.mubr.f32.mxu0 0.0
      %2748 = vmatmul.mubr.f32.gmra.mxu0 %v2639
      %v2749 = vpop.f32.mrf.mxu0
      %v2750 = vadd.f32 %v2538, %v2749
      %v2751 = vpop.f32.mrf.mxu0
      %2752 = vmatprep.mubr.f32.mxu0 0.0
      %2753 = vmatmul.mubr.f32.gmra.mxu0 %v2641
      %v2754 = vpop.f32.mrf.mxu0
      %v2755 = vadd.f32 %v2543, %v2754
      %v2756 = vpop.f32.mrf.mxu0
      %2757 = vmatprep.mubr.f32.mxu0 0.0
      %2758 = vmatmul.mubr.f32.gmra.mxu0 %v2643
      %v2759 = vpop.f32.mrf.mxu0
      %v2760 = vadd.f32 %v2548, %v2759
      %v2761 = vpop.f32.mrf.mxu0
      %2762 = vmatprep.mubr.f32.mxu0 0.0
      %2763 = vmatmul.mubr.f32.gmra.mxu0 %v2645
      %v2764 = vpop.f32.mrf.mxu0
      %v2765 = vadd.f32 %v2553, %v2764
      %v2766 = vpop.f32.mrf.mxu0
      %2767 = vmatprep.mubr.f32.mxu0 0.0
      %2768 = vmatmul.mubr.f32.gmra.mxu0 %v2647
      %v2769 = vpop.f32.mrf.mxu0
      %v2770 = vadd.f32 %v2558, %v2769
      %v2771 = vpop.f32.mrf.mxu0
      %2772 = vmatprep.mubr.f32.mxu0 0.0
      %2773 = vmatmul.mubr.f32.gmra.mxu0 %v2649
      %v2774 = vpop.f32.mrf.mxu0
      %v2775 = vadd.f32 %v2563, %v2774
      %v2776 = vpop.f32.mrf.mxu0
      %2777 = vmatprep.mubr.f32.mxu0 0.0
      %2778 = vmatmul.mubr.f32.gmra.mxu0 %v2651
      %v2779 = vpop.f32.mrf.mxu0
      %v2780 = vadd.f32 %v2568, %v2779
      %v2781 = vpop.f32.mrf.mxu0
      %2782 = vmatprep.mubr.f32.mxu0 0.0
      %2783 = vmatmul.mubr.f32.gmra.mxu0 %v2653
      %v2784 = vpop.f32.mrf.mxu0
      %v2785 = vadd.f32 %v2573, %v2784
      %v2786 = vpop.f32.mrf.mxu0
      %2787 = vmatprep.mubr.f32.mxu0 0.0
      %2788 = vmatmul.mubr.f32.gmra.mxu0 %v2655
      %v2789 = vpop.f32.mrf.mxu0
      %v2790 = vadd.f32 %v2578, %v2789
      %v2791 = vpop.f32.mrf.mxu0
      %2792 = vmatprep.mubr.f32.mxu0 0.0
      %2793 = vmatmul.mubr.f32.gmra.mxu0 %v2657
      %v2794 = vpop.f32.mrf.mxu0
      %v2795 = vadd.f32 %v2583, %v2794
      %v2796 = vpop.f32.mrf.mxu0
      %2797 = vmatprep.mubr.f32.mxu0 0.0
      %2798 = vmatmul.mubr.f32.gmra.mxu0 %v2659
      %v2799 = vpop.f32.mrf.mxu0
      %v2800 = vadd.f32 %v2588, %v2799
      %v2801 = vpop.f32.mrf.mxu0
      %2802 = vmatprep.mubr.f32.mxu0 0.0
      %2803 = vmatmul.mubr.f32.gmra.mxu0 %v2661
      %v2804 = vpop.f32.mrf.mxu0
      %v2805 = vadd.f32 %v2593, %v2804
      %v2806 = vpop.f32.mrf.mxu0
      %2807 = vmatprep.mubr.f32.mxu0 0.0
      %2808 = vmatmul.mubr.f32.gmra.mxu0 %v2663
      %v2809 = vpop.f32.mrf.mxu0
      %v2810 = vadd.f32 %v2598, %v2809
      %v2811 = vpop.f32.mrf.mxu0
      %2812 = vdwg.mxu0
      %v2813 = vrot.slane %v329, 2
      %v2814 = vrot.slane %v330, 2
      %v2815 = vsel %vm678, %v2813, %v2814
      %v2816 = vrot.slane %v331, 2
      %v2817 = vsel %vm678, %v2814, %v2816
      %s2818 = scalar_lea.vmem %s4, 4
      %v2819 = vld [vmem:[%s2818] sm:$0x3]
      %2820 = vrot.lane.b32.xlu0 %v2815, 124
      %v2821 = vpop.permute.xlu0 %2820
      %2822 = vrot.lane.b32.xlu0 %v2817, 124
      %v2823 = vpop.permute.xlu0 %2822
      %2824 = vrot.lane.b32.xlu0 %v681, 124
      %v2825 = vpop.permute.xlu0 %2824
      %2826 = vrot.lane.b32.xlu0 %v683, 124
      %v2827 = vpop.permute.xlu0 %2826
      %2828 = vrot.lane.b32.xlu0 %v686, 124
      %v2829 = vpop.permute.xlu0 %2828
      %2830 = vrot.lane.b32.xlu0 %v688, 124
      %v2831 = vpop.permute.xlu0 %2830
      %2832 = vrot.lane.b32.xlu0 %v691, 124
      %v2833 = vpop.permute.xlu0 %2832
      %2834 = vrot.lane.b32.xlu0 %v693, 124
      %v2835 = vpop.permute.xlu0 %2834
      %2836 = vrot.lane.b32.xlu0 %v696, 124
      %v2837 = vpop.permute.xlu0 %2836
      %2838 = vrot.lane.b32.xlu0 %v698, 124
      %v2839 = vpop.permute.xlu0 %2838
      %2840 = vrot.lane.b32.xlu0 %v701, 124
      %v2841 = vpop.permute.xlu0 %2840
      %2842 = vrot.lane.b32.xlu0 %v703, 124
      %v2843 = vpop.permute.xlu0 %2842
      %2844 = vrot.lane.b32.xlu0 %v706, 124
      %v2845 = vpop.permute.xlu0 %2844
      %2846 = vrot.lane.b32.xlu0 %v708, 124
      %v2847 = vpop.permute.xlu0 %2846
      %2848 = vrot.lane.b32.xlu0 %v711, 124
      %v2849 = vpop.permute.xlu0 %2848
      %2850 = vrot.lane.b32.xlu0 %v713, 124
      %v2851 = vpop.permute.xlu0 %2850
      %v2852 = vsel %vm2419, %v2821, 0
      %v2854 = vsel %vm2419, %v2823, 0
      %v2856 = vsel %vm2419, %v2825, 0
      %v2858 = vsel %vm2419, %v2827, 0
      %v2860 = vsel %vm2419, %v2829, 0
      %v2862 = vsel %vm2419, %v2831, 0
      %v2864 = vsel %vm2419, %v2833, 0
      %v2866 = vsel %vm2419, %v2835, 0
      %v2868 = vsel %vm2419, %v2837, 0
      %v2870 = vsel %vm2419, %v2839, 0
      %v2872 = vsel %vm2419, %v2841, 0
      %v2874 = vsel %vm2419, %v2843, 0
      %v2876 = vsel %vm2419, %v2845, 0
      %v2878 = vsel %vm2419, %v2847, 0
      %v2880 = vsel %vm2419, %v2849, 0
      %v2882 = vsel %vm2419, %v2851, 0
      %v2885 = vsel %vm2452, %v2819, 0
      %2887 = vmatprep.subr.mxu0 0.0
      %2888 = vmatpush1.msra.mxu0 0.0
      %2889 = vmatprep.subr.mxu0 0.0
      %2890 = vmatpush1.msra.mxu0 0.0
      %2891 = vmatprep.subr.mxu0 0.0
      %2892 = vmatpush1.msra.mxu0 0.0
      %2893 = vmatprep.subr.mxu0 0.0
      %2894 = vmatpush1.msra.mxu0 0.0
      %2895 = vmatprep.subr.mxu0 0.0
      %2896 = vmatpush1.msra.mxu0 0.0
      %2897 = vmatprep.subr.mxu0 0.0
      %2898 = vmatpush1.msra.mxu0 0.0
      %2899 = vmatprep.subr.mxu0 0.0
      %2900 = vmatpush1.msra.mxu0 0.0
      %2901 = vmatprep.subr.mxu0 0.0
      %2902 = vmatpush1.msra.mxu0 0.0
      %2903 = vmatprep.subr.mxu0 0.0
      %2904 = vmatpush1.msra.mxu0 0.0
      %2905 = vmatprep.subr.mxu0 0.0
      %2906 = vmatpush1.msra.mxu0 0.0
      %2907 = vmatprep.subr.mxu0 0.0
      %2908 = vmatpush1.msra.mxu0 0.0
      %2909 = vmatprep.subr.mxu0 0.0
      %2910 = vmatpush1.msra.mxu0 0.0
      %2911 = vmatprep.subr.mxu0 0.0
      %2912 = vmatpush1.msra.mxu0 0.0
      %2913 = vmatprep.subr.mxu0 0.0
      %2914 = vmatpush1.msra.mxu0 0.0
      %2915 = vmatprep.subr.mxu0 0.0
      %2916 = vmatpush1.msra.mxu0 0.0
      %2917 = vmatprep.subr.mxu0 0.0
      %2918 = vmatpush1.msra.mxu0 %v2885
      %2919 = vmatprep.subr.mxu0 0.0
      %2920 = vmatpush2.msra.mxu0 0.0
      %2921 = vmatprep.subr.mxu0 0.0
      %2922 = vmatpush2.msra.mxu0 0.0
      %2923 = vmatprep.subr.mxu0 0.0
      %2924 = vmatpush2.msra.mxu0 0.0
      %2925 = vmatprep.subr.mxu0 0.0
      %2926 = vmatpush2.msra.mxu0 0.0
      %2927 = vmatprep.subr.mxu0 0.0
      %2928 = vmatpush2.msra.mxu0 0.0
      %2929 = vmatprep.subr.mxu0 0.0
      %2930 = vmatpush2.msra.mxu0 0.0
      %2931 = vmatprep.subr.mxu0 0.0
      %2932 = vmatpush2.msra.mxu0 0.0
      %2933 = vmatprep.subr.mxu0 0.0
      %2934 = vmatpush2.msra.mxu0 0.0
      %2935 = vmatprep.subr.mxu0 0.0
      %2936 = vmatpush2.msra.mxu0 0.0
      %2937 = vmatprep.subr.mxu0 0.0
      %2938 = vmatpush2.msra.mxu0 0.0
      %2939 = vmatprep.subr.mxu0 0.0
      %2940 = vmatpush2.msra.mxu0 0.0
      %2941 = vmatprep.subr.mxu0 0.0
      %2942 = vmatpush2.msra.mxu0 0.0
      %2943 = vmatprep.subr.mxu0 0.0
      %2944 = vmatpush2.msra.mxu0 0.0
      %2945 = vmatprep.subr.mxu0 0.0
      %2946 = vmatpush2.msra.mxu0 0.0
      %2947 = vmatprep.subr.mxu0 0.0
      %2948 = vmatpush2.msra.mxu0 0.0
      %2949 = vmatprep.subr.mxu0 0.0
      %2950 = vmatpush2.msra.mxu0 0.0
      %2951 = vmatprep.mubr.f32.mxu0 0.0
      %2952 = vmatmul.mubr.f32.gmra.mxu0 %v2852
      %v2953 = vpop.f32.mrf.mxu0
      %v2954 = vadd.f32 0.0, %v2953
      %v2955 = vpop.f32.mrf.mxu0
      %2956 = vmatprep.mubr.f32.mxu0 0.0
      %2957 = vmatmul.mubr.f32.gmra.mxu0 %v2854
      %v2958 = vpop.f32.mrf.mxu0
      %v2959 = vadd.f32 0.0, %v2958
      %v2960 = vpop.f32.mrf.mxu0
      %2961 = vmatprep.mubr.f32.mxu0 0.0
      %2962 = vmatmul.mubr.f32.gmra.mxu0 %v2856
      %v2963 = vpop.f32.mrf.mxu0
      %v2964 = vadd.f32 0.0, %v2963
      %v2965 = vpop.f32.mrf.mxu0
      %2966 = vmatprep.mubr.f32.mxu0 0.0
      %2967 = vmatmul.mubr.f32.gmra.mxu0 %v2858
      %v2968 = vpop.f32.mrf.mxu0
      %v2969 = vadd.f32 0.0, %v2968
      %v2970 = vpop.f32.mrf.mxu0
      %2971 = vmatprep.mubr.f32.mxu0 0.0
      %2972 = vmatmul.mubr.f32.gmra.mxu0 %v2860
      %v2973 = vpop.f32.mrf.mxu0
      %v2974 = vadd.f32 0.0, %v2973
      %v2975 = vpop.f32.mrf.mxu0
      %2976 = vmatprep.mubr.f32.mxu0 0.0
      %2977 = vmatmul.mubr.f32.gmra.mxu0 %v2862
      %v2978 = vpop.f32.mrf.mxu0
      %v2979 = vadd.f32 0.0, %v2978
      %v2980 = vpop.f32.mrf.mxu0
      %2981 = vmatprep.mubr.f32.mxu0 0.0
      %2982 = vmatmul.mubr.f32.gmra.mxu0 %v2864
      %v2983 = vpop.f32.mrf.mxu0
      %v2984 = vadd.f32 0.0, %v2983
      %v2985 = vpop.f32.mrf.mxu0
      %2986 = vmatprep.mubr.f32.mxu0 0.0
      %2987 = vmatmul.mubr.f32.gmra.mxu0 %v2866
      %v2988 = vpop.f32.mrf.mxu0
      %v2989 = vadd.f32 0.0, %v2988
      %v2990 = vpop.f32.mrf.mxu0
      %2991 = vmatprep.mubr.f32.mxu0 0.0
      %2992 = vmatmul.mubr.f32.gmra.mxu0 %v2868
      %v2993 = vpop.f32.mrf.mxu0
      %v2994 = vadd.f32 0.0, %v2993
      %v2995 = vpop.f32.mrf.mxu0
      %2996 = vmatprep.mubr.f32.mxu0 0.0
      %2997 = vmatmul.mubr.f32.gmra.mxu0 %v2870
      %v2998 = vpop.f32.mrf.mxu0
      %v2999 = vadd.f32 0.0, %v2998
      %v3000 = vpop.f32.mrf.mxu0
      %3001 = vmatprep.mubr.f32.mxu0 0.0
      %3002 = vmatmul.mubr.f32.gmra.mxu0 %v2872
      %v3003 = vpop.f32.mrf.mxu0
      %v3004 = vadd.f32 0.0, %v3003
      %v3005 = vpop.f32.mrf.mxu0
      %3006 = vmatprep.mubr.f32.mxu0 0.0
      %3007 = vmatmul.mubr.f32.gmra.mxu0 %v2874
      %v3008 = vpop.f32.mrf.mxu0
      %v3009 = vadd.f32 0.0, %v3008
      %v3010 = vpop.f32.mrf.mxu0
      %3011 = vmatprep.mubr.f32.mxu0 0.0
      %3012 = vmatmul.mubr.f32.gmra.mxu0 %v2876
      %v3013 = vpop.f32.mrf.mxu0
      %v3014 = vadd.f32 0.0, %v3013
      %v3015 = vpop.f32.mrf.mxu0
      %3016 = vmatprep.mubr.f32.mxu0 0.0
      %3017 = vmatmul.mubr.f32.gmra.mxu0 %v2878
      %v3018 = vpop.f32.mrf.mxu0
      %v3019 = vadd.f32 0.0, %v3018
      %v3020 = vpop.f32.mrf.mxu0
      %3021 = vmatprep.mubr.f32.mxu0 0.0
      %3022 = vmatmul.mubr.f32.gmra.mxu0 %v2880
      %v3023 = vpop.f32.mrf.mxu0
      %v3024 = vadd.f32 0.0, %v3023
      %v3025 = vpop.f32.mrf.mxu0
      %3026 = vmatprep.mubr.f32.mxu0 0.0
      %3027 = vmatmul.mubr.f32.gmra.mxu0 %v2882
      %v3028 = vpop.f32.mrf.mxu0
      %v3029 = vadd.f32 0.0, %v3028
      %v3030 = vpop.f32.mrf.mxu0
      %3031 = vdwg.mxu0
      %v3032 = vadd.f32 %v2735, %v2954
      %v3033 = vadd.f32 %v2740, %v2959
      %v3034 = vadd.f32 %v2745, %v2964
      %v3035 = vadd.f32 %v2750, %v2969
      %v3036 = vadd.f32 %v2755, %v2974
      %v3037 = vadd.f32 %v2760, %v2979
      %v3038 = vadd.f32 %v2765, %v2984
      %v3039 = vadd.f32 %v2770, %v2989
      %v3040 = vadd.f32 %v2775, %v2994
      %v3041 = vadd.f32 %v2780, %v2999
      %v3042 = vadd.f32 %v2785, %v3004
      %v3043 = vadd.f32 %v2790, %v3009
      %v3044 = vadd.f32 %v2795, %v3014
      %v3045 = vadd.f32 %v2800, %v3019
      %v3046 = vadd.f32 %v2805, %v3024
      %v3047 = vadd.f32 %v2810, %v3029
      %v3048 = vrot.slane %v329, 3
      %v3049 = vrot.slane %v330, 3
      %v3050 = vsel %vm1081, %v3048, %v3049
      %v3051 = vrot.slane %v331, 3
      %v3052 = vsel %vm1081, %v3049, %v3051
      %s3053 = scalar_lea.vmem %s4, 6
      %v3054 = vld [vmem:[%s3053] sm:$0x3]
      %3055 = vrot.lane.b32.xlu0 %v3050, 124
      %v3056 = vpop.permute.xlu0 %3055
      %3057 = vrot.lane.b32.xlu0 %v3052, 124
      %v3058 = vpop.permute.xlu0 %3057
      %3059 = vrot.lane.b32.xlu0 %v1084, 124
      %v3060 = vpop.permute.xlu0 %3059
      %3061 = vrot.lane.b32.xlu0 %v1086, 124
      %v3062 = vpop.permute.xlu0 %3061
      %3063 = vrot.lane.b32.xlu0 %v1089, 124
      %v3064 = vpop.permute.xlu0 %3063
      %3065 = vrot.lane.b32.xlu0 %v1091, 124
      %v3066 = vpop.permute.xlu0 %3065
      %3067 = vrot.lane.b32.xlu0 %v1094, 124
      %v3068 = vpop.permute.xlu0 %3067
      %3069 = vrot.lane.b32.xlu0 %v1096, 124
      %v3070 = vpop.permute.xlu0 %3069
      %3071 = vrot.lane.b32.xlu0 %v1099, 124
      %v3072 = vpop.permute.xlu0 %3071
      %3073 = vrot.lane.b32.xlu0 %v1101, 124
      %v3074 = vpop.permute.xlu0 %3073
      %3075 = vrot.lane.b32.xlu0 %v1104, 124
      %v3076 = vpop.permute.xlu0 %3075
      %3077 = vrot.lane.b32.xlu0 %v1106, 124
      %v3078 = vpop.permute.xlu0 %3077
      %3079 = vrot.lane.b32.xlu0 %v1109, 124
      %v3080 = vpop.permute.xlu0 %3079
      %3081 = vrot.lane.b32.xlu0 %v1111, 124
      %v3082 = vpop.permute.xlu0 %3081
      %3083 = vrot.lane.b32.xlu0 %v1114, 124
      %v3084 = vpop.permute.xlu0 %3083
      %3085 = vrot.lane.b32.xlu0 %v1116, 124
      %v3086 = vpop.permute.xlu0 %3085
      %v3087 = vsel %vm2419, %v3056, 0
      %v3089 = vsel %vm2419, %v3058, 0
      %v3091 = vsel %vm2419, %v3060, 0
      %v3093 = vsel %vm2419, %v3062, 0
      %v3095 = vsel %vm2419, %v3064, 0
      %v3097 = vsel %vm2419, %v3066, 0
      %v3099 = vsel %vm2419, %v3068, 0
      %v3101 = vsel %vm2419, %v3070, 0
      %v3103 = vsel %vm2419, %v3072, 0
      %v3105 = vsel %vm2419, %v3074, 0
      %v3107 = vsel %vm2419, %v3076, 0
      %v3109 = vsel %vm2419, %v3078, 0
      %v3111 = vsel %vm2419, %v3080, 0
      %v3113 = vsel %vm2419, %v3082, 0
      %v3115 = vsel %vm2419, %v3084, 0
      %v3117 = vsel %vm2419, %v3086, 0
      %v3120 = vsel %vm2452, %v3054, 0
      %3122 = vmatprep.subr.mxu0 0.0
      %3123 = vmatpush1.msra.mxu0 0.0
      %3124 = vmatprep.subr.mxu0 0.0
      %3125 = vmatpush1.msra.mxu0 0.0
      %3126 = vmatprep.subr.mxu0 0.0
      %3127 = vmatpush1.msra.mxu0 0.0
      %3128 = vmatprep.subr.mxu0 0.0
      %3129 = vmatpush1.msra.mxu0 0.0
      %3130 = vmatprep.subr.mxu0 0.0
      %3131 = vmatpush1.msra.mxu0 0.0
      %3132 = vmatprep.subr.mxu0 0.0
      %3133 = vmatpush1.msra.mxu0 0.0
      %3134 = vmatprep.subr.mxu0 0.0
      %3135 = vmatpush1.msra.mxu0 0.0
      %3136 = vmatprep.subr.mxu0 0.0
      %3137 = vmatpush1.msra.mxu0 0.0
      %3138 = vmatprep.subr.mxu0 0.0
      %3139 = vmatpush1.msra.mxu0 0.0
      %3140 = vmatprep.subr.mxu0 0.0
      %3141 = vmatpush1.msra.mxu0 0.0
      %3142 = vmatprep.subr.mxu0 0.0
      %3143 = vmatpush1.msra.mxu0 0.0
      %3144 = vmatprep.subr.mxu0 0.0
      %3145 = vmatpush1.msra.mxu0 0.0
      %3146 = vmatprep.subr.mxu0 0.0
      %3147 = vmatpush1.msra.mxu0 0.0
      %3148 = vmatprep.subr.mxu0 0.0
      %3149 = vmatpush1.msra.mxu0 0.0
      %3150 = vmatprep.subr.mxu0 0.0
      %3151 = vmatpush1.msra.mxu0 0.0
      %3152 = vmatprep.subr.mxu0 0.0
      %3153 = vmatpush1.msra.mxu0 %v3120
      %3154 = vmatprep.subr.mxu0 0.0
      %3155 = vmatpush2.msra.mxu0 0.0
      %3156 = vmatprep.subr.mxu0 0.0
      %3157 = vmatpush2.msra.mxu0 0.0
      %3158 = vmatprep.subr.mxu0 0.0
      %3159 = vmatpush2.msra.mxu0 0.0
      %3160 = vmatprep.subr.mxu0 0.0
      %3161 = vmatpush2.msra.mxu0 0.0
      %3162 = vmatprep.subr.mxu0 0.0
      %3163 = vmatpush2.msra.mxu0 0.0
      %3164 = vmatprep.subr.mxu0 0.0
      %3165 = vmatpush2.msra.mxu0 0.0
      %3166 = vmatprep.subr.mxu0 0.0
      %3167 = vmatpush2.msra.mxu0 0.0
      %3168 = vmatprep.subr.mxu0 0.0
      %3169 = vmatpush2.msra.mxu0 0.0
      %3170 = vmatprep.subr.mxu0 0.0
      %3171 = vmatpush2.msra.mxu0 0.0
      %3172 = vmatprep.subr.mxu0 0.0
      %3173 = vmatpush2.msra.mxu0 0.0
      %3174 = vmatprep.subr.mxu0 0.0
      %3175 = vmatpush2.msra.mxu0 0.0
      %3176 = vmatprep.subr.mxu0 0.0
      %3177 = vmatpush2.msra.mxu0 0.0
      %3178 = vmatprep.subr.mxu0 0.0
      %3179 = vmatpush2.msra.mxu0 0.0
      %3180 = vmatprep.subr.mxu0 0.0
      %3181 = vmatpush2.msra.mxu0 0.0
      %3182 = vmatprep.subr.mxu0 0.0
      %3183 = vmatpush2.msra.mxu0 0.0
      %3184 = vmatprep.subr.mxu0 0.0
      %3185 = vmatpush2.msra.mxu0 0.0
      %3186 = vmatprep.mubr.f32.mxu0 0.0
      %3187 = vmatmul.mubr.f32.gmra.mxu0 %v3087
      %v3188 = vpop.f32.mrf.mxu0
      %v3189 = vadd.f32 0.0, %v3188
      %v3190 = vpop.f32.mrf.mxu0
      %3191 = vmatprep.mubr.f32.mxu0 0.0
      %3192 = vmatmul.mubr.f32.gmra.mxu0 %v3089
      %v3193 = vpop.f32.mrf.mxu0
      %v3194 = vadd.f32 0.0, %v3193
      %v3195 = vpop.f32.mrf.mxu0
      %3196 = vmatprep.mubr.f32.mxu0 0.0
      %3197 = vmatmul.mubr.f32.gmra.mxu0 %v3091
      %v3198 = vpop.f32.mrf.mxu0
      %v3199 = vadd.f32 0.0, %v3198
      %v3200 = vpop.f32.mrf.mxu0
      %3201 = vmatprep.mubr.f32.mxu0 0.0
      %3202 = vmatmul.mubr.f32.gmra.mxu0 %v3093
      %v3203 = vpop.f32.mrf.mxu0
      %v3204 = vadd.f32 0.0, %v3203
      %v3205 = vpop.f32.mrf.mxu0
      %3206 = vmatprep.mubr.f32.mxu0 0.0
      %3207 = vmatmul.mubr.f32.gmra.mxu0 %v3095
      %v3208 = vpop.f32.mrf.mxu0
      %v3209 = vadd.f32 0.0, %v3208
      %v3210 = vpop.f32.mrf.mxu0
      %3211 = vmatprep.mubr.f32.mxu0 0.0
      %3212 = vmatmul.mubr.f32.gmra.mxu0 %v3097
      %v3213 = vpop.f32.mrf.mxu0
      %v3214 = vadd.f32 0.0, %v3213
      %v3215 = vpop.f32.mrf.mxu0
      %3216 = vmatprep.mubr.f32.mxu0 0.0
      %3217 = vmatmul.mubr.f32.gmra.mxu0 %v3099
      %v3218 = vpop.f32.mrf.mxu0
      %v3219 = vadd.f32 0.0, %v3218
      %v3220 = vpop.f32.mrf.mxu0
      %3221 = vmatprep.mubr.f32.mxu0 0.0
      %3222 = vmatmul.mubr.f32.gmra.mxu0 %v3101
      %v3223 = vpop.f32.mrf.mxu0
      %v3224 = vadd.f32 0.0, %v3223
      %v3225 = vpop.f32.mrf.mxu0
      %3226 = vmatprep.mubr.f32.mxu0 0.0
      %3227 = vmatmul.mubr.f32.gmra.mxu0 %v3103
      %v3228 = vpop.f32.mrf.mxu0
      %v3229 = vadd.f32 0.0, %v3228
      %v3230 = vpop.f32.mrf.mxu0
      %3231 = vmatprep.mubr.f32.mxu0 0.0
      %3232 = vmatmul.mubr.f32.gmra.mxu0 %v3105
      %v3233 = vpop.f32.mrf.mxu0
      %v3234 = vadd.f32 0.0, %v3233
      %v3235 = vpop.f32.mrf.mxu0
      %3236 = vmatprep.mubr.f32.mxu0 0.0
      %3237 = vmatmul.mubr.f32.gmra.mxu0 %v3107
      %v3238 = vpop.f32.mrf.mxu0
      %v3239 = vadd.f32 0.0, %v3238
      %v3240 = vpop.f32.mrf.mxu0
      %3241 = vmatprep.mubr.f32.mxu0 0.0
      %3242 = vmatmul.mubr.f32.gmra.mxu0 %v3109
      %v3243 = vpop.f32.mrf.mxu0
      %v3244 = vadd.f32 0.0, %v3243
      %v3245 = vpop.f32.mrf.mxu0
      %3246 = vmatprep.mubr.f32.mxu0 0.0
      %3247 = vmatmul.mubr.f32.gmra.mxu0 %v3111
      %v3248 = vpop.f32.mrf.mxu0
      %v3249 = vadd.f32 0.0, %v3248
      %v3250 = vpop.f32.mrf.mxu0
      %3251 = vmatprep.mubr.f32.mxu0 0.0
      %3252 = vmatmul.mubr.f32.gmra.mxu0 %v3113
      %v3253 = vpop.f32.mrf.mxu0
      %v3254 = vadd.f32 0.0, %v3253
      %v3255 = vpop.f32.mrf.mxu0
      %3256 = vmatprep.mubr.f32.mxu0 0.0
      %3257 = vmatmul.mubr.f32.gmra.mxu0 %v3115
      %v3258 = vpop.f32.mrf.mxu0
      %v3259 = vadd.f32 0.0, %v3258
      %v3260 = vpop.f32.mrf.mxu0
      %3261 = vmatprep.mubr.f32.mxu0 0.0
      %3262 = vmatmul.mubr.f32.gmra.mxu0 %v3117
      %v3263 = vpop.f32.mrf.mxu0
      %v3264 = vadd.f32 0.0, %v3263
      %v3265 = vpop.f32.mrf.mxu0
      %3266 = vdwg.mxu0
      %v3267 = vadd.f32 %v3032, %v3189
      %v3268 = vadd.f32 %v3033, %v3194
      %v3269 = vadd.f32 %v3034, %v3199
      %v3270 = vadd.f32 %v3035, %v3204
      %v3271 = vadd.f32 %v3036, %v3209
      %v3272 = vadd.f32 %v3037, %v3214
      %v3273 = vadd.f32 %v3038, %v3219
      %v3274 = vadd.f32 %v3039, %v3224
      %v3275 = vadd.f32 %v3040, %v3229
      %v3276 = vadd.f32 %v3041, %v3234
      %v3277 = vadd.f32 %v3042, %v3239
      %v3278 = vadd.f32 %v3043, %v3244
      %v3279 = vadd.f32 %v3044, %v3249
      %v3280 = vadd.f32 %v3045, %v3254
      %v3281 = vadd.f32 %v3046, %v3259
      %v3282 = vadd.f32 %v3047, %v3264
      %v3283 = vrot.slane %v329, 4
      %v3284 = vrot.slane %v330, 4
      %v3285 = vsel %vm464, %v3283, %v3284
      %v3286 = vrot.slane %v331, 4
      %v3287 = vsel %vm464, %v3284, %v3286
      %v3288 = vrot.slane %v332, 4
      %v3289 = vrot.slane %v333, 4
      %v3290 = vsel %vm464, %v3288, %v3289
      %v3291 = vrot.slane %v334, 4
      %v3292 = vsel %vm464, %v3289, %v3291
      %v3293 = vrot.slane %v335, 4
      %v3294 = vrot.slane %v336, 4
      %v3295 = vsel %vm464, %v3293, %v3294
      %v3296 = vrot.slane %v337, 4
      %v3297 = vsel %vm464, %v3294, %v3296
      %v3298 = vrot.slane %v338, 4
      %v3299 = vrot.slane %v339, 4
      %v3300 = vsel %vm464, %v3298, %v3299
      %v3301 = vrot.slane %v340, 4
      %v3302 = vsel %vm464, %v3299, %v3301
      %v3303 = vrot.slane %v341, 4
      %v3304 = vrot.slane %v342, 4
      %v3305 = vsel %vm464, %v3303, %v3304
      %v3306 = vrot.slane %v343, 4
      %v3307 = vsel %vm464, %v3304, %v3306
      %v3308 = vrot.slane %v344, 4
      %v3309 = vrot.slane %v345, 4
      %v3310 = vsel %vm464, %v3308, %v3309
      %v3311 = vrot.slane %v346, 4
      %v3312 = vsel %vm464, %v3309, %v3311
      %v3313 = vrot.slane %v347, 4
      %v3314 = vrot.slane %v348, 4
      %v3315 = vsel %vm464, %v3313, %v3314
      %v3316 = vrot.slane %v349, 4
      %v3317 = vsel %vm464, %v3314, %v3316
      %v3318 = vrot.slane %v350, 4
      %v3319 = vrot.slane %v351, 4
      %v3320 = vsel %vm464, %v3318, %v3319
      %v3321 = vrot.slane %v352, 4
      %v3322 = vsel %vm464, %v3319, %v3321
      %s3323 = scalar_lea.vmem %s4, 8
      %v3324 = vld [vmem:[%s3323] sm:$0x3]
      %3325 = vrot.lane.b32.xlu0 %v3285, 124
      %v3326 = vpop.permute.xlu0 %3325
      %3327 = vrot.lane.b32.xlu0 %v3287, 124
      %v3328 = vpop.permute.xlu0 %3327
      %3329 = vrot.lane.b32.xlu0 %v3290, 124
      %v3330 = vpop.permute.xlu0 %3329
      %3331 = vrot.lane.b32.xlu0 %v3292, 124
      %v3332 = vpop.permute.xlu0 %3331
      %3333 = vrot.lane.b32.xlu0 %v3295, 124
      %v3334 = vpop.permute.xlu0 %3333
      %3335 = vrot.lane.b32.xlu0 %v3297, 124
      %v3336 = vpop.permute.xlu0 %3335
      %3337 = vrot.lane.b32.xlu0 %v3300, 124
      %v3338 = vpop.permute.xlu0 %3337
      %3339 = vrot.lane.b32.xlu0 %v3302, 124
      %v3340 = vpop.permute.xlu0 %3339
      %3341 = vrot.lane.b32.xlu0 %v3305, 124
      %v3342 = vpop.permute.xlu0 %3341
      %3343 = vrot.lane.b32.xlu0 %v3307, 124
      %v3344 = vpop.permute.xlu0 %3343
      %3345 = vrot.lane.b32.xlu0 %v3310, 124
      %v3346 = vpop.permute.xlu0 %3345
      %3347 = vrot.lane.b32.xlu0 %v3312, 124
      %v3348 = vpop.permute.xlu0 %3347
      %3349 = vrot.lane.b32.xlu0 %v3315, 124
      %v3350 = vpop.permute.xlu0 %3349
      %3351 = vrot.lane.b32.xlu0 %v3317, 124
      %v3352 = vpop.permute.xlu0 %3351
      %3353 = vrot.lane.b32.xlu0 %v3320, 124
      %v3354 = vpop.permute.xlu0 %3353
      %3355 = vrot.lane.b32.xlu0 %v3322, 124
      %v3356 = vpop.permute.xlu0 %3355
      %v3357 = vsel %vm2419, %v3326, 0
      %v3359 = vsel %vm2419, %v3328, 0
      %v3361 = vsel %vm2419, %v3330, 0
      %v3363 = vsel %vm2419, %v3332, 0
      %v3365 = vsel %vm2419, %v3334, 0
      %v3367 = vsel %vm2419, %v3336, 0
      %v3369 = vsel %vm2419, %v3338, 0
      %v3371 = vsel %vm2419, %v3340, 0
      %v3373 = vsel %vm2419, %v3342, 0
      %v3375 = vsel %vm2419, %v3344, 0
      %v3377 = vsel %vm2419, %v3346, 0
      %v3379 = vsel %vm2419, %v3348, 0
      %v3381 = vsel %vm2419, %v3350, 0
      %v3383 = vsel %vm2419, %v3352, 0
      %v3385 = vsel %vm2419, %v3354, 0
      %v3387 = vsel %vm2419, %v3356, 0
      %v3390 = vsel %vm2452, %v3324, 0
      %3392 = vmatprep.subr.mxu0 0.0
      %3393 = vmatpush1.msra.mxu0 0.0
      %3394 = vmatprep.subr.mxu0 0.0
      %3395 = vmatpush1.msra.mxu0 0.0
      %3396 = vmatprep.subr.mxu0 0.0
      %3397 = vmatpush1.msra.mxu0 0.0
      %3398 = vmatprep.subr.mxu0 0.0
      %3399 = vmatpush1.msra.mxu0 0.0
      %3400 = vmatprep.subr.mxu0 0.0
      %3401 = vmatpush1.msra.mxu0 0.0
      %3402 = vmatprep.subr.mxu0 0.0
      %3403 = vmatpush1.msra.mxu0 0.0
      %3404 = vmatprep.subr.mxu0 0.0
      %3405 = vmatpush1.msra.mxu0 0.0
      %3406 = vmatprep.subr.mxu0 0.0
      %3407 = vmatpush1.msra.mxu0 0.0
      %3408 = vmatprep.subr.mxu0 0.0
      %3409 = vmatpush1.msra.mxu0 0.0
      %3410 = vmatprep.subr.mxu0 0.0
      %3411 = vmatpush1.msra.mxu0 0.0
      %3412 = vmatprep.subr.mxu0 0.0
      %3413 = vmatpush1.msra.mxu0 0.0
      %3414 = vmatprep.subr.mxu0 0.0
      %3415 = vmatpush1.msra.mxu0 0.0
      %3416 = vmatprep.subr.mxu0 0.0
      %3417 = vmatpush1.msra.mxu0 0.0
      %3418 = vmatprep.subr.mxu0 0.0
      %3419 = vmatpush1.msra.mxu0 0.0
      %3420 = vmatprep.subr.mxu0 0.0
      %3421 = vmatpush1.msra.mxu0 0.0
      %3422 = vmatprep.subr.mxu0 0.0
      %3423 = vmatpush1.msra.mxu0 %v3390
      %3424 = vmatprep.subr.mxu0 0.0
      %3425 = vmatpush2.msra.mxu0 0.0
      %3426 = vmatprep.subr.mxu0 0.0
      %3427 = vmatpush2.msra.mxu0 0.0
      %3428 = vmatprep.subr.mxu0 0.0
      %3429 = vmatpush2.msra.mxu0 0.0
      %3430 = vmatprep.subr.mxu0 0.0
      %3431 = vmatpush2.msra.mxu0 0.0
      %3432 = vmatprep.subr.mxu0 0.0
      %3433 = vmatpush2.msra.mxu0 0.0
      %3434 = vmatprep.subr.mxu0 0.0
      %3435 = vmatpush2.msra.mxu0 0.0
      %3436 = vmatprep.subr.mxu0 0.0
      %3437 = vmatpush2.msra.mxu0 0.0
      %3438 = vmatprep.subr.mxu0 0.0
      %3439 = vmatpush2.msra.mxu0 0.0
      %3440 = vmatprep.subr.mxu0 0.0
      %3441 = vmatpush2.msra.mxu0 0.0
      %3442 = vmatprep.subr.mxu0 0.0
      %3443 = vmatpush2.msra.mxu0 0.0
      %3444 = vmatprep.subr.mxu0 0.0
      %3445 = vmatpush2.msra.mxu0 0.0
      %3446 = vmatprep.subr.mxu0 0.0
      %3447 = vmatpush2.msra.mxu0 0.0
      %3448 = vmatprep.subr.mxu0 0.0
      %3449 = vmatpush2.msra.mxu0 0.0
      %3450 = vmatprep.subr.mxu0 0.0
      %3451 = vmatpush2.msra.mxu0 0.0
      %3452 = vmatprep.subr.mxu0 0.0
      %3453 = vmatpush2.msra.mxu0 0.0
      %3454 = vmatprep.subr.mxu0 0.0
      %3455 = vmatpush2.msra.mxu0 0.0
      %3456 = vmatprep.mubr.f32.mxu0 0.0
      %3457 = vmatmul.mubr.f32.gmra.mxu0 %v3357
      %v3458 = vpop.f32.mrf.mxu0
      %v3459 = vadd.f32 0.0, %v3458
      %v3460 = vpop.f32.mrf.mxu0
      %3461 = vmatprep.mubr.f32.mxu0 0.0
      %3462 = vmatmul.mubr.f32.gmra.mxu0 %v3359
      %v3463 = vpop.f32.mrf.mxu0
      %v3464 = vadd.f32 0.0, %v3463
      %v3465 = vpop.f32.mrf.mxu0
      %3466 = vmatprep.mubr.f32.mxu0 0.0
      %3467 = vmatmul.mubr.f32.gmra.mxu0 %v3361
      %v3468 = vpop.f32.mrf.mxu0
      %v3469 = vadd.f32 0.0, %v3468
      %v3470 = vpop.f32.mrf.mxu0
      %3471 = vmatprep.mubr.f32.mxu0 0.0
      %3472 = vmatmul.mubr.f32.gmra.mxu0 %v3363
      %v3473 = vpop.f32.mrf.mxu0
      %v3474 = vadd.f32 0.0, %v3473
      %v3475 = vpop.f32.mrf.mxu0
      %3476 = vmatprep.mubr.f32.mxu0 0.0
      %3477 = vmatmul.mubr.f32.gmra.mxu0 %v3365
      %v3478 = vpop.f32.mrf.mxu0
      %v3479 = vadd.f32 0.0, %v3478
      %v3480 = vpop.f32.mrf.mxu0
      %3481 = vmatprep.mubr.f32.mxu0 0.0
      %3482 = vmatmul.mubr.f32.gmra.mxu0 %v3367
      %v3483 = vpop.f32.mrf.mxu0
      %v3484 = vadd.f32 0.0, %v3483
      %v3485 = vpop.f32.mrf.mxu0
      %3486 = vmatprep.mubr.f32.mxu0 0.0
      %3487 = vmatmul.mubr.f32.gmra.mxu0 %v3369
      %v3488 = vpop.f32.mrf.mxu0
      %v3489 = vadd.f32 0.0, %v3488
      %v3490 = vpop.f32.mrf.mxu0
      %3491 = vmatprep.mubr.f32.mxu0 0.0
      %3492 = vmatmul.mubr.f32.gmra.mxu0 %v3371
      %v3493 = vpop.f32.mrf.mxu0
      %v3494 = vadd.f32 0.0, %v3493
      %v3495 = vpop.f32.mrf.mxu0
      %3496 = vmatprep.mubr.f32.mxu0 0.0
      %3497 = vmatmul.mubr.f32.gmra.mxu0 %v3373
      %v3498 = vpop.f32.mrf.mxu0
      %v3499 = vadd.f32 0.0, %v3498
      %v3500 = vpop.f32.mrf.mxu0
      %3501 = vmatprep.mubr.f32.mxu0 0.0
      %3502 = vmatmul.mubr.f32.gmra.mxu0 %v3375
      %v3503 = vpop.f32.mrf.mxu0
      %v3504 = vadd.f32 0.0, %v3503
      %v3505 = vpop.f32.mrf.mxu0
      %3506 = vmatprep.mubr.f32.mxu0 0.0
      %3507 = vmatmul.mubr.f32.gmra.mxu0 %v3377
      %v3508 = vpop.f32.mrf.mxu0
      %v3509 = vadd.f32 0.0, %v3508
      %v3510 = vpop.f32.mrf.mxu0
      %3511 = vmatprep.mubr.f32.mxu0 0.0
      %3512 = vmatmul.mubr.f32.gmra.mxu0 %v3379
      %v3513 = vpop.f32.mrf.mxu0
      %v3514 = vadd.f32 0.0, %v3513
      %v3515 = vpop.f32.mrf.mxu0
      %3516 = vmatprep.mubr.f32.mxu0 0.0
      %3517 = vmatmul.mubr.f32.gmra.mxu0 %v3381
      %v3518 = vpop.f32.mrf.mxu0
      %v3519 = vadd.f32 0.0, %v3518
      %v3520 = vpop.f32.mrf.mxu0
      %3521 = vmatprep.mubr.f32.mxu0 0.0
      %3522 = vmatmul.mubr.f32.gmra.mxu0 %v3383
      %v3523 = vpop.f32.mrf.mxu0
      %v3524 = vadd.f32 0.0, %v3523
      %v3525 = vpop.f32.mrf.mxu0
      %3526 = vmatprep.mubr.f32.mxu0 0.0
      %3527 = vmatmul.mubr.f32.gmra.mxu0 %v3385
      %v3528 = vpop.f32.mrf.mxu0
      %v3529 = vadd.f32 0.0, %v3528
      %v3530 = vpop.f32.mrf.mxu0
      %3531 = vmatprep.mubr.f32.mxu0 0.0
      %3532 = vmatmul.mubr.f32.gmra.mxu0 %v3387
      %v3533 = vpop.f32.mrf.mxu0
      %v3534 = vadd.f32 0.0, %v3533
      %v3535 = vpop.f32.mrf.mxu0
      %3536 = vdwg.mxu0
      %v3537 = vadd.f32 %v3267, %v3459
      %v3538 = vadd.f32 %v3268, %v3464
      %v3539 = vadd.f32 %v3269, %v3469
      %v3540 = vadd.f32 %v3270, %v3474
      %v3541 = vadd.f32 %v3271, %v3479
      %v3542 = vadd.f32 %v3272, %v3484
      %v3543 = vadd.f32 %v3273, %v3489
      %v3544 = vadd.f32 %v3274, %v3494
      %v3545 = vadd.f32 %v3275, %v3499
      %v3546 = vadd.f32 %v3276, %v3504
      %v3547 = vadd.f32 %v3277, %v3509
      %v3548 = vadd.f32 %v3278, %v3514
      %v3549 = vadd.f32 %v3279, %v3519
      %v3550 = vadd.f32 %v3280, %v3524
      %v3551 = vadd.f32 %v3281, %v3529
      %v3552 = vadd.f32 %v3282, %v3534
      %s3553 = scalar_lea.vmem %s4, 10
      %v3554 = vld [vmem:[%s3553] sm:$0x3]
      %3555 = vrot.lane.b32.xlu0 %v353, 124
      %v3556 = vpop.permute.xlu0 %3555
      %3557 = vrot.lane.b32.xlu0 %v354, 124
      %v3558 = vpop.permute.xlu0 %3557
      %v3559 = vsel %vm2419, %v3556, 0
      %v3561 = vsel %vm2419, %v3558, 0
      %v3564 = vsel %vm2452, %v3554, 0
      %3566 = vmatprep.subr.mxu0 0.0
      %3567 = vmatpush1.msra.mxu0 0.0
      %3568 = vmatprep.subr.mxu0 0.0
      %3569 = vmatpush1.msra.mxu0 0.0
      %3570 = vmatprep.subr.mxu0 0.0
      %3571 = vmatpush1.msra.mxu0 0.0
      %3572 = vmatprep.subr.mxu0 0.0
      %3573 = vmatpush1.msra.mxu0 0.0
      %3574 = vmatprep.subr.mxu0 0.0
      %3575 = vmatpush1.msra.mxu0 0.0
      %3576 = vmatprep.subr.mxu0 0.0
      %3577 = vmatpush1.msra.mxu0 0.0
      %3578 = vmatprep.subr.mxu0 0.0
      %3579 = vmatpush1.msra.mxu0 0.0
      %3580 = vmatprep.subr.mxu0 0.0
      %3581 = vmatpush1.msra.mxu0 0.0
      %3582 = vmatprep.subr.mxu0 0.0
      %3583 = vmatpush1.msra.mxu0 0.0
      %3584 = vmatprep.subr.mxu0 0.0
      %3585 = vmatpush1.msra.mxu0 0.0
      %3586 = vmatprep.subr.mxu0 0.0
      %3587 = vmatpush1.msra.mxu0 0.0
      %3588 = vmatprep.subr.mxu0 0.0
      %3589 = vmatpush1.msra.mxu0 0.0
      %3590 = vmatprep.subr.mxu0 0.0
      %3591 = vmatpush1.msra.mxu0 0.0
      %3592 = vmatprep.subr.mxu0 0.0
      %3593 = vmatpush1.msra.mxu0 0.0
      %3594 = vmatprep.subr.mxu0 0.0
      %3595 = vmatpush1.msra.mxu0 0.0
      %3596 = vmatprep.subr.mxu0 0.0
      %3597 = vmatpush1.msra.mxu0 %v3564
      %3598 = vmatprep.subr.mxu0 0.0
      %3599 = vmatpush2.msra.mxu0 0.0
      %3600 = vmatprep.subr.mxu0 0.0
      %3601 = vmatpush2.msra.mxu0 0.0
      %3602 = vmatprep.subr.mxu0 0.0
      %3603 = vmatpush2.msra.mxu0 0.0
      %3604 = vmatprep.subr.mxu0 0.0
      %3605 = vmatpush2.msra.mxu0 0.0
      %3606 = vmatprep.subr.mxu0 0.0
      %3607 = vmatpush2.msra.mxu0 0.0
      %3608 = vmatprep.subr.mxu0 0.0
      %3609 = vmatpush2.msra.mxu0 0.0
      %3610 = vmatprep.subr.mxu0 0.0
      %3611 = vmatpush2.msra.mxu0 0.0
      %3612 = vmatprep.subr.mxu0 0.0
      %3613 = vmatpush2.msra.mxu0 0.0
      %3614 = vmatprep.subr.mxu0 0.0
      %3615 = vmatpush2.msra.mxu0 0.0
      %3616 = vmatprep.subr.mxu0 0.0
      %3617 = vmatpush2.msra.mxu0 0.0
      %3618 = vmatprep.subr.mxu0 0.0
      %3619 = vmatpush2.msra.mxu0 0.0
      %3620 = vmatprep.subr.mxu0 0.0
      %3621 = vmatpush2.msra.mxu0 0.0
      %3622 = vmatprep.subr.mxu0 0.0
      %3623 = vmatpush2.msra.mxu0 0.0
      %3624 = vmatprep.subr.mxu0 0.0
      %3625 = vmatpush2.msra.mxu0 0.0
      %3626 = vmatprep.subr.mxu0 0.0
      %3627 = vmatpush2.msra.mxu0 0.0
      %3628 = vmatprep.subr.mxu0 0.0
      %3629 = vmatpush2.msra.mxu0 0.0
      %3630 = vmatprep.mubr.f32.mxu0 0.0
      %3631 = vmatmul.mubr.f32.gmra.mxu0 %v2637
      %v3632 = vpop.f32.mrf.mxu0
      %v3633 = vadd.f32 0.0, %v3632
      %v3634 = vpop.f32.mrf.mxu0
      %3635 = vmatprep.mubr.f32.mxu0 0.0
      %3636 = vmatmul.mubr.f32.gmra.mxu0 %v2639
      %v3637 = vpop.f32.mrf.mxu0
      %v3638 = vadd.f32 0.0, %v3637
      %v3639 = vpop.f32.mrf.mxu0
      %3640 = vmatprep.mubr.f32.mxu0 0.0
      %3641 = vmatmul.mubr.f32.gmra.mxu0 %v2641
      %v3642 = vpop.f32.mrf.mxu0
      %v3643 = vadd.f32 0.0, %v3642
      %v3644 = vpop.f32.mrf.mxu0
      %3645 = vmatprep.mubr.f32.mxu0 0.0
      %3646 = vmatmul.mubr.f32.gmra.mxu0 %v2643
      %v3647 = vpop.f32.mrf.mxu0
      %v3648 = vadd.f32 0.0, %v3647
      %v3649 = vpop.f32.mrf.mxu0
      %3650 = vmatprep.mubr.f32.mxu0 0.0
      %3651 = vmatmul.mubr.f32.gmra.mxu0 %v2645
      %v3652 = vpop.f32.mrf.mxu0
      %v3653 = vadd.f32 0.0, %v3652
      %v3654 = vpop.f32.mrf.mxu0
      %3655 = vmatprep.mubr.f32.mxu0 0.0
      %3656 = vmatmul.mubr.f32.gmra.mxu0 %v2647
      %v3657 = vpop.f32.mrf.mxu0
      %v3658 = vadd.f32 0.0, %v3657
      %v3659 = vpop.f32.mrf.mxu0
      %3660 = vmatprep.mubr.f32.mxu0 0.0
      %3661 = vmatmul.mubr.f32.gmra.mxu0 %v2649
      %v3662 = vpop.f32.mrf.mxu0
      %v3663 = vadd.f32 0.0, %v3662
      %v3664 = vpop.f32.mrf.mxu0
      %3665 = vmatprep.mubr.f32.mxu0 0.0
      %3666 = vmatmul.mubr.f32.gmra.mxu0 %v2651
      %v3667 = vpop.f32.mrf.mxu0
      %v3668 = vadd.f32 0.0, %v3667
      %v3669 = vpop.f32.mrf.mxu0
      %3670 = vmatprep.mubr.f32.mxu0 0.0
      %3671 = vmatmul.mubr.f32.gmra.mxu0 %v2653
      %v3672 = vpop.f32.mrf.mxu0
      %v3673 = vadd.f32 0.0, %v3672
      %v3674 = vpop.f32.mrf.mxu0
      %3675 = vmatprep.mubr.f32.mxu0 0.0
      %3676 = vmatmul.mubr.f32.gmra.mxu0 %v2655
      %v3677 = vpop.f32.mrf.mxu0
      %v3678 = vadd.f32 0.0, %v3677
      %v3679 = vpop.f32.mrf.mxu0
      %3680 = vmatprep.mubr.f32.mxu0 0.0
      %3681 = vmatmul.mubr.f32.gmra.mxu0 %v2657
      %v3682 = vpop.f32.mrf.mxu0
      %v3683 = vadd.f32 0.0, %v3682
      %v3684 = vpop.f32.mrf.mxu0
      %3685 = vmatprep.mubr.f32.mxu0 0.0
      %3686 = vmatmul.mubr.f32.gmra.mxu0 %v2659
      %v3687 = vpop.f32.mrf.mxu0
      %v3688 = vadd.f32 0.0, %v3687
      %v3689 = vpop.f32.mrf.mxu0
      %3690 = vmatprep.mubr.f32.mxu0 0.0
      %3691 = vmatmul.mubr.f32.gmra.mxu0 %v2661
      %v3692 = vpop.f32.mrf.mxu0
      %v3693 = vadd.f32 0.0, %v3692
      %v3694 = vpop.f32.mrf.mxu0
      %3695 = vmatprep.mubr.f32.mxu0 0.0
      %3696 = vmatmul.mubr.f32.gmra.mxu0 %v2663
      %v3697 = vpop.f32.mrf.mxu0
      %v3698 = vadd.f32 0.0, %v3697
      %v3699 = vpop.f32.mrf.mxu0
      %3700 = vmatprep.mubr.f32.mxu0 0.0
      %3701 = vmatmul.mubr.f32.gmra.mxu0 %v3559
      %v3702 = vpop.f32.mrf.mxu0
      %v3703 = vadd.f32 0.0, %v3702
      %v3704 = vpop.f32.mrf.mxu0
      %3705 = vmatprep.mubr.f32.mxu0 0.0
      %3706 = vmatmul.mubr.f32.gmra.mxu0 %v3561
      %v3707 = vpop.f32.mrf.mxu0
      %v3708 = vadd.f32 0.0, %v3707
      %v3709 = vpop.f32.mrf.mxu0
      %3710 = vdwg.mxu0
      %v3711 = vadd.f32 %v3537, %v3633
      %v3712 = vadd.f32 %v3538, %v3638
      %v3713 = vadd.f32 %v3539, %v3643
      %v3714 = vadd.f32 %v3540, %v3648
      %v3715 = vadd.f32 %v3541, %v3653
      %v3716 = vadd.f32 %v3542, %v3658
      %v3717 = vadd.f32 %v3543, %v3663
      %v3718 = vadd.f32 %v3544, %v3668
      %v3719 = vadd.f32 %v3545, %v3673
      %v3720 = vadd.f32 %v3546, %v3678
      %v3721 = vadd.f32 %v3547, %v3683
      %v3722 = vadd.f32 %v3548, %v3688
      %v3723 = vadd.f32 %v3549, %v3693
      %v3724 = vadd.f32 %v3550, %v3698
      %v3725 = vadd.f32 %v3551, %v3703
      %v3726 = vadd.f32 %v3552, %v3708
      %s3727 = scalar_lea.vmem %s4, 12
      %v3728 = vld [vmem:[%s3727] sm:$0x3]
      %3729 = vrot.lane.b32.xlu0 %v674, 124
      %v3730 = vpop.permute.xlu0 %3729
      %3731 = vrot.lane.b32.xlu0 %v676, 124
      %v3732 = vpop.permute.xlu0 %3731
      %v3733 = vsel %vm2419, %v3730, 0
      %v3735 = vsel %vm2419, %v3732, 0
      %v3738 = vsel %vm2452, %v3728, 0
      %3740 = vmatprep.subr.mxu0 0.0
      %3741 = vmatpush1.msra.mxu0 0.0
      %3742 = vmatprep.subr.mxu0 0.0
      %3743 = vmatpush1.msra.mxu0 0.0
      %3744 = vmatprep.subr.mxu0 0.0
      %3745 = vmatpush1.msra.mxu0 0.0
      %3746 = vmatprep.subr.mxu0 0.0
      %3747 = vmatpush1.msra.mxu0 0.0
      %3748 = vmatprep.subr.mxu0 0.0
      %3749 = vmatpush1.msra.mxu0 0.0
      %3750 = vmatprep.subr.mxu0 0.0
      %3751 = vmatpush1.msra.mxu0 0.0
      %3752 = vmatprep.subr.mxu0 0.0
      %3753 = vmatpush1.msra.mxu0 0.0
      %3754 = vmatprep.subr.mxu0 0.0
      %3755 = vmatpush1.msra.mxu0 0.0
      %3756 = vmatprep.subr.mxu0 0.0
      %3757 = vmatpush1.msra.mxu0 0.0
      %3758 = vmatprep.subr.mxu0 0.0
      %3759 = vmatpush1.msra.mxu0 0.0
      %3760 = vmatprep.subr.mxu0 0.0
      %3761 = vmatpush1.msra.mxu0 0.0
      %3762 = vmatprep.subr.mxu0 0.0
      %3763 = vmatpush1.msra.mxu0 0.0
      %3764 = vmatprep.subr.mxu0 0.0
      %3765 = vmatpush1.msra.mxu0 0.0
      %3766 = vmatprep.subr.mxu0 0.0
      %3767 = vmatpush1.msra.mxu0 0.0
      %3768 = vmatprep.subr.mxu0 0.0
      %3769 = vmatpush1.msra.mxu0 0.0
      %3770 = vmatprep.subr.mxu0 0.0
      %3771 = vmatpush1.msra.mxu0 %v3738
      %3772 = vmatprep.subr.mxu0 0.0
      %3773 = vmatpush2.msra.mxu0 0.0
      %3774 = vmatprep.subr.mxu0 0.0
      %3775 = vmatpush2.msra.mxu0 0.0
      %3776 = vmatprep.subr.mxu0 0.0
      %3777 = vmatpush2.msra.mxu0 0.0
      %3778 = vmatprep.subr.mxu0 0.0
      %3779 = vmatpush2.msra.mxu0 0.0
      %3780 = vmatprep.subr.mxu0 0.0
      %3781 = vmatpush2.msra.mxu0 0.0
      %3782 = vmatprep.subr.mxu0 0.0
      %3783 = vmatpush2.msra.mxu0 0.0
      %3784 = vmatprep.subr.mxu0 0.0
      %3785 = vmatpush2.msra.mxu0 0.0
      %3786 = vmatprep.subr.mxu0 0.0
      %3787 = vmatpush2.msra.mxu0 0.0
      %3788 = vmatprep.subr.mxu0 0.0
      %3789 = vmatpush2.msra.mxu0 0.0
      %3790 = vmatprep.subr.mxu0 0.0
      %3791 = vmatpush2.msra.mxu0 0.0
      %3792 = vmatprep.subr.mxu0 0.0
      %3793 = vmatpush2.msra.mxu0 0.0
      %3794 = vmatprep.subr.mxu0 0.0
      %3795 = vmatpush2.msra.mxu0 0.0
      %3796 = vmatprep.subr.mxu0 0.0
      %3797 = vmatpush2.msra.mxu0 0.0
      %3798 = vmatprep.subr.mxu0 0.0
      %3799 = vmatpush2.msra.mxu0 0.0
      %3800 = vmatprep.subr.mxu0 0.0
      %3801 = vmatpush2.msra.mxu0 0.0
      %3802 = vmatprep.subr.mxu0 0.0
      %3803 = vmatpush2.msra.mxu0 0.0
      %3804 = vmatprep.mubr.f32.mxu0 0.0
      %3805 = vmatmul.mubr.f32.gmra.mxu0 %v2424
      %v3806 = vpop.f32.mrf.mxu0
      %v3807 = vadd.f32 0.0, %v3806
      %v3808 = vpop.f32.mrf.mxu0
      %3809 = vmatprep.mubr.f32.mxu0 0.0
      %3810 = vmatmul.mubr.f32.gmra.mxu0 %v2426
      %v3811 = vpop.f32.mrf.mxu0
      %v3812 = vadd.f32 0.0, %v3811
      %v3813 = vpop.f32.mrf.mxu0
      %3814 = vmatprep.mubr.f32.mxu0 0.0
      %3815 = vmatmul.mubr.f32.gmra.mxu0 %v2428
      %v3816 = vpop.f32.mrf.mxu0
      %v3817 = vadd.f32 0.0, %v3816
      %v3818 = vpop.f32.mrf.mxu0
      %3819 = vmatprep.mubr.f32.mxu0 0.0
      %3820 = vmatmul.mubr.f32.gmra.mxu0 %v2430
      %v3821 = vpop.f32.mrf.mxu0
      %v3822 = vadd.f32 0.0, %v3821
      %v3823 = vpop.f32.mrf.mxu0
      %3824 = vmatprep.mubr.f32.mxu0 0.0
      %3825 = vmatmul.mubr.f32.gmra.mxu0 %v2432
      %v3826 = vpop.f32.mrf.mxu0
      %v3827 = vadd.f32 0.0, %v3826
      %v3828 = vpop.f32.mrf.mxu0
      %3829 = vmatprep.mubr.f32.mxu0 0.0
      %3830 = vmatmul.mubr.f32.gmra.mxu0 %v2434
      %v3831 = vpop.f32.mrf.mxu0
      %v3832 = vadd.f32 0.0, %v3831
      %v3833 = vpop.f32.mrf.mxu0
      %3834 = vmatprep.mubr.f32.mxu0 0.0
      %3835 = vmatmul.mubr.f32.gmra.mxu0 %v2436
      %v3836 = vpop.f32.mrf.mxu0
      %v3837 = vadd.f32 0.0, %v3836
      %v3838 = vpop.f32.mrf.mxu0
      %3839 = vmatprep.mubr.f32.mxu0 0.0
      %3840 = vmatmul.mubr.f32.gmra.mxu0 %v2438
      %v3841 = vpop.f32.mrf.mxu0
      %v3842 = vadd.f32 0.0, %v3841
      %v3843 = vpop.f32.mrf.mxu0
      %3844 = vmatprep.mubr.f32.mxu0 0.0
      %3845 = vmatmul.mubr.f32.gmra.mxu0 %v2440
      %v3846 = vpop.f32.mrf.mxu0
      %v3847 = vadd.f32 0.0, %v3846
      %v3848 = vpop.f32.mrf.mxu0
      %3849 = vmatprep.mubr.f32.mxu0 0.0
      %3850 = vmatmul.mubr.f32.gmra.mxu0 %v2442
      %v3851 = vpop.f32.mrf.mxu0
      %v3852 = vadd.f32 0.0, %v3851
      %v3853 = vpop.f32.mrf.mxu0
      %3854 = vmatprep.mubr.f32.mxu0 0.0
      %3855 = vmatmul.mubr.f32.gmra.mxu0 %v2444
      %v3856 = vpop.f32.mrf.mxu0
      %v3857 = vadd.f32 0.0, %v3856
      %v3858 = vpop.f32.mrf.mxu0
      %3859 = vmatprep.mubr.f32.mxu0 0.0
      %3860 = vmatmul.mubr.f32.gmra.mxu0 %v2446
      %v3861 = vpop.f32.mrf.mxu0
      %v3862 = vadd.f32 0.0, %v3861
      %v3863 = vpop.f32.mrf.mxu0
      %3864 = vmatprep.mubr.f32.mxu0 0.0
      %3865 = vmatmul.mubr.f32.gmra.mxu0 %v2448
      %v3866 = vpop.f32.mrf.mxu0
      %v3867 = vadd.f32 0.0, %v3866
      %v3868 = vpop.f32.mrf.mxu0
      %3869 = vmatprep.mubr.f32.mxu0 0.0
      %3870 = vmatmul.mubr.f32.gmra.mxu0 %v2450
      %v3871 = vpop.f32.mrf.mxu0
      %v3872 = vadd.f32 0.0, %v3871
      %v3873 = vpop.f32.mrf.mxu0
      %3874 = vmatprep.mubr.f32.mxu0 0.0
      %3875 = vmatmul.mubr.f32.gmra.mxu0 %v3733
      %v3876 = vpop.f32.mrf.mxu0
      %v3877 = vadd.f32 0.0, %v3876
      %v3878 = vpop.f32.mrf.mxu0
      %3879 = vmatprep.mubr.f32.mxu0 0.0
      %3880 = vmatmul.mubr.f32.gmra.mxu0 %v3735
      %v3881 = vpop.f32.mrf.mxu0
      %v3882 = vadd.f32 0.0, %v3881
      %v3883 = vpop.f32.mrf.mxu0
      %3884 = vdwg.mxu0
      %v3885 = vadd.f32 %v3711, %v3807
      %v3886 = vadd.f32 %v3712, %v3812
      %v3887 = vadd.f32 %v3713, %v3817
      %v3888 = vadd.f32 %v3714, %v3822
      %v3889 = vadd.f32 %v3715, %v3827
      %v3890 = vadd.f32 %v3716, %v3832
      %v3891 = vadd.f32 %v3717, %v3837
      %v3892 = vadd.f32 %v3718, %v3842
      %v3893 = vadd.f32 %v3719, %v3847
      %v3894 = vadd.f32 %v3720, %v3852
      %v3895 = vadd.f32 %v3721, %v3857
      %v3896 = vadd.f32 %v3722, %v3862
      %v3897 = vadd.f32 %v3723, %v3867
      %v3898 = vadd.f32 %v3724, %v3872
      %v3899 = vadd.f32 %v3725, %v3877
      %v3900 = vadd.f32 %v3726, %v3882
      %s3901 = scalar_lea.vmem %s4, 14
      %v3902 = vld [vmem:[%s3901] sm:$0x3]
      %3903 = vrot.lane.b32.xlu0 %v716, 124
      %v3904 = vpop.permute.xlu0 %3903
      %3905 = vrot.lane.b32.xlu0 %v718, 124
      %v3906 = vpop.permute.xlu0 %3905
      %v3907 = vsel %vm2419, %v3904, 0
      %v3909 = vsel %vm2419, %v3906, 0
      %v3912 = vsel %vm2452, %v3902, 0
      %3914 = vmatprep.subr.mxu0 0.0
      %3915 = vmatpush1.msra.mxu0 0.0
      %3916 = vmatprep.subr.mxu0 0.0
      %3917 = vmatpush1.msra.mxu0 0.0
      %3918 = vmatprep.subr.mxu0 0.0
      %3919 = vmatpush1.msra.mxu0 0.0
      %3920 = vmatprep.subr.mxu0 0.0
      %3921 = vmatpush1.msra.mxu0 0.0
      %3922 = vmatprep.subr.mxu0 0.0
      %3923 = vmatpush1.msra.mxu0 0.0
      %3924 = vmatprep.subr.mxu0 0.0
      %3925 = vmatpush1.msra.mxu0 0.0
      %3926 = vmatprep.subr.mxu0 0.0
      %3927 = vmatpush1.msra.mxu0 0.0
      %3928 = vmatprep.subr.mxu0 0.0
      %3929 = vmatpush1.msra.mxu0 0.0
      %3930 = vmatprep.subr.mxu0 0.0
      %3931 = vmatpush1.msra.mxu0 0.0
      %3932 = vmatprep.subr.mxu0 0.0
      %3933 = vmatpush1.msra.mxu0 0.0
      %3934 = vmatprep.subr.mxu0 0.0
      %3935 = vmatpush1.msra.mxu0 0.0
      %3936 = vmatprep.subr.mxu0 0.0
      %3937 = vmatpush1.msra.mxu0 0.0
      %3938 = vmatprep.subr.mxu0 0.0
      %3939 = vmatpush1.msra.mxu0 0.0
      %3940 = vmatprep.subr.mxu0 0.0
      %3941 = vmatpush1.msra.mxu0 0.0
      %3942 = vmatprep.subr.mxu0 0.0
      %3943 = vmatpush1.msra.mxu0 0.0
      %3944 = vmatprep.subr.mxu0 0.0
      %3945 = vmatpush1.msra.mxu0 %v3912
      %3946 = vmatprep.subr.mxu0 0.0
      %3947 = vmatpush2.msra.mxu0 0.0
      %3948 = vmatprep.subr.mxu0 0.0
      %3949 = vmatpush2.msra.mxu0 0.0
      %3950 = vmatprep.subr.mxu0 0.0
      %3951 = vmatpush2.msra.mxu0 0.0
      %3952 = vmatprep.subr.mxu0 0.0
      %3953 = vmatpush2.msra.mxu0 0.0
      %3954 = vmatprep.subr.mxu0 0.0
      %3955 = vmatpush2.msra.mxu0 0.0
      %3956 = vmatprep.subr.mxu0 0.0
      %3957 = vmatpush2.msra.mxu0 0.0
      %3958 = vmatprep.subr.mxu0 0.0
      %3959 = vmatpush2.msra.mxu0 0.0
      %3960 = vmatprep.subr.mxu0 0.0
      %3961 = vmatpush2.msra.mxu0 0.0
      %3962 = vmatprep.subr.mxu0 0.0
      %3963 = vmatpush2.msra.mxu0 0.0
      %3964 = vmatprep.subr.mxu0 0.0
      %3965 = vmatpush2.msra.mxu0 0.0
      %3966 = vmatprep.subr.mxu0 0.0
      %3967 = vmatpush2.msra.mxu0 0.0
      %3968 = vmatprep.subr.mxu0 0.0
      %3969 = vmatpush2.msra.mxu0 0.0
      %3970 = vmatprep.subr.mxu0 0.0
      %3971 = vmatpush2.msra.mxu0 0.0
      %3972 = vmatprep.subr.mxu0 0.0
      %3973 = vmatpush2.msra.mxu0 0.0
      %3974 = vmatprep.subr.mxu0 0.0
      %3975 = vmatpush2.msra.mxu0 0.0
      %3976 = vmatprep.subr.mxu0 0.0
      %3977 = vmatpush2.msra.mxu0 0.0
      %3978 = vmatprep.mubr.f32.mxu0 0.0
      %3979 = vmatmul.mubr.f32.gmra.mxu0 %v2856
      %v3980 = vpop.f32.mrf.mxu0
      %v3981 = vadd.f32 0.0, %v3980
      %v3982 = vpop.f32.mrf.mxu0
      %3983 = vmatprep.mubr.f32.mxu0 0.0
      %3984 = vmatmul.mubr.f32.gmra.mxu0 %v2858
      %v3985 = vpop.f32.mrf.mxu0
      %v3986 = vadd.f32 0.0, %v3985
      %v3987 = vpop.f32.mrf.mxu0
      %3988 = vmatprep.mubr.f32.mxu0 0.0
      %3989 = vmatmul.mubr.f32.gmra.mxu0 %v2860
      %v3990 = vpop.f32.mrf.mxu0
      %v3991 = vadd.f32 0.0, %v3990
      %v3992 = vpop.f32.mrf.mxu0
      %3993 = vmatprep.mubr.f32.mxu0 0.0
      %3994 = vmatmul.mubr.f32.gmra.mxu0 %v2862
      %v3995 = vpop.f32.mrf.mxu0
      %v3996 = vadd.f32 0.0, %v3995
      %v3997 = vpop.f32.mrf.mxu0
      %3998 = vmatprep.mubr.f32.mxu0 0.0
      %3999 = vmatmul.mubr.f32.gmra.mxu0 %v2864
      %v4000 = vpop.f32.mrf.mxu0
      %v4001 = vadd.f32 0.0, %v4000
      %v4002 = vpop.f32.mrf.mxu0
      %4003 = vmatprep.mubr.f32.mxu0 0.0
      %4004 = vmatmul.mubr.f32.gmra.mxu0 %v2866
      %v4005 = vpop.f32.mrf.mxu0
      %v4006 = vadd.f32 0.0, %v4005
      %v4007 = vpop.f32.mrf.mxu0
      %4008 = vmatprep.mubr.f32.mxu0 0.0
      %4009 = vmatmul.mubr.f32.gmra.mxu0 %v2868
      %v4010 = vpop.f32.mrf.mxu0
      %v4011 = vadd.f32 0.0, %v4010
      %v4012 = vpop.f32.mrf.mxu0
      %4013 = vmatprep.mubr.f32.mxu0 0.0
      %4014 = vmatmul.mubr.f32.gmra.mxu0 %v2870
      %v4015 = vpop.f32.mrf.mxu0
      %v4016 = vadd.f32 0.0, %v4015
      %v4017 = vpop.f32.mrf.mxu0
      %4018 = vmatprep.mubr.f32.mxu0 0.0
      %4019 = vmatmul.mubr.f32.gmra.mxu0 %v2872
      %v4020 = vpop.f32.mrf.mxu0
      %v4021 = vadd.f32 0.0, %v4020
      %v4022 = vpop.f32.mrf.mxu0
      %4023 = vmatprep.mubr.f32.mxu0 0.0
      %4024 = vmatmul.mubr.f32.gmra.mxu0 %v2874
      %v4025 = vpop.f32.mrf.mxu0
      %v4026 = vadd.f32 0.0, %v4025
      %v4027 = vpop.f32.mrf.mxu0
      %4028 = vmatprep.mubr.f32.mxu0 0.0
      %4029 = vmatmul.mubr.f32.gmra.mxu0 %v2876
      %v4030 = vpop.f32.mrf.mxu0
      %v4031 = vadd.f32 0.0, %v4030
      %v4032 = vpop.f32.mrf.mxu0
      %4033 = vmatprep.mubr.f32.mxu0 0.0
      %4034 = vmatmul.mubr.f32.gmra.mxu0 %v2878
      %v4035 = vpop.f32.mrf.mxu0
      %v4036 = vadd.f32 0.0, %v4035
      %v4037 = vpop.f32.mrf.mxu0
      %4038 = vmatprep.mubr.f32.mxu0 0.0
      %4039 = vmatmul.mubr.f32.gmra.mxu0 %v2880
      %v4040 = vpop.f32.mrf.mxu0
      %v4041 = vadd.f32 0.0, %v4040
      %v4042 = vpop.f32.mrf.mxu0
      %4043 = vmatprep.mubr.f32.mxu0 0.0
      %4044 = vmatmul.mubr.f32.gmra.mxu0 %v2882
      %v4045 = vpop.f32.mrf.mxu0
      %v4046 = vadd.f32 0.0, %v4045
      %v4047 = vpop.f32.mrf.mxu0
      %4048 = vmatprep.mubr.f32.mxu0 0.0
      %4049 = vmatmul.mubr.f32.gmra.mxu0 %v3907
      %v4050 = vpop.f32.mrf.mxu0
      %v4051 = vadd.f32 0.0, %v4050
      %v4052 = vpop.f32.mrf.mxu0
      %4053 = vmatprep.mubr.f32.mxu0 0.0
      %4054 = vmatmul.mubr.f32.gmra.mxu0 %v3909
      %v4055 = vpop.f32.mrf.mxu0
      %v4056 = vadd.f32 0.0, %v4055
      %v4057 = vpop.f32.mrf.mxu0
      %4058 = vdwg.mxu0
      %v4059 = vadd.f32 %v3885, %v3981
      %v4060 = vadd.f32 %v3886, %v3986
      %v4061 = vadd.f32 %v3887, %v3991
      %v4062 = vadd.f32 %v3888, %v3996
      %v4063 = vadd.f32 %v3889, %v4001
      %v4064 = vadd.f32 %v3890, %v4006
      %v4065 = vadd.f32 %v3891, %v4011
      %v4066 = vadd.f32 %v3892, %v4016
      %v4067 = vadd.f32 %v3893, %v4021
      %v4068 = vadd.f32 %v3894, %v4026
      %v4069 = vadd.f32 %v3895, %v4031
      %v4070 = vadd.f32 %v3896, %v4036
      %v4071 = vadd.f32 %v3897, %v4041
      %v4072 = vadd.f32 %v3898, %v4046
      %v4073 = vadd.f32 %v3899, %v4051
      %v4074 = vadd.f32 %v3900, %v4056
      %s4075 = scalar_lea.vmem %s4, 16
      %v4076 = vld [vmem:[%s4075] sm:$0x3]
      %4077 = vrot.lane.b32.xlu0 %v1119, 124
      %v4078 = vpop.permute.xlu0 %4077
      %4079 = vrot.lane.b32.xlu0 %v1121, 124
      %v4080 = vpop.permute.xlu0 %4079
      %v4081 = vsel %vm2419, %v4078, 0
      %v4083 = vsel %vm2419, %v4080, 0
      %v4086 = vsel %vm2452, %v4076, 0
      %4088 = vmatprep.subr.mxu0 0.0
      %4089 = vmatpush1.msra.mxu0 0.0
      %4090 = vmatprep.subr.mxu0 0.0
      %4091 = vmatpush1.msra.mxu0 0.0
      %4092 = vmatprep.subr.mxu0 0.0
      %4093 = vmatpush1.msra.mxu0 0.0
      %4094 = vmatprep.subr.mxu0 0.0
      %4095 = vmatpush1.msra.mxu0 0.0
      %4096 = vmatprep.subr.mxu0 0.0
      %4097 = vmatpush1.msra.mxu0 0.0
      %4098 = vmatprep.subr.mxu0 0.0
      %4099 = vmatpush1.msra.mxu0 0.0
      %4100 = vmatprep.subr.mxu0 0.0
      %4101 = vmatpush1.msra.mxu0 0.0
      %4102 = vmatprep.subr.mxu0 0.0
      %4103 = vmatpush1.msra.mxu0 0.0
      %4104 = vmatprep.subr.mxu0 0.0
      %4105 = vmatpush1.msra.mxu0 0.0
      %4106 = vmatprep.subr.mxu0 0.0
      %4107 = vmatpush1.msra.mxu0 0.0
      %4108 = vmatprep.subr.mxu0 0.0
      %4109 = vmatpush1.msra.mxu0 0.0
      %4110 = vmatprep.subr.mxu0 0.0
      %4111 = vmatpush1.msra.mxu0 0.0
      %4112 = vmatprep.subr.mxu0 0.0
      %4113 = vmatpush1.msra.mxu0 0.0
      %4114 = vmatprep.subr.mxu0 0.0
      %4115 = vmatpush1.msra.mxu0 0.0
      %4116 = vmatprep.subr.mxu0 0.0
      %4117 = vmatpush1.msra.mxu0 0.0
      %4118 = vmatprep.subr.mxu0 0.0
      %4119 = vmatpush1.msra.mxu0 %v4086
      %4120 = vmatprep.subr.mxu0 0.0
      %4121 = vmatpush2.msra.mxu0 0.0
      %4122 = vmatprep.subr.mxu0 0.0
      %4123 = vmatpush2.msra.mxu0 0.0
      %4124 = vmatprep.subr.mxu0 0.0
      %4125 = vmatpush2.msra.mxu0 0.0
      %4126 = vmatprep.subr.mxu0 0.0
      %4127 = vmatpush2.msra.mxu0 0.0
      %4128 = vmatprep.subr.mxu0 0.0
      %4129 = vmatpush2.msra.mxu0 0.0
      %4130 = vmatprep.subr.mxu0 0.0
      %4131 = vmatpush2.msra.mxu0 0.0
      %4132 = vmatprep.subr.mxu0 0.0
      %4133 = vmatpush2.msra.mxu0 0.0
      %4134 = vmatprep.subr.mxu0 0.0
      %4135 = vmatpush2.msra.mxu0 0.0
      %4136 = vmatprep.subr.mxu0 0.0
      %4137 = vmatpush2.msra.mxu0 0.0
      %4138 = vmatprep.subr.mxu0 0.0
      %4139 = vmatpush2.msra.mxu0 0.0
      %4140 = vmatprep.subr.mxu0 0.0
      %4141 = vmatpush2.msra.mxu0 0.0
      %4142 = vmatprep.subr.mxu0 0.0
      %4143 = vmatpush2.msra.mxu0 0.0
      %4144 = vmatprep.subr.mxu0 0.0
      %4145 = vmatpush2.msra.mxu0 0.0
      %4146 = vmatprep.subr.mxu0 0.0
      %4147 = vmatpush2.msra.mxu0 0.0
      %4148 = vmatprep.subr.mxu0 0.0
      %4149 = vmatpush2.msra.mxu0 0.0
      %4150 = vmatprep.subr.mxu0 0.0
      %4151 = vmatpush2.msra.mxu0 0.0
      %4152 = vmatprep.mubr.f32.mxu0 0.0
      %4153 = vmatmul.mubr.f32.gmra.mxu0 %v3091
      %v4154 = vpop.f32.mrf.mxu0
      %v4155 = vadd.f32 0.0, %v4154
      %v4156 = vpop.f32.mrf.mxu0
      %4157 = vmatprep.mubr.f32.mxu0 0.0
      %4158 = vmatmul.mubr.f32.gmra.mxu0 %v3093
      %v4159 = vpop.f32.mrf.mxu0
      %v4160 = vadd.f32 0.0, %v4159
      %v4161 = vpop.f32.mrf.mxu0
      %4162 = vmatprep.mubr.f32.mxu0 0.0
      %4163 = vmatmul.mubr.f32.gmra.mxu0 %v3095
      %v4164 = vpop.f32.mrf.mxu0
      %v4165 = vadd.f32 0.0, %v4164
      %v4166 = vpop.f32.mrf.mxu0
      %4167 = vmatprep.mubr.f32.mxu0 0.0
      %4168 = vmatmul.mubr.f32.gmra.mxu0 %v3097
      %v4169 = vpop.f32.mrf.mxu0
      %v4170 = vadd.f32 0.0, %v4169
      %v4171 = vpop.f32.mrf.mxu0
      %4172 = vmatprep.mubr.f32.mxu0 0.0
      %4173 = vmatmul.mubr.f32.gmra.mxu0 %v3099
      %v4174 = vpop.f32.mrf.mxu0
      %v4175 = vadd.f32 0.0, %v4174
      %v4176 = vpop.f32.mrf.mxu0
      %4177 = vmatprep.mubr.f32.mxu0 0.0
      %4178 = vmatmul.mubr.f32.gmra.mxu0 %v3101
      %v4179 = vpop.f32.mrf.mxu0
      %v4180 = vadd.f32 0.0, %v4179
      %v4181 = vpop.f32.mrf.mxu0
      %4182 = vmatprep.mubr.f32.mxu0 0.0
      %4183 = vmatmul.mubr.f32.gmra.mxu0 %v3103
      %v4184 = vpop.f32.mrf.mxu0
      %v4185 = vadd.f32 0.0, %v4184
      %v4186 = vpop.f32.mrf.mxu0
      %4187 = vmatprep.mubr.f32.mxu0 0.0
      %4188 = vmatmul.mubr.f32.gmra.mxu0 %v3105
      %v4189 = vpop.f32.mrf.mxu0
      %v4190 = vadd.f32 0.0, %v4189
      %v4191 = vpop.f32.mrf.mxu0
      %4192 = vmatprep.mubr.f32.mxu0 0.0
      %4193 = vmatmul.mubr.f32.gmra.mxu0 %v3107
      %v4194 = vpop.f32.mrf.mxu0
      %v4195 = vadd.f32 0.0, %v4194
      %v4196 = vpop.f32.mrf.mxu0
      %4197 = vmatprep.mubr.f32.mxu0 0.0
      %4198 = vmatmul.mubr.f32.gmra.mxu0 %v3109
      %v4199 = vpop.f32.mrf.mxu0
      %v4200 = vadd.f32 0.0, %v4199
      %v4201 = vpop.f32.mrf.mxu0
      %4202 = vmatprep.mubr.f32.mxu0 0.0
      %4203 = vmatmul.mubr.f32.gmra.mxu0 %v3111
      %v4204 = vpop.f32.mrf.mxu0
      %v4205 = vadd.f32 0.0, %v4204
      %v4206 = vpop.f32.mrf.mxu0
      %4207 = vmatprep.mubr.f32.mxu0 0.0
      %4208 = vmatmul.mubr.f32.gmra.mxu0 %v3113
      %v4209 = vpop.f32.mrf.mxu0
      %v4210 = vadd.f32 0.0, %v4209
      %v4211 = vpop.f32.mrf.mxu0
      %4212 = vmatprep.mubr.f32.mxu0 0.0
      %4213 = vmatmul.mubr.f32.gmra.mxu0 %v3115
      %v4214 = vpop.f32.mrf.mxu0
      %v4215 = vadd.f32 0.0, %v4214
      %v4216 = vpop.f32.mrf.mxu0
      %4217 = vmatprep.mubr.f32.mxu0 0.0
      %4218 = vmatmul.mubr.f32.gmra.mxu0 %v3117
      %v4219 = vpop.f32.mrf.mxu0
      %v4220 = vadd.f32 0.0, %v4219
      %v4221 = vpop.f32.mrf.mxu0
      %4222 = vmatprep.mubr.f32.mxu0 0.0
      %4223 = vmatmul.mubr.f32.gmra.mxu0 %v4081
      %v4224 = vpop.f32.mrf.mxu0
      %v4225 = vadd.f32 0.0, %v4224
      %v4226 = vpop.f32.mrf.mxu0
      %4227 = vmatprep.mubr.f32.mxu0 0.0
      %4228 = vmatmul.mubr.f32.gmra.mxu0 %v4083
      %v4229 = vpop.f32.mrf.mxu0
      %v4230 = vadd.f32 0.0, %v4229
      %v4231 = vpop.f32.mrf.mxu0
      %4232 = vdwg.mxu0
      %v4233 = vadd.f32 %v4059, %v4155
      %v4234 = vadd.f32 %v4060, %v4160
      %v4235 = vadd.f32 %v4061, %v4165
      %v4236 = vadd.f32 %v4062, %v4170
      %v4237 = vadd.f32 %v4063, %v4175
      %v4238 = vadd.f32 %v4064, %v4180
      %v4239 = vadd.f32 %v4065, %v4185
      %v4240 = vadd.f32 %v4066, %v4190
      %v4241 = vadd.f32 %v4067, %v4195
      %v4242 = vadd.f32 %v4068, %v4200
      %v4243 = vadd.f32 %v4069, %v4205
      %v4244 = vadd.f32 %v4070, %v4210
      %v4245 = vadd.f32 %v4071, %v4215
      %v4246 = vadd.f32 %v4072, %v4220
      %v4247 = vadd.f32 %v4073, %v4225
      %v4248 = vadd.f32 %v4074, %v4230
      %v4249 = vrot.slane %v353, 4
      %v4250 = vrot.slane %v354, 4
      %v4251 = vsel %vm464, %v4249, %v4250
      %v4252 = vrot.slane %v355, 4
      %v4253 = vsel %vm464, %v4250, %v4252
      %s4254 = scalar_lea.vmem %s4, 18
      %v4255 = vld [vmem:[%s4254] sm:$0x3]
      %4256 = vrot.lane.b32.xlu0 %v4251, 124
      %v4257 = vpop.permute.xlu0 %4256
      %4258 = vrot.lane.b32.xlu0 %v4253, 124
      %v4259 = vpop.permute.xlu0 %4258
      %v4260 = vsel %vm2419, %v4257, 0
      %v4262 = vsel %vm2419, %v4259, 0
      %v4265 = vsel %vm2452, %v4255, 0
      %4267 = vmatprep.subr.mxu0 0.0
      %4268 = vmatpush1.msra.mxu0 0.0
      %4269 = vmatprep.subr.mxu0 0.0
      %4270 = vmatpush1.msra.mxu0 0.0
      %4271 = vmatprep.subr.mxu0 0.0
      %4272 = vmatpush1.msra.mxu0 0.0
      %4273 = vmatprep.subr.mxu0 0.0
      %4274 = vmatpush1.msra.mxu0 0.0
      %4275 = vmatprep.subr.mxu0 0.0
      %4276 = vmatpush1.msra.mxu0 0.0
      %4277 = vmatprep.subr.mxu0 0.0
      %4278 = vmatpush1.msra.mxu0 0.0
      %4279 = vmatprep.subr.mxu0 0.0
      %4280 = vmatpush1.msra.mxu0 0.0
      %4281 = vmatprep.subr.mxu0 0.0
      %4282 = vmatpush1.msra.mxu0 0.0
      %4283 = vmatprep.subr.mxu0 0.0
      %4284 = vmatpush1.msra.mxu0 0.0
      %4285 = vmatprep.subr.mxu0 0.0
      %4286 = vmatpush1.msra.mxu0 0.0
      %4287 = vmatprep.subr.mxu0 0.0
      %4288 = vmatpush1.msra.mxu0 0.0
      %4289 = vmatprep.subr.mxu0 0.0
      %4290 = vmatpush1.msra.mxu0 0.0
      %4291 = vmatprep.subr.mxu0 0.0
      %4292 = vmatpush1.msra.mxu0 0.0
      %4293 = vmatprep.subr.mxu0 0.0
      %4294 = vmatpush1.msra.mxu0 0.0
      %4295 = vmatprep.subr.mxu0 0.0
      %4296 = vmatpush1.msra.mxu0 0.0
      %4297 = vmatprep.subr.mxu0 0.0
      %4298 = vmatpush1.msra.mxu0 %v4265
      %4299 = vmatprep.subr.mxu0 0.0
      %4300 = vmatpush2.msra.mxu0 0.0
      %4301 = vmatprep.subr.mxu0 0.0
      %4302 = vmatpush2.msra.mxu0 0.0
      %4303 = vmatprep.subr.mxu0 0.0
      %4304 = vmatpush2.msra.mxu0 0.0
      %4305 = vmatprep.subr.mxu0 0.0
      %4306 = vmatpush2.msra.mxu0 0.0
      %4307 = vmatprep.subr.mxu0 0.0
      %4308 = vmatpush2.msra.mxu0 0.0
      %4309 = vmatprep.subr.mxu0 0.0
      %4310 = vmatpush2.msra.mxu0 0.0
      %4311 = vmatprep.subr.mxu0 0.0
      %4312 = vmatpush2.msra.mxu0 0.0
      %4313 = vmatprep.subr.mxu0 0.0
      %4314 = vmatpush2.msra.mxu0 0.0
      %4315 = vmatprep.subr.mxu0 0.0
      %4316 = vmatpush2.msra.mxu0 0.0
      %4317 = vmatprep.subr.mxu0 0.0
      %4318 = vmatpush2.msra.mxu0 0.0
      %4319 = vmatprep.subr.mxu0 0.0
      %4320 = vmatpush2.msra.mxu0 0.0
      %4321 = vmatprep.subr.mxu0 0.0
      %4322 = vmatpush2.msra.mxu0 0.0
      %4323 = vmatprep.subr.mxu0 0.0
      %4324 = vmatpush2.msra.mxu0 0.0
      %4325 = vmatprep.subr.mxu0 0.0
      %4326 = vmatpush2.msra.mxu0 0.0
      %4327 = vmatprep.subr.mxu0 0.0
      %4328 = vmatpush2.msra.mxu0 0.0
      %4329 = vmatprep.subr.mxu0 0.0
      %4330 = vmatpush2.msra.mxu0 0.0
      %4331 = vmatprep.mubr.f32.mxu0 0.0
      %4332 = vmatmul.mubr.f32.gmra.mxu0 %v3361
      %v4333 = vpop.f32.mrf.mxu0
      %v4334 = vadd.f32 0.0, %v4333
      %v4335 = vpop.f32.mrf.mxu0
      %4336 = vmatprep.mubr.f32.mxu0 0.0
      %4337 = vmatmul.mubr.f32.gmra.mxu0 %v3363
      %v4338 = vpop.f32.mrf.mxu0
      %v4339 = vadd.f32 0.0, %v4338
      %v4340 = vpop.f32.mrf.mxu0
      %4341 = vmatprep.mubr.f32.mxu0 0.0
      %4342 = vmatmul.mubr.f32.gmra.mxu0 %v3365
      %v4343 = vpop.f32.mrf.mxu0
      %v4344 = vadd.f32 0.0, %v4343
      %v4345 = vpop.f32.mrf.mxu0
      %4346 = vmatprep.mubr.f32.mxu0 0.0
      %4347 = vmatmul.mubr.f32.gmra.mxu0 %v3367
      %v4348 = vpop.f32.mrf.mxu0
      %v4349 = vadd.f32 0.0, %v4348
      %v4350 = vpop.f32.mrf.mxu0
      %4351 = vmatprep.mubr.f32.mxu0 0.0
      %4352 = vmatmul.mubr.f32.gmra.mxu0 %v3369
      %v4353 = vpop.f32.mrf.mxu0
      %v4354 = vadd.f32 0.0, %v4353
      %v4355 = vpop.f32.mrf.mxu0
      %4356 = vmatprep.mubr.f32.mxu0 0.0
      %4357 = vmatmul.mubr.f32.gmra.mxu0 %v3371
      %v4358 = vpop.f32.mrf.mxu0
      %v4359 = vadd.f32 0.0, %v4358
      %v4360 = vpop.f32.mrf.mxu0
      %4361 = vmatprep.mubr.f32.mxu0 0.0
      %4362 = vmatmul.mubr.f32.gmra.mxu0 %v3373
      %v4363 = vpop.f32.mrf.mxu0
      %v4364 = vadd.f32 0.0, %v4363
      %v4365 = vpop.f32.mrf.mxu0
      %4366 = vmatprep.mubr.f32.mxu0 0.0
      %4367 = vmatmul.mubr.f32.gmra.mxu0 %v3375
      %v4368 = vpop.f32.mrf.mxu0
      %v4369 = vadd.f32 0.0, %v4368
      %v4370 = vpop.f32.mrf.mxu0
      %4371 = vmatprep.mubr.f32.mxu0 0.0
      %4372 = vmatmul.mubr.f32.gmra.mxu0 %v3377
      %v4373 = vpop.f32.mrf.mxu0
      %v4374 = vadd.f32 0.0, %v4373
      %v4375 = vpop.f32.mrf.mxu0
      %4376 = vmatprep.mubr.f32.mxu0 0.0
      %4377 = vmatmul.mubr.f32.gmra.mxu0 %v3379
      %v4378 = vpop.f32.mrf.mxu0
      %v4379 = vadd.f32 0.0, %v4378
      %v4380 = vpop.f32.mrf.mxu0
      %4381 = vmatprep.mubr.f32.mxu0 0.0
      %4382 = vmatmul.mubr.f32.gmra.mxu0 %v3381
      %v4383 = vpop.f32.mrf.mxu0
      %v4384 = vadd.f32 0.0, %v4383
      %v4385 = vpop.f32.mrf.mxu0
      %4386 = vmatprep.mubr.f32.mxu0 0.0
      %4387 = vmatmul.mubr.f32.gmra.mxu0 %v3383
      %v4388 = vpop.f32.mrf.mxu0
      %v4389 = vadd.f32 0.0, %v4388
      %v4390 = vpop.f32.mrf.mxu0
      %4391 = vmatprep.mubr.f32.mxu0 0.0
      %4392 = vmatmul.mubr.f32.gmra.mxu0 %v3385
      %v4393 = vpop.f32.mrf.mxu0
      %v4394 = vadd.f32 0.0, %v4393
      %v4395 = vpop.f32.mrf.mxu0
      %4396 = vmatprep.mubr.f32.mxu0 0.0
      %4397 = vmatmul.mubr.f32.gmra.mxu0 %v3387
      %v4398 = vpop.f32.mrf.mxu0
      %v4399 = vadd.f32 0.0, %v4398
      %v4400 = vpop.f32.mrf.mxu0
      %4401 = vmatprep.mubr.f32.mxu0 0.0
      %4402 = vmatmul.mubr.f32.gmra.mxu0 %v4260
      %v4403 = vpop.f32.mrf.mxu0
      %v4404 = vadd.f32 0.0, %v4403
      %v4405 = vpop.f32.mrf.mxu0
      %4406 = vmatprep.mubr.f32.mxu0 0.0
      %4407 = vmatmul.mubr.f32.gmra.mxu0 %v4262
      %v4408 = vpop.f32.mrf.mxu0
      %v4409 = vadd.f32 0.0, %v4408
      %v4410 = vpop.f32.mrf.mxu0
      %4411 = vdwg.mxu0
      %v4412 = vadd.f32 %v4233, %v4334
      %v4413 = vadd.f32 %v4234, %v4339
      %v4414 = vadd.f32 %v4235, %v4344
      %v4415 = vadd.f32 %v4236, %v4349
      %v4416 = vadd.f32 %v4237, %v4354
      %v4417 = vadd.f32 %v4238, %v4359
      %v4418 = vadd.f32 %v4239, %v4364
      %v4419 = vadd.f32 %v4240, %v4369
      %v4420 = vadd.f32 %v4241, %v4374
      %v4421 = vadd.f32 %v4242, %v4379
      %v4422 = vadd.f32 %v4243, %v4384
      %v4423 = vadd.f32 %v4244, %v4389
      %v4424 = vadd.f32 %v4245, %v4394
      %v4425 = vadd.f32 %v4246, %v4399
      %v4426 = vadd.f32 %v4247, %v4404
      %v4427 = vadd.f32 %v4248, %v4409
      %s4428 = scalar_lea.vmem %s4, 20
      %v4429 = vld [vmem:[%s4428] sm:$0x3]
      %4430 = vrot.lane.b32.xlu0 %v356, 124
      %v4431 = vpop.permute.xlu0 %4430
      %4432 = vrot.lane.b32.xlu0 %v357, 124
      %v4433 = vpop.permute.xlu0 %4432
      %v4434 = vsel %vm2419, %v4431, 0
      %v4436 = vsel %vm2419, %v4433, 0
      %v4439 = vsel %vm2452, %v4429, 0
      %4441 = vmatprep.subr.mxu0 0.0
      %4442 = vmatpush1.msra.mxu0 0.0
      %4443 = vmatprep.subr.mxu0 0.0
      %4444 = vmatpush1.msra.mxu0 0.0
      %4445 = vmatprep.subr.mxu0 0.0
      %4446 = vmatpush1.msra.mxu0 0.0
      %4447 = vmatprep.subr.mxu0 0.0
      %4448 = vmatpush1.msra.mxu0 0.0
      %4449 = vmatprep.subr.mxu0 0.0
      %4450 = vmatpush1.msra.mxu0 0.0
      %4451 = vmatprep.subr.mxu0 0.0
      %4452 = vmatpush1.msra.mxu0 0.0
      %4453 = vmatprep.subr.mxu0 0.0
      %4454 = vmatpush1.msra.mxu0 0.0
      %4455 = vmatprep.subr.mxu0 0.0
      %4456 = vmatpush1.msra.mxu0 0.0
      %4457 = vmatprep.subr.mxu0 0.0
      %4458 = vmatpush1.msra.mxu0 0.0
      %4459 = vmatprep.subr.mxu0 0.0
      %4460 = vmatpush1.msra.mxu0 0.0
      %4461 = vmatprep.subr.mxu0 0.0
      %4462 = vmatpush1.msra.mxu0 0.0
      %4463 = vmatprep.subr.mxu0 0.0
      %4464 = vmatpush1.msra.mxu0 0.0
      %4465 = vmatprep.subr.mxu0 0.0
      %4466 = vmatpush1.msra.mxu0 0.0
      %4467 = vmatprep.subr.mxu0 0.0
      %4468 = vmatpush1.msra.mxu0 0.0
      %4469 = vmatprep.subr.mxu0 0.0
      %4470 = vmatpush1.msra.mxu0 0.0
      %4471 = vmatprep.subr.mxu0 0.0
      %4472 = vmatpush1.msra.mxu0 %v4439
      %4473 = vmatprep.subr.mxu0 0.0
      %4474 = vmatpush2.msra.mxu0 0.0
      %4475 = vmatprep.subr.mxu0 0.0
      %4476 = vmatpush2.msra.mxu0 0.0
      %4477 = vmatprep.subr.mxu0 0.0
      %4478 = vmatpush2.msra.mxu0 0.0
      %4479 = vmatprep.subr.mxu0 0.0
      %4480 = vmatpush2.msra.mxu0 0.0
      %4481 = vmatprep.subr.mxu0 0.0
      %4482 = vmatpush2.msra.mxu0 0.0
      %4483 = vmatprep.subr.mxu0 0.0
      %4484 = vmatpush2.msra.mxu0 0.0
      %4485 = vmatprep.subr.mxu0 0.0
      %4486 = vmatpush2.msra.mxu0 0.0
      %4487 = vmatprep.subr.mxu0 0.0
      %4488 = vmatpush2.msra.mxu0 0.0
      %4489 = vmatprep.subr.mxu0 0.0
      %4490 = vmatpush2.msra.mxu0 0.0
      %4491 = vmatprep.subr.mxu0 0.0
      %4492 = vmatpush2.msra.mxu0 0.0
      %4493 = vmatprep.subr.mxu0 0.0
      %4494 = vmatpush2.msra.mxu0 0.0
      %4495 = vmatprep.subr.mxu0 0.0
      %4496 = vmatpush2.msra.mxu0 0.0
      %4497 = vmatprep.subr.mxu0 0.0
      %4498 = vmatpush2.msra.mxu0 0.0
      %4499 = vmatprep.subr.mxu0 0.0
      %4500 = vmatpush2.msra.mxu0 0.0
      %4501 = vmatprep.subr.mxu0 0.0
      %4502 = vmatpush2.msra.mxu0 0.0
      %4503 = vmatprep.subr.mxu0 0.0
      %4504 = vmatpush2.msra.mxu0 0.0
      %4505 = vmatprep.mubr.f32.mxu0 0.0
      %4506 = vmatmul.mubr.f32.gmra.mxu0 %v2641
      %v4507 = vpop.f32.mrf.mxu0
      %v4508 = vadd.f32 0.0, %v4507
      %v4509 = vpop.f32.mrf.mxu0
      %4510 = vmatprep.mubr.f32.mxu0 0.0
      %4511 = vmatmul.mubr.f32.gmra.mxu0 %v2643
      %v4512 = vpop.f32.mrf.mxu0
      %v4513 = vadd.f32 0.0, %v4512
      %v4514 = vpop.f32.mrf.mxu0
      %4515 = vmatprep.mubr.f32.mxu0 0.0
      %4516 = vmatmul.mubr.f32.gmra.mxu0 %v2645
      %v4517 = vpop.f32.mrf.mxu0
      %v4518 = vadd.f32 0.0, %v4517
      %v4519 = vpop.f32.mrf.mxu0
      %4520 = vmatprep.mubr.f32.mxu0 0.0
      %4521 = vmatmul.mubr.f32.gmra.mxu0 %v2647
      %v4522 = vpop.f32.mrf.mxu0
      %v4523 = vadd.f32 0.0, %v4522
      %v4524 = vpop.f32.mrf.mxu0
      %4525 = vmatprep.mubr.f32.mxu0 0.0
      %4526 = vmatmul.mubr.f32.gmra.mxu0 %v2649
      %v4527 = vpop.f32.mrf.mxu0
      %v4528 = vadd.f32 0.0, %v4527
      %v4529 = vpop.f32.mrf.mxu0
      %4530 = vmatprep.mubr.f32.mxu0 0.0
      %4531 = vmatmul.mubr.f32.gmra.mxu0 %v2651
      %v4532 = vpop.f32.mrf.mxu0
      %v4533 = vadd.f32 0.0, %v4532
      %v4534 = vpop.f32.mrf.mxu0
      %4535 = vmatprep.mubr.f32.mxu0 0.0
      %4536 = vmatmul.mubr.f32.gmra.mxu0 %v2653
      %v4537 = vpop.f32.mrf.mxu0
      %v4538 = vadd.f32 0.0, %v4537
      %v4539 = vpop.f32.mrf.mxu0
      %4540 = vmatprep.mubr.f32.mxu0 0.0
      %4541 = vmatmul.mubr.f32.gmra.mxu0 %v2655
      %v4542 = vpop.f32.mrf.mxu0
      %v4543 = vadd.f32 0.0, %v4542
      %v4544 = vpop.f32.mrf.mxu0
      %4545 = vmatprep.mubr.f32.mxu0 0.0
      %4546 = vmatmul.mubr.f32.gmra.mxu0 %v2657
      %v4547 = vpop.f32.mrf.mxu0
      %v4548 = vadd.f32 0.0, %v4547
      %v4549 = vpop.f32.mrf.mxu0
      %4550 = vmatprep.mubr.f32.mxu0 0.0
      %4551 = vmatmul.mubr.f32.gmra.mxu0 %v2659
      %v4552 = vpop.f32.mrf.mxu0
      %v4553 = vadd.f32 0.0, %v4552
      %v4554 = vpop.f32.mrf.mxu0
      %4555 = vmatprep.mubr.f32.mxu0 0.0
      %4556 = vmatmul.mubr.f32.gmra.mxu0 %v2661
      %v4557 = vpop.f32.mrf.mxu0
      %v4558 = vadd.f32 0.0, %v4557
      %v4559 = vpop.f32.mrf.mxu0
      %4560 = vmatprep.mubr.f32.mxu0 0.0
      %4561 = vmatmul.mubr.f32.gmra.mxu0 %v2663
      %v4562 = vpop.f32.mrf.mxu0
      %v4563 = vadd.f32 0.0, %v4562
      %v4564 = vpop.f32.mrf.mxu0
      %4565 = vmatprep.mubr.f32.mxu0 0.0
      %4566 = vmatmul.mubr.f32.gmra.mxu0 %v3559
      %v4567 = vpop.f32.mrf.mxu0
      %v4568 = vadd.f32 0.0, %v4567
      %v4569 = vpop.f32.mrf.mxu0
      %4570 = vmatprep.mubr.f32.mxu0 0.0
      %4571 = vmatmul.mubr.f32.gmra.mxu0 %v3561
      %v4572 = vpop.f32.mrf.mxu0
      %v4573 = vadd.f32 0.0, %v4572
      %v4574 = vpop.f32.mrf.mxu0
      %4575 = vmatprep.mubr.f32.mxu0 0.0
      %4576 = vmatmul.mubr.f32.gmra.mxu0 %v4434
      %v4577 = vpop.f32.mrf.mxu0
      %v4578 = vadd.f32 0.0, %v4577
      %v4579 = vpop.f32.mrf.mxu0
      %4580 = vmatprep.mubr.f32.mxu0 0.0
      %4581 = vmatmul.mubr.f32.gmra.mxu0 %v4436
      %v4582 = vpop.f32.mrf.mxu0
      %v4583 = vadd.f32 0.0, %v4582
      %v4584 = vpop.f32.mrf.mxu0
      %4585 = vdwg.mxu0
      %v4586 = vadd.f32 %v4412, %v4508
      %v4587 = vadd.f32 %v4413, %v4513
      %v4588 = vadd.f32 %v4414, %v4518
      %v4589 = vadd.f32 %v4415, %v4523
      %v4590 = vadd.f32 %v4416, %v4528
      %v4591 = vadd.f32 %v4417, %v4533
      %v4592 = vadd.f32 %v4418, %v4538
      %v4593 = vadd.f32 %v4419, %v4543
      %v4594 = vadd.f32 %v4420, %v4548
      %v4595 = vadd.f32 %v4421, %v4553
      %v4596 = vadd.f32 %v4422, %v4558
      %v4597 = vadd.f32 %v4423, %v4563
      %v4598 = vadd.f32 %v4424, %v4568
      %v4599 = vadd.f32 %v4425, %v4573
      %v4600 = vadd.f32 %v4426, %v4578
      %v4601 = vadd.f32 %v4427, %v4583
      %s4602 = scalar_lea.vmem %s4, 22
      %v4603 = vld [vmem:[%s4602] sm:$0x3]
      %4604 = vrot.lane.b32.xlu0 %v1325, 124
      %v4605 = vpop.permute.xlu0 %4604
      %4606 = vrot.lane.b32.xlu0 %v1327, 124
      %v4607 = vpop.permute.xlu0 %4606
      %v4608 = vsel %vm2419, %v4605, 0
      %v4610 = vsel %vm2419, %v4607, 0
      %v4613 = vsel %vm2452, %v4603, 0
      %4615 = vmatprep.subr.mxu0 0.0
      %4616 = vmatpush1.msra.mxu0 0.0
      %4617 = vmatprep.subr.mxu0 0.0
      %4618 = vmatpush1.msra.mxu0 0.0
      %4619 = vmatprep.subr.mxu0 0.0
      %4620 = vmatpush1.msra.mxu0 0.0
      %4621 = vmatprep.subr.mxu0 0.0
      %4622 = vmatpush1.msra.mxu0 0.0
      %4623 = vmatprep.subr.mxu0 0.0
      %4624 = vmatpush1.msra.mxu0 0.0
      %4625 = vmatprep.subr.mxu0 0.0
      %4626 = vmatpush1.msra.mxu0 0.0
      %4627 = vmatprep.subr.mxu0 0.0
      %4628 = vmatpush1.msra.mxu0 0.0
      %4629 = vmatprep.subr.mxu0 0.0
      %4630 = vmatpush1.msra.mxu0 0.0
      %4631 = vmatprep.subr.mxu0 0.0
      %4632 = vmatpush1.msra.mxu0 0.0
      %4633 = vmatprep.subr.mxu0 0.0
      %4634 = vmatpush1.msra.mxu0 0.0
      %4635 = vmatprep.subr.mxu0 0.0
      %4636 = vmatpush1.msra.mxu0 0.0
      %4637 = vmatprep.subr.mxu0 0.0
      %4638 = vmatpush1.msra.mxu0 0.0
      %4639 = vmatprep.subr.mxu0 0.0
      %4640 = vmatpush1.msra.mxu0 0.0
      %4641 = vmatprep.subr.mxu0 0.0
      %4642 = vmatpush1.msra.mxu0 0.0
      %4643 = vmatprep.subr.mxu0 0.0
      %4644 = vmatpush1.msra.mxu0 0.0
      %4645 = vmatprep.subr.mxu0 0.0
      %4646 = vmatpush1.msra.mxu0 %v4613
      %4647 = vmatprep.subr.mxu0 0.0
      %4648 = vmatpush2.msra.mxu0 0.0
      %4649 = vmatprep.subr.mxu0 0.0
      %4650 = vmatpush2.msra.mxu0 0.0
      %4651 = vmatprep.subr.mxu0 0.0
      %4652 = vmatpush2.msra.mxu0 0.0
      %4653 = vmatprep.subr.mxu0 0.0
      %4654 = vmatpush2.msra.mxu0 0.0
      %4655 = vmatprep.subr.mxu0 0.0
      %4656 = vmatpush2.msra.mxu0 0.0
      %4657 = vmatprep.subr.mxu0 0.0
      %4658 = vmatpush2.msra.mxu0 0.0
      %4659 = vmatprep.subr.mxu0 0.0
      %4660 = vmatpush2.msra.mxu0 0.0
      %4661 = vmatprep.subr.mxu0 0.0
      %4662 = vmatpush2.msra.mxu0 0.0
      %4663 = vmatprep.subr.mxu0 0.0
      %4664 = vmatpush2.msra.mxu0 0.0
      %4665 = vmatprep.subr.mxu0 0.0
      %4666 = vmatpush2.msra.mxu0 0.0
      %4667 = vmatprep.subr.mxu0 0.0
      %4668 = vmatpush2.msra.mxu0 0.0
      %4669 = vmatprep.subr.mxu0 0.0
      %4670 = vmatpush2.msra.mxu0 0.0
      %4671 = vmatprep.subr.mxu0 0.0
      %4672 = vmatpush2.msra.mxu0 0.0
      %4673 = vmatprep.subr.mxu0 0.0
      %4674 = vmatpush2.msra.mxu0 0.0
      %4675 = vmatprep.subr.mxu0 0.0
      %4676 = vmatpush2.msra.mxu0 0.0
      %4677 = vmatprep.subr.mxu0 0.0
      %4678 = vmatpush2.msra.mxu0 0.0
      %4679 = vmatprep.mubr.f32.mxu0 0.0
      %4680 = vmatmul.mubr.f32.gmra.mxu0 %v2428
      %v4681 = vpop.f32.mrf.mxu0
      %v4682 = vadd.f32 0.0, %v4681
      %v4683 = vpop.f32.mrf.mxu0
      %4684 = vmatprep.mubr.f32.mxu0 0.0
      %4685 = vmatmul.mubr.f32.gmra.mxu0 %v2430
      %v4686 = vpop.f32.mrf.mxu0
      %v4687 = vadd.f32 0.0, %v4686
      %v4688 = vpop.f32.mrf.mxu0
      %4689 = vmatprep.mubr.f32.mxu0 0.0
      %4690 = vmatmul.mubr.f32.gmra.mxu0 %v2432
      %v4691 = vpop.f32.mrf.mxu0
      %v4692 = vadd.f32 0.0, %v4691
      %v4693 = vpop.f32.mrf.mxu0
      %4694 = vmatprep.mubr.f32.mxu0 0.0
      %4695 = vmatmul.mubr.f32.gmra.mxu0 %v2434
      %v4696 = vpop.f32.mrf.mxu0
      %v4697 = vadd.f32 0.0, %v4696
      %v4698 = vpop.f32.mrf.mxu0
      %4699 = vmatprep.mubr.f32.mxu0 0.0
      %4700 = vmatmul.mubr.f32.gmra.mxu0 %v2436
      %v4701 = vpop.f32.mrf.mxu0
      %v4702 = vadd.f32 0.0, %v4701
      %v4703 = vpop.f32.mrf.mxu0
      %4704 = vmatprep.mubr.f32.mxu0 0.0
      %4705 = vmatmul.mubr.f32.gmra.mxu0 %v2438
      %v4706 = vpop.f32.mrf.mxu0
      %v4707 = vadd.f32 0.0, %v4706
      %v4708 = vpop.f32.mrf.mxu0
      %4709 = vmatprep.mubr.f32.mxu0 0.0
      %4710 = vmatmul.mubr.f32.gmra.mxu0 %v2440
      %v4711 = vpop.f32.mrf.mxu0
      %v4712 = vadd.f32 0.0, %v4711
      %v4713 = vpop.f32.mrf.mxu0
      %4714 = vmatprep.mubr.f32.mxu0 0.0
      %4715 = vmatmul.mubr.f32.gmra.mxu0 %v2442
      %v4716 = vpop.f32.mrf.mxu0
      %v4717 = vadd.f32 0.0, %v4716
      %v4718 = vpop.f32.mrf.mxu0
      %4719 = vmatprep.mubr.f32.mxu0 0.0
      %4720 = vmatmul.mubr.f32.gmra.mxu0 %v2444
      %v4721 = vpop.f32.mrf.mxu0
      %v4722 = vadd.f32 0.0, %v4721
      %v4723 = vpop.f32.mrf.mxu0
      %4724 = vmatprep.mubr.f32.mxu0 0.0
      %4725 = vmatmul.mubr.f32.gmra.mxu0 %v2446
      %v4726 = vpop.f32.mrf.mxu0
      %v4727 = vadd.f32 0.0, %v4726
      %v4728 = vpop.f32.mrf.mxu0
      %4729 = vmatprep.mubr.f32.mxu0 0.0
      %4730 = vmatmul.mubr.f32.gmra.mxu0 %v2448
      %v4731 = vpop.f32.mrf.mxu0
      %v4732 = vadd.f32 0.0, %v4731
      %v4733 = vpop.f32.mrf.mxu0
      %4734 = vmatprep.mubr.f32.mxu0 0.0
      %4735 = vmatmul.mubr.f32.gmra.mxu0 %v2450
      %v4736 = vpop.f32.mrf.mxu0
      %v4737 = vadd.f32 0.0, %v4736
      %v4738 = vpop.f32.mrf.mxu0
      %4739 = vmatprep.mubr.f32.mxu0 0.0
      %4740 = vmatmul.mubr.f32.gmra.mxu0 %v3733
      %v4741 = vpop.f32.mrf.mxu0
      %v4742 = vadd.f32 0.0, %v4741
      %v4743 = vpop.f32.mrf.mxu0
      %4744 = vmatprep.mubr.f32.mxu0 0.0
      %4745 = vmatmul.mubr.f32.gmra.mxu0 %v3735
      %v4746 = vpop.f32.mrf.mxu0
      %v4747 = vadd.f32 0.0, %v4746
      %v4748 = vpop.f32.mrf.mxu0
      %4749 = vmatprep.mubr.f32.mxu0 0.0
      %4750 = vmatmul.mubr.f32.gmra.mxu0 %v4608
      %v4751 = vpop.f32.mrf.mxu0
      %v4752 = vadd.f32 0.0, %v4751
      %v4753 = vpop.f32.mrf.mxu0
      %4754 = vmatprep.mubr.f32.mxu0 0.0
      %4755 = vmatmul.mubr.f32.gmra.mxu0 %v4610
      %v4756 = vpop.f32.mrf.mxu0
      %v4757 = vadd.f32 0.0, %v4756
      %v4758 = vpop.f32.mrf.mxu0
      %4759 = vdwg.mxu0
      %v4760 = vadd.f32 %v4586, %v4682
      %v4761 = vadd.f32 %v4587, %v4687
      %v4762 = vadd.f32 %v4588, %v4692
      %v4763 = vadd.f32 %v4589, %v4697
      %v4764 = vadd.f32 %v4590, %v4702
      %v4765 = vadd.f32 %v4591, %v4707
      %v4766 = vadd.f32 %v4592, %v4712
      %v4767 = vadd.f32 %v4593, %v4717
      %v4768 = vadd.f32 %v4594, %v4722
      %v4769 = vadd.f32 %v4595, %v4727
      %v4770 = vadd.f32 %v4596, %v4732
      %v4771 = vadd.f32 %v4597, %v4737
      %v4772 = vadd.f32 %v4598, %v4742
      %v4773 = vadd.f32 %v4599, %v4747
      %v4774 = vadd.f32 %v4600, %v4752
      %v4775 = vadd.f32 %v4601, %v4757
      %s4776 = scalar_lea.vmem %s4, 24
      %v4777 = vld [vmem:[%s4776] sm:$0x3]
      %4778 = vrot.lane.b32.xlu0 %v1500, 124
      %v4779 = vpop.permute.xlu0 %4778
      %4780 = vrot.lane.b32.xlu0 %v1502, 124
      %v4781 = vpop.permute.xlu0 %4780
      %v4782 = vsel %vm2419, %v4779, 0
      %v4784 = vsel %vm2419, %v4781, 0
      %v4787 = vsel %vm2452, %v4777, 0
      %4789 = vmatprep.subr.mxu0 0.0
      %4790 = vmatpush1.msra.mxu0 0.0
      %4791 = vmatprep.subr.mxu0 0.0
      %4792 = vmatpush1.msra.mxu0 0.0
      %4793 = vmatprep.subr.mxu0 0.0
      %4794 = vmatpush1.msra.mxu0 0.0
      %4795 = vmatprep.subr.mxu0 0.0
      %4796 = vmatpush1.msra.mxu0 0.0
      %4797 = vmatprep.subr.mxu0 0.0
      %4798 = vmatpush1.msra.mxu0 0.0
      %4799 = vmatprep.subr.mxu0 0.0
      %4800 = vmatpush1.msra.mxu0 0.0
      %4801 = vmatprep.subr.mxu0 0.0
      %4802 = vmatpush1.msra.mxu0 0.0
      %4803 = vmatprep.subr.mxu0 0.0
      %4804 = vmatpush1.msra.mxu0 0.0
      %4805 = vmatprep.subr.mxu0 0.0
      %4806 = vmatpush1.msra.mxu0 0.0
      %4807 = vmatprep.subr.mxu0 0.0
      %4808 = vmatpush1.msra.mxu0 0.0
      %4809 = vmatprep.subr.mxu0 0.0
      %4810 = vmatpush1.msra.mxu0 0.0
      %4811 = vmatprep.subr.mxu0 0.0
      %4812 = vmatpush1.msra.mxu0 0.0
      %4813 = vmatprep.subr.mxu0 0.0
      %4814 = vmatpush1.msra.mxu0 0.0
      %4815 = vmatprep.subr.mxu0 0.0
      %4816 = vmatpush1.msra.mxu0 0.0
      %4817 = vmatprep.subr.mxu0 0.0
      %4818 = vmatpush1.msra.mxu0 0.0
      %4819 = vmatprep.subr.mxu0 0.0
      %4820 = vmatpush1.msra.mxu0 %v4787
      %4821 = vmatprep.subr.mxu0 0.0
      %4822 = vmatpush2.msra.mxu0 0.0
      %4823 = vmatprep.subr.mxu0 0.0
      %4824 = vmatpush2.msra.mxu0 0.0
      %4825 = vmatprep.subr.mxu0 0.0
      %4826 = vmatpush2.msra.mxu0 0.0
      %4827 = vmatprep.subr.mxu0 0.0
      %4828 = vmatpush2.msra.mxu0 0.0
      %4829 = vmatprep.subr.mxu0 0.0
      %4830 = vmatpush2.msra.mxu0 0.0
      %4831 = vmatprep.subr.mxu0 0.0
      %4832 = vmatpush2.msra.mxu0 0.0
      %4833 = vmatprep.subr.mxu0 0.0
      %4834 = vmatpush2.msra.mxu0 0.0
      %4835 = vmatprep.subr.mxu0 0.0
      %4836 = vmatpush2.msra.mxu0 0.0
      %4837 = vmatprep.subr.mxu0 0.0
      %4838 = vmatpush2.msra.mxu0 0.0
      %4839 = vmatprep.subr.mxu0 0.0
      %4840 = vmatpush2.msra.mxu0 0.0
      %4841 = vmatprep.subr.mxu0 0.0
      %4842 = vmatpush2.msra.mxu0 0.0
      %4843 = vmatprep.subr.mxu0 0.0
      %4844 = vmatpush2.msra.mxu0 0.0
      %4845 = vmatprep.subr.mxu0 0.0
      %4846 = vmatpush2.msra.mxu0 0.0
      %4847 = vmatprep.subr.mxu0 0.0
      %4848 = vmatpush2.msra.mxu0 0.0
      %4849 = vmatprep.subr.mxu0 0.0
      %4850 = vmatpush2.msra.mxu0 0.0
      %4851 = vmatprep.subr.mxu0 0.0
      %4852 = vmatpush2.msra.mxu0 0.0
      %4853 = vmatprep.mubr.f32.mxu0 0.0
      %4854 = vmatmul.mubr.f32.gmra.mxu0 %v2860
      %v4855 = vpop.f32.mrf.mxu0
      %v4856 = vadd.f32 0.0, %v4855
      %v4857 = vpop.f32.mrf.mxu0
      %4858 = vmatprep.mubr.f32.mxu0 0.0
      %4859 = vmatmul.mubr.f32.gmra.mxu0 %v2862
      %v4860 = vpop.f32.mrf.mxu0
      %v4861 = vadd.f32 0.0, %v4860
      %v4862 = vpop.f32.mrf.mxu0
      %4863 = vmatprep.mubr.f32.mxu0 0.0
      %4864 = vmatmul.mubr.f32.gmra.mxu0 %v2864
      %v4865 = vpop.f32.mrf.mxu0
      %v4866 = vadd.f32 0.0, %v4865
      %v4867 = vpop.f32.mrf.mxu0
      %4868 = vmatprep.mubr.f32.mxu0 0.0
      %4869 = vmatmul.mubr.f32.gmra.mxu0 %v2866
      %v4870 = vpop.f32.mrf.mxu0
      %v4871 = vadd.f32 0.0, %v4870
      %v4872 = vpop.f32.mrf.mxu0
      %4873 = vmatprep.mubr.f32.mxu0 0.0
      %4874 = vmatmul.mubr.f32.gmra.mxu0 %v2868
      %v4875 = vpop.f32.mrf.mxu0
      %v4876 = vadd.f32 0.0, %v4875
      %v4877 = vpop.f32.mrf.mxu0
      %4878 = vmatprep.mubr.f32.mxu0 0.0
      %4879 = vmatmul.mubr.f32.gmra.mxu0 %v2870
      %v4880 = vpop.f32.mrf.mxu0
      %v4881 = vadd.f32 0.0, %v4880
      %v4882 = vpop.f32.mrf.mxu0
      %4883 = vmatprep.mubr.f32.mxu0 0.0
      %4884 = vmatmul.mubr.f32.gmra.mxu0 %v2872
      %v4885 = vpop.f32.mrf.mxu0
      %v4886 = vadd.f32 0.0, %v4885
      %v4887 = vpop.f32.mrf.mxu0
      %4888 = vmatprep.mubr.f32.mxu0 0.0
      %4889 = vmatmul.mubr.f32.gmra.mxu0 %v2874
      %v4890 = vpop.f32.mrf.mxu0
      %v4891 = vadd.f32 0.0, %v4890
      %v4892 = vpop.f32.mrf.mxu0
      %4893 = vmatprep.mubr.f32.mxu0 0.0
      %4894 = vmatmul.mubr.f32.gmra.mxu0 %v2876
      %v4895 = vpop.f32.mrf.mxu0
      %v4896 = vadd.f32 0.0, %v4895
      %v4897 = vpop.f32.mrf.mxu0
      %4898 = vmatprep.mubr.f32.mxu0 0.0
      %4899 = vmatmul.mubr.f32.gmra.mxu0 %v2878
      %v4900 = vpop.f32.mrf.mxu0
      %v4901 = vadd.f32 0.0, %v4900
      %v4902 = vpop.f32.mrf.mxu0
      %4903 = vmatprep.mubr.f32.mxu0 0.0
      %4904 = vmatmul.mubr.f32.gmra.mxu0 %v2880
      %v4905 = vpop.f32.mrf.mxu0
      %v4906 = vadd.f32 0.0, %v4905
      %v4907 = vpop.f32.mrf.mxu0
      %4908 = vmatprep.mubr.f32.mxu0 0.0
      %4909 = vmatmul.mubr.f32.gmra.mxu0 %v2882
      %v4910 = vpop.f32.mrf.mxu0
      %v4911 = vadd.f32 0.0, %v4910
      %v4912 = vpop.f32.mrf.mxu0
      %4913 = vmatprep.mubr.f32.mxu0 0.0
      %4914 = vmatmul.mubr.f32.gmra.mxu0 %v3907
      %v4915 = vpop.f32.mrf.mxu0
      %v4916 = vadd.f32 0.0, %v4915
      %v4917 = vpop.f32.mrf.mxu0
      %4918 = vmatprep.mubr.f32.mxu0 0.0
      %4919 = vmatmul.mubr.f32.gmra.mxu0 %v3909
      %v4920 = vpop.f32.mrf.mxu0
      %v4921 = vadd.f32 0.0, %v4920
      %v4922 = vpop.f32.mrf.mxu0
      %4923 = vmatprep.mubr.f32.mxu0 0.0
      %4924 = vmatmul.mubr.f32.gmra.mxu0 %v4782
      %v4925 = vpop.f32.mrf.mxu0
      %v4926 = vadd.f32 0.0, %v4925
      %v4927 = vpop.f32.mrf.mxu0
      %4928 = vmatprep.mubr.f32.mxu0 0.0
      %4929 = vmatmul.mubr.f32.gmra.mxu0 %v4784
      %v4930 = vpop.f32.mrf.mxu0
      %v4931 = vadd.f32 0.0, %v4930
      %v4932 = vpop.f32.mrf.mxu0
      %4933 = vdwg.mxu0
      %v4934 = vadd.f32 %v4760, %v4856
      %v4935 = vadd.f32 %v4761, %v4861
      %v4936 = vadd.f32 %v4762, %v4866
      %v4937 = vadd.f32 %v4763, %v4871
      %v4938 = vadd.f32 %v4764, %v4876
      %v4939 = vadd.f32 %v4765, %v4881
      %v4940 = vadd.f32 %v4766, %v4886
      %v4941 = vadd.f32 %v4767, %v4891
      %v4942 = vadd.f32 %v4768, %v4896
      %v4943 = vadd.f32 %v4769, %v4901
      %v4944 = vadd.f32 %v4770, %v4906
      %v4945 = vadd.f32 %v4771, %v4911
      %v4946 = vadd.f32 %v4772, %v4916
      %v4947 = vadd.f32 %v4773, %v4921
      %v4948 = vadd.f32 %v4774, %v4926
      %v4949 = vadd.f32 %v4775, %v4931
      %s4950 = scalar_lea.vmem %s4, 26
      %v4951 = vld [vmem:[%s4950] sm:$0x3]
      %4952 = vrot.lane.b32.xlu0 %v1675, 124
      %v4953 = vpop.permute.xlu0 %4952
      %4954 = vrot.lane.b32.xlu0 %v1677, 124
      %v4955 = vpop.permute.xlu0 %4954
      %v4956 = vsel %vm2419, %v4953, 0
      %v4958 = vsel %vm2419, %v4955, 0
      %v4961 = vsel %vm2452, %v4951, 0
      %4963 = vmatprep.subr.mxu0 0.0
      %4964 = vmatpush1.msra.mxu0 0.0
      %4965 = vmatprep.subr.mxu0 0.0
      %4966 = vmatpush1.msra.mxu0 0.0
      %4967 = vmatprep.subr.mxu0 0.0
      %4968 = vmatpush1.msra.mxu0 0.0
      %4969 = vmatprep.subr.mxu0 0.0
      %4970 = vmatpush1.msra.mxu0 0.0
      %4971 = vmatprep.subr.mxu0 0.0
      %4972 = vmatpush1.msra.mxu0 0.0
      %4973 = vmatprep.subr.mxu0 0.0
      %4974 = vmatpush1.msra.mxu0 0.0
      %4975 = vmatprep.subr.mxu0 0.0
      %4976 = vmatpush1.msra.mxu0 0.0
      %4977 = vmatprep.subr.mxu0 0.0
      %4978 = vmatpush1.msra.mxu0 0.0
      %4979 = vmatprep.subr.mxu0 0.0
      %4980 = vmatpush1.msra.mxu0 0.0
      %4981 = vmatprep.subr.mxu0 0.0
      %4982 = vmatpush1.msra.mxu0 0.0
      %4983 = vmatprep.subr.mxu0 0.0
      %4984 = vmatpush1.msra.mxu0 0.0
      %4985 = vmatprep.subr.mxu0 0.0
      %4986 = vmatpush1.msra.mxu0 0.0
      %4987 = vmatprep.subr.mxu0 0.0
      %4988 = vmatpush1.msra.mxu0 0.0
      %4989 = vmatprep.subr.mxu0 0.0
      %4990 = vmatpush1.msra.mxu0 0.0
      %4991 = vmatprep.subr.mxu0 0.0
      %4992 = vmatpush1.msra.mxu0 0.0
      %4993 = vmatprep.subr.mxu0 0.0
      %4994 = vmatpush1.msra.mxu0 %v4961
      %4995 = vmatprep.subr.mxu0 0.0
      %4996 = vmatpush2.msra.mxu0 0.0
      %4997 = vmatprep.subr.mxu0 0.0
      %4998 = vmatpush2.msra.mxu0 0.0
      %4999 = vmatprep.subr.mxu0 0.0
      %5000 = vmatpush2.msra.mxu0 0.0
      %5001 = vmatprep.subr.mxu0 0.0
      %5002 = vmatpush2.msra.mxu0 0.0
      %5003 = vmatprep.subr.mxu0 0.0
      %5004 = vmatpush2.msra.mxu0 0.0
      %5005 = vmatprep.subr.mxu0 0.0
      %5006 = vmatpush2.msra.mxu0 0.0
      %5007 = vmatprep.subr.mxu0 0.0
      %5008 = vmatpush2.msra.mxu0 0.0
      %5009 = vmatprep.subr.mxu0 0.0
      %5010 = vmatpush2.msra.mxu0 0.0
      %5011 = vmatprep.subr.mxu0 0.0
      %5012 = vmatpush2.msra.mxu0 0.0
      %5013 = vmatprep.subr.mxu0 0.0
      %5014 = vmatpush2.msra.mxu0 0.0
      %5015 = vmatprep.subr.mxu0 0.0
      %5016 = vmatpush2.msra.mxu0 0.0
      %5017 = vmatprep.subr.mxu0 0.0
      %5018 = vmatpush2.msra.mxu0 0.0
      %5019 = vmatprep.subr.mxu0 0.0
      %5020 = vmatpush2.msra.mxu0 0.0
      %5021 = vmatprep.subr.mxu0 0.0
      %5022 = vmatpush2.msra.mxu0 0.0
      %5023 = vmatprep.subr.mxu0 0.0
      %5024 = vmatpush2.msra.mxu0 0.0
      %5025 = vmatprep.subr.mxu0 0.0
      %5026 = vmatpush2.msra.mxu0 0.0
      %5027 = vmatprep.mubr.f32.mxu0 0.0
      %5028 = vmatmul.mubr.f32.gmra.mxu0 %v3095
      %v5029 = vpop.f32.mrf.mxu0
      %v5030 = vadd.f32 0.0, %v5029
      %v5031 = vpop.f32.mrf.mxu0
      %5032 = vmatprep.mubr.f32.mxu0 0.0
      %5033 = vmatmul.mubr.f32.gmra.mxu0 %v3097
      %v5034 = vpop.f32.mrf.mxu0
      %v5035 = vadd.f32 0.0, %v5034
      %v5036 = vpop.f32.mrf.mxu0
      %5037 = vmatprep.mubr.f32.mxu0 0.0
      %5038 = vmatmul.mubr.f32.gmra.mxu0 %v3099
      %v5039 = vpop.f32.mrf.mxu0
      %v5040 = vadd.f32 0.0, %v5039
      %v5041 = vpop.f32.mrf.mxu0
      %5042 = vmatprep.mubr.f32.mxu0 0.0
      %5043 = vmatmul.mubr.f32.gmra.mxu0 %v3101
      %v5044 = vpop.f32.mrf.mxu0
      %v5045 = vadd.f32 0.0, %v5044
      %v5046 = vpop.f32.mrf.mxu0
      %5047 = vmatprep.mubr.f32.mxu0 0.0
      %5048 = vmatmul.mubr.f32.gmra.mxu0 %v3103
      %v5049 = vpop.f32.mrf.mxu0
      %v5050 = vadd.f32 0.0, %v5049
      %v5051 = vpop.f32.mrf.mxu0
      %5052 = vmatprep.mubr.f32.mxu0 0.0
      %5053 = vmatmul.mubr.f32.gmra.mxu0 %v3105
      %v5054 = vpop.f32.mrf.mxu0
      %v5055 = vadd.f32 0.0, %v5054
      %v5056 = vpop.f32.mrf.mxu0
      %5057 = vmatprep.mubr.f32.mxu0 0.0
      %5058 = vmatmul.mubr.f32.gmra.mxu0 %v3107
      %v5059 = vpop.f32.mrf.mxu0
      %v5060 = vadd.f32 0.0, %v5059
      %v5061 = vpop.f32.mrf.mxu0
      %5062 = vmatprep.mubr.f32.mxu0 0.0
      %5063 = vmatmul.mubr.f32.gmra.mxu0 %v3109
      %v5064 = vpop.f32.mrf.mxu0
      %v5065 = vadd.f32 0.0, %v5064
      %v5066 = vpop.f32.mrf.mxu0
      %5067 = vmatprep.mubr.f32.mxu0 0.0
      %5068 = vmatmul.mubr.f32.gmra.mxu0 %v3111
      %v5069 = vpop.f32.mrf.mxu0
      %v5070 = vadd.f32 0.0, %v5069
      %v5071 = vpop.f32.mrf.mxu0
      %5072 = vmatprep.mubr.f32.mxu0 0.0
      %5073 = vmatmul.mubr.f32.gmra.mxu0 %v3113
      %v5074 = vpop.f32.mrf.mxu0
      %v5075 = vadd.f32 0.0, %v5074
      %v5076 = vpop.f32.mrf.mxu0
      %5077 = vmatprep.mubr.f32.mxu0 0.0
      %5078 = vmatmul.mubr.f32.gmra.mxu0 %v3115
      %v5079 = vpop.f32.mrf.mxu0
      %v5080 = vadd.f32 0.0, %v5079
      %v5081 = vpop.f32.mrf.mxu0
      %5082 = vmatprep.mubr.f32.mxu0 0.0
      %5083 = vmatmul.mubr.f32.gmra.mxu0 %v3117
      %v5084 = vpop.f32.mrf.mxu0
      %v5085 = vadd.f32 0.0, %v5084
      %v5086 = vpop.f32.mrf.mxu0
      %5087 = vmatprep.mubr.f32.mxu0 0.0
      %5088 = vmatmul.mubr.f32.gmra.mxu0 %v4081
      %v5089 = vpop.f32.mrf.mxu0
      %v5090 = vadd.f32 0.0, %v5089
      %v5091 = vpop.f32.mrf.mxu0
      %5092 = vmatprep.mubr.f32.mxu0 0.0
      %5093 = vmatmul.mubr.f32.gmra.mxu0 %v4083
      %v5094 = vpop.f32.mrf.mxu0
      %v5095 = vadd.f32 0.0, %v5094
      %v5096 = vpop.f32.mrf.mxu0
      %5097 = vmatprep.mubr.f32.mxu0 0.0
      %5098 = vmatmul.mubr.f32.gmra.mxu0 %v4956
      %v5099 = vpop.f32.mrf.mxu0
      %v5100 = vadd.f32 0.0, %v5099
      %v5101 = vpop.f32.mrf.mxu0
      %5102 = vmatprep.mubr.f32.mxu0 0.0
      %5103 = vmatmul.mubr.f32.gmra.mxu0 %v4958
      %v5104 = vpop.f32.mrf.mxu0
      %v5105 = vadd.f32 0.0, %v5104
      %v5106 = vpop.f32.mrf.mxu0
      %5107 = vdwg.mxu0
      %v5108 = vadd.f32 %v4934, %v5030
      %v5109 = vadd.f32 %v4935, %v5035
      %v5110 = vadd.f32 %v4936, %v5040
      %v5111 = vadd.f32 %v4937, %v5045
      %v5112 = vadd.f32 %v4938, %v5050
      %v5113 = vadd.f32 %v4939, %v5055
      %v5114 = vadd.f32 %v4940, %v5060
      %v5115 = vadd.f32 %v4941, %v5065
      %v5116 = vadd.f32 %v4942, %v5070
      %v5117 = vadd.f32 %v4943, %v5075
      %v5118 = vadd.f32 %v4944, %v5080
      %v5119 = vadd.f32 %v4945, %v5085
      %v5120 = vadd.f32 %v4946, %v5090
      %v5121 = vadd.f32 %v4947, %v5095
      %v5122 = vadd.f32 %v4948, %v5100
      %v5123 = vadd.f32 %v4949, %v5105
      %v5124 = vrot.slane %v356, 4
      %v5125 = vrot.slane %v357, 4
      %v5126 = vsel %vm464, %v5124, %v5125
      %v5127 = vrot.slane %v358, 4
      %v5128 = vsel %vm464, %v5125, %v5127
      %s5129 = scalar_lea.vmem %s4, 28
      %v5130 = vld [vmem:[%s5129] sm:$0x3]
      %5131 = vrot.lane.b32.xlu0 %v5126, 124
      %v5132 = vpop.permute.xlu0 %5131
      %5133 = vrot.lane.b32.xlu0 %v5128, 124
      %v5134 = vpop.permute.xlu0 %5133
      %v5135 = vsel %vm2419, %v5132, 0
      %v5137 = vsel %vm2419, %v5134, 0
      %v5140 = vsel %vm2452, %v5130, 0
      %5142 = vmatprep.subr.mxu0 0.0
      %5143 = vmatpush1.msra.mxu0 0.0
      %5144 = vmatprep.subr.mxu0 0.0
      %5145 = vmatpush1.msra.mxu0 0.0
      %5146 = vmatprep.subr.mxu0 0.0
      %5147 = vmatpush1.msra.mxu0 0.0
      %5148 = vmatprep.subr.mxu0 0.0
      %5149 = vmatpush1.msra.mxu0 0.0
      %5150 = vmatprep.subr.mxu0 0.0
      %5151 = vmatpush1.msra.mxu0 0.0
      %5152 = vmatprep.subr.mxu0 0.0
      %5153 = vmatpush1.msra.mxu0 0.0
      %5154 = vmatprep.subr.mxu0 0.0
      %5155 = vmatpush1.msra.mxu0 0.0
      %5156 = vmatprep.subr.mxu0 0.0
      %5157 = vmatpush1.msra.mxu0 0.0
      %5158 = vmatprep.subr.mxu0 0.0
      %5159 = vmatpush1.msra.mxu0 0.0
      %5160 = vmatprep.subr.mxu0 0.0
      %5161 = vmatpush1.msra.mxu0 0.0
      %5162 = vmatprep.subr.mxu0 0.0
      %5163 = vmatpush1.msra.mxu0 0.0
      %5164 = vmatprep.subr.mxu0 0.0
      %5165 = vmatpush1.msra.mxu0 0.0
      %5166 = vmatprep.subr.mxu0 0.0
      %5167 = vmatpush1.msra.mxu0 0.0
      %5168 = vmatprep.subr.mxu0 0.0
      %5169 = vmatpush1.msra.mxu0 0.0
      %5170 = vmatprep.subr.mxu0 0.0
      %5171 = vmatpush1.msra.mxu0 0.0
      %5172 = vmatprep.subr.mxu0 0.0
      %5173 = vmatpush1.msra.mxu0 %v5140
      %5174 = vmatprep.subr.mxu0 0.0
      %5175 = vmatpush2.msra.mxu0 0.0
      %5176 = vmatprep.subr.mxu0 0.0
      %5177 = vmatpush2.msra.mxu0 0.0
      %5178 = vmatprep.subr.mxu0 0.0
      %5179 = vmatpush2.msra.mxu0 0.0
      %5180 = vmatprep.subr.mxu0 0.0
      %5181 = vmatpush2.msra.mxu0 0.0
      %5182 = vmatprep.subr.mxu0 0.0
      %5183 = vmatpush2.msra.mxu0 0.0
      %5184 = vmatprep.subr.mxu0 0.0
      %5185 = vmatpush2.msra.mxu0 0.0
      %5186 = vmatprep.subr.mxu0 0.0
      %5187 = vmatpush2.msra.mxu0 0.0
      %5188 = vmatprep.subr.mxu0 0.0
      %5189 = vmatpush2.msra.mxu0 0.0
      %5190 = vmatprep.subr.mxu0 0.0
      %5191 = vmatpush2.msra.mxu0 0.0
      %5192 = vmatprep.subr.mxu0 0.0
      %5193 = vmatpush2.msra.mxu0 0.0
      %5194 = vmatprep.subr.mxu0 0.0
      %5195 = vmatpush2.msra.mxu0 0.0
      %5196 = vmatprep.subr.mxu0 0.0
      %5197 = vmatpush2.msra.mxu0 0.0
      %5198 = vmatprep.subr.mxu0 0.0
      %5199 = vmatpush2.msra.mxu0 0.0
      %5200 = vmatprep.subr.mxu0 0.0
      %5201 = vmatpush2.msra.mxu0 0.0
      %5202 = vmatprep.subr.mxu0 0.0
      %5203 = vmatpush2.msra.mxu0 0.0
      %5204 = vmatprep.subr.mxu0 0.0
      %5205 = vmatpush2.msra.mxu0 0.0
      %5206 = vmatprep.mubr.f32.mxu0 0.0
      %5207 = vmatmul.mubr.f32.gmra.mxu0 %v3365
      %v5208 = vpop.f32.mrf.mxu0
      %v5209 = vadd.f32 0.0, %v5208
      %v5210 = vpop.f32.mrf.mxu0
      %5211 = vmatprep.mubr.f32.mxu0 0.0
      %5212 = vmatmul.mubr.f32.gmra.mxu0 %v3367
      %v5213 = vpop.f32.mrf.mxu0
      %v5214 = vadd.f32 0.0, %v5213
      %v5215 = vpop.f32.mrf.mxu0
      %5216 = vmatprep.mubr.f32.mxu0 0.0
      %5217 = vmatmul.mubr.f32.gmra.mxu0 %v3369
      %v5218 = vpop.f32.mrf.mxu0
      %v5219 = vadd.f32 0.0, %v5218
      %v5220 = vpop.f32.mrf.mxu0
      %5221 = vmatprep.mubr.f32.mxu0 0.0
      %5222 = vmatmul.mubr.f32.gmra.mxu0 %v3371
      %v5223 = vpop.f32.mrf.mxu0
      %v5224 = vadd.f32 0.0, %v5223
      %v5225 = vpop.f32.mrf.mxu0
      %5226 = vmatprep.mubr.f32.mxu0 0.0
      %5227 = vmatmul.mubr.f32.gmra.mxu0 %v3373
      %v5228 = vpop.f32.mrf.mxu0
      %v5229 = vadd.f32 0.0, %v5228
      %v5230 = vpop.f32.mrf.mxu0
      %5231 = vmatprep.mubr.f32.mxu0 0.0
      %5232 = vmatmul.mubr.f32.gmra.mxu0 %v3375
      %v5233 = vpop.f32.mrf.mxu0
      %v5234 = vadd.f32 0.0, %v5233
      %v5235 = vpop.f32.mrf.mxu0
      %5236 = vmatprep.mubr.f32.mxu0 0.0
      %5237 = vmatmul.mubr.f32.gmra.mxu0 %v3377
      %v5238 = vpop.f32.mrf.mxu0
      %v5239 = vadd.f32 0.0, %v5238
      %v5240 = vpop.f32.mrf.mxu0
      %5241 = vmatprep.mubr.f32.mxu0 0.0
      %5242 = vmatmul.mubr.f32.gmra.mxu0 %v3379
      %v5243 = vpop.f32.mrf.mxu0
      %v5244 = vadd.f32 0.0, %v5243
      %v5245 = vpop.f32.mrf.mxu0
      %5246 = vmatprep.mubr.f32.mxu0 0.0
      %5247 = vmatmul.mubr.f32.gmra.mxu0 %v3381
      %v5248 = vpop.f32.mrf.mxu0
      %v5249 = vadd.f32 0.0, %v5248
      %v5250 = vpop.f32.mrf.mxu0
      %5251 = vmatprep.mubr.f32.mxu0 0.0
      %5252 = vmatmul.mubr.f32.gmra.mxu0 %v3383
      %v5253 = vpop.f32.mrf.mxu0
      %v5254 = vadd.f32 0.0, %v5253
      %v5255 = vpop.f32.mrf.mxu0
      %5256 = vmatprep.mubr.f32.mxu0 0.0
      %5257 = vmatmul.mubr.f32.gmra.mxu0 %v3385
      %v5258 = vpop.f32.mrf.mxu0
      %v5259 = vadd.f32 0.0, %v5258
      %v5260 = vpop.f32.mrf.mxu0
      %5261 = vmatprep.mubr.f32.mxu0 0.0
      %5262 = vmatmul.mubr.f32.gmra.mxu0 %v3387
      %v5263 = vpop.f32.mrf.mxu0
      %v5264 = vadd.f32 0.0, %v5263
      %v5265 = vpop.f32.mrf.mxu0
      %5266 = vmatprep.mubr.f32.mxu0 0.0
      %5267 = vmatmul.mubr.f32.gmra.mxu0 %v4260
      %v5268 = vpop.f32.mrf.mxu0
      %v5269 = vadd.f32 0.0, %v5268
      %v5270 = vpop.f32.mrf.mxu0
      %5271 = vmatprep.mubr.f32.mxu0 0.0
      %5272 = vmatmul.mubr.f32.gmra.mxu0 %v4262
      %v5273 = vpop.f32.mrf.mxu0
      %v5274 = vadd.f32 0.0, %v5273
      %v5275 = vpop.f32.mrf.mxu0
      %5276 = vmatprep.mubr.f32.mxu0 0.0
      %5277 = vmatmul.mubr.f32.gmra.mxu0 %v5135
      %v5278 = vpop.f32.mrf.mxu0
      %v5279 = vadd.f32 0.0, %v5278
      %v5280 = vpop.f32.mrf.mxu0
      %5281 = vmatprep.mubr.f32.mxu0 0.0
      %5282 = vmatmul.mubr.f32.gmra.mxu0 %v5137
      %v5283 = vpop.f32.mrf.mxu0
      %v5284 = vadd.f32 0.0, %v5283
      %v5285 = vpop.f32.mrf.mxu0
      %5286 = vdwg.mxu0
      %v5287 = vadd.f32 %v5108, %v5209
      %v5288 = vadd.f32 %v5109, %v5214
      %v5289 = vadd.f32 %v5110, %v5219
      %v5290 = vadd.f32 %v5111, %v5224
      %v5291 = vadd.f32 %v5112, %v5229
      %v5292 = vadd.f32 %v5113, %v5234
      %v5293 = vadd.f32 %v5114, %v5239
      %v5294 = vadd.f32 %v5115, %v5244
      %v5295 = vadd.f32 %v5116, %v5249
      %v5296 = vadd.f32 %v5117, %v5254
      %v5297 = vadd.f32 %v5118, %v5259
      %v5298 = vadd.f32 %v5119, %v5264
      %v5299 = vadd.f32 %v5120, %v5269
      %v5300 = vadd.f32 %v5121, %v5274
      %v5301 = vadd.f32 %v5122, %v5279
      %v5302 = vadd.f32 %v5123, %v5284
      %s5303 = scalar_lea.vmem %s4, 30
      %v5304 = vld [vmem:[%s5303] sm:$0x3]
      %5305 = vrot.lane.b32.xlu0 %v359, 124
      %v5306 = vpop.permute.xlu0 %5305
      %5307 = vrot.lane.b32.xlu0 %v360, 124
      %v5308 = vpop.permute.xlu0 %5307
      %v5309 = vsel %vm2419, %v5306, 0
      %v5311 = vsel %vm2419, %v5308, 0
      %v5314 = vsel %vm2452, %v5304, 0
      %5316 = vmatprep.subr.mxu0 0.0
      %5317 = vmatpush1.msra.mxu0 0.0
      %5318 = vmatprep.subr.mxu0 0.0
      %5319 = vmatpush1.msra.mxu0 0.0
      %5320 = vmatprep.subr.mxu0 0.0
      %5321 = vmatpush1.msra.mxu0 0.0
      %5322 = vmatprep.subr.mxu0 0.0
      %5323 = vmatpush1.msra.mxu0 0.0
      %5324 = vmatprep.subr.mxu0 0.0
      %5325 = vmatpush1.msra.mxu0 0.0
      %5326 = vmatprep.subr.mxu0 0.0
      %5327 = vmatpush1.msra.mxu0 0.0
      %5328 = vmatprep.subr.mxu0 0.0
      %5329 = vmatpush1.msra.mxu0 0.0
      %5330 = vmatprep.subr.mxu0 0.0
      %5331 = vmatpush1.msra.mxu0 0.0
      %5332 = vmatprep.subr.mxu0 0.0
      %5333 = vmatpush1.msra.mxu0 0.0
      %5334 = vmatprep.subr.mxu0 0.0
      %5335 = vmatpush1.msra.mxu0 0.0
      %5336 = vmatprep.subr.mxu0 0.0
      %5337 = vmatpush1.msra.mxu0 0.0
      %5338 = vmatprep.subr.mxu0 0.0
      %5339 = vmatpush1.msra.mxu0 0.0
      %5340 = vmatprep.subr.mxu0 0.0
      %5341 = vmatpush1.msra.mxu0 0.0
      %5342 = vmatprep.subr.mxu0 0.0
      %5343 = vmatpush1.msra.mxu0 0.0
      %5344 = vmatprep.subr.mxu0 0.0
      %5345 = vmatpush1.msra.mxu0 0.0
      %5346 = vmatprep.subr.mxu0 0.0
      %5347 = vmatpush1.msra.mxu0 %v5314
      %5348 = vmatprep.subr.mxu0 0.0
      %5349 = vmatpush2.msra.mxu0 0.0
      %5350 = vmatprep.subr.mxu0 0.0
      %5351 = vmatpush2.msra.mxu0 0.0
      %5352 = vmatprep.subr.mxu0 0.0
      %5353 = vmatpush2.msra.mxu0 0.0
      %5354 = vmatprep.subr.mxu0 0.0
      %5355 = vmatpush2.msra.mxu0 0.0
      %5356 = vmatprep.subr.mxu0 0.0
      %5357 = vmatpush2.msra.mxu0 0.0
      %5358 = vmatprep.subr.mxu0 0.0
      %5359 = vmatpush2.msra.mxu0 0.0
      %5360 = vmatprep.subr.mxu0 0.0
      %5361 = vmatpush2.msra.mxu0 0.0
      %5362 = vmatprep.subr.mxu0 0.0
      %5363 = vmatpush2.msra.mxu0 0.0
      %5364 = vmatprep.subr.mxu0 0.0
      %5365 = vmatpush2.msra.mxu0 0.0
      %5366 = vmatprep.subr.mxu0 0.0
      %5367 = vmatpush2.msra.mxu0 0.0
      %5368 = vmatprep.subr.mxu0 0.0
      %5369 = vmatpush2.msra.mxu0 0.0
      %5370 = vmatprep.subr.mxu0 0.0
      %5371 = vmatpush2.msra.mxu0 0.0
      %5372 = vmatprep.subr.mxu0 0.0
      %5373 = vmatpush2.msra.mxu0 0.0
      %5374 = vmatprep.subr.mxu0 0.0
      %5375 = vmatpush2.msra.mxu0 0.0
      %5376 = vmatprep.subr.mxu0 0.0
      %5377 = vmatpush2.msra.mxu0 0.0
      %5378 = vmatprep.subr.mxu0 0.0
      %5379 = vmatpush2.msra.mxu0 0.0
      %5380 = vmatprep.mubr.f32.mxu0 0.0
      %5381 = vmatmul.mubr.f32.gmra.mxu0 %v2645
      %v5382 = vpop.f32.mrf.mxu0
      %v5383 = vadd.f32 0.0, %v5382
      %v5384 = vpop.f32.mrf.mxu0
      %5385 = vmatprep.mubr.f32.mxu0 0.0
      %5386 = vmatmul.mubr.f32.gmra.mxu0 %v2647
      %v5387 = vpop.f32.mrf.mxu0
      %v5388 = vadd.f32 0.0, %v5387
      %v5389 = vpop.f32.mrf.mxu0
      %5390 = vmatprep.mubr.f32.mxu0 0.0
      %5391 = vmatmul.mubr.f32.gmra.mxu0 %v2649
      %v5392 = vpop.f32.mrf.mxu0
      %v5393 = vadd.f32 0.0, %v5392
      %v5394 = vpop.f32.mrf.mxu0
      %5395 = vmatprep.mubr.f32.mxu0 0.0
      %5396 = vmatmul.mubr.f32.gmra.mxu0 %v2651
      %v5397 = vpop.f32.mrf.mxu0
      %v5398 = vadd.f32 0.0, %v5397
      %v5399 = vpop.f32.mrf.mxu0
      %5400 = vmatprep.mubr.f32.mxu0 0.0
      %5401 = vmatmul.mubr.f32.gmra.mxu0 %v2653
      %v5402 = vpop.f32.mrf.mxu0
      %v5403 = vadd.f32 0.0, %v5402
      %v5404 = vpop.f32.mrf.mxu0
      %5405 = vmatprep.mubr.f32.mxu0 0.0
      %5406 = vmatmul.mubr.f32.gmra.mxu0 %v2655
      %v5407 = vpop.f32.mrf.mxu0
      %v5408 = vadd.f32 0.0, %v5407
      %v5409 = vpop.f32.mrf.mxu0
      %5410 = vmatprep.mubr.f32.mxu0 0.0
      %5411 = vmatmul.mubr.f32.gmra.mxu0 %v2657
      %v5412 = vpop.f32.mrf.mxu0
      %v5413 = vadd.f32 0.0, %v5412
      %v5414 = vpop.f32.mrf.mxu0
      %5415 = vmatprep.mubr.f32.mxu0 0.0
      %5416 = vmatmul.mubr.f32.gmra.mxu0 %v2659
      %v5417 = vpop.f32.mrf.mxu0
      %v5418 = vadd.f32 0.0, %v5417
      %v5419 = vpop.f32.mrf.mxu0
      %5420 = vmatprep.mubr.f32.mxu0 0.0
      %5421 = vmatmul.mubr.f32.gmra.mxu0 %v2661
      %v5422 = vpop.f32.mrf.mxu0
      %v5423 = vadd.f32 0.0, %v5422
      %v5424 = vpop.f32.mrf.mxu0
      %5425 = vmatprep.mubr.f32.mxu0 0.0
      %5426 = vmatmul.mubr.f32.gmra.mxu0 %v2663
      %v5427 = vpop.f32.mrf.mxu0
      %v5428 = vadd.f32 0.0, %v5427
      %v5429 = vpop.f32.mrf.mxu0
      %5430 = vmatprep.mubr.f32.mxu0 0.0
      %5431 = vmatmul.mubr.f32.gmra.mxu0 %v3559
      %v5432 = vpop.f32.mrf.mxu0
      %v5433 = vadd.f32 0.0, %v5432
      %v5434 = vpop.f32.mrf.mxu0
      %5435 = vmatprep.mubr.f32.mxu0 0.0
      %5436 = vmatmul.mubr.f32.gmra.mxu0 %v3561
      %v5437 = vpop.f32.mrf.mxu0
      %v5438 = vadd.f32 0.0, %v5437
      %v5439 = vpop.f32.mrf.mxu0
      %5440 = vmatprep.mubr.f32.mxu0 0.0
      %5441 = vmatmul.mubr.f32.gmra.mxu0 %v4434
      %v5442 = vpop.f32.mrf.mxu0
      %v5443 = vadd.f32 0.0, %v5442
      %v5444 = vpop.f32.mrf.mxu0
      %5445 = vmatprep.mubr.f32.mxu0 0.0
      %5446 = vmatmul.mubr.f32.gmra.mxu0 %v4436
      %v5447 = vpop.f32.mrf.mxu0
      %v5448 = vadd.f32 0.0, %v5447
      %v5449 = vpop.f32.mrf.mxu0
      %5450 = vmatprep.mubr.f32.mxu0 0.0
      %5451 = vmatmul.mubr.f32.gmra.mxu0 %v5309
      %v5452 = vpop.f32.mrf.mxu0
      %v5453 = vadd.f32 0.0, %v5452
      %v5454 = vpop.f32.mrf.mxu0
      %5455 = vmatprep.mubr.f32.mxu0 0.0
      %5456 = vmatmul.mubr.f32.gmra.mxu0 %v5311
      %v5457 = vpop.f32.mrf.mxu0
      %v5458 = vadd.f32 0.0, %v5457
      %v5459 = vpop.f32.mrf.mxu0
      %5460 = vdwg.mxu0
      %v5461 = vadd.f32 %v5287, %v5383
      %v5462 = vadd.f32 %v5288, %v5388
      %v5463 = vadd.f32 %v5289, %v5393
      %v5464 = vadd.f32 %v5290, %v5398
      %v5465 = vadd.f32 %v5291, %v5403
      %v5466 = vadd.f32 %v5292, %v5408
      %v5467 = vadd.f32 %v5293, %v5413
      %v5468 = vadd.f32 %v5294, %v5418
      %v5469 = vadd.f32 %v5295, %v5423
      %v5470 = vadd.f32 %v5296, %v5428
      %v5471 = vadd.f32 %v5297, %v5433
      %v5472 = vadd.f32 %v5298, %v5438
      %v5473 = vadd.f32 %v5299, %v5443
      %v5474 = vadd.f32 %v5300, %v5448
      %v5475 = vadd.f32 %v5301, %v5453
      %v5476 = vadd.f32 %v5302, %v5458
      %s5477 = scalar_lea.vmem %s4, 32
      %v5478 = vld [vmem:[%s5477] sm:$0x3]
      %5479 = vrot.lane.b32.xlu0 %v1853, 124
      %v5480 = vpop.permute.xlu0 %5479
      %5481 = vrot.lane.b32.xlu0 %v1855, 124
      %v5482 = vpop.permute.xlu0 %5481
      %v5483 = vsel %vm2419, %v5480, 0
      %v5485 = vsel %vm2419, %v5482, 0
      %v5488 = vsel %vm2452, %v5478, 0
      %5490 = vmatprep.subr.mxu0 0.0
      %5491 = vmatpush1.msra.mxu0 0.0
      %5492 = vmatprep.subr.mxu0 0.0
      %5493 = vmatpush1.msra.mxu0 0.0
      %5494 = vmatprep.subr.mxu0 0.0
      %5495 = vmatpush1.msra.mxu0 0.0
      %5496 = vmatprep.subr.mxu0 0.0
      %5497 = vmatpush1.msra.mxu0 0.0
      %5498 = vmatprep.subr.mxu0 0.0
      %5499 = vmatpush1.msra.mxu0 0.0
      %5500 = vmatprep.subr.mxu0 0.0
      %5501 = vmatpush1.msra.mxu0 0.0
      %5502 = vmatprep.subr.mxu0 0.0
      %5503 = vmatpush1.msra.mxu0 0.0
      %5504 = vmatprep.subr.mxu0 0.0
      %5505 = vmatpush1.msra.mxu0 0.0
      %5506 = vmatprep.subr.mxu0 0.0
      %5507 = vmatpush1.msra.mxu0 0.0
      %5508 = vmatprep.subr.mxu0 0.0
      %5509 = vmatpush1.msra.mxu0 0.0
      %5510 = vmatprep.subr.mxu0 0.0
      %5511 = vmatpush1.msra.mxu0 0.0
      %5512 = vmatprep.subr.mxu0 0.0
      %5513 = vmatpush1.msra.mxu0 0.0
      %5514 = vmatprep.subr.mxu0 0.0
      %5515 = vmatpush1.msra.mxu0 0.0
      %5516 = vmatprep.subr.mxu0 0.0
      %5517 = vmatpush1.msra.mxu0 0.0
      %5518 = vmatprep.subr.mxu0 0.0
      %5519 = vmatpush1.msra.mxu0 0.0
      %5520 = vmatprep.subr.mxu0 0.0
      %5521 = vmatpush1.msra.mxu0 %v5488
      %5522 = vmatprep.subr.mxu0 0.0
      %5523 = vmatpush2.msra.mxu0 0.0
      %5524 = vmatprep.subr.mxu0 0.0
      %5525 = vmatpush2.msra.mxu0 0.0
      %5526 = vmatprep.subr.mxu0 0.0
      %5527 = vmatpush2.msra.mxu0 0.0
      %5528 = vmatprep.subr.mxu0 0.0
      %5529 = vmatpush2.msra.mxu0 0.0
      %5530 = vmatprep.subr.mxu0 0.0
      %5531 = vmatpush2.msra.mxu0 0.0
      %5532 = vmatprep.subr.mxu0 0.0
      %5533 = vmatpush2.msra.mxu0 0.0
      %5534 = vmatprep.subr.mxu0 0.0
      %5535 = vmatpush2.msra.mxu0 0.0
      %5536 = vmatprep.subr.mxu0 0.0
      %5537 = vmatpush2.msra.mxu0 0.0
      %5538 = vmatprep.subr.mxu0 0.0
      %5539 = vmatpush2.msra.mxu0 0.0
      %5540 = vmatprep.subr.mxu0 0.0
      %5541 = vmatpush2.msra.mxu0 0.0
      %5542 = vmatprep.subr.mxu0 0.0
      %5543 = vmatpush2.msra.mxu0 0.0
      %5544 = vmatprep.subr.mxu0 0.0
      %5545 = vmatpush2.msra.mxu0 0.0
      %5546 = vmatprep.subr.mxu0 0.0
      %5547 = vmatpush2.msra.mxu0 0.0
      %5548 = vmatprep.subr.mxu0 0.0
      %5549 = vmatpush2.msra.mxu0 0.0
      %5550 = vmatprep.subr.mxu0 0.0
      %5551 = vmatpush2.msra.mxu0 0.0
      %5552 = vmatprep.subr.mxu0 0.0
      %5553 = vmatpush2.msra.mxu0 0.0
      %5554 = vmatprep.mubr.f32.mxu0 0.0
      %5555 = vmatmul.mubr.f32.gmra.mxu0 %v2432
      %v5556 = vpop.f32.mrf.mxu0
      %v5557 = vadd.f32 0.0, %v5556
      %v5558 = vpop.f32.mrf.mxu0
      %5559 = vmatprep.mubr.f32.mxu0 0.0
      %5560 = vmatmul.mubr.f32.gmra.mxu0 %v2434
      %v5561 = vpop.f32.mrf.mxu0
      %v5562 = vadd.f32 0.0, %v5561
      %v5563 = vpop.f32.mrf.mxu0
      %5564 = vmatprep.mubr.f32.mxu0 0.0
      %5565 = vmatmul.mubr.f32.gmra.mxu0 %v2436
      %v5566 = vpop.f32.mrf.mxu0
      %v5567 = vadd.f32 0.0, %v5566
      %v5568 = vpop.f32.mrf.mxu0
      %5569 = vmatprep.mubr.f32.mxu0 0.0
      %5570 = vmatmul.mubr.f32.gmra.mxu0 %v2438
      %v5571 = vpop.f32.mrf.mxu0
      %v5572 = vadd.f32 0.0, %v5571
      %v5573 = vpop.f32.mrf.mxu0
      %5574 = vmatprep.mubr.f32.mxu0 0.0
      %5575 = vmatmul.mubr.f32.gmra.mxu0 %v2440
      %v5576 = vpop.f32.mrf.mxu0
      %v5577 = vadd.f32 0.0, %v5576
      %v5578 = vpop.f32.mrf.mxu0
      %5579 = vmatprep.mubr.f32.mxu0 0.0
      %5580 = vmatmul.mubr.f32.gmra.mxu0 %v2442
      %v5581 = vpop.f32.mrf.mxu0
      %v5582 = vadd.f32 0.0, %v5581
      %v5583 = vpop.f32.mrf.mxu0
      %5584 = vmatprep.mubr.f32.mxu0 0.0
      %5585 = vmatmul.mubr.f32.gmra.mxu0 %v2444
      %v5586 = vpop.f32.mrf.mxu0
      %v5587 = vadd.f32 0.0, %v5586
      %v5588 = vpop.f32.mrf.mxu0
      %5589 = vmatprep.mubr.f32.mxu0 0.0
      %5590 = vmatmul.mubr.f32.gmra.mxu0 %v2446
      %v5591 = vpop.f32.mrf.mxu0
      %v5592 = vadd.f32 0.0, %v5591
      %v5593 = vpop.f32.mrf.mxu0
      %5594 = vmatprep.mubr.f32.mxu0 0.0
      %5595 = vmatmul.mubr.f32.gmra.mxu0 %v2448
      %v5596 = vpop.f32.mrf.mxu0
      %v5597 = vadd.f32 0.0, %v5596
      %v5598 = vpop.f32.mrf.mxu0
      %5599 = vmatprep.mubr.f32.mxu0 0.0
      %5600 = vmatmul.mubr.f32.gmra.mxu0 %v2450
      %v5601 = vpop.f32.mrf.mxu0
      %v5602 = vadd.f32 0.0, %v5601
      %v5603 = vpop.f32.mrf.mxu0
      %5604 = vmatprep.mubr.f32.mxu0 0.0
      %5605 = vmatmul.mubr.f32.gmra.mxu0 %v3733
      %v5606 = vpop.f32.mrf.mxu0
      %v5607 = vadd.f32 0.0, %v5606
      %v5608 = vpop.f32.mrf.mxu0
      %5609 = vmatprep.mubr.f32.mxu0 0.0
      %5610 = vmatmul.mubr.f32.gmra.mxu0 %v3735
      %v5611 = vpop.f32.mrf.mxu0
      %v5612 = vadd.f32 0.0, %v5611
      %v5613 = vpop.f32.mrf.mxu0
      %5614 = vmatprep.mubr.f32.mxu0 0.0
      %5615 = vmatmul.mubr.f32.gmra.mxu0 %v4608
      %v5616 = vpop.f32.mrf.mxu0
      %v5617 = vadd.f32 0.0, %v5616
      %v5618 = vpop.f32.mrf.mxu0
      %5619 = vmatprep.mubr.f32.mxu0 0.0
      %5620 = vmatmul.mubr.f32.gmra.mxu0 %v4610
      %v5621 = vpop.f32.mrf.mxu0
      %v5622 = vadd.f32 0.0, %v5621
      %v5623 = vpop.f32.mrf.mxu0
      %5624 = vmatprep.mubr.f32.mxu0 0.0
      %5625 = vmatmul.mubr.f32.gmra.mxu0 %v5483
      %v5626 = vpop.f32.mrf.mxu0
      %v5627 = vadd.f32 0.0, %v5626
      %v5628 = vpop.f32.mrf.mxu0
      %5629 = vmatprep.mubr.f32.mxu0 0.0
      %5630 = vmatmul.mubr.f32.gmra.mxu0 %v5485
      %v5631 = vpop.f32.mrf.mxu0
      %v5632 = vadd.f32 0.0, %v5631
      %v5633 = vpop.f32.mrf.mxu0
      %5634 = vdwg.mxu0
      %v5635 = vadd.f32 %v5461, %v5557
      %v5636 = vadd.f32 %v5462, %v5562
      %v5637 = vadd.f32 %v5463, %v5567
      %v5638 = vadd.f32 %v5464, %v5572
      %v5639 = vadd.f32 %v5465, %v5577
      %v5640 = vadd.f32 %v5466, %v5582
      %v5641 = vadd.f32 %v5467, %v5587
      %v5642 = vadd.f32 %v5468, %v5592
      %v5643 = vadd.f32 %v5469, %v5597
      %v5644 = vadd.f32 %v5470, %v5602
      %v5645 = vadd.f32 %v5471, %v5607
      %v5646 = vadd.f32 %v5472, %v5612
      %v5647 = vadd.f32 %v5473, %v5617
      %v5648 = vadd.f32 %v5474, %v5622
      %v5649 = vadd.f32 %v5475, %v5627
      %v5650 = vadd.f32 %v5476, %v5632
      %s5651 = scalar_lea.vmem %s4, 34
      %v5652 = vld [vmem:[%s5651] sm:$0x3]
      %5653 = vrot.lane.b32.xlu0 %v2028, 124
      %v5654 = vpop.permute.xlu0 %5653
      %5655 = vrot.lane.b32.xlu0 %v2030, 124
      %v5656 = vpop.permute.xlu0 %5655
      %v5657 = vsel %vm2419, %v5654, 0
      %v5659 = vsel %vm2419, %v5656, 0
      %v5662 = vsel %vm2452, %v5652, 0
      %5664 = vmatprep.subr.mxu0 0.0
      %5665 = vmatpush1.msra.mxu0 0.0
      %5666 = vmatprep.subr.mxu0 0.0
      %5667 = vmatpush1.msra.mxu0 0.0
      %5668 = vmatprep.subr.mxu0 0.0
      %5669 = vmatpush1.msra.mxu0 0.0
      %5670 = vmatprep.subr.mxu0 0.0
      %5671 = vmatpush1.msra.mxu0 0.0
      %5672 = vmatprep.subr.mxu0 0.0
      %5673 = vmatpush1.msra.mxu0 0.0
      %5674 = vmatprep.subr.mxu0 0.0
      %5675 = vmatpush1.msra.mxu0 0.0
      %5676 = vmatprep.subr.mxu0 0.0
      %5677 = vmatpush1.msra.mxu0 0.0
      %5678 = vmatprep.subr.mxu0 0.0
      %5679 = vmatpush1.msra.mxu0 0.0
      %5680 = vmatprep.subr.mxu0 0.0
      %5681 = vmatpush1.msra.mxu0 0.0
      %5682 = vmatprep.subr.mxu0 0.0
      %5683 = vmatpush1.msra.mxu0 0.0
      %5684 = vmatprep.subr.mxu0 0.0
      %5685 = vmatpush1.msra.mxu0 0.0
      %5686 = vmatprep.subr.mxu0 0.0
      %5687 = vmatpush1.msra.mxu0 0.0
      %5688 = vmatprep.subr.mxu0 0.0
      %5689 = vmatpush1.msra.mxu0 0.0
      %5690 = vmatprep.subr.mxu0 0.0
      %5691 = vmatpush1.msra.mxu0 0.0
      %5692 = vmatprep.subr.mxu0 0.0
      %5693 = vmatpush1.msra.mxu0 0.0
      %5694 = vmatprep.subr.mxu0 0.0
      %5695 = vmatpush1.msra.mxu0 %v5662
      %5696 = vmatprep.subr.mxu0 0.0
      %5697 = vmatpush2.msra.mxu0 0.0
      %5698 = vmatprep.subr.mxu0 0.0
      %5699 = vmatpush2.msra.mxu0 0.0
      %5700 = vmatprep.subr.mxu0 0.0
      %5701 = vmatpush2.msra.mxu0 0.0
      %5702 = vmatprep.subr.mxu0 0.0
      %5703 = vmatpush2.msra.mxu0 0.0
      %5704 = vmatprep.subr.mxu0 0.0
      %5705 = vmatpush2.msra.mxu0 0.0
      %5706 = vmatprep.subr.mxu0 0.0
      %5707 = vmatpush2.msra.mxu0 0.0
      %5708 = vmatprep.subr.mxu0 0.0
      %5709 = vmatpush2.msra.mxu0 0.0
      %5710 = vmatprep.subr.mxu0 0.0
      %5711 = vmatpush2.msra.mxu0 0.0
      %5712 = vmatprep.subr.mxu0 0.0
      %5713 = vmatpush2.msra.mxu0 0.0
      %5714 = vmatprep.subr.mxu0 0.0
      %5715 = vmatpush2.msra.mxu0 0.0
      %5716 = vmatprep.subr.mxu0 0.0
      %5717 = vmatpush2.msra.mxu0 0.0
      %5718 = vmatprep.subr.mxu0 0.0
      %5719 = vmatpush2.msra.mxu0 0.0
      %5720 = vmatprep.subr.mxu0 0.0
      %5721 = vmatpush2.msra.mxu0 0.0
      %5722 = vmatprep.subr.mxu0 0.0
      %5723 = vmatpush2.msra.mxu0 0.0
      %5724 = vmatprep.subr.mxu0 0.0
      %5725 = vmatpush2.msra.mxu0 0.0
      %5726 = vmatprep.subr.mxu0 0.0
      %5727 = vmatpush2.msra.mxu0 0.0
      %5728 = vmatprep.mubr.f32.mxu0 0.0
      %5729 = vmatmul.mubr.f32.gmra.mxu0 %v2864
      %v5730 = vpop.f32.mrf.mxu0
      %v5731 = vadd.f32 0.0, %v5730
      %v5732 = vpop.f32.mrf.mxu0
      %5733 = vmatprep.mubr.f32.mxu0 0.0
      %5734 = vmatmul.mubr.f32.gmra.mxu0 %v2866
      %v5735 = vpop.f32.mrf.mxu0
      %v5736 = vadd.f32 0.0, %v5735
      %v5737 = vpop.f32.mrf.mxu0
      %5738 = vmatprep.mubr.f32.mxu0 0.0
      %5739 = vmatmul.mubr.f32.gmra.mxu0 %v2868
      %v5740 = vpop.f32.mrf.mxu0
      %v5741 = vadd.f32 0.0, %v5740
      %v5742 = vpop.f32.mrf.mxu0
      %5743 = vmatprep.mubr.f32.mxu0 0.0
      %5744 = vmatmul.mubr.f32.gmra.mxu0 %v2870
      %v5745 = vpop.f32.mrf.mxu0
      %v5746 = vadd.f32 0.0, %v5745
      %v5747 = vpop.f32.mrf.mxu0
      %5748 = vmatprep.mubr.f32.mxu0 0.0
      %5749 = vmatmul.mubr.f32.gmra.mxu0 %v2872
      %v5750 = vpop.f32.mrf.mxu0
      %v5751 = vadd.f32 0.0, %v5750
      %v5752 = vpop.f32.mrf.mxu0
      %5753 = vmatprep.mubr.f32.mxu0 0.0
      %5754 = vmatmul.mubr.f32.gmra.mxu0 %v2874
      %v5755 = vpop.f32.mrf.mxu0
      %v5756 = vadd.f32 0.0, %v5755
      %v5757 = vpop.f32.mrf.mxu0
      %5758 = vmatprep.mubr.f32.mxu0 0.0
      %5759 = vmatmul.mubr.f32.gmra.mxu0 %v2876
      %v5760 = vpop.f32.mrf.mxu0
      %v5761 = vadd.f32 0.0, %v5760
      %v5762 = vpop.f32.mrf.mxu0
      %5763 = vmatprep.mubr.f32.mxu0 0.0
      %5764 = vmatmul.mubr.f32.gmra.mxu0 %v2878
      %v5765 = vpop.f32.mrf.mxu0
      %v5766 = vadd.f32 0.0, %v5765
      %v5767 = vpop.f32.mrf.mxu0
      %5768 = vmatprep.mubr.f32.mxu0 0.0
      %5769 = vmatmul.mubr.f32.gmra.mxu0 %v2880
      %v5770 = vpop.f32.mrf.mxu0
      %v5771 = vadd.f32 0.0, %v5770
      %v5772 = vpop.f32.mrf.mxu0
      %5773 = vmatprep.mubr.f32.mxu0 0.0
      %5774 = vmatmul.mubr.f32.gmra.mxu0 %v2882
      %v5775 = vpop.f32.mrf.mxu0
      %v5776 = vadd.f32 0.0, %v5775
      %v5777 = vpop.f32.mrf.mxu0
      %5778 = vmatprep.mubr.f32.mxu0 0.0
      %5779 = vmatmul.mubr.f32.gmra.mxu0 %v3907
      %v5780 = vpop.f32.mrf.mxu0
      %v5781 = vadd.f32 0.0, %v5780
      %v5782 = vpop.f32.mrf.mxu0
      %5783 = vmatprep.mubr.f32.mxu0 0.0
      %5784 = vmatmul.mubr.f32.gmra.mxu0 %v3909
      %v5785 = vpop.f32.mrf.mxu0
      %v5786 = vadd.f32 0.0, %v5785
      %v5787 = vpop.f32.mrf.mxu0
      %5788 = vmatprep.mubr.f32.mxu0 0.0
      %5789 = vmatmul.mubr.f32.gmra.mxu0 %v4782
      %v5790 = vpop.f32.mrf.mxu0
      %v5791 = vadd.f32 0.0, %v5790
      %v5792 = vpop.f32.mrf.mxu0
      %5793 = vmatprep.mubr.f32.mxu0 0.0
      %5794 = vmatmul.mubr.f32.gmra.mxu0 %v4784
      %v5795 = vpop.f32.mrf.mxu0
      %v5796 = vadd.f32 0.0, %v5795
      %v5797 = vpop.f32.mrf.mxu0
      %5798 = vmatprep.mubr.f32.mxu0 0.0
      %5799 = vmatmul.mubr.f32.gmra.mxu0 %v5657
      %v5800 = vpop.f32.mrf.mxu0
      %v5801 = vadd.f32 0.0, %v5800
      %v5802 = vpop.f32.mrf.mxu0
      %5803 = vmatprep.mubr.f32.mxu0 0.0
      %5804 = vmatmul.mubr.f32.gmra.mxu0 %v5659
      %v5805 = vpop.f32.mrf.mxu0
      %v5806 = vadd.f32 0.0, %v5805
      %v5807 = vpop.f32.mrf.mxu0
      %5808 = vdwg.mxu0
      %v5809 = vadd.f32 %v5635, %v5731
      %v5810 = vadd.f32 %v5636, %v5736
      %v5811 = vadd.f32 %v5637, %v5741
      %v5812 = vadd.f32 %v5638, %v5746
      %v5813 = vadd.f32 %v5639, %v5751
      %v5814 = vadd.f32 %v5640, %v5756
      %v5815 = vadd.f32 %v5641, %v5761
      %v5816 = vadd.f32 %v5642, %v5766
      %v5817 = vadd.f32 %v5643, %v5771
      %v5818 = vadd.f32 %v5644, %v5776
      %v5819 = vadd.f32 %v5645, %v5781
      %v5820 = vadd.f32 %v5646, %v5786
      %v5821 = vadd.f32 %v5647, %v5791
      %v5822 = vadd.f32 %v5648, %v5796
      %v5823 = vadd.f32 %v5649, %v5801
      %v5824 = vadd.f32 %v5650, %v5806
      %s5825 = scalar_lea.vmem %s4, 36
      %v5826 = vld [vmem:[%s5825] sm:$0x3]
      %5827 = vrot.lane.b32.xlu0 %v2203, 124
      %v5828 = vpop.permute.xlu0 %5827
      %5829 = vrot.lane.b32.xlu0 %v2205, 124
      %v5830 = vpop.permute.xlu0 %5829
      %v5831 = vsel %vm2419, %v5828, 0
      %v5833 = vsel %vm2419, %v5830, 0
      %v5836 = vsel %vm2452, %v5826, 0
      %5838 = vmatprep.subr.mxu0 0.0
      %5839 = vmatpush1.msra.mxu0 0.0
      %5840 = vmatprep.subr.mxu0 0.0
      %5841 = vmatpush1.msra.mxu0 0.0
      %5842 = vmatprep.subr.mxu0 0.0
      %5843 = vmatpush1.msra.mxu0 0.0
      %5844 = vmatprep.subr.mxu0 0.0
      %5845 = vmatpush1.msra.mxu0 0.0
      %5846 = vmatprep.subr.mxu0 0.0
      %5847 = vmatpush1.msra.mxu0 0.0
      %5848 = vmatprep.subr.mxu0 0.0
      %5849 = vmatpush1.msra.mxu0 0.0
      %5850 = vmatprep.subr.mxu0 0.0
      %5851 = vmatpush1.msra.mxu0 0.0
      %5852 = vmatprep.subr.mxu0 0.0
      %5853 = vmatpush1.msra.mxu0 0.0
      %5854 = vmatprep.subr.mxu0 0.0
      %5855 = vmatpush1.msra.mxu0 0.0
      %5856 = vmatprep.subr.mxu0 0.0
      %5857 = vmatpush1.msra.mxu0 0.0
      %5858 = vmatprep.subr.mxu0 0.0
      %5859 = vmatpush1.msra.mxu0 0.0
      %5860 = vmatprep.subr.mxu0 0.0
      %5861 = vmatpush1.msra.mxu0 0.0
      %5862 = vmatprep.subr.mxu0 0.0
      %5863 = vmatpush1.msra.mxu0 0.0
      %5864 = vmatprep.subr.mxu0 0.0
      %5865 = vmatpush1.msra.mxu0 0.0
      %5866 = vmatprep.subr.mxu0 0.0
      %5867 = vmatpush1.msra.mxu0 0.0
      %5868 = vmatprep.subr.mxu0 0.0
      %5869 = vmatpush1.msra.mxu0 %v5836
      %5870 = vmatprep.subr.mxu0 0.0
      %5871 = vmatpush2.msra.mxu0 0.0
      %5872 = vmatprep.subr.mxu0 0.0
      %5873 = vmatpush2.msra.mxu0 0.0
      %5874 = vmatprep.subr.mxu0 0.0
      %5875 = vmatpush2.msra.mxu0 0.0
      %5876 = vmatprep.subr.mxu0 0.0
      %5877 = vmatpush2.msra.mxu0 0.0
      %5878 = vmatprep.subr.mxu0 0.0
      %5879 = vmatpush2.msra.mxu0 0.0
      %5880 = vmatprep.subr.mxu0 0.0
      %5881 = vmatpush2.msra.mxu0 0.0
      %5882 = vmatprep.subr.mxu0 0.0
      %5883 = vmatpush2.msra.mxu0 0.0
      %5884 = vmatprep.subr.mxu0 0.0
      %5885 = vmatpush2.msra.mxu0 0.0
      %5886 = vmatprep.subr.mxu0 0.0
      %5887 = vmatpush2.msra.mxu0 0.0
      %5888 = vmatprep.subr.mxu0 0.0
      %5889 = vmatpush2.msra.mxu0 0.0
      %5890 = vmatprep.subr.mxu0 0.0
      %5891 = vmatpush2.msra.mxu0 0.0
      %5892 = vmatprep.subr.mxu0 0.0
      %5893 = vmatpush2.msra.mxu0 0.0
      %5894 = vmatprep.subr.mxu0 0.0
      %5895 = vmatpush2.msra.mxu0 0.0
      %5896 = vmatprep.subr.mxu0 0.0
      %5897 = vmatpush2.msra.mxu0 0.0
      %5898 = vmatprep.subr.mxu0 0.0
      %5899 = vmatpush2.msra.mxu0 0.0
      %5900 = vmatprep.subr.mxu0 0.0
      %5901 = vmatpush2.msra.mxu0 0.0
      %5902 = vmatprep.mubr.f32.mxu0 0.0
      %5903 = vmatmul.mubr.f32.gmra.mxu0 %v3099
      %v5904 = vpop.f32.mrf.mxu0
      %v5905 = vadd.f32 0.0, %v5904
      %v5906 = vpop.f32.mrf.mxu0
      %5907 = vmatprep.mubr.f32.mxu0 0.0
      %5908 = vmatmul.mubr.f32.gmra.mxu0 %v3101
      %v5909 = vpop.f32.mrf.mxu0
      %v5910 = vadd.f32 0.0, %v5909
      %v5911 = vpop.f32.mrf.mxu0
      %5912 = vmatprep.mubr.f32.mxu0 0.0
      %5913 = vmatmul.mubr.f32.gmra.mxu0 %v3103
      %v5914 = vpop.f32.mrf.mxu0
      %v5915 = vadd.f32 0.0, %v5914
      %v5916 = vpop.f32.mrf.mxu0
      %5917 = vmatprep.mubr.f32.mxu0 0.0
      %5918 = vmatmul.mubr.f32.gmra.mxu0 %v3105
      %v5919 = vpop.f32.mrf.mxu0
      %v5920 = vadd.f32 0.0, %v5919
      %v5921 = vpop.f32.mrf.mxu0
      %5922 = vmatprep.mubr.f32.mxu0 0.0
      %5923 = vmatmul.mubr.f32.gmra.mxu0 %v3107
      %v5924 = vpop.f32.mrf.mxu0
      %v5925 = vadd.f32 0.0, %v5924
      %v5926 = vpop.f32.mrf.mxu0
      %5927 = vmatprep.mubr.f32.mxu0 0.0
      %5928 = vmatmul.mubr.f32.gmra.mxu0 %v3109
      %v5929 = vpop.f32.mrf.mxu0
      %v5930 = vadd.f32 0.0, %v5929
      %v5931 = vpop.f32.mrf.mxu0
      %5932 = vmatprep.mubr.f32.mxu0 0.0
      %5933 = vmatmul.mubr.f32.gmra.mxu0 %v3111
      %v5934 = vpop.f32.mrf.mxu0
      %v5935 = vadd.f32 0.0, %v5934
      %v5936 = vpop.f32.mrf.mxu0
      %5937 = vmatprep.mubr.f32.mxu0 0.0
      %5938 = vmatmul.mubr.f32.gmra.mxu0 %v3113
      %v5939 = vpop.f32.mrf.mxu0
      %v5940 = vadd.f32 0.0, %v5939
      %v5941 = vpop.f32.mrf.mxu0
      %5942 = vmatprep.mubr.f32.mxu0 0.0
      %5943 = vmatmul.mubr.f32.gmra.mxu0 %v3115
      %v5944 = vpop.f32.mrf.mxu0
      %v5945 = vadd.f32 0.0, %v5944
      %v5946 = vpop.f32.mrf.mxu0
      %5947 = vmatprep.mubr.f32.mxu0 0.0
      %5948 = vmatmul.mubr.f32.gmra.mxu0 %v3117
      %v5949 = vpop.f32.mrf.mxu0
      %v5950 = vadd.f32 0.0, %v5949
      %v5951 = vpop.f32.mrf.mxu0
      %5952 = vmatprep.mubr.f32.mxu0 0.0
      %5953 = vmatmul.mubr.f32.gmra.mxu0 %v4081
      %v5954 = vpop.f32.mrf.mxu0
      %v5955 = vadd.f32 0.0, %v5954
      %v5956 = vpop.f32.mrf.mxu0
      %5957 = vmatprep.mubr.f32.mxu0 0.0
      %5958 = vmatmul.mubr.f32.gmra.mxu0 %v4083
      %v5959 = vpop.f32.mrf.mxu0
      %v5960 = vadd.f32 0.0, %v5959
      %v5961 = vpop.f32.mrf.mxu0
      %5962 = vmatprep.mubr.f32.mxu0 0.0
      %5963 = vmatmul.mubr.f32.gmra.mxu0 %v4956
      %v5964 = vpop.f32.mrf.mxu0
      %v5965 = vadd.f32 0.0, %v5964
      %v5966 = vpop.f32.mrf.mxu0
      %5967 = vmatprep.mubr.f32.mxu0 0.0
      %5968 = vmatmul.mubr.f32.gmra.mxu0 %v4958
      %v5969 = vpop.f32.mrf.mxu0
      %v5970 = vadd.f32 0.0, %v5969
      %v5971 = vpop.f32.mrf.mxu0
      %5972 = vmatprep.mubr.f32.mxu0 0.0
      %5973 = vmatmul.mubr.f32.gmra.mxu0 %v5831
      %v5974 = vpop.f32.mrf.mxu0
      %v5975 = vadd.f32 0.0, %v5974
      %v5976 = vpop.f32.mrf.mxu0
      %5977 = vmatprep.mubr.f32.mxu0 0.0
      %5978 = vmatmul.mubr.f32.gmra.mxu0 %v5833
      %v5979 = vpop.f32.mrf.mxu0
      %v5980 = vadd.f32 0.0, %v5979
      %v5981 = vpop.f32.mrf.mxu0
      %5982 = vdwg.mxu0
      %v5983 = vadd.f32 %v5809, %v5905
      %v5984 = vadd.f32 %v5810, %v5910
      %v5985 = vadd.f32 %v5811, %v5915
      %v5986 = vadd.f32 %v5812, %v5920
      %v5987 = vadd.f32 %v5813, %v5925
      %v5988 = vadd.f32 %v5814, %v5930
      %v5989 = vadd.f32 %v5815, %v5935
      %v5990 = vadd.f32 %v5816, %v5940
      %v5991 = vadd.f32 %v5817, %v5945
      %v5992 = vadd.f32 %v5818, %v5950
      %v5993 = vadd.f32 %v5819, %v5955
      %v5994 = vadd.f32 %v5820, %v5960
      %v5995 = vadd.f32 %v5821, %v5965
      %v5996 = vadd.f32 %v5822, %v5970
      %v5997 = vadd.f32 %v5823, %v5975
      %v5998 = vadd.f32 %v5824, %v5980
      %v5999 = vrot.slane %v359, 4
      %v6000 = vrot.slane %v360, 4
      %v6001 = vsel %vm464, %v5999, %v6000
      %v6002 = vrot.slane %v361, 4
      %v6003 = vsel %vm464, %v6000, %v6002
      %s6004 = scalar_lea.vmem %s4, 38
      %v6005 = vld [vmem:[%s6004] sm:$0x3]
      %6006 = vrot.lane.b32.xlu0 %v6001, 124
      %v6007 = vpop.permute.xlu0 %6006
      %6008 = vrot.lane.b32.xlu0 %v6003, 124
      %v6009 = vpop.permute.xlu0 %6008
      %v6010 = vsel %vm2419, %v6007, 0
      %v6012 = vsel %vm2419, %v6009, 0
      %v6015 = vsel %vm2452, %v6005, 0
      %6017 = vmatprep.subr.mxu0 0.0
      %6018 = vmatpush1.msra.mxu0 0.0
      %6019 = vmatprep.subr.mxu0 0.0
      %6020 = vmatpush1.msra.mxu0 0.0
      %6021 = vmatprep.subr.mxu0 0.0
      %6022 = vmatpush1.msra.mxu0 0.0
      %6023 = vmatprep.subr.mxu0 0.0
      %6024 = vmatpush1.msra.mxu0 0.0
      %6025 = vmatprep.subr.mxu0 0.0
      %6026 = vmatpush1.msra.mxu0 0.0
      %6027 = vmatprep.subr.mxu0 0.0
      %6028 = vmatpush1.msra.mxu0 0.0
      %6029 = vmatprep.subr.mxu0 0.0
      %6030 = vmatpush1.msra.mxu0 0.0
      %6031 = vmatprep.subr.mxu0 0.0
      %6032 = vmatpush1.msra.mxu0 0.0
      %6033 = vmatprep.subr.mxu0 0.0
      %6034 = vmatpush1.msra.mxu0 0.0
      %6035 = vmatprep.subr.mxu0 0.0
      %6036 = vmatpush1.msra.mxu0 0.0
      %6037 = vmatprep.subr.mxu0 0.0
      %6038 = vmatpush1.msra.mxu0 0.0
      %6039 = vmatprep.subr.mxu0 0.0
      %6040 = vmatpush1.msra.mxu0 0.0
      %6041 = vmatprep.subr.mxu0 0.0
      %6042 = vmatpush1.msra.mxu0 0.0
      %6043 = vmatprep.subr.mxu0 0.0
      %6044 = vmatpush1.msra.mxu0 0.0
      %6045 = vmatprep.subr.mxu0 0.0
      %6046 = vmatpush1.msra.mxu0 0.0
      %6047 = vmatprep.subr.mxu0 0.0
      %6048 = vmatpush1.msra.mxu0 %v6015
      %6049 = vmatprep.subr.mxu0 0.0
      %6050 = vmatpush2.msra.mxu0 0.0
      %6051 = vmatprep.subr.mxu0 0.0
      %6052 = vmatpush2.msra.mxu0 0.0
      %6053 = vmatprep.subr.mxu0 0.0
      %6054 = vmatpush2.msra.mxu0 0.0
      %6055 = vmatprep.subr.mxu0 0.0
      %6056 = vmatpush2.msra.mxu0 0.0
      %6057 = vmatprep.subr.mxu0 0.0
      %6058 = vmatpush2.msra.mxu0 0.0
      %6059 = vmatprep.subr.mxu0 0.0
      %6060 = vmatpush2.msra.mxu0 0.0
      %6061 = vmatprep.subr.mxu0 0.0
      %6062 = vmatpush2.msra.mxu0 0.0
      %6063 = vmatprep.subr.mxu0 0.0
      %6064 = vmatpush2.msra.mxu0 0.0
      %6065 = vmatprep.subr.mxu0 0.0
      %6066 = vmatpush2.msra.mxu0 0.0
      %6067 = vmatprep.subr.mxu0 0.0
      %6068 = vmatpush2.msra.mxu0 0.0
      %6069 = vmatprep.subr.mxu0 0.0
      %6070 = vmatpush2.msra.mxu0 0.0
      %6071 = vmatprep.subr.mxu0 0.0
      %6072 = vmatpush2.msra.mxu0 0.0
      %6073 = vmatprep.subr.mxu0 0.0
      %6074 = vmatpush2.msra.mxu0 0.0
      %6075 = vmatprep.subr.mxu0 0.0
      %6076 = vmatpush2.msra.mxu0 0.0
      %6077 = vmatprep.subr.mxu0 0.0
      %6078 = vmatpush2.msra.mxu0 0.0
      %6079 = vmatprep.subr.mxu0 0.0
      %6080 = vmatpush2.msra.mxu0 0.0
      %6081 = vmatprep.mubr.f32.mxu0 0.0
      %6082 = vmatmul.mubr.f32.gmra.mxu0 %v3369
      %v6083 = vpop.f32.mrf.mxu0
      %v6084 = vadd.f32 0.0, %v6083
      %v6085 = vpop.f32.mrf.mxu0
      %6086 = vmatprep.mubr.f32.mxu0 0.0
      %6087 = vmatmul.mubr.f32.gmra.mxu0 %v3371
      %v6088 = vpop.f32.mrf.mxu0
      %v6089 = vadd.f32 0.0, %v6088
      %v6090 = vpop.f32.mrf.mxu0
      %6091 = vmatprep.mubr.f32.mxu0 0.0
      %6092 = vmatmul.mubr.f32.gmra.mxu0 %v3373
      %v6093 = vpop.f32.mrf.mxu0
      %v6094 = vadd.f32 0.0, %v6093
      %v6095 = vpop.f32.mrf.mxu0
      %6096 = vmatprep.mubr.f32.mxu0 0.0
      %6097 = vmatmul.mubr.f32.gmra.mxu0 %v3375
      %v6098 = vpop.f32.mrf.mxu0
      %v6099 = vadd.f32 0.0, %v6098
      %v6100 = vpop.f32.mrf.mxu0
      %6101 = vmatprep.mubr.f32.mxu0 0.0
      %6102 = vmatmul.mubr.f32.gmra.mxu0 %v3377
      %v6103 = vpop.f32.mrf.mxu0
      %v6104 = vadd.f32 0.0, %v6103
      %v6105 = vpop.f32.mrf.mxu0
      %6106 = vmatprep.mubr.f32.mxu0 0.0
      %6107 = vmatmul.mubr.f32.gmra.mxu0 %v3379
      %v6108 = vpop.f32.mrf.mxu0
      %v6109 = vadd.f32 0.0, %v6108
      %v6110 = vpop.f32.mrf.mxu0
      %6111 = vmatprep.mubr.f32.mxu0 0.0
      %6112 = vmatmul.mubr.f32.gmra.mxu0 %v3381
      %v6113 = vpop.f32.mrf.mxu0
      %v6114 = vadd.f32 0.0, %v6113
      %v6115 = vpop.f32.mrf.mxu0
      %6116 = vmatprep.mubr.f32.mxu0 0.0
      %6117 = vmatmul.mubr.f32.gmra.mxu0 %v3383
      %v6118 = vpop.f32.mrf.mxu0
      %v6119 = vadd.f32 0.0, %v6118
      %v6120 = vpop.f32.mrf.mxu0
      %6121 = vmatprep.mubr.f32.mxu0 0.0
      %6122 = vmatmul.mubr.f32.gmra.mxu0 %v3385
      %v6123 = vpop.f32.mrf.mxu0
      %v6124 = vadd.f32 0.0, %v6123
      %v6125 = vpop.f32.mrf.mxu0
      %6126 = vmatprep.mubr.f32.mxu0 0.0
      %6127 = vmatmul.mubr.f32.gmra.mxu0 %v3387
      %v6128 = vpop.f32.mrf.mxu0
      %v6129 = vadd.f32 0.0, %v6128
      %v6130 = vpop.f32.mrf.mxu0
      %6131 = vmatprep.mubr.f32.mxu0 0.0
      %6132 = vmatmul.mubr.f32.gmra.mxu0 %v4260
      %v6133 = vpop.f32.mrf.mxu0
      %v6134 = vadd.f32 0.0, %v6133
      %v6135 = vpop.f32.mrf.mxu0
      %6136 = vmatprep.mubr.f32.mxu0 0.0
      %6137 = vmatmul.mubr.f32.gmra.mxu0 %v4262
      %v6138 = vpop.f32.mrf.mxu0
      %v6139 = vadd.f32 0.0, %v6138
      %v6140 = vpop.f32.mrf.mxu0
      %6141 = vmatprep.mubr.f32.mxu0 0.0
      %6142 = vmatmul.mubr.f32.gmra.mxu0 %v5135
      %v6143 = vpop.f32.mrf.mxu0
      %v6144 = vadd.f32 0.0, %v6143
      %v6145 = vpop.f32.mrf.mxu0
      %6146 = vmatprep.mubr.f32.mxu0 0.0
      %6147 = vmatmul.mubr.f32.gmra.mxu0 %v5137
      %v6148 = vpop.f32.mrf.mxu0
      %v6149 = vadd.f32 0.0, %v6148
      %v6150 = vpop.f32.mrf.mxu0
      %6151 = vmatprep.mubr.f32.mxu0 0.0
      %6152 = vmatmul.mubr.f32.gmra.mxu0 %v6010
      %v6153 = vpop.f32.mrf.mxu0
      %v6154 = vadd.f32 0.0, %v6153
      %v6155 = vpop.f32.mrf.mxu0
      %6156 = vmatprep.mubr.f32.mxu0 0.0
      %6157 = vmatmul.mubr.f32.gmra.mxu0 %v6012
      %v6158 = vpop.f32.mrf.mxu0
      %v6159 = vadd.f32 0.0, %v6158
      %v6160 = vpop.f32.mrf.mxu0
      %6161 = vdwg.mxu0
      %v6162 = vadd.f32 %v5983, %v6084
      %v6163 = vadd.f32 %v5984, %v6089
      %v6164 = vadd.f32 %v5985, %v6094
      %v6165 = vadd.f32 %v5986, %v6099
      %v6166 = vadd.f32 %v5987, %v6104
      %v6167 = vadd.f32 %v5988, %v6109
      %v6168 = vadd.f32 %v5989, %v6114
      %v6169 = vadd.f32 %v5990, %v6119
      %v6170 = vadd.f32 %v5991, %v6124
      %v6171 = vadd.f32 %v5992, %v6129
      %v6172 = vadd.f32 %v5993, %v6134
      %v6173 = vadd.f32 %v5994, %v6139
      %v6174 = vadd.f32 %v5995, %v6144
      %v6175 = vadd.f32 %v5996, %v6149
      %v6176 = vadd.f32 %v5997, %v6154
      %v6177 = vadd.f32 %v5998, %v6159
      %s6178 = scalar_lea.vmem %s4, 40
      %v6179 = vld [vmem:[%s6178] sm:$0x3]
      %6182 = vrot.lane.b32.xlu0 %v362, 124
      %v6183 = vpop.permute.xlu0 %6182
      %6184 = vrot.lane.b32.xlu0 %v363, 124
      %v6185 = vpop.permute.xlu0 %6184
      %v6186 = vsel %vm2419, %v6183, 0
      %v6188 = vsel %vm2419, %v6185, 0
      %v6191 = vsel %vm2452, %v6179, 0
      %6193 = vmatprep.subr.mxu0 0.0
      %6194 = vmatpush1.msra.mxu0 0.0
      %6195 = vmatprep.subr.mxu0 0.0
      %6196 = vmatpush1.msra.mxu0 0.0
      %6197 = vmatprep.subr.mxu0 0.0
      %6198 = vmatpush1.msra.mxu0 0.0
      %6199 = vmatprep.subr.mxu0 0.0
      %6200 = vmatpush1.msra.mxu0 0.0
      %6201 = vmatprep.subr.mxu0 0.0
      %6202 = vmatpush1.msra.mxu0 0.0
      %6203 = vmatprep.subr.mxu0 0.0
      %6204 = vmatpush1.msra.mxu0 0.0
      %6205 = vmatprep.subr.mxu0 0.0
      %6206 = vmatpush1.msra.mxu0 0.0
      %6207 = vmatprep.subr.mxu0 0.0
      %6208 = vmatpush1.msra.mxu0 0.0
      %6209 = vmatprep.subr.mxu0 0.0
      %6210 = vmatpush1.msra.mxu0 0.0
      %6211 = vmatprep.subr.mxu0 0.0
      %6212 = vmatpush1.msra.mxu0 0.0
      %6213 = vmatprep.subr.mxu0 0.0
      %6214 = vmatpush1.msra.mxu0 0.0
      %6215 = vmatprep.subr.mxu0 0.0
      %6216 = vmatpush1.msra.mxu0 0.0
      %6217 = vmatprep.subr.mxu0 0.0
      %6218 = vmatpush1.msra.mxu0 0.0
      %6219 = vmatprep.subr.mxu0 0.0
      %6220 = vmatpush1.msra.mxu0 0.0
      %6221 = vmatprep.subr.mxu0 0.0
      %6222 = vmatpush1.msra.mxu0 0.0
      %6223 = vmatprep.subr.mxu0 0.0
      %6224 = vmatpush1.msra.mxu0 %v6191
      %6225 = vmatprep.subr.mxu0 0.0
      %6226 = vmatpush2.msra.mxu0 0.0
      %6227 = vmatprep.subr.mxu0 0.0
      %6228 = vmatpush2.msra.mxu0 0.0
      %6229 = vmatprep.subr.mxu0 0.0
      %6230 = vmatpush2.msra.mxu0 0.0
      %6231 = vmatprep.subr.mxu0 0.0
      %6232 = vmatpush2.msra.mxu0 0.0
      %6233 = vmatprep.subr.mxu0 0.0
      %6234 = vmatpush2.msra.mxu0 0.0
      %6235 = vmatprep.subr.mxu0 0.0
      %6236 = vmatpush2.msra.mxu0 0.0
      %6237 = vmatprep.subr.mxu0 0.0
      %6238 = vmatpush2.msra.mxu0 0.0
      %6239 = vmatprep.subr.mxu0 0.0
      %6240 = vmatpush2.msra.mxu0 0.0
      %6241 = vmatprep.subr.mxu0 0.0
      %6242 = vmatpush2.msra.mxu0 0.0
      %6243 = vmatprep.subr.mxu0 0.0
      %6244 = vmatpush2.msra.mxu0 0.0
      %6245 = vmatprep.subr.mxu0 0.0
      %6246 = vmatpush2.msra.mxu0 0.0
      %6247 = vmatprep.subr.mxu0 0.0
      %6248 = vmatpush2.msra.mxu0 0.0
      %6249 = vmatprep.subr.mxu0 0.0
      %6250 = vmatpush2.msra.mxu0 0.0
      %6251 = vmatprep.subr.mxu0 0.0
      %6252 = vmatpush2.msra.mxu0 0.0
      %6253 = vmatprep.subr.mxu0 0.0
      %6254 = vmatpush2.msra.mxu0 0.0
      %6255 = vmatprep.subr.mxu0 0.0
      %6256 = vmatpush2.msra.mxu0 0.0
      %6257 = vmatprep.mubr.f32.mxu0 0.0
      %6258 = vmatmul.mubr.f32.gmra.mxu0 %v2649
      %v6259 = vpop.f32.mrf.mxu0
      %v6260 = vadd.f32 0.0, %v6259
      %v6261 = vpop.f32.mrf.mxu0
      %6262 = vmatprep.mubr.f32.mxu0 0.0
      %6263 = vmatmul.mubr.f32.gmra.mxu0 %v2651
      %v6264 = vpop.f32.mrf.mxu0
      %v6265 = vadd.f32 0.0, %v6264
      %v6266 = vpop.f32.mrf.mxu0
      %6267 = vmatprep.mubr.f32.mxu0 0.0
      %6268 = vmatmul.mubr.f32.gmra.mxu0 %v2653
      %v6269 = vpop.f32.mrf.mxu0
      %v6270 = vadd.f32 0.0, %v6269
      %v6271 = vpop.f32.mrf.mxu0
      %6272 = vmatprep.mubr.f32.mxu0 0.0
      %6273 = vmatmul.mubr.f32.gmra.mxu0 %v2655
      %v6274 = vpop.f32.mrf.mxu0
      %v6275 = vadd.f32 0.0, %v6274
      %v6276 = vpop.f32.mrf.mxu0
      %6277 = vmatprep.mubr.f32.mxu0 0.0
      %6278 = vmatmul.mubr.f32.gmra.mxu0 %v2657
      %v6279 = vpop.f32.mrf.mxu0
      %v6280 = vadd.f32 0.0, %v6279
      %v6281 = vpop.f32.mrf.mxu0
      %6282 = vmatprep.mubr.f32.mxu0 0.0
      %6283 = vmatmul.mubr.f32.gmra.mxu0 %v2659
      %v6284 = vpop.f32.mrf.mxu0
      %v6285 = vadd.f32 0.0, %v6284
      %v6286 = vpop.f32.mrf.mxu0
      %6287 = vmatprep.mubr.f32.mxu0 0.0
      %6288 = vmatmul.mubr.f32.gmra.mxu0 %v2661
      %v6289 = vpop.f32.mrf.mxu0
      %v6290 = vadd.f32 0.0, %v6289
      %v6291 = vpop.f32.mrf.mxu0
      %6292 = vmatprep.mubr.f32.mxu0 0.0
      %6293 = vmatmul.mubr.f32.gmra.mxu0 %v2663
      %v6294 = vpop.f32.mrf.mxu0
      %v6295 = vadd.f32 0.0, %v6294
      %v6296 = vpop.f32.mrf.mxu0
      %6297 = vmatprep.mubr.f32.mxu0 0.0
      %6298 = vmatmul.mubr.f32.gmra.mxu0 %v3559
      %v6299 = vpop.f32.mrf.mxu0
      %v6300 = vadd.f32 0.0, %v6299
      %v6301 = vpop.f32.mrf.mxu0
      %6302 = vmatprep.mubr.f32.mxu0 0.0
      %6303 = vmatmul.mubr.f32.gmra.mxu0 %v3561
      %v6304 = vpop.f32.mrf.mxu0
      %v6305 = vadd.f32 0.0, %v6304
      %v6306 = vpop.f32.mrf.mxu0
      %6307 = vmatprep.mubr.f32.mxu0 0.0
      %6308 = vmatmul.mubr.f32.gmra.mxu0 %v4434
      %v6309 = vpop.f32.mrf.mxu0
      %v6310 = vadd.f32 0.0, %v6309
      %v6311 = vpop.f32.mrf.mxu0
      %6312 = vmatprep.mubr.f32.mxu0 0.0
      %6313 = vmatmul.mubr.f32.gmra.mxu0 %v4436
      %v6314 = vpop.f32.mrf.mxu0
      %v6315 = vadd.f32 0.0, %v6314
      %v6316 = vpop.f32.mrf.mxu0
      %6317 = vmatprep.mubr.f32.mxu0 0.0
      %6318 = vmatmul.mubr.f32.gmra.mxu0 %v5309
      %v6319 = vpop.f32.mrf.mxu0
      %v6320 = vadd.f32 0.0, %v6319
      %v6321 = vpop.f32.mrf.mxu0
      %6322 = vmatprep.mubr.f32.mxu0 0.0
      %6323 = vmatmul.mubr.f32.gmra.mxu0 %v5311
      %v6324 = vpop.f32.mrf.mxu0
      %v6325 = vadd.f32 0.0, %v6324
      %v6326 = vpop.f32.mrf.mxu0
      %6327 = vmatprep.mubr.f32.mxu0 0.0
      %6328 = vmatmul.mubr.f32.gmra.mxu0 %v6186
      %v6329 = vpop.f32.mrf.mxu0
      %v6330 = vadd.f32 0.0, %v6329
      %v6331 = vpop.f32.mrf.mxu0
      %6332 = vmatprep.mubr.f32.mxu0 0.0
      %6333 = vmatmul.mubr.f32.gmra.mxu0 %v6188
      %v6334 = vpop.f32.mrf.mxu0
      %v6335 = vadd.f32 0.0, %v6334
      %v6336 = vpop.f32.mrf.mxu0
      %6337 = vdwg.mxu0
      %v6338 = vadd.f32 %v6162, %v6260
      %v6339 = vadd.f32 %v6163, %v6265
      %v6340 = vadd.f32 %v6164, %v6270
      %v6341 = vadd.f32 %v6165, %v6275
      %v6342 = vadd.f32 %v6166, %v6280
      %v6343 = vadd.f32 %v6167, %v6285
      %v6344 = vadd.f32 %v6168, %v6290
      %v6345 = vadd.f32 %v6169, %v6295
      %v6346 = vadd.f32 %v6170, %v6300
      %v6347 = vadd.f32 %v6171, %v6305
      %v6348 = vadd.f32 %v6172, %v6310
      %v6349 = vadd.f32 %v6173, %v6315
      %v6350 = vadd.f32 %v6174, %v6320
      %v6351 = vadd.f32 %v6175, %v6325
      %v6352 = vadd.f32 %v6176, %v6330
      %v6353 = vadd.f32 %v6177, %v6335
      %v6355 = vrot.slane %v362, 1
      %v6356 = vrot.slane %v363, 1
      %v6357 = vsel %vm389, %v6355, %v6356
      %v6358 = vrot.slane %v364, 1
      %v6359 = vsel %vm389, %v6356, %v6358
      %s6360 = scalar_lea.vmem %s4, 42
      %v6361 = vld [vmem:[%s6360] sm:$0x3]
      %6362 = vrot.lane.b32.xlu0 %v6357, 124
      %v6363 = vpop.permute.xlu0 %6362
      %6364 = vrot.lane.b32.xlu0 %v6359, 124
      %v6365 = vpop.permute.xlu0 %6364
      %v6366 = vsel %vm2419, %v6363, 0
      %v6368 = vsel %vm2419, %v6365, 0
      %v6371 = vsel %vm2452, %v6361, 0
      %6373 = vmatprep.subr.mxu0 0.0
      %6374 = vmatpush1.msra.mxu0 0.0
      %6375 = vmatprep.subr.mxu0 0.0
      %6376 = vmatpush1.msra.mxu0 0.0
      %6377 = vmatprep.subr.mxu0 0.0
      %6378 = vmatpush1.msra.mxu0 0.0
      %6379 = vmatprep.subr.mxu0 0.0
      %6380 = vmatpush1.msra.mxu0 0.0
      %6381 = vmatprep.subr.mxu0 0.0
      %6382 = vmatpush1.msra.mxu0 0.0
      %6383 = vmatprep.subr.mxu0 0.0
      %6384 = vmatpush1.msra.mxu0 0.0
      %6385 = vmatprep.subr.mxu0 0.0
      %6386 = vmatpush1.msra.mxu0 0.0
      %6387 = vmatprep.subr.mxu0 0.0
      %6388 = vmatpush1.msra.mxu0 0.0
      %6389 = vmatprep.subr.mxu0 0.0
      %6390 = vmatpush1.msra.mxu0 0.0
      %6391 = vmatprep.subr.mxu0 0.0
      %6392 = vmatpush1.msra.mxu0 0.0
      %6393 = vmatprep.subr.mxu0 0.0
      %6394 = vmatpush1.msra.mxu0 0.0
      %6395 = vmatprep.subr.mxu0 0.0
      %6396 = vmatpush1.msra.mxu0 0.0
      %6397 = vmatprep.subr.mxu0 0.0
      %6398 = vmatpush1.msra.mxu0 0.0
      %6399 = vmatprep.subr.mxu0 0.0
      %6400 = vmatpush1.msra.mxu0 0.0
      %6401 = vmatprep.subr.mxu0 0.0
      %6402 = vmatpush1.msra.mxu0 0.0
      %6403 = vmatprep.subr.mxu0 0.0
      %6404 = vmatpush1.msra.mxu0 %v6371
      %6405 = vmatprep.subr.mxu0 0.0
      %6406 = vmatpush2.msra.mxu0 0.0
      %6407 = vmatprep.subr.mxu0 0.0
      %6408 = vmatpush2.msra.mxu0 0.0
      %6409 = vmatprep.subr.mxu0 0.0
      %6410 = vmatpush2.msra.mxu0 0.0
      %6411 = vmatprep.subr.mxu0 0.0
      %6412 = vmatpush2.msra.mxu0 0.0
      %6413 = vmatprep.subr.mxu0 0.0
      %6414 = vmatpush2.msra.mxu0 0.0
      %6415 = vmatprep.subr.mxu0 0.0
      %6416 = vmatpush2.msra.mxu0 0.0
      %6417 = vmatprep.subr.mxu0 0.0
      %6418 = vmatpush2.msra.mxu0 0.0
      %6419 = vmatprep.subr.mxu0 0.0
      %6420 = vmatpush2.msra.mxu0 0.0
      %6421 = vmatprep.subr.mxu0 0.0
      %6422 = vmatpush2.msra.mxu0 0.0
      %6423 = vmatprep.subr.mxu0 0.0
      %6424 = vmatpush2.msra.mxu0 0.0
      %6425 = vmatprep.subr.mxu0 0.0
      %6426 = vmatpush2.msra.mxu0 0.0
      %6427 = vmatprep.subr.mxu0 0.0
      %6428 = vmatpush2.msra.mxu0 0.0
      %6429 = vmatprep.subr.mxu0 0.0
      %6430 = vmatpush2.msra.mxu0 0.0
      %6431 = vmatprep.subr.mxu0 0.0
      %6432 = vmatpush2.msra.mxu0 0.0
      %6433 = vmatprep.subr.mxu0 0.0
      %6434 = vmatpush2.msra.mxu0 0.0
      %6435 = vmatprep.subr.mxu0 0.0
      %6436 = vmatpush2.msra.mxu0 0.0
      %6437 = vmatprep.mubr.f32.mxu0 0.0
      %6438 = vmatmul.mubr.f32.gmra.mxu0 %v2436
      %v6439 = vpop.f32.mrf.mxu0
      %v6440 = vadd.f32 0.0, %v6439
      %v6441 = vpop.f32.mrf.mxu0
      %6442 = vmatprep.mubr.f32.mxu0 0.0
      %6443 = vmatmul.mubr.f32.gmra.mxu0 %v2438
      %v6444 = vpop.f32.mrf.mxu0
      %v6445 = vadd.f32 0.0, %v6444
      %v6446 = vpop.f32.mrf.mxu0
      %6447 = vmatprep.mubr.f32.mxu0 0.0
      %6448 = vmatmul.mubr.f32.gmra.mxu0 %v2440
      %v6449 = vpop.f32.mrf.mxu0
      %v6450 = vadd.f32 0.0, %v6449
      %v6451 = vpop.f32.mrf.mxu0
      %6452 = vmatprep.mubr.f32.mxu0 0.0
      %6453 = vmatmul.mubr.f32.gmra.mxu0 %v2442
      %v6454 = vpop.f32.mrf.mxu0
      %v6455 = vadd.f32 0.0, %v6454
      %v6456 = vpop.f32.mrf.mxu0
      %6457 = vmatprep.mubr.f32.mxu0 0.0
      %6458 = vmatmul.mubr.f32.gmra.mxu0 %v2444
      %v6459 = vpop.f32.mrf.mxu0
      %v6460 = vadd.f32 0.0, %v6459
      %v6461 = vpop.f32.mrf.mxu0
      %6462 = vmatprep.mubr.f32.mxu0 0.0
      %6463 = vmatmul.mubr.f32.gmra.mxu0 %v2446
      %v6464 = vpop.f32.mrf.mxu0
      %v6465 = vadd.f32 0.0, %v6464
      %v6466 = vpop.f32.mrf.mxu0
      %6467 = vmatprep.mubr.f32.mxu0 0.0
      %6468 = vmatmul.mubr.f32.gmra.mxu0 %v2448
      %v6469 = vpop.f32.mrf.mxu0
      %v6470 = vadd.f32 0.0, %v6469
      %v6471 = vpop.f32.mrf.mxu0
      %6472 = vmatprep.mubr.f32.mxu0 0.0
      %6473 = vmatmul.mubr.f32.gmra.mxu0 %v2450
      %v6474 = vpop.f32.mrf.mxu0
      %v6475 = vadd.f32 0.0, %v6474
      %v6476 = vpop.f32.mrf.mxu0
      %6477 = vmatprep.mubr.f32.mxu0 0.0
      %6478 = vmatmul.mubr.f32.gmra.mxu0 %v3733
      %v6479 = vpop.f32.mrf.mxu0
      %v6480 = vadd.f32 0.0, %v6479
      %v6481 = vpop.f32.mrf.mxu0
      %6482 = vmatprep.mubr.f32.mxu0 0.0
      %6483 = vmatmul.mubr.f32.gmra.mxu0 %v3735
      %v6484 = vpop.f32.mrf.mxu0
      %v6485 = vadd.f32 0.0, %v6484
      %v6486 = vpop.f32.mrf.mxu0
      %6487 = vmatprep.mubr.f32.mxu0 0.0
      %6488 = vmatmul.mubr.f32.gmra.mxu0 %v4608
      %v6489 = vpop.f32.mrf.mxu0
      %v6490 = vadd.f32 0.0, %v6489
      %v6491 = vpop.f32.mrf.mxu0
      %6492 = vmatprep.mubr.f32.mxu0 0.0
      %6493 = vmatmul.mubr.f32.gmra.mxu0 %v4610
      %v6494 = vpop.f32.mrf.mxu0
      %v6495 = vadd.f32 0.0, %v6494
      %v6496 = vpop.f32.mrf.mxu0
      %6497 = vmatprep.mubr.f32.mxu0 0.0
      %6498 = vmatmul.mubr.f32.gmra.mxu0 %v5483
      %v6499 = vpop.f32.mrf.mxu0
      %v6500 = vadd.f32 0.0, %v6499
      %v6501 = vpop.f32.mrf.mxu0
      %6502 = vmatprep.mubr.f32.mxu0 0.0
      %6503 = vmatmul.mubr.f32.gmra.mxu0 %v5485
      %v6504 = vpop.f32.mrf.mxu0
      %v6505 = vadd.f32 0.0, %v6504
      %v6506 = vpop.f32.mrf.mxu0
      %6507 = vmatprep.mubr.f32.mxu0 0.0
      %6508 = vmatmul.mubr.f32.gmra.mxu0 %v6366
      %v6509 = vpop.f32.mrf.mxu0
      %v6510 = vadd.f32 0.0, %v6509
      %v6511 = vpop.f32.mrf.mxu0
      %6512 = vmatprep.mubr.f32.mxu0 0.0
      %6513 = vmatmul.mubr.f32.gmra.mxu0 %v6368
      %v6514 = vpop.f32.mrf.mxu0
      %v6515 = vadd.f32 0.0, %v6514
      %v6516 = vpop.f32.mrf.mxu0
      %6517 = vdwg.mxu0
      %v6518 = vadd.f32 %v6338, %v6440
      %v6519 = vadd.f32 %v6339, %v6445
      %v6520 = vadd.f32 %v6340, %v6450
      %v6521 = vadd.f32 %v6341, %v6455
      %v6522 = vadd.f32 %v6342, %v6460
      %v6523 = vadd.f32 %v6343, %v6465
      %v6524 = vadd.f32 %v6344, %v6470
      %v6525 = vadd.f32 %v6345, %v6475
      %v6526 = vadd.f32 %v6346, %v6480
      %v6527 = vadd.f32 %v6347, %v6485
      %v6528 = vadd.f32 %v6348, %v6490
      %v6529 = vadd.f32 %v6349, %v6495
      %v6530 = vadd.f32 %v6350, %v6500
      %v6531 = vadd.f32 %v6351, %v6505
      %v6532 = vadd.f32 %v6352, %v6510
      %v6533 = vadd.f32 %v6353, %v6515
      %v6534 = vrot.slane %v362, 2
      %v6535 = vrot.slane %v363, 2
      %v6536 = vsel %vm678, %v6534, %v6535
      %v6537 = vrot.slane %v364, 2
      %v6538 = vsel %vm678, %v6535, %v6537
      %s6539 = scalar_lea.vmem %s4, 44
      %v6540 = vld [vmem:[%s6539] sm:$0x3]
      %6541 = vrot.lane.b32.xlu0 %v6536, 124
      %v6542 = vpop.permute.xlu0 %6541
      %6543 = vrot.lane.b32.xlu0 %v6538, 124
      %v6544 = vpop.permute.xlu0 %6543
      %v6545 = vsel %vm2419, %v6542, 0
      %v6547 = vsel %vm2419, %v6544, 0
      %v6550 = vsel %vm2452, %v6540, 0
      %6552 = vmatprep.subr.mxu0 0.0
      %6553 = vmatpush1.msra.mxu0 0.0
      %6554 = vmatprep.subr.mxu0 0.0
      %6555 = vmatpush1.msra.mxu0 0.0
      %6556 = vmatprep.subr.mxu0 0.0
      %6557 = vmatpush1.msra.mxu0 0.0
      %6558 = vmatprep.subr.mxu0 0.0
      %6559 = vmatpush1.msra.mxu0 0.0
      %6560 = vmatprep.subr.mxu0 0.0
      %6561 = vmatpush1.msra.mxu0 0.0
      %6562 = vmatprep.subr.mxu0 0.0
      %6563 = vmatpush1.msra.mxu0 0.0
      %6564 = vmatprep.subr.mxu0 0.0
      %6565 = vmatpush1.msra.mxu0 0.0
      %6566 = vmatprep.subr.mxu0 0.0
      %6567 = vmatpush1.msra.mxu0 0.0
      %6568 = vmatprep.subr.mxu0 0.0
      %6569 = vmatpush1.msra.mxu0 0.0
      %6570 = vmatprep.subr.mxu0 0.0
      %6571 = vmatpush1.msra.mxu0 0.0
      %6572 = vmatprep.subr.mxu0 0.0
      %6573 = vmatpush1.msra.mxu0 0.0
      %6574 = vmatprep.subr.mxu0 0.0
      %6575 = vmatpush1.msra.mxu0 0.0
      %6576 = vmatprep.subr.mxu0 0.0
      %6577 = vmatpush1.msra.mxu0 0.0
      %6578 = vmatprep.subr.mxu0 0.0
      %6579 = vmatpush1.msra.mxu0 0.0
      %6580 = vmatprep.subr.mxu0 0.0
      %6581 = vmatpush1.msra.mxu0 0.0
      %6582 = vmatprep.subr.mxu0 0.0
      %6583 = vmatpush1.msra.mxu0 %v6550
      %6584 = vmatprep.subr.mxu0 0.0
      %6585 = vmatpush2.msra.mxu0 0.0
      %6586 = vmatprep.subr.mxu0 0.0
      %6587 = vmatpush2.msra.mxu0 0.0
      %6588 = vmatprep.subr.mxu0 0.0
      %6589 = vmatpush2.msra.mxu0 0.0
      %6590 = vmatprep.subr.mxu0 0.0
      %6591 = vmatpush2.msra.mxu0 0.0
      %6592 = vmatprep.subr.mxu0 0.0
      %6593 = vmatpush2.msra.mxu0 0.0
      %6594 = vmatprep.subr.mxu0 0.0
      %6595 = vmatpush2.msra.mxu0 0.0
      %6596 = vmatprep.subr.mxu0 0.0
      %6597 = vmatpush2.msra.mxu0 0.0
      %6598 = vmatprep.subr.mxu0 0.0
      %6599 = vmatpush2.msra.mxu0 0.0
      %6600 = vmatprep.subr.mxu0 0.0
      %6601 = vmatpush2.msra.mxu0 0.0
      %6602 = vmatprep.subr.mxu0 0.0
      %6603 = vmatpush2.msra.mxu0 0.0
      %6604 = vmatprep.subr.mxu0 0.0
      %6605 = vmatpush2.msra.mxu0 0.0
      %6606 = vmatprep.subr.mxu0 0.0
      %6607 = vmatpush2.msra.mxu0 0.0
      %6608 = vmatprep.subr.mxu0 0.0
      %6609 = vmatpush2.msra.mxu0 0.0
      %6610 = vmatprep.subr.mxu0 0.0
      %6611 = vmatpush2.msra.mxu0 0.0
      %6612 = vmatprep.subr.mxu0 0.0
      %6613 = vmatpush2.msra.mxu0 0.0
      %6614 = vmatprep.subr.mxu0 0.0
      %6615 = vmatpush2.msra.mxu0 0.0
      %6616 = vmatprep.mubr.f32.mxu0 0.0
      %6617 = vmatmul.mubr.f32.gmra.mxu0 %v2868
      %v6618 = vpop.f32.mrf.mxu0
      %v6619 = vadd.f32 0.0, %v6618
      %v6620 = vpop.f32.mrf.mxu0
      %6621 = vmatprep.mubr.f32.mxu0 0.0
      %6622 = vmatmul.mubr.f32.gmra.mxu0 %v2870
      %v6623 = vpop.f32.mrf.mxu0
      %v6624 = vadd.f32 0.0, %v6623
      %v6625 = vpop.f32.mrf.mxu0
      %6626 = vmatprep.mubr.f32.mxu0 0.0
      %6627 = vmatmul.mubr.f32.gmra.mxu0 %v2872
      %v6628 = vpop.f32.mrf.mxu0
      %v6629 = vadd.f32 0.0, %v6628
      %v6630 = vpop.f32.mrf.mxu0
      %6631 = vmatprep.mubr.f32.mxu0 0.0
      %6632 = vmatmul.mubr.f32.gmra.mxu0 %v2874
      %v6633 = vpop.f32.mrf.mxu0
      %v6634 = vadd.f32 0.0, %v6633
      %v6635 = vpop.f32.mrf.mxu0
      %6636 = vmatprep.mubr.f32.mxu0 0.0
      %6637 = vmatmul.mubr.f32.gmra.mxu0 %v2876
      %v6638 = vpop.f32.mrf.mxu0
      %v6639 = vadd.f32 0.0, %v6638
      %v6640 = vpop.f32.mrf.mxu0
      %6641 = vmatprep.mubr.f32.mxu0 0.0
      %6642 = vmatmul.mubr.f32.gmra.mxu0 %v2878
      %v6643 = vpop.f32.mrf.mxu0
      %v6644 = vadd.f32 0.0, %v6643
      %v6645 = vpop.f32.mrf.mxu0
      %6646 = vmatprep.mubr.f32.mxu0 0.0
      %6647 = vmatmul.mubr.f32.gmra.mxu0 %v2880
      %v6648 = vpop.f32.mrf.mxu0
      %v6649 = vadd.f32 0.0, %v6648
      %v6650 = vpop.f32.mrf.mxu0
      %6651 = vmatprep.mubr.f32.mxu0 0.0
      %6652 = vmatmul.mubr.f32.gmra.mxu0 %v2882
      %v6653 = vpop.f32.mrf.mxu0
      %v6654 = vadd.f32 0.0, %v6653
      %v6655 = vpop.f32.mrf.mxu0
      %6656 = vmatprep.mubr.f32.mxu0 0.0
      %6657 = vmatmul.mubr.f32.gmra.mxu0 %v3907
      %v6658 = vpop.f32.mrf.mxu0
      %v6659 = vadd.f32 0.0, %v6658
      %v6660 = vpop.f32.mrf.mxu0
      %6661 = vmatprep.mubr.f32.mxu0 0.0
      %6662 = vmatmul.mubr.f32.gmra.mxu0 %v3909
      %v6663 = vpop.f32.mrf.mxu0
      %v6664 = vadd.f32 0.0, %v6663
      %v6665 = vpop.f32.mrf.mxu0
      %6666 = vmatprep.mubr.f32.mxu0 0.0
      %6667 = vmatmul.mubr.f32.gmra.mxu0 %v4782
      %v6668 = vpop.f32.mrf.mxu0
      %v6669 = vadd.f32 0.0, %v6668
      %v6670 = vpop.f32.mrf.mxu0
      %6671 = vmatprep.mubr.f32.mxu0 0.0
      %6672 = vmatmul.mubr.f32.gmra.mxu0 %v4784
      %v6673 = vpop.f32.mrf.mxu0
      %v6674 = vadd.f32 0.0, %v6673
      %v6675 = vpop.f32.mrf.mxu0
      %6676 = vmatprep.mubr.f32.mxu0 0.0
      %6677 = vmatmul.mubr.f32.gmra.mxu0 %v5657
      %v6678 = vpop.f32.mrf.mxu0
      %v6679 = vadd.f32 0.0, %v6678
      %v6680 = vpop.f32.mrf.mxu0
      %6681 = vmatprep.mubr.f32.mxu0 0.0
      %6682 = vmatmul.mubr.f32.gmra.mxu0 %v5659
      %v6683 = vpop.f32.mrf.mxu0
      %v6684 = vadd.f32 0.0, %v6683
      %v6685 = vpop.f32.mrf.mxu0
      %6686 = vmatprep.mubr.f32.mxu0 0.0
      %6687 = vmatmul.mubr.f32.gmra.mxu0 %v6545
      %v6688 = vpop.f32.mrf.mxu0
      %v6689 = vadd.f32 0.0, %v6688
      %v6690 = vpop.f32.mrf.mxu0
      %6691 = vmatprep.mubr.f32.mxu0 0.0
      %6692 = vmatmul.mubr.f32.gmra.mxu0 %v6547
      %v6693 = vpop.f32.mrf.mxu0
      %v6694 = vadd.f32 0.0, %v6693
      %v6695 = vpop.f32.mrf.mxu0
      %6696 = vdwg.mxu0
      %v6697 = vadd.f32 %v6518, %v6619
      %v6698 = vadd.f32 %v6519, %v6624
      %v6699 = vadd.f32 %v6520, %v6629
      %v6700 = vadd.f32 %v6521, %v6634
      %v6701 = vadd.f32 %v6522, %v6639
      %v6702 = vadd.f32 %v6523, %v6644
      %v6703 = vadd.f32 %v6524, %v6649
      %v6704 = vadd.f32 %v6525, %v6654
      %v6705 = vadd.f32 %v6526, %v6659
      %v6706 = vadd.f32 %v6527, %v6664
      %v6707 = vadd.f32 %v6528, %v6669
      %v6708 = vadd.f32 %v6529, %v6674
      %v6709 = vadd.f32 %v6530, %v6679
      %v6710 = vadd.f32 %v6531, %v6684
      %v6711 = vadd.f32 %v6532, %v6689
      %v6712 = vadd.f32 %v6533, %v6694
      %v6713 = vrot.slane %v362, 3
      %v6714 = vrot.slane %v363, 3
      %v6715 = vsel %vm1081, %v6713, %v6714
      %v6716 = vrot.slane %v364, 3
      %v6717 = vsel %vm1081, %v6714, %v6716
      %s6718 = scalar_lea.vmem %s4, 46
      %v6719 = vld [vmem:[%s6718] sm:$0x3]
      %6720 = vrot.lane.b32.xlu0 %v6715, 124
      %v6721 = vpop.permute.xlu0 %6720
      %6722 = vrot.lane.b32.xlu0 %v6717, 124
      %v6723 = vpop.permute.xlu0 %6722
      %v6724 = vsel %vm2419, %v6721, 0
      %v6726 = vsel %vm2419, %v6723, 0
      %v6729 = vsel %vm2452, %v6719, 0
      %6731 = vmatprep.subr.mxu0 0.0
      %6732 = vmatpush1.msra.mxu0 0.0
      %6733 = vmatprep.subr.mxu0 0.0
      %6734 = vmatpush1.msra.mxu0 0.0
      %6735 = vmatprep.subr.mxu0 0.0
      %6736 = vmatpush1.msra.mxu0 0.0
      %6737 = vmatprep.subr.mxu0 0.0
      %6738 = vmatpush1.msra.mxu0 0.0
      %6739 = vmatprep.subr.mxu0 0.0
      %6740 = vmatpush1.msra.mxu0 0.0
      %6741 = vmatprep.subr.mxu0 0.0
      %6742 = vmatpush1.msra.mxu0 0.0
      %6743 = vmatprep.subr.mxu0 0.0
      %6744 = vmatpush1.msra.mxu0 0.0
      %6745 = vmatprep.subr.mxu0 0.0
      %6746 = vmatpush1.msra.mxu0 0.0
      %6747 = vmatprep.subr.mxu0 0.0
      %6748 = vmatpush1.msra.mxu0 0.0
      %6749 = vmatprep.subr.mxu0 0.0
      %6750 = vmatpush1.msra.mxu0 0.0
      %6751 = vmatprep.subr.mxu0 0.0
      %6752 = vmatpush1.msra.mxu0 0.0
      %6753 = vmatprep.subr.mxu0 0.0
      %6754 = vmatpush1.msra.mxu0 0.0
      %6755 = vmatprep.subr.mxu0 0.0
      %6756 = vmatpush1.msra.mxu0 0.0
      %6757 = vmatprep.subr.mxu0 0.0
      %6758 = vmatpush1.msra.mxu0 0.0
      %6759 = vmatprep.subr.mxu0 0.0
      %6760 = vmatpush1.msra.mxu0 0.0
      %6761 = vmatprep.subr.mxu0 0.0
      %6762 = vmatpush1.msra.mxu0 %v6729
      %6763 = vmatprep.subr.mxu0 0.0
      %6764 = vmatpush2.msra.mxu0 0.0
      %6765 = vmatprep.subr.mxu0 0.0
      %6766 = vmatpush2.msra.mxu0 0.0
      %6767 = vmatprep.subr.mxu0 0.0
      %6768 = vmatpush2.msra.mxu0 0.0
      %6769 = vmatprep.subr.mxu0 0.0
      %6770 = vmatpush2.msra.mxu0 0.0
      %6771 = vmatprep.subr.mxu0 0.0
      %6772 = vmatpush2.msra.mxu0 0.0
      %6773 = vmatprep.subr.mxu0 0.0
      %6774 = vmatpush2.msra.mxu0 0.0
      %6775 = vmatprep.subr.mxu0 0.0
      %6776 = vmatpush2.msra.mxu0 0.0
      %6777 = vmatprep.subr.mxu0 0.0
      %6778 = vmatpush2.msra.mxu0 0.0
      %6779 = vmatprep.subr.mxu0 0.0
      %6780 = vmatpush2.msra.mxu0 0.0
      %6781 = vmatprep.subr.mxu0 0.0
      %6782 = vmatpush2.msra.mxu0 0.0
      %6783 = vmatprep.subr.mxu0 0.0
      %6784 = vmatpush2.msra.mxu0 0.0
      %6785 = vmatprep.subr.mxu0 0.0
      %6786 = vmatpush2.msra.mxu0 0.0
      %6787 = vmatprep.subr.mxu0 0.0
      %6788 = vmatpush2.msra.mxu0 0.0
      %6789 = vmatprep.subr.mxu0 0.0
      %6790 = vmatpush2.msra.mxu0 0.0
      %6791 = vmatprep.subr.mxu0 0.0
      %6792 = vmatpush2.msra.mxu0 0.0
      %6793 = vmatprep.subr.mxu0 0.0
      %6794 = vmatpush2.msra.mxu0 0.0
      %6795 = vmatprep.mubr.f32.mxu0 0.0
      %6796 = vmatmul.mubr.f32.gmra.mxu0 %v3103
      %v6797 = vpop.f32.mrf.mxu0
      %v6798 = vadd.f32 0.0, %v6797
      %v6799 = vpop.f32.mrf.mxu0
      %6800 = vmatprep.mubr.f32.mxu0 0.0
      %6801 = vmatmul.mubr.f32.gmra.mxu0 %v3105
      %v6802 = vpop.f32.mrf.mxu0
      %v6803 = vadd.f32 0.0, %v6802
      %v6804 = vpop.f32.mrf.mxu0
      %6805 = vmatprep.mubr.f32.mxu0 0.0
      %6806 = vmatmul.mubr.f32.gmra.mxu0 %v3107
      %v6807 = vpop.f32.mrf.mxu0
      %v6808 = vadd.f32 0.0, %v6807
      %v6809 = vpop.f32.mrf.mxu0
      %6810 = vmatprep.mubr.f32.mxu0 0.0
      %6811 = vmatmul.mubr.f32.gmra.mxu0 %v3109
      %v6812 = vpop.f32.mrf.mxu0
      %v6813 = vadd.f32 0.0, %v6812
      %v6814 = vpop.f32.mrf.mxu0
      %6815 = vmatprep.mubr.f32.mxu0 0.0
      %6816 = vmatmul.mubr.f32.gmra.mxu0 %v3111
      %v6817 = vpop.f32.mrf.mxu0
      %v6818 = vadd.f32 0.0, %v6817
      %v6819 = vpop.f32.mrf.mxu0
      %6820 = vmatprep.mubr.f32.mxu0 0.0
      %6821 = vmatmul.mubr.f32.gmra.mxu0 %v3113
      %v6822 = vpop.f32.mrf.mxu0
      %v6823 = vadd.f32 0.0, %v6822
      %v6824 = vpop.f32.mrf.mxu0
      %6825 = vmatprep.mubr.f32.mxu0 0.0
      %6826 = vmatmul.mubr.f32.gmra.mxu0 %v3115
      %v6827 = vpop.f32.mrf.mxu0
      %v6828 = vadd.f32 0.0, %v6827
      %v6829 = vpop.f32.mrf.mxu0
      %6830 = vmatprep.mubr.f32.mxu0 0.0
      %6831 = vmatmul.mubr.f32.gmra.mxu0 %v3117
      %v6832 = vpop.f32.mrf.mxu0
      %v6833 = vadd.f32 0.0, %v6832
      %v6834 = vpop.f32.mrf.mxu0
      %6835 = vmatprep.mubr.f32.mxu0 0.0
      %6836 = vmatmul.mubr.f32.gmra.mxu0 %v4081
      %v6837 = vpop.f32.mrf.mxu0
      %v6838 = vadd.f32 0.0, %v6837
      %v6839 = vpop.f32.mrf.mxu0
      %6840 = vmatprep.mubr.f32.mxu0 0.0
      %6841 = vmatmul.mubr.f32.gmra.mxu0 %v4083
      %v6842 = vpop.f32.mrf.mxu0
      %v6843 = vadd.f32 0.0, %v6842
      %v6844 = vpop.f32.mrf.mxu0
      %6845 = vmatprep.mubr.f32.mxu0 0.0
      %6846 = vmatmul.mubr.f32.gmra.mxu0 %v4956
      %v6847 = vpop.f32.mrf.mxu0
      %v6848 = vadd.f32 0.0, %v6847
      %v6849 = vpop.f32.mrf.mxu0
      %6850 = vmatprep.mubr.f32.mxu0 0.0
      %6851 = vmatmul.mubr.f32.gmra.mxu0 %v4958
      %v6852 = vpop.f32.mrf.mxu0
      %v6853 = vadd.f32 0.0, %v6852
      %v6854 = vpop.f32.mrf.mxu0
      %6855 = vmatprep.mubr.f32.mxu0 0.0
      %6856 = vmatmul.mubr.f32.gmra.mxu0 %v5831
      %v6857 = vpop.f32.mrf.mxu0
      %v6858 = vadd.f32 0.0, %v6857
      %v6859 = vpop.f32.mrf.mxu0
      %6860 = vmatprep.mubr.f32.mxu0 0.0
      %6861 = vmatmul.mubr.f32.gmra.mxu0 %v5833
      %v6862 = vpop.f32.mrf.mxu0
      %v6863 = vadd.f32 0.0, %v6862
      %v6864 = vpop.f32.mrf.mxu0
      %6865 = vmatprep.mubr.f32.mxu0 0.0
      %6866 = vmatmul.mubr.f32.gmra.mxu0 %v6724
      %v6867 = vpop.f32.mrf.mxu0
      %v6868 = vadd.f32 0.0, %v6867
      %v6869 = vpop.f32.mrf.mxu0
      %6870 = vmatprep.mubr.f32.mxu0 0.0
      %6871 = vmatmul.mubr.f32.gmra.mxu0 %v6726
      %v6872 = vpop.f32.mrf.mxu0
      %v6873 = vadd.f32 0.0, %v6872
      %v6874 = vpop.f32.mrf.mxu0
      %6875 = vdwg.mxu0
      %v6876 = vadd.f32 %v6697, %v6798
      %v6877 = vadd.f32 %v6698, %v6803
      %v6878 = vadd.f32 %v6699, %v6808
      %v6879 = vadd.f32 %v6700, %v6813
      %v6880 = vadd.f32 %v6701, %v6818
      %v6881 = vadd.f32 %v6702, %v6823
      %v6882 = vadd.f32 %v6703, %v6828
      %v6883 = vadd.f32 %v6704, %v6833
      %v6884 = vadd.f32 %v6705, %v6838
      %v6885 = vadd.f32 %v6706, %v6843
      %v6886 = vadd.f32 %v6707, %v6848
      %v6887 = vadd.f32 %v6708, %v6853
      %v6888 = vadd.f32 %v6709, %v6858
      %v6889 = vadd.f32 %v6710, %v6863
      %v6890 = vadd.f32 %v6711, %v6868
      %v6891 = vadd.f32 %v6712, %v6873
      %v6892 = vrot.slane %v362, 4
      %v6893 = vrot.slane %v363, 4
      %v6894 = vsel %vm464, %v6892, %v6893
      %v6895 = vrot.slane %v364, 4
      %v6896 = vsel %vm464, %v6893, %v6895
      %s6897 = scalar_lea.vmem %s4, 48
      %v6898 = vld [vmem:[%s6897] sm:$0x3]
      %6899 = vrot.lane.b32.xlu0 %v6894, 124
      %v6900 = vpop.permute.xlu0 %6899
      %6901 = vrot.lane.b32.xlu0 %v6896, 124
      %v6902 = vpop.permute.xlu0 %6901
      %v6903 = vsel %vm2419, %v6900, 0
      %v6905 = vsel %vm2419, %v6902, 0
      %v6908 = vsel %vm2452, %v6898, 0
      %6910 = vmatprep.subr.mxu0 0.0
      %6911 = vmatpush1.msra.mxu0 0.0
      %6912 = vmatprep.subr.mxu0 0.0
      %6913 = vmatpush1.msra.mxu0 0.0
      %6914 = vmatprep.subr.mxu0 0.0
      %6915 = vmatpush1.msra.mxu0 0.0
      %6916 = vmatprep.subr.mxu0 0.0
      %6917 = vmatpush1.msra.mxu0 0.0
      %6918 = vmatprep.subr.mxu0 0.0
      %6919 = vmatpush1.msra.mxu0 0.0
      %6920 = vmatprep.subr.mxu0 0.0
      %6921 = vmatpush1.msra.mxu0 0.0
      %6922 = vmatprep.subr.mxu0 0.0
      %6923 = vmatpush1.msra.mxu0 0.0
      %6924 = vmatprep.subr.mxu0 0.0
      %6925 = vmatpush1.msra.mxu0 0.0
      %6926 = vmatprep.subr.mxu0 0.0
      %6927 = vmatpush1.msra.mxu0 0.0
      %6928 = vmatprep.subr.mxu0 0.0
      %6929 = vmatpush1.msra.mxu0 0.0
      %6930 = vmatprep.subr.mxu0 0.0
      %6931 = vmatpush1.msra.mxu0 0.0
      %6932 = vmatprep.subr.mxu0 0.0
      %6933 = vmatpush1.msra.mxu0 0.0
      %6934 = vmatprep.subr.mxu0 0.0
      %6935 = vmatpush1.msra.mxu0 0.0
      %6936 = vmatprep.subr.mxu0 0.0
      %6937 = vmatpush1.msra.mxu0 0.0
      %6938 = vmatprep.subr.mxu0 0.0
      %6939 = vmatpush1.msra.mxu0 0.0
      %6940 = vmatprep.subr.mxu0 0.0
      %6941 = vmatpush1.msra.mxu0 %v6908
      %6942 = vmatprep.subr.mxu0 0.0
      %6943 = vmatpush2.msra.mxu0 0.0
      %6944 = vmatprep.subr.mxu0 0.0
      %6945 = vmatpush2.msra.mxu0 0.0
      %6946 = vmatprep.subr.mxu0 0.0
      %6947 = vmatpush2.msra.mxu0 0.0
      %6948 = vmatprep.subr.mxu0 0.0
      %6949 = vmatpush2.msra.mxu0 0.0
      %6950 = vmatprep.subr.mxu0 0.0
      %6951 = vmatpush2.msra.mxu0 0.0
      %6952 = vmatprep.subr.mxu0 0.0
      %6953 = vmatpush2.msra.mxu0 0.0
      %6954 = vmatprep.subr.mxu0 0.0
      %6955 = vmatpush2.msra.mxu0 0.0
      %6956 = vmatprep.subr.mxu0 0.0
      %6957 = vmatpush2.msra.mxu0 0.0
      %6958 = vmatprep.subr.mxu0 0.0
      %6959 = vmatpush2.msra.mxu0 0.0
      %6960 = vmatprep.subr.mxu0 0.0
      %6961 = vmatpush2.msra.mxu0 0.0
      %6962 = vmatprep.subr.mxu0 0.0
      %6963 = vmatpush2.msra.mxu0 0.0
      %6964 = vmatprep.subr.mxu0 0.0
      %6965 = vmatpush2.msra.mxu0 0.0
      %6966 = vmatprep.subr.mxu0 0.0
      %6967 = vmatpush2.msra.mxu0 0.0
      %6968 = vmatprep.subr.mxu0 0.0
      %6969 = vmatpush2.msra.mxu0 0.0
      %6970 = vmatprep.subr.mxu0 0.0
      %6971 = vmatpush2.msra.mxu0 0.0
      %6972 = vmatprep.subr.mxu0 0.0
      %6973 = vmatpush2.msra.mxu0 0.0
      %6974 = vmatprep.mubr.f32.mxu0 0.0
      %6975 = vmatmul.mubr.f32.gmra.mxu0 %v3373
      %v6976 = vpop.f32.mrf.mxu0
      %v6977 = vadd.f32 0.0, %v6976
      %v6978 = vpop.f32.mrf.mxu0
      %6979 = vmatprep.mubr.f32.mxu0 0.0
      %6980 = vmatmul.mubr.f32.gmra.mxu0 %v3375
      %v6981 = vpop.f32.mrf.mxu0
      %v6982 = vadd.f32 0.0, %v6981
      %v6983 = vpop.f32.mrf.mxu0
      %6984 = vmatprep.mubr.f32.mxu0 0.0
      %6985 = vmatmul.mubr.f32.gmra.mxu0 %v3377
      %v6986 = vpop.f32.mrf.mxu0
      %v6987 = vadd.f32 0.0, %v6986
      %v6988 = vpop.f32.mrf.mxu0
      %6989 = vmatprep.mubr.f32.mxu0 0.0
      %6990 = vmatmul.mubr.f32.gmra.mxu0 %v3379
      %v6991 = vpop.f32.mrf.mxu0
      %v6992 = vadd.f32 0.0, %v6991
      %v6993 = vpop.f32.mrf.mxu0
      %6994 = vmatprep.mubr.f32.mxu0 0.0
      %6995 = vmatmul.mubr.f32.gmra.mxu0 %v3381
      %v6996 = vpop.f32.mrf.mxu0
      %v6997 = vadd.f32 0.0, %v6996
      %v6998 = vpop.f32.mrf.mxu0
      %6999 = vmatprep.mubr.f32.mxu0 0.0
      %7000 = vmatmul.mubr.f32.gmra.mxu0 %v3383
      %v7001 = vpop.f32.mrf.mxu0
      %v7002 = vadd.f32 0.0, %v7001
      %v7003 = vpop.f32.mrf.mxu0
      %7004 = vmatprep.mubr.f32.mxu0 0.0
      %7005 = vmatmul.mubr.f32.gmra.mxu0 %v3385
      %v7006 = vpop.f32.mrf.mxu0
      %v7007 = vadd.f32 0.0, %v7006
      %v7008 = vpop.f32.mrf.mxu0
      %7009 = vmatprep.mubr.f32.mxu0 0.0
      %7010 = vmatmul.mubr.f32.gmra.mxu0 %v3387
      %v7011 = vpop.f32.mrf.mxu0
      %v7012 = vadd.f32 0.0, %v7011
      %v7013 = vpop.f32.mrf.mxu0
      %7014 = vmatprep.mubr.f32.mxu0 0.0
      %7015 = vmatmul.mubr.f32.gmra.mxu0 %v4260
      %v7016 = vpop.f32.mrf.mxu0
      %v7017 = vadd.f32 0.0, %v7016
      %v7018 = vpop.f32.mrf.mxu0
      %7019 = vmatprep.mubr.f32.mxu0 0.0
      %7020 = vmatmul.mubr.f32.gmra.mxu0 %v4262
      %v7021 = vpop.f32.mrf.mxu0
      %v7022 = vadd.f32 0.0, %v7021
      %v7023 = vpop.f32.mrf.mxu0
      %7024 = vmatprep.mubr.f32.mxu0 0.0
      %7025 = vmatmul.mubr.f32.gmra.mxu0 %v5135
      %v7026 = vpop.f32.mrf.mxu0
      %v7027 = vadd.f32 0.0, %v7026
      %v7028 = vpop.f32.mrf.mxu0
      %7029 = vmatprep.mubr.f32.mxu0 0.0
      %7030 = vmatmul.mubr.f32.gmra.mxu0 %v5137
      %v7031 = vpop.f32.mrf.mxu0
      %v7032 = vadd.f32 0.0, %v7031
      %v7033 = vpop.f32.mrf.mxu0
      %7034 = vmatprep.mubr.f32.mxu0 0.0
      %7035 = vmatmul.mubr.f32.gmra.mxu0 %v6010
      %v7036 = vpop.f32.mrf.mxu0
      %v7037 = vadd.f32 0.0, %v7036
      %v7038 = vpop.f32.mrf.mxu0
      %7039 = vmatprep.mubr.f32.mxu0 0.0
      %7040 = vmatmul.mubr.f32.gmra.mxu0 %v6012
      %v7041 = vpop.f32.mrf.mxu0
      %v7042 = vadd.f32 0.0, %v7041
      %v7043 = vpop.f32.mrf.mxu0
      %7044 = vmatprep.mubr.f32.mxu0 0.0
      %7045 = vmatmul.mubr.f32.gmra.mxu0 %v6903
      %v7046 = vpop.f32.mrf.mxu0
      %v7047 = vadd.f32 0.0, %v7046
      %v7048 = vpop.f32.mrf.mxu0
      %7049 = vmatprep.mubr.f32.mxu0 0.0
      %7050 = vmatmul.mubr.f32.gmra.mxu0 %v6905
      %v7051 = vpop.f32.mrf.mxu0
      %v7052 = vadd.f32 0.0, %v7051
      %v7053 = vpop.f32.mrf.mxu0
      %7054 = vdwg.mxu0
      %v7055 = vadd.f32 %v6876, %v6977
      %v7056 = vadd.f32 %v6877, %v6982
      %v7057 = vadd.f32 %v6878, %v6987
      %v7058 = vadd.f32 %v6879, %v6992
      %v7059 = vadd.f32 %v6880, %v6997
      %v7060 = vadd.f32 %v6881, %v7002
      %v7061 = vadd.f32 %v6882, %v7007
      %v7062 = vadd.f32 %v6883, %v7012
      %v7063 = vadd.f32 %v6884, %v7017
      %v7064 = vadd.f32 %v6885, %v7022
      %v7065 = vadd.f32 %v6886, %v7027
      %v7066 = vadd.f32 %v6887, %v7032
      %v7067 = vadd.f32 %v6888, %v7037
      %v7068 = vadd.f32 %v6889, %v7042
      %v7069 = vadd.f32 %v6890, %v7047
      %v7070 = vadd.f32 %v6891, %v7052
      %v7074 = vrot.slane %v299, 1
      %v7075 = vrot.slane %v300, 1
      %v7076 = vsel %vm389, %v7074, %v7075
      %v7077 = vrot.slane %v301, 1
      %v7078 = vsel %vm389, %v7075, %v7077
      %v7095 = vmax.f32 %v299, %v7076
      %v7096 = vmax.f32 %v300, %v7078
      %v7097 = vmax.f32 %v302, %v392
      %v7098 = vmax.f32 %v303, %v394
      %v7099 = vmax.f32 %v305, %v397
      %v7100 = vmax.f32 %v306, %v399
      %v7101 = vmax.f32 %v308, %v402
      %v7102 = vmax.f32 %v309, %v404
      %v7103 = vmax.f32 %v311, %v407
      %v7104 = vmax.f32 %v312, %v409
      %v7105 = vmax.f32 %v314, %v412
      %v7106 = vmax.f32 %v315, %v414
      %v7107 = vmax.f32 %v317, %v417
      %v7108 = vmax.f32 %v318, %v419
      %v7109 = vmax.f32 %v320, %v422
      %v7110 = vmax.f32 %v321, %v424
      %v7111 = vrot.slane %v299, 2
      %v7112 = vrot.slane %v300, 2
      %v7113 = vsel %vm678, %v7111, %v7112
      %v7114 = vrot.slane %v301, 2
      %v7115 = vsel %vm678, %v7112, %v7114
      %v7116 = vrot.slane %v302, 2
      %v7117 = vrot.slane %v303, 2
      %v7118 = vsel %vm678, %v7116, %v7117
      %v7119 = vrot.slane %v304, 2
      %v7120 = vsel %vm678, %v7117, %v7119
      %v7121 = vrot.slane %v305, 2
      %v7122 = vrot.slane %v306, 2
      %v7123 = vsel %vm678, %v7121, %v7122
      %v7124 = vrot.slane %v307, 2
      %v7125 = vsel %vm678, %v7122, %v7124
      %v7126 = vrot.slane %v308, 2
      %v7127 = vrot.slane %v309, 2
      %v7128 = vsel %vm678, %v7126, %v7127
      %v7129 = vrot.slane %v310, 2
      %v7130 = vsel %vm678, %v7127, %v7129
      %v7131 = vrot.slane %v311, 2
      %v7132 = vrot.slane %v312, 2
      %v7133 = vsel %vm678, %v7131, %v7132
      %v7134 = vrot.slane %v313, 2
      %v7135 = vsel %vm678, %v7132, %v7134
      %v7136 = vrot.slane %v314, 2
      %v7137 = vrot.slane %v315, 2
      %v7138 = vsel %vm678, %v7136, %v7137
      %v7139 = vrot.slane %v316, 2
      %v7140 = vsel %vm678, %v7137, %v7139
      %v7141 = vrot.slane %v317, 2
      %v7142 = vrot.slane %v318, 2
      %v7143 = vsel %vm678, %v7141, %v7142
      %v7144 = vrot.slane %v319, 2
      %v7145 = vsel %vm678, %v7142, %v7144
      %v7146 = vrot.slane %v320, 2
      %v7147 = vrot.slane %v321, 2
      %v7148 = vsel %vm678, %v7146, %v7147
      %v7149 = vrot.slane %v322, 2
      %v7150 = vsel %vm678, %v7147, %v7149
      %v7167 = vmax.f32 %v7095, %v7113
      %v7168 = vmax.f32 %v7096, %v7115
      %v7169 = vmax.f32 %v7097, %v7118
      %v7170 = vmax.f32 %v7098, %v7120
      %v7171 = vmax.f32 %v7099, %v7123
      %v7172 = vmax.f32 %v7100, %v7125
      %v7173 = vmax.f32 %v7101, %v7128
      %v7174 = vmax.f32 %v7102, %v7130
      %v7175 = vmax.f32 %v7103, %v7133
      %v7176 = vmax.f32 %v7104, %v7135
      %v7177 = vmax.f32 %v7105, %v7138
      %v7178 = vmax.f32 %v7106, %v7140
      %v7179 = vmax.f32 %v7107, %v7143
      %v7180 = vmax.f32 %v7108, %v7145
      %v7181 = vmax.f32 %v7109, %v7148
      %v7182 = vmax.f32 %v7110, %v7150
      %v7183 = vmax.f32 %v7167, %v302
      %v7184 = vmax.f32 %v7168, %v303
      %v7185 = vmax.f32 %v7169, %v305
      %v7186 = vmax.f32 %v7170, %v306
      %v7187 = vmax.f32 %v7171, %v308
      %v7188 = vmax.f32 %v7172, %v309
      %v7189 = vmax.f32 %v7173, %v311
      %v7190 = vmax.f32 %v7174, %v312
      %v7191 = vmax.f32 %v7175, %v314
      %v7192 = vmax.f32 %v7176, %v315
      %v7193 = vmax.f32 %v7177, %v317
      %v7194 = vmax.f32 %v7178, %v318
      %v7195 = vmax.f32 %v7179, %v320
      %v7196 = vmax.f32 %v7180, %v321
      %v7197 = vmax.f32 %v7181, %v323
      %v7198 = vmax.f32 %v7182, %v324
      %v7201 = vmax.f32 %v7183, %v392
      %v7202 = vmax.f32 %v7184, %v394
      %v7203 = vmax.f32 %v7185, %v397
      %v7204 = vmax.f32 %v7186, %v399
      %v7205 = vmax.f32 %v7187, %v402
      %v7206 = vmax.f32 %v7188, %v404
      %v7207 = vmax.f32 %v7189, %v407
      %v7208 = vmax.f32 %v7190, %v409
      %v7209 = vmax.f32 %v7191, %v412
      %v7210 = vmax.f32 %v7192, %v414
      %v7211 = vmax.f32 %v7193, %v417
      %v7212 = vmax.f32 %v7194, %v419
      %v7213 = vmax.f32 %v7195, %v422
      %v7214 = vmax.f32 %v7196, %v424
      %v7215 = vmax.f32 %v7197, %v427
      %v7216 = vmax.f32 %v7198, %v429
      %v7217 = vrot.slane %v323, 2
      %v7218 = vrot.slane %v324, 2
      %v7219 = vsel %vm678, %v7217, %v7218
      %v7220 = vrot.slane %v325, 2
      %v7221 = vsel %vm678, %v7218, %v7220
      %v7224 = vmax.f32 %v7201, %v7118
      %v7225 = vmax.f32 %v7202, %v7120
      %v7226 = vmax.f32 %v7203, %v7123
      %v7227 = vmax.f32 %v7204, %v7125
      %v7228 = vmax.f32 %v7205, %v7128
      %v7229 = vmax.f32 %v7206, %v7130
      %v7230 = vmax.f32 %v7207, %v7133
      %v7231 = vmax.f32 %v7208, %v7135
      %v7232 = vmax.f32 %v7209, %v7138
      %v7233 = vmax.f32 %v7210, %v7140
      %v7234 = vmax.f32 %v7211, %v7143
      %v7235 = vmax.f32 %v7212, %v7145
      %v7236 = vmax.f32 %v7213, %v7148
      %v7237 = vmax.f32 %v7214, %v7150
      %v7238 = vmax.f32 %v7215, %v7219
      %v7239 = vmax.f32 %v7216, %v7221
      %v7240 = vmax.f32 %v7224, %v305
      %v7241 = vmax.f32 %v7225, %v306
      %v7242 = vmax.f32 %v7226, %v308
      %v7243 = vmax.f32 %v7227, %v309
      %v7244 = vmax.f32 %v7228, %v311
      %v7245 = vmax.f32 %v7229, %v312
      %v7246 = vmax.f32 %v7230, %v314
      %v7247 = vmax.f32 %v7231, %v315
      %v7248 = vmax.f32 %v7232, %v317
      %v7249 = vmax.f32 %v7233, %v318
      %v7250 = vmax.f32 %v7234, %v320
      %v7251 = vmax.f32 %v7235, %v321
      %v7252 = vmax.f32 %v7236, %v323
      %v7253 = vmax.f32 %v7237, %v324
      %v7254 = vmax.f32 %v7238, %v326
      %v7255 = vmax.f32 %v7239, %v327
      %v7259 = vrot.slane %v326, 1
      %v7260 = vrot.slane %v327, 1
      %v7261 = vsel %vm389, %v7259, %v7260
      %v7262 = vrot.slane %v328, 1
      %v7263 = vsel %vm389, %v7260, %v7262
      %v7266 = vmax.f32 %v7240, %v397
      %v7267 = vmax.f32 %v7241, %v399
      %v7268 = vmax.f32 %v7242, %v402
      %v7269 = vmax.f32 %v7243, %v404
      %v7270 = vmax.f32 %v7244, %v407
      %v7271 = vmax.f32 %v7245, %v409
      %v7272 = vmax.f32 %v7246, %v412
      %v7273 = vmax.f32 %v7247, %v414
      %v7274 = vmax.f32 %v7248, %v417
      %v7275 = vmax.f32 %v7249, %v419
      %v7276 = vmax.f32 %v7250, %v422
      %v7277 = vmax.f32 %v7251, %v424
      %v7278 = vmax.f32 %v7252, %v427
      %v7279 = vmax.f32 %v7253, %v429
      %v7280 = vmax.f32 %v7254, %v7261
      %v7281 = vmax.f32 %v7255, %v7263
      %v7282 = vrot.slane %v326, 2
      %v7283 = vrot.slane %v327, 2
      %v7284 = vsel %vm678, %v7282, %v7283
      %v7285 = vrot.slane %v328, 2
      %v7286 = vsel %vm678, %v7283, %v7285
      %v7289 = vmax.f32 %v7266, %v7123
      %v7290 = vmax.f32 %v7267, %v7125
      %v7291 = vmax.f32 %v7268, %v7128
      %v7292 = vmax.f32 %v7269, %v7130
      %v7293 = vmax.f32 %v7270, %v7133
      %v7294 = vmax.f32 %v7271, %v7135
      %v7295 = vmax.f32 %v7272, %v7138
      %v7296 = vmax.f32 %v7273, %v7140
      %v7297 = vmax.f32 %v7274, %v7143
      %v7298 = vmax.f32 %v7275, %v7145
      %v7299 = vmax.f32 %v7276, %v7148
      %v7300 = vmax.f32 %v7277, %v7150
      %v7301 = vmax.f32 %v7278, %v7219
      %v7302 = vmax.f32 %v7279, %v7221
      %v7303 = vmax.f32 %v7280, %v7284
      %v7304 = vmax.f32 %v7281, %v7286
      %v7305 = vld [vmem:[%s5] sm:$0xf]
      %v7307 = vsel %vm431, %v7289, 0
      %v7310 = vsel %vm431, %v7290, 0
      %v7313 = vsel %vm431, %v7291, 0
      %v7316 = vsel %vm431, %v7292, 0
      %v7319 = vsel %vm431, %v7293, 0
      %v7322 = vsel %vm431, %v7294, 0
      %v7325 = vsel %vm431, %v7295, 0
      %v7328 = vsel %vm431, %v7296, 0
      %v7331 = vsel %vm431, %v7297, 0
      %v7334 = vsel %vm431, %v7298, 0
      %v7337 = vsel %vm431, %v7299, 0
      %v7340 = vsel %vm431, %v7300, 0
      %v7343 = vsel %vm431, %v7301, 0
      %v7346 = vsel %vm431, %v7302, 0
      %v7349 = vsel %vm431, %v7303, 0
      %v7352 = vsel %vm431, %v7304, 0
      %v7355 = vsel %vm464, %v7305, 0
      %7357 = vmatprep.subr.mxu0 0.0
      %7358 = vmatpush1.msra.mxu0 0.0
      %7359 = vmatprep.subr.mxu0 0.0
      %7360 = vmatpush1.msra.mxu0 0.0
      %7361 = vmatprep.subr.mxu0 0.0
      %7362 = vmatpush1.msra.mxu0 0.0
      %7363 = vmatprep.subr.mxu0 0.0
      %7364 = vmatpush1.msra.mxu0 0.0
      %7365 = vmatprep.subr.mxu0 0.0
      %7366 = vmatpush1.msra.mxu0 0.0
      %7367 = vmatprep.subr.mxu0 0.0
      %7368 = vmatpush1.msra.mxu0 0.0
      %7369 = vmatprep.subr.mxu0 0.0
      %7370 = vmatpush1.msra.mxu0 0.0
      %7371 = vmatprep.subr.mxu0 0.0
      %7372 = vmatpush1.msra.mxu0 0.0
      %7373 = vmatprep.subr.mxu0 0.0
      %7374 = vmatpush1.msra.mxu0 0.0
      %7375 = vmatprep.subr.mxu0 0.0
      %7376 = vmatpush1.msra.mxu0 0.0
      %7377 = vmatprep.subr.mxu0 0.0
      %7378 = vmatpush1.msra.mxu0 0.0
      %7379 = vmatprep.subr.mxu0 0.0
      %7380 = vmatpush1.msra.mxu0 0.0
      %7381 = vmatprep.subr.mxu0 0.0
      %7382 = vmatpush1.msra.mxu0 0.0
      %7383 = vmatprep.subr.mxu0 0.0
      %7384 = vmatpush1.msra.mxu0 0.0
      %7385 = vmatprep.subr.mxu0 0.0
      %7386 = vmatpush1.msra.mxu0 0.0
      %7387 = vmatprep.subr.mxu0 0.0
      %7388 = vmatpush1.msra.mxu0 %v7355
      %7389 = vmatprep.subr.mxu0 0.0
      %7390 = vmatpush2.msra.mxu0 0.0
      %7391 = vmatprep.subr.mxu0 0.0
      %7392 = vmatpush2.msra.mxu0 0.0
      %7393 = vmatprep.subr.mxu0 0.0
      %7394 = vmatpush2.msra.mxu0 0.0
      %7395 = vmatprep.subr.mxu0 0.0
      %7396 = vmatpush2.msra.mxu0 0.0
      %7397 = vmatprep.subr.mxu0 0.0
      %7398 = vmatpush2.msra.mxu0 0.0
      %7399 = vmatprep.subr.mxu0 0.0
      %7400 = vmatpush2.msra.mxu0 0.0
      %7401 = vmatprep.subr.mxu0 0.0
      %7402 = vmatpush2.msra.mxu0 0.0
      %7403 = vmatprep.subr.mxu0 0.0
      %7404 = vmatpush2.msra.mxu0 0.0
      %7405 = vmatprep.subr.mxu0 0.0
      %7406 = vmatpush2.msra.mxu0 0.0
      %7407 = vmatprep.subr.mxu0 0.0
      %7408 = vmatpush2.msra.mxu0 0.0
      %7409 = vmatprep.subr.mxu0 0.0
      %7410 = vmatpush2.msra.mxu0 0.0
      %7411 = vmatprep.subr.mxu0 0.0
      %7412 = vmatpush2.msra.mxu0 0.0
      %7413 = vmatprep.subr.mxu0 0.0
      %7414 = vmatpush2.msra.mxu0 0.0
      %7415 = vmatprep.subr.mxu0 0.0
      %7416 = vmatpush2.msra.mxu0 0.0
      %7417 = vmatprep.subr.mxu0 0.0
      %7418 = vmatpush2.msra.mxu0 0.0
      %7419 = vmatprep.subr.mxu0 0.0
      %7420 = vmatpush2.msra.mxu0 0.0
      %7421 = vmatprep.mubr.f32.mxu0 0.0
      %7422 = vmatmul.mubr.f32.gmra.mxu0 %v7307
      %v7423 = vpop.f32.mrf.mxu0
      %v7424 = vadd.f32 0.0, %v7423
      %v7425 = vpop.f32.mrf.mxu0
      %7426 = vmatprep.mubr.f32.mxu0 0.0
      %7427 = vmatmul.mubr.f32.gmra.mxu0 %v7310
      %v7428 = vpop.f32.mrf.mxu0
      %v7429 = vadd.f32 0.0, %v7428
      %v7430 = vpop.f32.mrf.mxu0
      %7431 = vmatprep.mubr.f32.mxu0 0.0
      %7432 = vmatmul.mubr.f32.gmra.mxu0 %v7313
      %v7433 = vpop.f32.mrf.mxu0
      %v7434 = vadd.f32 0.0, %v7433
      %v7435 = vpop.f32.mrf.mxu0
      %7436 = vmatprep.mubr.f32.mxu0 0.0
      %7437 = vmatmul.mubr.f32.gmra.mxu0 %v7316
      %v7438 = vpop.f32.mrf.mxu0
      %v7439 = vadd.f32 0.0, %v7438
      %v7440 = vpop.f32.mrf.mxu0
      %7441 = vmatprep.mubr.f32.mxu0 0.0
      %7442 = vmatmul.mubr.f32.gmra.mxu0 %v7319
      %v7443 = vpop.f32.mrf.mxu0
      %v7444 = vadd.f32 0.0, %v7443
      %v7445 = vpop.f32.mrf.mxu0
      %7446 = vmatprep.mubr.f32.mxu0 0.0
      %7447 = vmatmul.mubr.f32.gmra.mxu0 %v7322
      %v7448 = vpop.f32.mrf.mxu0
      %v7449 = vadd.f32 0.0, %v7448
      %v7450 = vpop.f32.mrf.mxu0
      %7451 = vmatprep.mubr.f32.mxu0 0.0
      %7452 = vmatmul.mubr.f32.gmra.mxu0 %v7325
      %v7453 = vpop.f32.mrf.mxu0
      %v7454 = vadd.f32 0.0, %v7453
      %v7455 = vpop.f32.mrf.mxu0
      %7456 = vmatprep.mubr.f32.mxu0 0.0
      %7457 = vmatmul.mubr.f32.gmra.mxu0 %v7328
      %v7458 = vpop.f32.mrf.mxu0
      %v7459 = vadd.f32 0.0, %v7458
      %v7460 = vpop.f32.mrf.mxu0
      %7461 = vmatprep.mubr.f32.mxu0 0.0
      %7462 = vmatmul.mubr.f32.gmra.mxu0 %v7331
      %v7463 = vpop.f32.mrf.mxu0
      %v7464 = vadd.f32 0.0, %v7463
      %v7465 = vpop.f32.mrf.mxu0
      %7466 = vmatprep.mubr.f32.mxu0 0.0
      %7467 = vmatmul.mubr.f32.gmra.mxu0 %v7334
      %v7468 = vpop.f32.mrf.mxu0
      %v7469 = vadd.f32 0.0, %v7468
      %v7470 = vpop.f32.mrf.mxu0
      %7471 = vmatprep.mubr.f32.mxu0 0.0
      %7472 = vmatmul.mubr.f32.gmra.mxu0 %v7337
      %v7473 = vpop.f32.mrf.mxu0
      %v7474 = vadd.f32 0.0, %v7473
      %v7475 = vpop.f32.mrf.mxu0
      %7476 = vmatprep.mubr.f32.mxu0 0.0
      %7477 = vmatmul.mubr.f32.gmra.mxu0 %v7340
      %v7478 = vpop.f32.mrf.mxu0
      %v7479 = vadd.f32 0.0, %v7478
      %v7480 = vpop.f32.mrf.mxu0
      %7481 = vmatprep.mubr.f32.mxu0 0.0
      %7482 = vmatmul.mubr.f32.gmra.mxu0 %v7343
      %v7483 = vpop.f32.mrf.mxu0
      %v7484 = vadd.f32 0.0, %v7483
      %v7485 = vpop.f32.mrf.mxu0
      %7486 = vmatprep.mubr.f32.mxu0 0.0
      %7487 = vmatmul.mubr.f32.gmra.mxu0 %v7346
      %v7488 = vpop.f32.mrf.mxu0
      %v7489 = vadd.f32 0.0, %v7488
      %v7490 = vpop.f32.mrf.mxu0
      %7491 = vmatprep.mubr.f32.mxu0 0.0
      %7492 = vmatmul.mubr.f32.gmra.mxu0 %v7349
      %v7493 = vpop.f32.mrf.mxu0
      %v7494 = vadd.f32 0.0, %v7493
      %v7495 = vpop.f32.mrf.mxu0
      %7496 = vmatprep.mubr.f32.mxu0 0.0
      %7497 = vmatmul.mubr.f32.gmra.mxu0 %v7352
      %v7498 = vpop.f32.mrf.mxu0
      %v7499 = vadd.f32 0.0, %v7498
      %v7500 = vpop.f32.mrf.mxu0
      %7501 = vdwg.mxu0
      %7518 = vrot.lane.b32.xlu0 %v2360, 4
      %v7519 = vpop.permute.xlu0 %7518
      %7520 = vrot.lane.b32.xlu0 %v2361, 4
      %v7521 = vpop.permute.xlu0 %7520
      %7522 = vrot.lane.b32.xlu0 %v2362, 4
      %v7523 = vpop.permute.xlu0 %7522
      %7524 = vrot.lane.b32.xlu0 %v2363, 4
      %v7525 = vpop.permute.xlu0 %7524
      %7526 = vrot.lane.b32.xlu0 %v2364, 4
      %v7527 = vpop.permute.xlu0 %7526
      %7528 = vrot.lane.b32.xlu0 %v2365, 4
      %v7529 = vpop.permute.xlu0 %7528
      %7530 = vrot.lane.b32.xlu0 %v2366, 4
      %v7531 = vpop.permute.xlu0 %7530
      %7532 = vrot.lane.b32.xlu0 %v2367, 4
      %v7533 = vpop.permute.xlu0 %7532
      %7534 = vrot.lane.b32.xlu0 %v2368, 4
      %v7535 = vpop.permute.xlu0 %7534
      %7536 = vrot.lane.b32.xlu0 %v2369, 4
      %v7537 = vpop.permute.xlu0 %7536
      %7538 = vrot.lane.b32.xlu0 %v2370, 4
      %v7539 = vpop.permute.xlu0 %7538
      %7540 = vrot.lane.b32.xlu0 %v2371, 4
      %v7541 = vpop.permute.xlu0 %7540
      %7542 = vrot.lane.b32.xlu0 %v2372, 4
      %v7543 = vpop.permute.xlu0 %7542
      %7544 = vrot.lane.b32.xlu0 %v2373, 4
      %v7545 = vpop.permute.xlu0 %7544
      %7546 = vrot.lane.b32.xlu0 %v2374, 4
      %v7547 = vpop.permute.xlu0 %7546
      %7548 = vrot.lane.b32.xlu0 %v2375, 4
      %v7549 = vpop.permute.xlu0 %7548
      %7582 = vrot.lane.b32.xlu0 %v7055, 12
      %v7583 = vpop.permute.xlu0 %7582
      %7584 = vrot.lane.b32.xlu0 %v7056, 12
      %v7585 = vpop.permute.xlu0 %7584
      %7586 = vrot.lane.b32.xlu0 %v7057, 12
      %v7587 = vpop.permute.xlu0 %7586
      %7588 = vrot.lane.b32.xlu0 %v7058, 12
      %v7589 = vpop.permute.xlu0 %7588
      %7590 = vrot.lane.b32.xlu0 %v7059, 12
      %v7591 = vpop.permute.xlu0 %7590
      %7592 = vrot.lane.b32.xlu0 %v7060, 12
      %v7593 = vpop.permute.xlu0 %7592
      %7594 = vrot.lane.b32.xlu0 %v7061, 12
      %v7595 = vpop.permute.xlu0 %7594
      %7596 = vrot.lane.b32.xlu0 %v7062, 12
      %v7597 = vpop.permute.xlu0 %7596
      %7598 = vrot.lane.b32.xlu0 %v7063, 12
      %v7599 = vpop.permute.xlu0 %7598
      %7600 = vrot.lane.b32.xlu0 %v7064, 12
      %v7601 = vpop.permute.xlu0 %7600
      %7602 = vrot.lane.b32.xlu0 %v7065, 12
      %v7603 = vpop.permute.xlu0 %7602
      %7604 = vrot.lane.b32.xlu0 %v7066, 12
      %v7605 = vpop.permute.xlu0 %7604
      %7606 = vrot.lane.b32.xlu0 %v7067, 12
      %v7607 = vpop.permute.xlu0 %7606
      %7608 = vrot.lane.b32.xlu0 %v7068, 12
      %v7609 = vpop.permute.xlu0 %7608
      %7610 = vrot.lane.b32.xlu0 %v7069, 12
      %v7611 = vpop.permute.xlu0 %7610
      %7612 = vrot.lane.b32.xlu0 %v7070, 12
      %v7613 = vpop.permute.xlu0 %7612
      %7646 = vrot.lane.b32.xlu0 %v7424, 16
      %v7647 = vpop.permute.xlu0 %7646
      %7648 = vrot.lane.b32.xlu0 %v7429, 16
      %v7649 = vpop.permute.xlu0 %7648
      %7650 = vrot.lane.b32.xlu0 %v7434, 16
      %v7651 = vpop.permute.xlu0 %7650
      %7652 = vrot.lane.b32.xlu0 %v7439, 16
      %v7653 = vpop.permute.xlu0 %7652
      %7654 = vrot.lane.b32.xlu0 %v7444, 16
      %v7655 = vpop.permute.xlu0 %7654
      %7656 = vrot.lane.b32.xlu0 %v7449, 16
      %v7657 = vpop.permute.xlu0 %7656
      %7658 = vrot.lane.b32.xlu0 %v7454, 16
      %v7659 = vpop.permute.xlu0 %7658
      %7660 = vrot.lane.b32.xlu0 %v7459, 16
      %v7661 = vpop.permute.xlu0 %7660
      %7662 = vrot.lane.b32.xlu0 %v7464, 16
      %v7663 = vpop.permute.xlu0 %7662
      %7664 = vrot.lane.b32.xlu0 %v7469, 16
      %v7665 = vpop.permute.xlu0 %7664
      %7666 = vrot.lane.b32.xlu0 %v7474, 16
      %v7667 = vpop.permute.xlu0 %7666
      %7668 = vrot.lane.b32.xlu0 %v7479, 16
      %v7669 = vpop.permute.xlu0 %7668
      %7670 = vrot.lane.b32.xlu0 %v7484, 16
      %v7671 = vpop.permute.xlu0 %7670
      %7672 = vrot.lane.b32.xlu0 %v7489, 16
      %v7673 = vpop.permute.xlu0 %7672
      %7674 = vrot.lane.b32.xlu0 %v7494, 16
      %v7675 = vpop.permute.xlu0 %7674
      %7676 = vrot.lane.b32.xlu0 %v7499, 16
      %v7677 = vpop.permute.xlu0 %7676
      %v7694 = vsel %vm431, %v535, %v7519
      %v7695 = vsel %vm431, %v540, %v7521
      %v7696 = vsel %vm431, %v545, %v7523
      %v7697 = vsel %vm431, %v550, %v7525
      %v7698 = vsel %vm431, %v555, %v7527
      %v7699 = vsel %vm431, %v560, %v7529
      %v7700 = vsel %vm431, %v565, %v7531
      %v7701 = vsel %vm431, %v570, %v7533
      %v7702 = vsel %vm431, %v575, %v7535
      %v7703 = vsel %vm431, %v580, %v7537
      %v7704 = vsel %vm431, %v585, %v7539
      %v7705 = vsel %vm431, %v590, %v7541
      %v7706 = vsel %vm431, %v595, %v7543
      %v7707 = vsel %vm431, %v600, %v7545
      %v7708 = vsel %vm431, %v605, %v7547
      %v7709 = vsel %vm431, %v610, %v7549
      %vm7710 = vcmask 97280
      %v7711 = vsel %vm7710, %v7694, %v7583
      %v7712 = vsel %vm7710, %v7695, %v7585
      %v7713 = vsel %vm7710, %v7696, %v7587
      %v7714 = vsel %vm7710, %v7697, %v7589
      %v7715 = vsel %vm7710, %v7698, %v7591
      %v7716 = vsel %vm7710, %v7699, %v7593
      %v7717 = vsel %vm7710, %v7700, %v7595
      %v7718 = vsel %vm7710, %v7701, %v7597
      %v7719 = vsel %vm7710, %v7702, %v7599
      %v7720 = vsel %vm7710, %v7703, %v7601
      %v7721 = vsel %vm7710, %v7704, %v7603
      %v7722 = vsel %vm7710, %v7705, %v7605
      %v7723 = vsel %vm7710, %v7706, %v7607
      %v7724 = vsel %vm7710, %v7707, %v7609
      %v7725 = vsel %vm7710, %v7708, %v7611
      %v7726 = vsel %vm7710, %v7709, %v7613
      %vm7727 = vcmask 130048
      %v7728 = vsel %vm7727, %v7711, %v7647
      %v7729 = vsel %vm7727, %v7712, %v7649
      %v7730 = vsel %vm7727, %v7713, %v7651
      %v7731 = vsel %vm7727, %v7714, %v7653
      %v7732 = vsel %vm7727, %v7715, %v7655
      %v7733 = vsel %vm7727, %v7716, %v7657
      %v7734 = vsel %vm7727, %v7717, %v7659
      %v7735 = vsel %vm7727, %v7718, %v7661
      %v7736 = vsel %vm7727, %v7719, %v7663
      %v7737 = vsel %vm7727, %v7720, %v7665
      %v7738 = vsel %vm7727, %v7721, %v7667
      %v7739 = vsel %vm7727, %v7722, %v7669
      %v7740 = vsel %vm7727, %v7723, %v7671
      %v7741 = vsel %vm7727, %v7724, %v7673
      %v7742 = vsel %vm7727, %v7725, %v7675
      %v7743 = vsel %vm7727, %v7726, %v7677
      %vm7744 = vcmask 162816
      %v7745 = vsel %vm7744, %v7728, 0.0
      %v7746 = vsel %vm7744, %v7729, 0.0
      %v7747 = vsel %vm7744, %v7730, 0.0
      %v7748 = vsel %vm7744, %v7731, 0.0
      %v7749 = vsel %vm7744, %v7732, 0.0
      %v7750 = vsel %vm7744, %v7733, 0.0
      %v7751 = vsel %vm7744, %v7734, 0.0
      %v7752 = vsel %vm7744, %v7735, 0.0
      %v7753 = vsel %vm7744, %v7736, 0.0
      %v7754 = vsel %vm7744, %v7737, 0.0
      %v7755 = vsel %vm7744, %v7738, 0.0
      %v7756 = vsel %vm7744, %v7739, 0.0
      %v7757 = vsel %vm7744, %v7740, 0.0
      %v7758 = vsel %vm7744, %v7741, 0.0
      %v7759 = vsel %vm7744, %v7742, 0.0
      %v7760 = vsel %vm7744, %v7743, 0.0
      %v7761 = vld [vmem:[%s6] sm:$0x1]
      %v7763 = vlaneseq
      %v7764 = vshrl.u32 %v7763, 7
      %v7765 = vsub.s32 0, %v7764
      %v7766 = vrot.slane %v7761, %v7765
      %v7768 = vadd.f32 %v7745, %v7766
      %v7769 = vadd.f32 %v7746, %v7766
      %v7770 = vadd.f32 %v7747, %v7766
      %v7771 = vadd.f32 %v7748, %v7766
      %v7772 = vadd.f32 %v7749, %v7766
      %v7773 = vadd.f32 %v7750, %v7766
      %v7774 = vadd.f32 %v7751, %v7766
      %v7775 = vadd.f32 %v7752, %v7766
      %v7776 = vadd.f32 %v7753, %v7766
      %v7777 = vadd.f32 %v7754, %v7766
      %v7778 = vadd.f32 %v7755, %v7766
      %v7779 = vadd.f32 %v7756, %v7766
      %v7780 = vadd.f32 %v7757, %v7766
      %v7781 = vadd.f32 %v7758, %v7766
      %v7782 = vadd.f32 %v7759, %v7766
      %v7783 = vadd.f32 %v7760, %v7766
      %7784 = vst [vmem:[%s298] sm:$0xff] %v7768
      %7785 = vst [vmem:[%s298 + $0x8] sm:$0xff] %v7769
      %7786 = vst [vmem:[%s298 + $0x10] sm:$0xff] %v7770
      %7787 = vst [vmem:[%s298 + $0x18] sm:$0xff] %v7771
      %7788 = vst [vmem:[%s298 + $0x20] sm:$0xff] %v7772
      %7789 = vst [vmem:[%s298 + $0x28] sm:$0xff] %v7773
      %7790 = vst [vmem:[%s298 + $0x30] sm:$0xff] %v7774
      %7791 = vst [vmem:[%s298 + $0x38] sm:$0xff] %v7775
      %7792 = vst [vmem:[%s298 + $0x40] sm:$0xff] %v7776
      %7793 = vst [vmem:[%s298 + $0x48] sm:$0xff] %v7777
      %7794 = vst [vmem:[%s298 + $0x50] sm:$0xff] %v7778
      %7795 = vst [vmem:[%s298 + $0x58] sm:$0xff] %v7779
      %7796 = vst [vmem:[%s298 + $0x60] sm:$0xff] %v7780
      %7797 = vst [vmem:[%s298 + $0x68] sm:$0xff] %v7781
      %7798 = vst [vmem:[%s298 + $0x70] sm:$0xff] %v7782
      %7799 = vst [vmem:[%s298 + $0x78] sm:$0xff] %v7783
      %p7800 = scmp.lt.s32.totalorder %s18, 3
      %s7801 = scalar_select %p7800, %s18, 3
      %s7802 = smul.addr %s7801, 16
      %s7803 = smul.addr %s7802, 8
      %s7804 = scalar_lea.vmem %s7, %s7803
      // Predicated region
      $region49: #{inception_forward.3} parent=47 // pred_check
        %p7805 = pneg %p193
      $region50: #{inception_forward.3} parent=47 // pred_check_branch
        %7807 = sbr.rel (%p7805) target = $region52
      $region51: #{inception_forward.3} parent=47 // pred_region
        _
      $region52: #{inception_forward.3} parent=47 // pred_fallthru
        _
    $region48: #{inception_forward.3} parent=5 // pred_fallthru
      _
    %p7808 = scmp.le.s32.totalorder 2, %s13
    // Predicated region
    $region53: #{inception_forward.3} parent=5 // pred_check
      %p7809 = pneg %p7808
    $region54: #{inception_forward.3} parent=5 // pred_check_branch
      %7811 = sbr.rel (%p7809) target = $region56
    $region55: #{inception_forward.3} parent=5 // pred_region
      %s7812 = ssub.s32 %s13, 2
      // Predicated region
      $region57: #{inception_forward.3} parent=55 // pred_check
        %p7813 = pneg %p199
      $region58: #{inception_forward.3} parent=55 // pred_check_branch
        %7815 = sbr.rel (%p7813) target = $region60
      $region59: #{inception_forward.3} parent=55 // pred_region
        %p7816 = scmp.lt.s32.totalorder %s19, 3
        %s7817 = scalar_select %p7816, %s19, 3
        %s7818 = smul.addr %s7817, 16
        %s7819 = smul.addr %s7818, 8
        %s7820 = scalar_lea.vmem %s7, %s7819
      $region60: #{inception_forward.3} parent=55 // pred_fallthru
        _
    $region56: #{inception_forward.3} parent=5 // pred_fallthru
      _
  $region6: #{inception_forward.3} parent=0 // loop_footer
    %s17 = sadd.s32 1, %s13
  $region7: #{inception_forward.3} parent=0 // loop_footer_branch
    %12 = sbr.rel target = $region3
  $region8: #{inception_forward.3} parent=0 // loop_exit
    _

</llo_original>
